<compile_context>
chip_gen: v7x
topology: tpu7x:2x2x1
jax: 0.10.0
libtpu: 0.0.40
codegen_flags: <defaults>
</compile_context>

<pallas_src>
import functools

import jax
import jax.numpy as jnp
from jax.experimental import pallas as pl
from jax.experimental.pallas import tpu as pltpu

LANE = 128


def _round_up(n, m):
    return ((n + m - 1) // m) * m


def _default_vmem_limit():
    # ~75% of the chip's VMEM (96 MiB on v5e/v6e, 48 MiB on v7x); safe fallback.
    try:
        cap = int(pltpu.get_tpu_info().vmem_capacity_bytes)
    except Exception:
        cap = 64 * 1024 * 1024
    return min(cap * 3 // 4, 100 * 1024 * 1024)


# ----------------------------------------------------------------------------
# Fused Pallas kernel: whole Postnet for one (batch, time-tile) per grid step.
# ----------------------------------------------------------------------------
def postnet_kernel(x_ref, *refs, T, K, T_tile, halo, cdims, t_chunk):
    # x_ref   : (L_in, cdims[0])      input tile, channel-padded, act dtype
    # w refs  : per-layer (K*Cin_pad, Cout_pad) compute dtype, BN scale folded in
    # s refs  : per-layer (1, Cout_pad) f32 shift (conv bias + BN shift)
    # o_ref   : (T_tile, Cout_last_pad) f32
    # buf_a/b : (L_in, Cbuf) act-dtype ping-pong activation scratch (no init needed)
    # col     : (t_chunk, K * Cin_max) compute-dtype im2col staging scratch
    nl = len(cdims) - 1
    w_refs = refs[:nl]
    s_refs = refs[nl:2 * nl]
    o_ref = refs[2 * nl]
    buf_a = refs[2 * nl + 1]
    buf_b = refs[2 * nl + 2]
    col = refs[2 * nl + 3]
    pad = (K - 1) // 2
    L_in = T_tile + 2 * halo

    # Rows of this tile whose absolute frame index falls outside [0, T) must
    # present zeros to the next layer — this reproduces exactly the reference's
    # per-layer zero padding (Conv1d padding=pad) at the true sequence edges.
    frame0 = pl.program_id(1) * T_tile - halo
    frames = jax.lax.broadcasted_iota(jnp.int32, (L_in, 1), 0) + frame0
    valid = jnp.logical_and(frames >= 0, frames < T).astype(jnp.float32)

    for i in range(nl):                          # layers — unrolled at trace time
        cin, cout = cdims[i], cdims[i + 1]
        last = i == nl - 1
        src = x_ref if i == 0 else (buf_a if (i % 2 == 1) else buf_b)
        dst = None if last else (buf_a if (i % 2 == 0) else buf_b)
        off_in = i * pad                         # first src row this layer reads
        off_out = (i + 1) * pad                  # buffer row of first output row
        n_out = L_in - 2 * off_out               # "valid" conv output rows
        for t0 in range(0, n_out, t_chunk):      # chunk loop (usually 1 chunk)
            tt = min(t_chunk, n_out - t0)
            # Manual im2col: K shifted slices packed side-by-side along lanes.
            for k in range(K):
                col[0:tt, k * cin:(k + 1) * cin] = (
                    src[pl.ds(off_in + t0 + k, tt), 0:cin].astype(col.dtype))
            # One MXU matmul per layer/chunk, f32 accumulation.
            y = jnp.dot(col[0:tt, 0:K * cin], w_refs[i][...],
                        preferred_element_type=jnp.float32)
            y = y + s_refs[i][...]               # folded conv-bias + BN shift (f32)
            if last:
                o_ref[pl.ds(t0, tt), :] = y.astype(o_ref.dtype)
            else:
                y = jnp.tanh(y) * valid[off_out + t0:off_out + t0 + tt, :]
                dst[pl.ds(off_out + t0, tt), 0:cout] = y.astype(dst.dtype)
    # TODO(synk): F.dropout(p=0.5, training) is identity in eval mode; a
    #             training-mode variant would mask `y` with pltpu.prng_random_bits.


# ----------------------------------------------------------------------------
# One-time weight preparation (constant folding on weights, not activations).
# ----------------------------------------------------------------------------
def prepare_postnet_weights(params, eps=1e-5, compute_dtype=jnp.bfloat16,
                            act_dtype=None):
    """Fold inference BatchNorm into conv weights, pad channels to lane
    multiples, and reshape to the (K*Cin_pad, Cout_pad) im2col layout."""
    if act_dtype is None:
        act_dtype = compute_dtype
    K = params[0]["w"].shape[2]
    w_list, s_list, cdims = [], [], []
    for li, p in enumerate(params):
        cout, cin, _ = p["w"].shape
        inv_std = 1.0 / jnp.sqrt(p["var"] + eps)
        scale = p["gamma"] * inv_std                         # (Cout,)
        shift = (p["b"] - p["mean"]) * scale + p["beta"]     # (Cout,)
        w = p["w"] * scale[:, None, None]                    # fold BN scale into W
        w_kio = jnp.transpose(w, (2, 1, 0))                  # (K, Cin, Cout)
        cin_p = _round_up(cin, LANE)
        cout_p = _round_up(cout, LANE)
        w_pad = jnp.pad(w_kio, ((0, 0), (0, cin_p - cin), (0, cout_p - cout)))
        w_list.append(w_pad.reshape(K * cin_p, cout_p).astype(compute_dtype))
        s_list.append(jnp.pad(shift, (0, cout_p - cout))
                      .reshape(1, cout_p).astype(jnp.float32))
        if li == 0:
            cdims.append(cin_p)
        cdims.append(cout_p)
    return dict(weights=w_list, shifts=s_list, cdims=tuple(cdims), K=K,
                num_mels=params[-1]["w"].shape[0],
                compute_dtype=compute_dtype, act_dtype=act_dtype)


# ----------------------------------------------------------------------------
# pallas_call builder (weight single-buffering is optional for fallback).
# ----------------------------------------------------------------------------
def _build_postnet_call(*, B, n_tiles, T, T_tile, L_in, cdims, K, halo, t_chunk,
                        w_list, s_list, act_dtype, compute_dtype, vmem_limit,
                        single_buffer_weights):
    nl = len(cdims) - 1
    c0p, c_last = cdims[0], cdims[-1]
    cbuf = max(cdims[1:nl]) if nl > 1 else LANE
    cin_max = max(cdims[:nl])
    wmode = dict(pipeline_mode=pl.Buffered(1)) if single_buffer_weights else {}

    kernel = functools.partial(postnet_kernel, T=T, K=K, T_tile=T_tile,
                               halo=halo, cdims=cdims, t_chunk=t_chunk)
    return pl.pallas_call(
        kernel,
        out_shape=jax.ShapeDtypeStruct((B, n_tiles, T_tile, c_last), jnp.float32),
        grid_spec=pltpu.PrefetchScalarGridSpec(
            num_scalar_prefetch=0,
            grid=(B, n_tiles),                   # batch x time-tiles, both parallel
            in_specs=(
                [pl.BlockSpec((None, None, L_in, c0p),
                              lambda b, t: (b, t, 0, 0))]
                + [pl.BlockSpec(w.shape, lambda b, t: (0, 0), **wmode)
                   for w in w_list]
                + [pl.BlockSpec(s.shape, lambda b, t: (0, 0), **wmode)
                   for s in s_list]),
            out_specs=pl.BlockSpec((None, None, T_tile, c_last),
                                   lambda b, t: (b, t, 0, 0)),
            scratch_shapes=[
                pltpu.VMEM((L_in, cbuf), act_dtype),          # ping
                pltpu.VMEM((L_in, cbuf), act_dtype),          # pong
                pltpu.VMEM((t_chunk, K * cin_max), compute_dtype),  # im2col staging
            ],
        ),
        compiler_params=pltpu.CompilerParams(
            dimension_semantics=("parallel", "parallel"),
            vmem_limit_bytes=vmem_limit,
        ),
    )


# ----------------------------------------------------------------------------
# Full Postnet forward (inference mode).
# ----------------------------------------------------------------------------
def postnet_forward(x_ncl, prep, *, t_tile=512, t_chunk=None):
    """x_ncl: (B, num_mels, T) — same layout as the PyTorch module input."""
    B, C0, T = x_ncl.shape
    K = prep["K"]
    nl = len(prep["weights"])
    pad = (K - 1) // 2
    halo = nl * pad
    cdims = prep["cdims"]
    c0p, c_last = cdims[0], cdims[-1]
    act_dtype, compute_dtype = prep["act_dtype"], prep["compute_dtype"]
    w_list, s_list = prep["weights"], prep["shifts"]

    T_tile = min(t_tile, T)
    n_tiles = -(-T // T_tile)
    L_in = T_tile + 2 * halo
    tc = L_in if t_chunk is None else max(1, min(t_chunk, L_in))

    # Channels-last, channel-pad to a lane multiple (lane-dense input blocks),
    # zero time-halo on both ends (+ right pad up to a whole number of tiles).
    x_btc = jnp.transpose(x_ncl, (0, 2, 1)).astype(act_dtype)
    x_p = jnp.pad(x_btc, ((0, 0),
                          (halo, halo + n_tiles * T_tile - T),
                          (0, c0p - C0)))
    # Overlapping (T_tile + 2*halo)-frame windows, one per time tile.
    starts = jnp.arange(n_tiles) * T_tile
    x_tiles = jax.vmap(
        lambda s: jax.lax.dynamic_slice_in_dim(x_p, s, L_in, axis=1))(starts)
    x_tiles = jnp.transpose(x_tiles, (1, 0, 2, 3))   # (B, n_tiles, L_in, c0p)

    common = dict(B=B, n_tiles=n_tiles, T=T, T_tile=T_tile, L_in=L_in,
                  cdims=cdims, K=K, halo=halo, t_chunk=tc,
                  w_list=w_list, s_list=s_list, act_dtype=act_dtype,
                  compute_dtype=compute_dtype, vmem_limit=_default_vmem_limit())
    try:
        out = _build_postnet_call(single_buffer_weights=True, **common)(
            x_tiles, *w_list, *s_list)
    except Exception:
        # Fallback for Pallas builds that reject Buffered(1) on the outer pipeline.
        out = _build_postnet_call(single_buffer_weights=False, **common)(
            x_tiles, *w_list, *s_list)

    out = out.reshape(B, n_tiles * T_tile, c_last)[:, :T, :prep["num_mels"]]
    return jnp.transpose(out, (0, 2, 1))             # -> (B, C, T)


# ----------------------------------------------------------------------------
# Parameter construction (deterministic, synthetic — no checkpoint loading).
# ----------------------------------------------------------------------------
def make_postnet_params(key, num_mels, num_layers, hidden_dim, kernel_size):
    dims = [num_mels] + [hidden_dim] * (num_layers - 1) + [num_mels]
    params = []
    for i in range(num_layers):
        cin, cout = dims[i], dims[i + 1]
        key, kw, kb, kg, kbe, km, kv = jax.random.split(key, 7)
        w = 0.1 * jax.random.normal(kw, (cout, cin, kernel_size), jnp.float32)
        b = 0.1 * jax.random.normal(kb, (cout,), jnp.float32)
        gamma = 1.0 + 0.1 * jax.random.normal(kg, (cout,), jnp.float32)
        beta = 0.1 * jax.random.normal(kbe, (cout,), jnp.float32)
        running_mean = 0.1 * jax.random.normal(km, (cout,), jnp.float32)
        running_var = 1.0 + 0.1 * jax.random.uniform(kv, (cout,), jnp.float32)
        params.append(dict(w=w, b=b, gamma=gamma, beta=beta,
                           mean=running_mean, var=running_var))
    return params


# ----------------------------------------------------------------------------
# Pure-JAX reference (lax conv) for the correctness check.
# ----------------------------------------------------------------------------
def postnet_reference(x_ncl, params, eps=1e-5):
    x = x_ncl.astype(jnp.float32)
    n = len(params)
    for i, layer in enumerate(params):
        pad = (layer["w"].shape[2] - 1) // 2
        y = jax.lax.conv_general_dilated(
            x, layer["w"], window_strides=(1,), padding=((pad, pad),),
            dimension_numbers=("NCH", "OIH", "NCH"))
        y = y + layer["b"][None, :, None]
        inv_std = 1.0 / jnp.sqrt(layer["var"] + eps)
        y = (y - layer["mean"][None, :, None]) * (layer["gamma"] * inv_std)[None, :, None] \
            + layer["beta"][None, :, None]
        if i < n - 1:
            y = jnp.tanh(y)
        x = y
    return x


if __name__ == "__main__":
    # Small shapes consistent with the module: Postnet(num_mels, 5 layers,
    # hidden_dim, kernel_size=5); input is (B, num_mels, T).
    B, NUM_MELS, HIDDEN, T, K, NLAYERS = 2, 16, 24, 24, 5, 5

    key = jax.random.PRNGKey(0)
    kx, kx2, kp = jax.random.split(key, 3)
    x = jax.random.normal(kx, (B, NUM_MELS, T), jnp.float32)
    params = make_postnet_params(kp, NUM_MELS, NLAYERS, HIDDEN, K)
    ref = postnet_reference(x, params)

    # f32 path: tight numerical check against the pure-JAX reference (single tile).
    prep_f32 = prepare_postnet_weights(params, compute_dtype=jnp.float32)
    out_f32 = jax.block_until_ready(postnet_forward(x, prep_f32))
    assert out_f32.shape == (B, NUM_MELS, T), out_f32.shape
    assert jnp.allclose(out_f32, ref, atol=1e-4, rtol=1e-4), \
        float(jnp.max(jnp.abs(out_f32 - ref)))

    # Multi-tile path (time-tiled parallel grid): exercises halo recompute and
    # the per-layer edge mask across tile boundaries.
    T2 = 100
    x2 = jax.random.normal(kx2, (B, NUM_MELS, T2), jnp.float32)
    ref2 = postnet_reference(x2, params)
    out_tiled = jax.block_until_ready(postnet_forward(x2, prep_f32, t_tile=32))
    assert out_tiled.shape == (B, NUM_MELS, T2), out_tiled.shape
    assert jnp.allclose(out_tiled, ref2, atol=1e-4, rtol=1e-4), \
        float(jnp.max(jnp.abs(out_tiled - ref2)))

    # bf16 MXU + bf16 activation-scratch path (v6e/v7x fast path): looser tolerance.
    prep_bf16 = prepare_postnet_weights(params, compute_dtype=jnp.bfloat16)
    out_bf16 = jax.block_until_ready(postnet_forward(x, prep_bf16))
    assert out_bf16.shape == (B, NUM_MELS, T), out_bf16.shape
    assert jnp.allclose(out_bf16, ref, atol=1e-1, rtol=5e-2), \
        float(jnp.max(jnp.abs(out_bf16 - ref)))

    print("KERNEL_OK")
</pallas_src>

<mosaic_0001>
module attributes {stable_mosaic.version = 11 : i64} {
  func.func @postnet_kernel(%arg0: i32, %arg1: i32, %arg2: memref<1x1x44x128xf32, #tpu.memory_space<vmem>>, %arg3: memref<640x128xf32, #tpu.memory_space<vmem>>, %arg4: memref<640x128xf32, #tpu.memory_space<vmem>>, %arg5: memref<640x128xf32, #tpu.memory_space<vmem>>, %arg6: memref<640x128xf32, #tpu.memory_space<vmem>>, %arg7: memref<640x128xf32, #tpu.memory_space<vmem>>, %arg8: memref<1x128xf32, #tpu.memory_space<vmem>>, %arg9: memref<1x128xf32, #tpu.memory_space<vmem>>, %arg10: memref<1x128xf32, #tpu.memory_space<vmem>>, %arg11: memref<1x128xf32, #tpu.memory_space<vmem>>, %arg12: memref<1x128xf32, #tpu.memory_space<vmem>>, %arg13: memref<1x1x24x128xf32, #tpu.memory_space<vmem>>, %arg14: memref<44x128xf32, #tpu.memory_space<vmem>>, %arg15: memref<44x128xf32, #tpu.memory_space<vmem>>, %arg16: memref<44x640xf32, #tpu.memory_space<vmem>>) attributes {dimension_semantics = [#tpu.dimension_semantics<parallel>, #tpu.dimension_semantics<parallel>], iteration_bounds = array<i64: 2, 1>, scalar_prefetch = 0 : i64, scratch_operands = 3 : i64, tpu.core_type = #tpu.core_type<tc>, window_params = [{transform_indices = @transform_0, window_bounds = array<i64: 1, 1, 44, 128>}, {pipeline_mode = #tpu.pipeline_mode<synchronous>, transform_indices = @transform_1, window_bounds = array<i64: 640, 128>}, {pipeline_mode = #tpu.pipeline_mode<synchronous>, transform_indices = @transform_2, window_bounds = array<i64: 640, 128>}, {pipeline_mode = #tpu.pipeline_mode<synchronous>, transform_indices = @transform_3, window_bounds = array<i64: 640, 128>}, {pipeline_mode = #tpu.pipeline_mode<synchronous>, transform_indices = @transform_4, window_bounds = array<i64: 640, 128>}, {pipeline_mode = #tpu.pipeline_mode<synchronous>, transform_indices = @transform_5, window_bounds = array<i64: 640, 128>}, {pipeline_mode = #tpu.pipeline_mode<synchronous>, transform_indices = @transform_6, window_bounds = array<i64: 1, 128>}, {pipeline_mode = #tpu.pipeline_mode<synchronous>, transform_indices = @transform_7, window_bounds = array<i64: 1, 128>}, {pipeline_mode = #tpu.pipeline_mode<synchronous>, transform_indices = @transform_8, window_bounds = array<i64: 1, 128>}, {pipeline_mode = #tpu.pipeline_mode<synchronous>, transform_indices = @transform_9, window_bounds = array<i64: 1, 128>}, {pipeline_mode = #tpu.pipeline_mode<synchronous>, transform_indices = @transform_10, window_bounds = array<i64: 1, 128>}, {transform_indices = @transform_11, window_bounds = array<i64: 1, 1, 24, 128>}]} {
    %c24_i32 = arith.constant 24 : i32
    %0 = arith.muli %arg1, %c24_i32 : i32
    %c10_i32 = arith.constant 10 : i32
    %1 = arith.subi %0, %c10_i32 : i32
    %2 = tpu.iota {dimensions = array<i32: 0>} : vector<44x1xi32>
    %3 = vector.broadcast %1 : i32 to vector<44x1xi32>
    %4 = arith.addi %2, %3 : vector<44x1xi32>
    %c0_i32 = arith.constant 0 : i32
    %5 = vector.broadcast %c0_i32 : i32 to vector<44x1xi32>
    %6 = arith.cmpi sge, %4, %5 : vector<44x1xi32>
    %c24_i32_0 = arith.constant 24 : i32
    %7 = vector.broadcast %c24_i32_0 : i32 to vector<44x1xi32>
    %8 = arith.cmpi slt, %4, %7 : vector<44x1xi32>
    %9 = arith.andi %6, %8 : vector<44x1xi1>
    %10 = arith.extui %9 : vector<44x1xi1> to vector<44x1xi32>
    %11 = arith.sitofp %10 : vector<44x1xi32> to vector<44x1xf32>
    %c0 = arith.constant 0 : index
    %c0_1 = arith.constant 0 : index
    %c0_2 = arith.constant 0 : index
    %c0_3 = arith.constant 0 : index
    %12 = vector.load %arg2[%c0, %c0_1, %c0_2, %c0_3] : memref<1x1x44x128xf32, #tpu.memory_space<vmem>>, vector<1x1x40x128xf32>
    %13 = vector.shape_cast %12 : vector<1x1x40x128xf32> to vector<40x128xf32>
    %c0_4 = arith.constant 0 : index
    %c0_5 = arith.constant 0 : index
    %14 = vector.load %arg16[%c0_4, %c0_5] : memref<44x640xf32, #tpu.memory_space<vmem>>, vector<40x128xf32>
    tpu.vector_store %arg16[%c0_4, %c0_5], %13 {strides = array<i32>} : memref<44x640xf32, #tpu.memory_space<vmem>>, vector<40x128xf32>,
    %c0_6 = arith.constant 0 : index
    %c0_7 = arith.constant 0 : index
    %c1 = arith.constant 1 : index
    %c0_8 = arith.constant 0 : index
    %15 = vector.load %arg2[%c0_6, %c0_7, %c1, %c0_8] : memref<1x1x44x128xf32, #tpu.memory_space<vmem>>, vector<1x1x40x128xf32>
    %16 = vector.shape_cast %15 : vector<1x1x40x128xf32> to vector<40x128xf32>
    %c0_9 = arith.constant 0 : index
    %c128 = arith.constant 128 : index
    %17 = vector.load %arg16[%c0_9, %c128] : memref<44x640xf32, #tpu.memory_space<vmem>>, vector<40x128xf32>
    tpu.vector_store %arg16[%c0_9, %c128], %16 {strides = array<i32>} : memref<44x640xf32, #tpu.memory_space<vmem>>, vector<40x128xf32>,
    %c0_10 = arith.constant 0 : index
    %c0_11 = arith.constant 0 : index
    %c2 = arith.constant 2 : index
    %c0_12 = arith.constant 0 : index
    %18 = vector.load %arg2[%c0_10, %c0_11, %c2, %c0_12] : memref<1x1x44x128xf32, #tpu.memory_space<vmem>>, vector<1x1x40x128xf32>
    %19 = vector.shape_cast %18 : vector<1x1x40x128xf32> to vector<40x128xf32>
    %c0_13 = arith.constant 0 : index
    %c256 = arith.constant 256 : index
    %20 = vector.load %arg16[%c0_13, %c256] : memref<44x640xf32, #tpu.memory_space<vmem>>, vector<40x128xf32>
    tpu.vector_store %arg16[%c0_13, %c256], %19 {strides = array<i32>} : memref<44x640xf32, #tpu.memory_space<vmem>>, vector<40x128xf32>,
    %c0_14 = arith.constant 0 : index
    %c0_15 = arith.constant 0 : index
    %c3 = arith.constant 3 : index
    %c0_16 = arith.constant 0 : index
    %21 = vector.load %arg2[%c0_14, %c0_15, %c3, %c0_16] : memref<1x1x44x128xf32, #tpu.memory_space<vmem>>, vector<1x1x40x128xf32>
    %22 = vector.shape_cast %21 : vector<1x1x40x128xf32> to vector<40x128xf32>
    %c0_17 = arith.constant 0 : index
    %c384 = arith.constant 384 : index
    %23 = vector.load %arg16[%c0_17, %c384] : memref<44x640xf32, #tpu.memory_space<vmem>>, vector<40x128xf32>
    tpu.vector_store %arg16[%c0_17, %c384], %22 {strides = array<i32>} : memref<44x640xf32, #tpu.memory_space<vmem>>, vector<40x128xf32>,
    %c0_18 = arith.constant 0 : index
    %c0_19 = arith.constant 0 : index
    %c4 = arith.constant 4 : index
    %c0_20 = arith.constant 0 : index
    %24 = vector.load %arg2[%c0_18, %c0_19, %c4, %c0_20] : memref<1x1x44x128xf32, #tpu.memory_space<vmem>>, vector<1x1x40x128xf32>
    %25 = vector.shape_cast %24 : vector<1x1x40x128xf32> to vector<40x128xf32>
    %c0_21 = arith.constant 0 : index
    %c512 = arith.constant 512 : index
    %26 = vector.load %arg16[%c0_21, %c512] : memref<44x640xf32, #tpu.memory_space<vmem>>, vector<40x128xf32>
    tpu.vector_store %arg16[%c0_21, %c512], %25 {strides = array<i32>} : memref<44x640xf32, #tpu.memory_space<vmem>>, vector<40x128xf32>,
    %c0_22 = arith.constant 0 : index
    %c0_23 = arith.constant 0 : index
    %27 = vector.load %arg16[%c0_22, %c0_23] : memref<44x640xf32, #tpu.memory_space<vmem>>, vector<40x640xf32>
    %c0_24 = arith.constant 0 : index
    %c0_25 = arith.constant 0 : index
    %28 = vector.load %arg3[%c0_24, %c0_25] : memref<640x128xf32, #tpu.memory_space<vmem>>, vector<640x128xf32>
    %cst = arith.constant dense<0.000000e+00> : vector<40x128xf32>
    %29 = tpu.matmul %27, %28, %cst {dimension_numbers = #tpu.dot_dimension_numbers<[1], [0], [0], [1], [0, 0, 1, 1], [], []>} : vector<40x640xf32>, vector<640x128xf32>, vector<40x128xf32> -> vector<40x128xf32>
    %c0_26 = arith.constant 0 : index
    %c0_27 = arith.constant 0 : index
    %30 = vector.load %arg8[%c0_26, %c0_27] : memref<1x128xf32, #tpu.memory_space<vmem>>, vector<1x128xf32>
    %31 = vector.broadcast %30 : vector<1x128xf32> to vector<40x128xf32>
    %32 = arith.addf %29, %31 : vector<40x128xf32>
    %33 = math.tanh %32 : vector<40x128xf32>
    %34 = vector.extract_strided_slice %11 {offsets = [2, 0], sizes = [40, 1], strides = [1, 1]} : vector<44x1xf32> to vector<40x1xf32>
    %35 = vector.broadcast %34 : vector<40x1xf32> to vector<40x128xf32>
    %36 = arith.mulf %33, %35 : vector<40x128xf32>
    %c2_28 = arith.constant 2 : index
    %c0_29 = arith.constant 0 : index
    %37 = vector.load %arg14[%c2_28, %c0_29] : memref<44x128xf32, #tpu.memory_space<vmem>>, vector<40x128xf32>
    tpu.vector_store %arg14[%c2_28, %c0_29], %36 {strides = array<i32>} : memref<44x128xf32, #tpu.memory_space<vmem>>, vector<40x128xf32>,
    %c2_30 = arith.constant 2 : index
    %c0_31 = arith.constant 0 : index
    %38 = vector.load %arg14[%c2_30, %c0_31] : memref<44x128xf32, #tpu.memory_space<vmem>>, vector<36x128xf32>
    %c0_32 = arith.constant 0 : index
    %c0_33 = arith.constant 0 : index
    %39 = vector.load %arg16[%c0_32, %c0_33] : memref<44x640xf32, #tpu.memory_space<vmem>>, vector<36x128xf32>
    tpu.vector_store %arg16[%c0_32, %c0_33], %38 {strides = array<i32>} : memref<44x640xf32, #tpu.memory_space<vmem>>, vector<36x128xf32>,
    %c3_34 = arith.constant 3 : index
    %c0_35 = arith.constant 0 : index
    %40 = vector.load %arg14[%c3_34, %c0_35] : memref<44x128xf32, #tpu.memory_space<vmem>>, vector<36x128xf32>
    %c0_36 = arith.constant 0 : index
    %c128_37 = arith.constant 128 : index
    %41 = vector.load %arg16[%c0_36, %c128_37] : memref<44x640xf32, #tpu.memory_space<vmem>>, vector<36x128xf32>
    tpu.vector_store %arg16[%c0_36, %c128_37], %40 {strides = array<i32>} : memref<44x640xf32, #tpu.memory_space<vmem>>, vector<36x128xf32>,
    %c4_38 = arith.constant 4 : index
    %c0_39 = arith.constant 0 : index
    %42 = vector.load %arg14[%c4_38, %c0_39] : memref<44x128xf32, #tpu.memory_space<vmem>>, vector<36x128xf32>
    %c0_40 = arith.constant 0 : index
    %c256_41 = arith.constant 256 : index
    %43 = vector.load %arg16[%c0_40, %c256_41] : memref<44x640xf32, #tpu.memory_space<vmem>>, vector<36x128xf32>
    tpu.vector_store %arg16[%c0_40, %c256_41], %42 {strides = array<i32>} : memref<44x640xf32, #tpu.memory_space<vmem>>, vector<36x128xf32>,
    %c5 = arith.constant 5 : index
    %c0_42 = arith.constant 0 : index
    %44 = vector.load %arg14[%c5, %c0_42] : memref<44x128xf32, #tpu.memory_space<vmem>>, vector<36x128xf32>
    %c0_43 = arith.constant 0 : index
    %c384_44 = arith.constant 384 : index
    %45 = vector.load %arg16[%c0_43, %c384_44] : memref<44x640xf32, #tpu.memory_space<vmem>>, vector<36x128xf32>
    tpu.vector_store %arg16[%c0_43, %c384_44], %44 {strides = array<i32>} : memref<44x640xf32, #tpu.memory_space<vmem>>, vector<36x128xf32>,
    %c6 = arith.constant 6 : index
    %c0_45 = arith.constant 0 : index
    %46 = vector.load %arg14[%c6, %c0_45] : memref<44x128xf32, #tpu.memory_space<vmem>>, vector<36x128xf32>
    %c0_46 = arith.constant 0 : index
    %c512_47 = arith.constant 512 : index
    %47 = vector.load %arg16[%c0_46, %c512_47] : memref<44x640xf32, #tpu.memory_space<vmem>>, vector<36x128xf32>
    tpu.vector_store %arg16[%c0_46, %c512_47], %46 {strides = array<i32>} : memref<44x640xf32, #tpu.memory_space<vmem>>, vector<36x128xf32>,
    %c0_48 = arith.constant 0 : index
    %c0_49 = arith.constant 0 : index
    %48 = vector.load %arg16[%c0_48, %c0_49] : memref<44x640xf32, #tpu.memory_space<vmem>>, vector<36x640xf32>
    %c0_50 = arith.constant 0 : index
    %c0_51 = arith.constant 0 : index
    %49 = vector.load %arg4[%c0_50, %c0_51] : memref<640x128xf32, #tpu.memory_space<vmem>>, vector<640x128xf32>
    %cst_52 = arith.constant dense<0.000000e+00> : vector<36x128xf32>
    %50 = tpu.matmul %48, %49, %cst_52 {dimension_numbers = #tpu.dot_dimension_numbers<[1], [0], [0], [1], [0, 0, 1, 1], [], []>} : vector<36x640xf32>, vector<640x128xf32>, vector<36x128xf32> -> vector<36x128xf32>
    %c0_53 = arith.constant 0 : index
    %c0_54 = arith.constant 0 : index
    %51 = vector.load %arg9[%c0_53, %c0_54] : memref<1x128xf32, #tpu.memory_space<vmem>>, vector<1x128xf32>
    %52 = vector.broadcast %51 : vector<1x128xf32> to vector<36x128xf32>
    %53 = arith.addf %50, %52 : vector<36x128xf32>
    %54 = math.tanh %53 : vector<36x128xf32>
    %55 = vector.extract_strided_slice %11 {offsets = [4, 0], sizes = [36, 1], strides = [1, 1]} : vector<44x1xf32> to vector<36x1xf32>
    %56 = vector.broadcast %55 : vector<36x1xf32> to vector<36x128xf32>
    %57 = arith.mulf %54, %56 : vector<36x128xf32>
    %c4_55 = arith.constant 4 : index
    %c0_56 = arith.constant 0 : index
    %58 = vector.load %arg15[%c4_55, %c0_56] : memref<44x128xf32, #tpu.memory_space<vmem>>, vector<36x128xf32>
    tpu.vector_store %arg15[%c4_55, %c0_56], %57 {strides = array<i32>} : memref<44x128xf32, #tpu.memory_space<vmem>>, vector<36x128xf32>,
    %c4_57 = arith.constant 4 : index
    %c0_58 = arith.constant 0 : index
    %59 = vector.load %arg15[%c4_57, %c0_58] : memref<44x128xf32, #tpu.memory_space<vmem>>, vector<32x128xf32>
    %c0_59 = arith.constant 0 : index
    %c0_60 = arith.constant 0 : index
    %60 = vector.load %arg16[%c0_59, %c0_60] : memref<44x640xf32, #tpu.memory_space<vmem>>, vector<32x128xf32>
    tpu.vector_store %arg16[%c0_59, %c0_60], %59 {strides = array<i32>} : memref<44x640xf32, #tpu.memory_space<vmem>>, vector<32x128xf32>,
    %c5_61 = arith.constant 5 : index
    %c0_62 = arith.constant 0 : index
    %61 = vector.load %arg15[%c5_61, %c0_62] : memref<44x128xf32, #tpu.memory_space<vmem>>, vector<32x128xf32>
    %c0_63 = arith.constant 0 : index
    %c128_64 = arith.constant 128 : index
    %62 = vector.load %arg16[%c0_63, %c128_64] : memref<44x640xf32, #tpu.memory_space<vmem>>, vector<32x128xf32>
    tpu.vector_store %arg16[%c0_63, %c128_64], %61 {strides = array<i32>} : memref<44x640xf32, #tpu.memory_space<vmem>>, vector<32x128xf32>,
    %c6_65 = arith.constant 6 : index
    %c0_66 = arith.constant 0 : index
    %63 = vector.load %arg15[%c6_65, %c0_66] : memref<44x128xf32, #tpu.memory_space<vmem>>, vector<32x128xf32>
    %c0_67 = arith.constant 0 : index
    %c256_68 = arith.constant 256 : index
    %64 = vector.load %arg16[%c0_67, %c256_68] : memref<44x640xf32, #tpu.memory_space<vmem>>, vector<32x128xf32>
    tpu.vector_store %arg16[%c0_67, %c256_68], %63 {strides = array<i32>} : memref<44x640xf32, #tpu.memory_space<vmem>>, vector<32x128xf32>,
    %c7 = arith.constant 7 : index
    %c0_69 = arith.constant 0 : index
    %65 = vector.load %arg15[%c7, %c0_69] : memref<44x128xf32, #tpu.memory_space<vmem>>, vector<32x128xf32>
    %c0_70 = arith.constant 0 : index
    %c384_71 = arith.constant 384 : index
    %66 = vector.load %arg16[%c0_70, %c384_71] : memref<44x640xf32, #tpu.memory_space<vmem>>, vector<32x128xf32>
    tpu.vector_store %arg16[%c0_70, %c384_71], %65 {strides = array<i32>} : memref<44x640xf32, #tpu.memory_space<vmem>>, vector<32x128xf32>,
    %c8 = arith.constant 8 : index
    %c0_72 = arith.constant 0 : index
    %67 = vector.load %arg15[%c8, %c0_72] : memref<44x128xf32, #tpu.memory_space<vmem>>, vector<32x128xf32>
    %c0_73 = arith.constant 0 : index
    %c512_74 = arith.constant 512 : index
    %68 = vector.load %arg16[%c0_73, %c512_74] : memref<44x640xf32, #tpu.memory_space<vmem>>, vector<32x128xf32>
    tpu.vector_store %arg16[%c0_73, %c512_74], %67 {strides = array<i32>} : memref<44x640xf32, #tpu.memory_space<vmem>>, vector<32x128xf32>,
    %c0_75 = arith.constant 0 : index
    %c0_76 = arith.constant 0 : index
    %69 = vector.load %arg16[%c0_75, %c0_76] : memref<44x640xf32, #tpu.memory_space<vmem>>, vector<32x640xf32>
    %c0_77 = arith.constant 0 : index
    %c0_78 = arith.constant 0 : index
    %70 = vector.load %arg5[%c0_77, %c0_78] : memref<640x128xf32, #tpu.memory_space<vmem>>, vector<640x128xf32>
    %cst_79 = arith.constant dense<0.000000e+00> : vector<32x128xf32>
    %71 = tpu.matmul %69, %70, %cst_79 {dimension_numbers = #tpu.dot_dimension_numbers<[1], [0], [0], [1], [0, 0, 1, 1], [], []>} : vector<32x640xf32>, vector<640x128xf32>, vector<32x128xf32> -> vector<32x128xf32>
    %c0_80 = arith.constant 0 : index
    %c0_81 = arith.constant 0 : index
    %72 = vector.load %arg10[%c0_80, %c0_81] : memref<1x128xf32, #tpu.memory_space<vmem>>, vector<1x128xf32>
    %73 = vector.broadcast %72 : vector<1x128xf32> to vector<32x128xf32>
    %74 = arith.addf %71, %73 : vector<32x128xf32>
    %75 = math.tanh %74 : vector<32x128xf32>
    %76 = vector.extract_strided_slice %11 {offsets = [6, 0], sizes = [32, 1], strides = [1, 1]} : vector<44x1xf32> to vector<32x1xf32>
    %77 = vector.broadcast %76 : vector<32x1xf32> to vector<32x128xf32>
    %78 = arith.mulf %75, %77 : vector<32x128xf32>
    %c6_82 = arith.constant 6 : index
    %c0_83 = arith.constant 0 : index
    %79 = vector.load %arg14[%c6_82, %c0_83] : memref<44x128xf32, #tpu.memory_space<vmem>>, vector<32x128xf32>
    tpu.vector_store %arg14[%c6_82, %c0_83], %78 {strides = array<i32>} : memref<44x128xf32, #tpu.memory_space<vmem>>, vector<32x128xf32>,
    %c6_84 = arith.constant 6 : index
    %c0_85 = arith.constant 0 : index
    %80 = vector.load %arg14[%c6_84, %c0_85] : memref<44x128xf32, #tpu.memory_space<vmem>>, vector<28x128xf32>
    %c0_86 = arith.constant 0 : index
    %c0_87 = arith.constant 0 : index
    %81 = vector.load %arg16[%c0_86, %c0_87] : memref<44x640xf32, #tpu.memory_space<vmem>>, vector<28x128xf32>
    tpu.vector_store %arg16[%c0_86, %c0_87], %80 {strides = array<i32>} : memref<44x640xf32, #tpu.memory_space<vmem>>, vector<28x128xf32>,
    %c7_88 = arith.constant 7 : index
    %c0_89 = arith.constant 0 : index
    %82 = vector.load %arg14[%c7_88, %c0_89] : memref<44x128xf32, #tpu.memory_space<vmem>>, vector<28x128xf32>
    %c0_90 = arith.constant 0 : index
    %c128_91 = arith.constant 128 : index
    %83 = vector.load %arg16[%c0_90, %c128_91] : memref<44x640xf32, #tpu.memory_space<vmem>>, vector<28x128xf32>
    tpu.vector_store %arg16[%c0_90, %c128_91], %82 {strides = array<i32>} : memref<44x640xf32, #tpu.memory_space<vmem>>, vector<28x128xf32>,
    %c8_92 = arith.constant 8 : index
    %c0_93 = arith.constant 0 : index
    %84 = vector.load %arg14[%c8_92, %c0_93] : memref<44x128xf32, #tpu.memory_space<vmem>>, vector<28x128xf32>
    %c0_94 = arith.constant 0 : index
    %c256_95 = arith.constant 256 : index
    %85 = vector.load %arg16[%c0_94, %c256_95] : memref<44x640xf32, #tpu.memory_space<vmem>>, vector<28x128xf32>
    tpu.vector_store %arg16[%c0_94, %c256_95], %84 {strides = array<i32>} : memref<44x640xf32, #tpu.memory_space<vmem>>, vector<28x128xf32>,
    %c9 = arith.constant 9 : index
    %c0_96 = arith.constant 0 : index
    %86 = vector.load %arg14[%c9, %c0_96] : memref<44x128xf32, #tpu.memory_space<vmem>>, vector<28x128xf32>
    %c0_97 = arith.constant 0 : index
    %c384_98 = arith.constant 384 : index
    %87 = vector.load %arg16[%c0_97, %c384_98] : memref<44x640xf32, #tpu.memory_space<vmem>>, vector<28x128xf32>
    tpu.vector_store %arg16[%c0_97, %c384_98], %86 {strides = array<i32>} : memref<44x640xf32, #tpu.memory_space<vmem>>, vector<28x128xf32>,
    %c10 = arith.constant 10 : index
    %c0_99 = arith.constant 0 : index
    %88 = vector.load %arg14[%c10, %c0_99] : memref<44x128xf32, #tpu.memory_space<vmem>>, vector<28x128xf32>
    %c0_100 = arith.constant 0 : index
    %c512_101 = arith.constant 512 : index
    %89 = vector.load %arg16[%c0_100, %c512_101] : memref<44x640xf32, #tpu.memory_space<vmem>>, vector<28x128xf32>
    tpu.vector_store %arg16[%c0_100, %c512_101], %88 {strides = array<i32>} : memref<44x640xf32, #tpu.memory_space<vmem>>, vector<28x128xf32>,
    %c0_102 = arith.constant 0 : index
    %c0_103 = arith.constant 0 : index
    %90 = vector.load %arg16[%c0_102, %c0_103] : memref<44x640xf32, #tpu.memory_space<vmem>>, vector<28x640xf32>
    %c0_104 = arith.constant 0 : index
    %c0_105 = arith.constant 0 : index
    %91 = vector.load %arg6[%c0_104, %c0_105] : memref<640x128xf32, #tpu.memory_space<vmem>>, vector<640x128xf32>
    %cst_106 = arith.constant dense<0.000000e+00> : vector<28x128xf32>
    %92 = tpu.matmul %90, %91, %cst_106 {dimension_numbers = #tpu.dot_dimension_numbers<[1], [0], [0], [1], [0, 0, 1, 1], [], []>} : vector<28x640xf32>, vector<640x128xf32>, vector<28x128xf32> -> vector<28x128xf32>
    %c0_107 = arith.constant 0 : index
    %c0_108 = arith.constant 0 : index
    %93 = vector.load %arg11[%c0_107, %c0_108] : memref<1x128xf32, #tpu.memory_space<vmem>>, vector<1x128xf32>
    %94 = vector.broadcast %93 : vector<1x128xf32> to vector<28x128xf32>
    %95 = arith.addf %92, %94 : vector<28x128xf32>
    %96 = math.tanh %95 : vector<28x128xf32>
    %97 = vector.extract_strided_slice %11 {offsets = [8, 0], sizes = [28, 1], strides = [1, 1]} : vector<44x1xf32> to vector<28x1xf32>
    %98 = vector.broadcast %97 : vector<28x1xf32> to vector<28x128xf32>
    %99 = arith.mulf %96, %98 : vector<28x128xf32>
    %c8_109 = arith.constant 8 : index
    %c0_110 = arith.constant 0 : index
    %100 = vector.load %arg15[%c8_109, %c0_110] : memref<44x128xf32, #tpu.memory_space<vmem>>, vector<28x128xf32>
    tpu.vector_store %arg15[%c8_109, %c0_110], %99 {strides = array<i32>} : memref<44x128xf32, #tpu.memory_space<vmem>>, vector<28x128xf32>,
    %c8_111 = arith.constant 8 : index
    %c0_112 = arith.constant 0 : index
    %101 = vector.load %arg15[%c8_111, %c0_112] : memref<44x128xf32, #tpu.memory_space<vmem>>, vector<24x128xf32>
    %c0_113 = arith.constant 0 : index
    %c0_114 = arith.constant 0 : index
    %102 = vector.load %arg16[%c0_113, %c0_114] : memref<44x640xf32, #tpu.memory_space<vmem>>, vector<24x128xf32>
    tpu.vector_store %arg16[%c0_113, %c0_114], %101 {strides = array<i32>} : memref<44x640xf32, #tpu.memory_space<vmem>>, vector<24x128xf32>,
    %c9_115 = arith.constant 9 : index
    %c0_116 = arith.constant 0 : index
    %103 = vector.load %arg15[%c9_115, %c0_116] : memref<44x128xf32, #tpu.memory_space<vmem>>, vector<24x128xf32>
    %c0_117 = arith.constant 0 : index
    %c128_118 = arith.constant 128 : index
    %104 = vector.load %arg16[%c0_117, %c128_118] : memref<44x640xf32, #tpu.memory_space<vmem>>, vector<24x128xf32>
    tpu.vector_store %arg16[%c0_117, %c128_118], %103 {strides = array<i32>} : memref<44x640xf32, #tpu.memory_space<vmem>>, vector<24x128xf32>,
    %c10_119 = arith.constant 10 : index
    %c0_120 = arith.constant 0 : index
    %105 = vector.load %arg15[%c10_119, %c0_120] : memref<44x128xf32, #tpu.memory_space<vmem>>, vector<24x128xf32>
    %c0_121 = arith.constant 0 : index
    %c256_122 = arith.constant 256 : index
    %106 = vector.load %arg16[%c0_121, %c256_122] : memref<44x640xf32, #tpu.memory_space<vmem>>, vector<24x128xf32>
    tpu.vector_store %arg16[%c0_121, %c256_122], %105 {strides = array<i32>} : memref<44x640xf32, #tpu.memory_space<vmem>>, vector<24x128xf32>,
    %c11 = arith.constant 11 : index
    %c0_123 = arith.constant 0 : index
    %107 = vector.load %arg15[%c11, %c0_123] : memref<44x128xf32, #tpu.memory_space<vmem>>, vector<24x128xf32>
    %c0_124 = arith.constant 0 : index
    %c384_125 = arith.constant 384 : index
    %108 = vector.load %arg16[%c0_124, %c384_125] : memref<44x640xf32, #tpu.memory_space<vmem>>, vector<24x128xf32>
    tpu.vector_store %arg16[%c0_124, %c384_125], %107 {strides = array<i32>} : memref<44x640xf32, #tpu.memory_space<vmem>>, vector<24x128xf32>,
    %c12 = arith.constant 12 : index
    %c0_126 = arith.constant 0 : index
    %109 = vector.load %arg15[%c12, %c0_126] : memref<44x128xf32, #tpu.memory_space<vmem>>, vector<24x128xf32>
    %c0_127 = arith.constant 0 : index
    %c512_128 = arith.constant 512 : index
    %110 = vector.load %arg16[%c0_127, %c512_128] : memref<44x640xf32, #tpu.memory_space<vmem>>, vector<24x128xf32>
    tpu.vector_store %arg16[%c0_127, %c512_128], %109 {strides = array<i32>} : memref<44x640xf32, #tpu.memory_space<vmem>>, vector<24x128xf32>,
    %c0_129 = arith.constant 0 : index
    %c0_130 = arith.constant 0 : index
    %111 = vector.load %arg16[%c0_129, %c0_130] : memref<44x640xf32, #tpu.memory_space<vmem>>, vector<24x640xf32>
    %c0_131 = arith.constant 0 : index
    %c0_132 = arith.constant 0 : index
    %112 = vector.load %arg7[%c0_131, %c0_132] : memref<640x128xf32, #tpu.memory_space<vmem>>, vector<640x128xf32>
    %cst_133 = arith.constant dense<0.000000e+00> : vector<24x128xf32>
    %113 = tpu.matmul %111, %112, %cst_133 {dimension_numbers = #tpu.dot_dimension_numbers<[1], [0], [0], [1], [0, 0, 1, 1], [], []>} : vector<24x640xf32>, vector<640x128xf32>, vector<24x128xf32> -> vector<24x128xf32>
    %c0_134 = arith.constant 0 : index
    %c0_135 = arith.constant 0 : index
    %114 = vector.load %arg12[%c0_134, %c0_135] : memref<1x128xf32, #tpu.memory_space<vmem>>, vector<1x128xf32>
    %115 = vector.broadcast %114 : vector<1x128xf32> to vector<24x128xf32>
    %116 = arith.addf %113, %115 : vector<24x128xf32>
    %c0_136 = arith.constant 0 : index
    %c0_137 = arith.constant 0 : index
    %c0_138 = arith.constant 0 : index
    %c0_139 = arith.constant 0 : index
    %117 = vector.load %arg13[%c0_136, %c0_137, %c0_138, %c0_139] : memref<1x1x24x128xf32, #tpu.memory_space<vmem>>, vector<1x1x24x128xf32>
    %118 = vector.shape_cast %117 : vector<1x1x24x128xf32> to vector<24x128xf32>
    %119 = vector.shape_cast %116 : vector<24x128xf32> to vector<1x1x24x128xf32>
    tpu.vector_store %arg13[%c0_136, %c0_137, %c0_138, %c0_139], %119 {strides = array<i32>} : memref<1x1x24x128xf32, #tpu.memory_space<vmem>>, vector<1x1x24x128xf32>,
    return
  }
  func.func @transform_0(%arg0: i32, %arg1: i32) -> (i32, i32, i32, i32) {
    %c0_i32 = arith.constant 0 : i32
    %c0_i32_0 = arith.constant 0 : i32
    %c0_i32_1 = arith.constant 0 : i32
    return %arg0, %arg1, %c0_i32, %c0_i32_0 : i32, i32, i32, i32
  }
  func.func @transform_1(%arg0: i32, %arg1: i32) -> (i32, i32) {
    %c0_i32 = arith.constant 0 : i32
    %c0_i32_0 = arith.constant 0 : i32
    %c0_i32_1 = arith.constant 0 : i32
    return %c0_i32, %c0_i32_0 : i32, i32
  }
  func.func @transform_2(%arg0: i32, %arg1: i32) -> (i32, i32) {
    %c0_i32 = arith.constant 0 : i32
    %c0_i32_0 = arith.constant 0 : i32
    %c0_i32_1 = arith.constant 0 : i32
    return %c0_i32, %c0_i32_0 : i32, i32
  }
  func.func @transform_3(%arg0: i32, %arg1: i32) -> (i32, i32) {
    %c0_i32 = arith.constant 0 : i32
    %c0_i32_0 = arith.constant 0 : i32
    %c0_i32_1 = arith.constant 0 : i32
    return %c0_i32, %c0_i32_0 : i32, i32
  }
  func.func @transform_4(%arg0: i32, %arg1: i32) -> (i32, i32) {
    %c0_i32 = arith.constant 0 : i32
    %c0_i32_0 = arith.constant 0 : i32
    %c0_i32_1 = arith.constant 0 : i32
    return %c0_i32, %c0_i32_0 : i32, i32
  }
  func.func @transform_5(%arg0: i32, %arg1: i32) -> (i32, i32) {
    %c0_i32 = arith.constant 0 : i32
    %c0_i32_0 = arith.constant 0 : i32
    %c0_i32_1 = arith.constant 0 : i32
    return %c0_i32, %c0_i32_0 : i32, i32
  }
  func.func @transform_6(%arg0: i32, %arg1: i32) -> (i32, i32) {
    %c0_i32 = arith.constant 0 : i32
    %c0_i32_0 = arith.constant 0 : i32
    %c0_i32_1 = arith.constant 0 : i32
    return %c0_i32, %c0_i32_0 : i32, i32
  }
  func.func @transform_7(%arg0: i32, %arg1: i32) -> (i32, i32) {
    %c0_i32 = arith.constant 0 : i32
    %c0_i32_0 = arith.constant 0 : i32
    %c0_i32_1 = arith.constant 0 : i32
    return %c0_i32, %c0_i32_0 : i32, i32
  }
  func.func @transform_8(%arg0: i32, %arg1: i32) -> (i32, i32) {
    %c0_i32 = arith.constant 0 : i32
    %c0_i32_0 = arith.constant 0 : i32
    %c0_i32_1 = arith.constant 0 : i32
    return %c0_i32, %c0_i32_0 : i32, i32
  }
  func.func @transform_9(%arg0: i32, %arg1: i32) -> (i32, i32) {
    %c0_i32 = arith.constant 0 : i32
    %c0_i32_0 = arith.constant 0 : i32
    %c0_i32_1 = arith.constant 0 : i32
    return %c0_i32, %c0_i32_0 : i32, i32
  }
  func.func @transform_10(%arg0: i32, %arg1: i32) -> (i32, i32) {
    %c0_i32 = arith.constant 0 : i32
    %c0_i32_0 = arith.constant 0 : i32
    %c0_i32_1 = arith.constant 0 : i32
    return %c0_i32, %c0_i32_0 : i32, i32
  }
  func.func @transform_11(%arg0: i32, %arg1: i32) -> (i32, i32, i32, i32) {
    %c0_i32 = arith.constant 0 : i32
    %c0_i32_0 = arith.constant 0 : i32
    %c0_i32_1 = arith.constant 0 : i32
    return %arg0, %arg1, %c0_i32, %c0_i32_0 : i32, i32, i32, i32
  }
}

module attributes {stable_mosaic.version = 11 : i64} {
  func.func @postnet_kernel(%arg0: i32, %arg1: i32, %arg2: memref<1x1x44x128xf32, #tpu.memory_space<vmem>>, %arg3: memref<640x128xf32, #tpu.memory_space<vmem>>, %arg4: memref<640x128xf32, #tpu.memory_space<vmem>>, %arg5: memref<640x128xf32, #tpu.memory_space<vmem>>, %arg6: memref<640x128xf32, #tpu.memory_space<vmem>>, %arg7: memref<640x128xf32, #tpu.memory_space<vmem>>, %arg8: memref<1x128xf32, #tpu.memory_space<vmem>>, %arg9: memref<1x128xf32, #tpu.memory_space<vmem>>, %arg10: memref<1x128xf32, #tpu.memory_space<vmem>>, %arg11: memref<1x128xf32, #tpu.memory_space<vmem>>, %arg12: memref<1x128xf32, #tpu.memory_space<vmem>>, %arg13: memref<1x1x24x128xf32, #tpu.memory_space<vmem>>, %arg14: memref<44x128xf32, #tpu.memory_space<vmem>>, %arg15: memref<44x128xf32, #tpu.memory_space<vmem>>, %arg16: memref<44x640xf32, #tpu.memory_space<vmem>>) attributes {dimension_semantics = [#tpu.dimension_semantics<parallel>, #tpu.dimension_semantics<parallel>], iteration_bounds = array<i64: 2, 1>, scalar_prefetch = 0 : i64, scratch_operands = 3 : i64, tpu.core_type = #tpu.core_type<tc>, window_params = [{transform_indices = @transform_0, window_bounds = array<i64: 1, 1, 44, 128>}, {pipeline_mode = #tpu.pipeline_mode<synchronous>, transform_indices = @transform_1, window_bounds = array<i64: 640, 128>}, {pipeline_mode = #tpu.pipeline_mode<synchronous>, transform_indices = @transform_2, window_bounds = array<i64: 640, 128>}, {pipeline_mode = #tpu.pipeline_mode<synchronous>, transform_indices = @transform_3, window_bounds = array<i64: 640, 128>}, {pipeline_mode = #tpu.pipeline_mode<synchronous>, transform_indices = @transform_4, window_bounds = array<i64: 640, 128>}, {pipeline_mode = #tpu.pipeline_mode<synchronous>, transform_indices = @transform_5, window_bounds = array<i64: 640, 128>}, {pipeline_mode = #tpu.pipeline_mode<synchronous>, transform_indices = @transform_6, window_bounds = array<i64: 1, 128>}, {pipeline_mode = #tpu.pipeline_mode<synchronous>, transform_indices = @transform_7, window_bounds = array<i64: 1, 128>}, {pipeline_mode = #tpu.pipeline_mode<synchronous>, transform_indices = @transform_8, window_bounds = array<i64: 1, 128>}, {pipeline_mode = #tpu.pipeline_mode<synchronous>, transform_indices = @transform_9, window_bounds = array<i64: 1, 128>}, {pipeline_mode = #tpu.pipeline_mode<synchronous>, transform_indices = @transform_10, window_bounds = array<i64: 1, 128>}, {transform_indices = @transform_11, window_bounds = array<i64: 1, 1, 24, 128>}]} {
    %c24_i32 = arith.constant 24 : i32
    %0 = arith.muli %arg1, %c24_i32 : i32
    %c10_i32 = arith.constant 10 : i32
    %1 = arith.subi %0, %c10_i32 : i32
    %2 = tpu.iota {dimensions = array<i32: 0>} : vector<44x1xi32>
    %3 = vector.broadcast %1 : i32 to vector<44x1xi32>
    %4 = arith.addi %2, %3 : vector<44x1xi32>
    %c0_i32 = arith.constant 0 : i32
    %5 = vector.broadcast %c0_i32 : i32 to vector<44x1xi32>
    %6 = arith.cmpi sge, %4, %5 : vector<44x1xi32>
    %c24_i32_0 = arith.constant 24 : i32
    %7 = vector.broadcast %c24_i32_0 : i32 to vector<44x1xi32>
    %8 = arith.cmpi slt, %4, %7 : vector<44x1xi32>
    %9 = arith.andi %6, %8 : vector<44x1xi1>
    %10 = arith.extui %9 : vector<44x1xi1> to vector<44x1xi32>
    %11 = arith.sitofp %10 : vector<44x1xi32> to vector<44x1xf32>
    %c0 = arith.constant 0 : index
    %c0_1 = arith.constant 0 : index
    %c0_2 = arith.constant 0 : index
    %c0_3 = arith.constant 0 : index
    %12 = vector.load %arg2[%c0, %c0_1, %c0_2, %c0_3] : memref<1x1x44x128xf32, #tpu.memory_space<vmem>>, vector<1x1x40x128xf32>
    %13 = vector.shape_cast %12 : vector<1x1x40x128xf32> to vector<40x128xf32>
    %c0_4 = arith.constant 0 : index
    %c0_5 = arith.constant 0 : index
    %14 = vector.load %arg16[%c0_4, %c0_5] : memref<44x640xf32, #tpu.memory_space<vmem>>, vector<40x128xf32>
    tpu.vector_store %arg16[%c0_4, %c0_5], %13 {strides = array<i32>} : memref<44x640xf32, #tpu.memory_space<vmem>>, vector<40x128xf32>,
    %c0_6 = arith.constant 0 : index
    %c0_7 = arith.constant 0 : index
    %c1 = arith.constant 1 : index
    %c0_8 = arith.constant 0 : index
    %15 = vector.load %arg2[%c0_6, %c0_7, %c1, %c0_8] : memref<1x1x44x128xf32, #tpu.memory_space<vmem>>, vector<1x1x40x128xf32>
    %16 = vector.shape_cast %15 : vector<1x1x40x128xf32> to vector<40x128xf32>
    %c0_9 = arith.constant 0 : index
    %c128 = arith.constant 128 : index
    %17 = vector.load %arg16[%c0_9, %c128] : memref<44x640xf32, #tpu.memory_space<vmem>>, vector<40x128xf32>
    tpu.vector_store %arg16[%c0_9, %c128], %16 {strides = array<i32>} : memref<44x640xf32, #tpu.memory_space<vmem>>, vector<40x128xf32>,
    %c0_10 = arith.constant 0 : index
    %c0_11 = arith.constant 0 : index
    %c2 = arith.constant 2 : index
    %c0_12 = arith.constant 0 : index
    %18 = vector.load %arg2[%c0_10, %c0_11, %c2, %c0_12] : memref<1x1x44x128xf32, #tpu.memory_space<vmem>>, vector<1x1x40x128xf32>
    %19 = vector.shape_cast %18 : vector<1x1x40x128xf32> to vector<40x128xf32>
    %c0_13 = arith.constant 0 : index
    %c256 = arith.constant 256 : index
    %20 = vector.load %arg16[%c0_13, %c256] : memref<44x640xf32, #tpu.memory_space<vmem>>, vector<40x128xf32>
    tpu.vector_store %arg16[%c0_13, %c256], %19 {strides = array<i32>} : memref<44x640xf32, #tpu.memory_space<vmem>>, vector<40x128xf32>,
    %c0_14 = arith.constant 0 : index
    %c0_15 = arith.constant 0 : index
    %c3 = arith.constant 3 : index
    %c0_16 = arith.constant 0 : index
    %21 = vector.load %arg2[%c0_14, %c0_15, %c3, %c0_16] : memref<1x1x44x128xf32, #tpu.memory_space<vmem>>, vector<1x1x40x128xf32>
    %22 = vector.shape_cast %21 : vector<1x1x40x128xf32> to vector<40x128xf32>
    %c0_17 = arith.constant 0 : index
    %c384 = arith.constant 384 : index
    %23 = vector.load %arg16[%c0_17, %c384] : memref<44x640xf32, #tpu.memory_space<vmem>>, vector<40x128xf32>
    tpu.vector_store %arg16[%c0_17, %c384], %22 {strides = array<i32>} : memref<44x640xf32, #tpu.memory_space<vmem>>, vector<40x128xf32>,
    %c0_18 = arith.constant 0 : index
    %c0_19 = arith.constant 0 : index
    %c4 = arith.constant 4 : index
    %c0_20 = arith.constant 0 : index
    %24 = vector.load %arg2[%c0_18, %c0_19, %c4, %c0_20] : memref<1x1x44x128xf32, #tpu.memory_space<vmem>>, vector<1x1x40x128xf32>
    %25 = vector.shape_cast %24 : vector<1x1x40x128xf32> to vector<40x128xf32>
    %c0_21 = arith.constant 0 : index
    %c512 = arith.constant 512 : index
    %26 = vector.load %arg16[%c0_21, %c512] : memref<44x640xf32, #tpu.memory_space<vmem>>, vector<40x128xf32>
    tpu.vector_store %arg16[%c0_21, %c512], %25 {strides = array<i32>} : memref<44x640xf32, #tpu.memory_space<vmem>>, vector<40x128xf32>,
    %c0_22 = arith.constant 0 : index
    %c0_23 = arith.constant 0 : index
    %27 = vector.load %arg16[%c0_22, %c0_23] : memref<44x640xf32, #tpu.memory_space<vmem>>, vector<40x640xf32>
    %c0_24 = arith.constant 0 : index
    %c0_25 = arith.constant 0 : index
    %28 = vector.load %arg3[%c0_24, %c0_25] : memref<640x128xf32, #tpu.memory_space<vmem>>, vector<640x128xf32>
    %cst = arith.constant dense<0.000000e+00> : vector<40x128xf32>
    %29 = tpu.matmul %27, %28, %cst {dimension_numbers = #tpu.dot_dimension_numbers<[1], [0], [0], [1], [0, 0, 1, 1], [], []>} : vector<40x640xf32>, vector<640x128xf32>, vector<40x128xf32> -> vector<40x128xf32>
    %c0_26 = arith.constant 0 : index
    %c0_27 = arith.constant 0 : index
    %30 = vector.load %arg8[%c0_26, %c0_27] : memref<1x128xf32, #tpu.memory_space<vmem>>, vector<1x128xf32>
    %31 = vector.broadcast %30 : vector<1x128xf32> to vector<40x128xf32>
    %32 = arith.addf %29, %31 : vector<40x128xf32>
    %33 = math.tanh %32 : vector<40x128xf32>
    %34 = vector.extract_strided_slice %11 {offsets = [2, 0], sizes = [40, 1], strides = [1, 1]} : vector<44x1xf32> to vector<40x1xf32>
    %35 = vector.broadcast %34 : vector<40x1xf32> to vector<40x128xf32>
    %36 = arith.mulf %33, %35 : vector<40x128xf32>
    %c2_28 = arith.constant 2 : index
    %c0_29 = arith.constant 0 : index
    %37 = vector.load %arg14[%c2_28, %c0_29] : memref<44x128xf32, #tpu.memory_space<vmem>>, vector<40x128xf32>
    tpu.vector_store %arg14[%c2_28, %c0_29], %36 {strides = array<i32>} : memref<44x128xf32, #tpu.memory_space<vmem>>, vector<40x128xf32>,
    %c2_30 = arith.constant 2 : index
    %c0_31 = arith.constant 0 : index
    %38 = vector.load %arg14[%c2_30, %c0_31] : memref<44x128xf32, #tpu.memory_space<vmem>>, vector<36x128xf32>
    %c0_32 = arith.constant 0 : index
    %c0_33 = arith.constant 0 : index
    %39 = vector.load %arg16[%c0_32, %c0_33] : memref<44x640xf32, #tpu.memory_space<vmem>>, vector<36x128xf32>
    tpu.vector_store %arg16[%c0_32, %c0_33], %38 {strides = array<i32>} : memref<44x640xf32, #tpu.memory_space<vmem>>, vector<36x128xf32>,
    %c3_34 = arith.constant 3 : index
    %c0_35 = arith.constant 0 : index
    %40 = vector.load %arg14[%c3_34, %c0_35] : memref<44x128xf32, #tpu.memory_space<vmem>>, vector<36x128xf32>
    %c0_36 = arith.constant 0 : index
    %c128_37 = arith.constant 128 : index
    %41 = vector.load %arg16[%c0_36, %c128_37] : memref<44x640xf32, #tpu.memory_space<vmem>>, vector<36x128xf32>
    tpu.vector_store %arg16[%c0_36, %c128_37], %40 {strides = array<i32>} : memref<44x640xf32, #tpu.memory_space<vmem>>, vector<36x128xf32>,
    %c4_38 = arith.constant 4 : index
    %c0_39 = arith.constant 0 : index
    %42 = vector.load %arg14[%c4_38, %c0_39] : memref<44x128xf32, #tpu.memory_space<vmem>>, vector<36x128xf32>
    %c0_40 = arith.constant 0 : index
    %c256_41 = arith.constant 256 : index
    %43 = vector.load %arg16[%c0_40, %c256_41] : memref<44x640xf32, #tpu.memory_space<vmem>>, vector<36x128xf32>
    tpu.vector_store %arg16[%c0_40, %c256_41], %42 {strides = array<i32>} : memref<44x640xf32, #tpu.memory_space<vmem>>, vector<36x128xf32>,
    %c5 = arith.constant 5 : index
    %c0_42 = arith.constant 0 : index
    %44 = vector.load %arg14[%c5, %c0_42] : memref<44x128xf32, #tpu.memory_space<vmem>>, vector<36x128xf32>
    %c0_43 = arith.constant 0 : index
    %c384_44 = arith.constant 384 : index
    %45 = vector.load %arg16[%c0_43, %c384_44] : memref<44x640xf32, #tpu.memory_space<vmem>>, vector<36x128xf32>
    tpu.vector_store %arg16[%c0_43, %c384_44], %44 {strides = array<i32>} : memref<44x640xf32, #tpu.memory_space<vmem>>, vector<36x128xf32>,
    %c6 = arith.constant 6 : index
    %c0_45 = arith.constant 0 : index
    %46 = vector.load %arg14[%c6, %c0_45] : memref<44x128xf32, #tpu.memory_space<vmem>>, vector<36x128xf32>
    %c0_46 = arith.constant 0 : index
    %c512_47 = arith.constant 512 : index
    %47 = vector.load %arg16[%c0_46, %c512_47] : memref<44x640xf32, #tpu.memory_space<vmem>>, vector<36x128xf32>
    tpu.vector_store %arg16[%c0_46, %c512_47], %46 {strides = array<i32>} : memref<44x640xf32, #tpu.memory_space<vmem>>, vector<36x128xf32>,
    %c0_48 = arith.constant 0 : index
    %c0_49 = arith.constant 0 : index
    %48 = vector.load %arg16[%c0_48, %c0_49] : memref<44x640xf32, #tpu.memory_space<vmem>>, vector<36x640xf32>
    %c0_50 = arith.constant 0 : index
    %c0_51 = arith.constant 0 : index
    %49 = vector.load %arg4[%c0_50, %c0_51] : memref<640x128xf32, #tpu.memory_space<vmem>>, vector<640x128xf32>
    %cst_52 = arith.constant dense<0.000000e+00> : vector<36x128xf32>
    %50 = tpu.matmul %48, %49, %cst_52 {dimension_numbers = #tpu.dot_dimension_numbers<[1], [0], [0], [1], [0, 0, 1, 1], [], []>} : vector<36x640xf32>, vector<640x128xf32>, vector<36x128xf32> -> vector<36x128xf32>
    %c0_53 = arith.constant 0 : index
    %c0_54 = arith.constant 0 : index
    %51 = vector.load %arg9[%c0_53, %c0_54] : memref<1x128xf32, #tpu.memory_space<vmem>>, vector<1x128xf32>
    %52 = vector.broadcast %51 : vector<1x128xf32> to vector<36x128xf32>
    %53 = arith.addf %50, %52 : vector<36x128xf32>
    %54 = math.tanh %53 : vector<36x128xf32>
    %55 = vector.extract_strided_slice %11 {offsets = [4, 0], sizes = [36, 1], strides = [1, 1]} : vector<44x1xf32> to vector<36x1xf32>
    %56 = vector.broadcast %55 : vector<36x1xf32> to vector<36x128xf32>
    %57 = arith.mulf %54, %56 : vector<36x128xf32>
    %c4_55 = arith.constant 4 : index
    %c0_56 = arith.constant 0 : index
    %58 = vector.load %arg15[%c4_55, %c0_56] : memref<44x128xf32, #tpu.memory_space<vmem>>, vector<36x128xf32>
    tpu.vector_store %arg15[%c4_55, %c0_56], %57 {strides = array<i32>} : memref<44x128xf32, #tpu.memory_space<vmem>>, vector<36x128xf32>,
    %c4_57 = arith.constant 4 : index
    %c0_58 = arith.constant 0 : index
    %59 = vector.load %arg15[%c4_57, %c0_58] : memref<44x128xf32, #tpu.memory_space<vmem>>, vector<32x128xf32>
    %c0_59 = arith.constant 0 : index
    %c0_60 = arith.constant 0 : index
    %60 = vector.load %arg16[%c0_59, %c0_60] : memref<44x640xf32, #tpu.memory_space<vmem>>, vector<32x128xf32>
    tpu.vector_store %arg16[%c0_59, %c0_60], %59 {strides = array<i32>} : memref<44x640xf32, #tpu.memory_space<vmem>>, vector<32x128xf32>,
    %c5_61 = arith.constant 5 : index
    %c0_62 = arith.constant 0 : index
    %61 = vector.load %arg15[%c5_61, %c0_62] : memref<44x128xf32, #tpu.memory_space<vmem>>, vector<32x128xf32>
    %c0_63 = arith.constant 0 : index
    %c128_64 = arith.constant 128 : index
    %62 = vector.load %arg16[%c0_63, %c128_64] : memref<44x640xf32, #tpu.memory_space<vmem>>, vector<32x128xf32>
    tpu.vector_store %arg16[%c0_63, %c128_64], %61 {strides = array<i32>} : memref<44x640xf32, #tpu.memory_space<vmem>>, vector<32x128xf32>,
    %c6_65 = arith.constant 6 : index
    %c0_66 = arith.constant 0 : index
    %63 = vector.load %arg15[%c6_65, %c0_66] : memref<44x128xf32, #tpu.memory_space<vmem>>, vector<32x128xf32>
    %c0_67 = arith.constant 0 : index
    %c256_68 = arith.constant 256 : index
    %64 = vector.load %arg16[%c0_67, %c256_68] : memref<44x640xf32, #tpu.memory_space<vmem>>, vector<32x128xf32>
    tpu.vector_store %arg16[%c0_67, %c256_68], %63 {strides = array<i32>} : memref<44x640xf32, #tpu.memory_space<vmem>>, vector<32x128xf32>,
    %c7 = arith.constant 7 : index
    %c0_69 = arith.constant 0 : index
    %65 = vector.load %arg15[%c7, %c0_69] : memref<44x128xf32, #tpu.memory_space<vmem>>, vector<32x128xf32>
    %c0_70 = arith.constant 0 : index
    %c384_71 = arith.constant 384 : index
    %66 = vector.load %arg16[%c0_70, %c384_71] : memref<44x640xf32, #tpu.memory_space<vmem>>, vector<32x128xf32>
    tpu.vector_store %arg16[%c0_70, %c384_71], %65 {strides = array<i32>} : memref<44x640xf32, #tpu.memory_space<vmem>>, vector<32x128xf32>,
    %c8 = arith.constant 8 : index
    %c0_72 = arith.constant 0 : index
    %67 = vector.load %arg15[%c8, %c0_72] : memref<44x128xf32, #tpu.memory_space<vmem>>, vector<32x128xf32>
    %c0_73 = arith.constant 0 : index
    %c512_74 = arith.constant 512 : index
    %68 = vector.load %arg16[%c0_73, %c512_74] : memref<44x640xf32, #tpu.memory_space<vmem>>, vector<32x128xf32>
    tpu.vector_store %arg16[%c0_73, %c512_74], %67 {strides = array<i32>} : memref<44x640xf32, #tpu.memory_space<vmem>>, vector<32x128xf32>,
    %c0_75 = arith.constant 0 : index
    %c0_76 = arith.constant 0 : index
    %69 = vector.load %arg16[%c0_75, %c0_76] : memref<44x640xf32, #tpu.memory_space<vmem>>, vector<32x640xf32>
    %c0_77 = arith.constant 0 : index
    %c0_78 = arith.constant 0 : index
    %70 = vector.load %arg5[%c0_77, %c0_78] : memref<640x128xf32, #tpu.memory_space<vmem>>, vector<640x128xf32>
    %cst_79 = arith.constant dense<0.000000e+00> : vector<32x128xf32>
    %71 = tpu.matmul %69, %70, %cst_79 {dimension_numbers = #tpu.dot_dimension_numbers<[1], [0], [0], [1], [0, 0, 1, 1], [], []>} : vector<32x640xf32>, vector<640x128xf32>, vector<32x128xf32> -> vector<32x128xf32>
    %c0_80 = arith.constant 0 : index
    %c0_81 = arith.constant 0 : index
    %72 = vector.load %arg10[%c0_80, %c0_81] : memref<1x128xf32, #tpu.memory_space<vmem>>, vector<1x128xf32>
    %73 = vector.broadcast %72 : vector<1x128xf32> to vector<32x128xf32>
    %74 = arith.addf %71, %73 : vector<32x128xf32>
    %75 = math.tanh %74 : vector<32x128xf32>
    %76 = vector.extract_strided_slice %11 {offsets = [6, 0], sizes = [32, 1], strides = [1, 1]} : vector<44x1xf32> to vector<32x1xf32>
    %77 = vector.broadcast %76 : vector<32x1xf32> to vector<32x128xf32>
    %78 = arith.mulf %75, %77 : vector<32x128xf32>
    %c6_82 = arith.constant 6 : index
    %c0_83 = arith.constant 0 : index
    %79 = vector.load %arg14[%c6_82, %c0_83] : memref<44x128xf32, #tpu.memory_space<vmem>>, vector<32x128xf32>
    tpu.vector_store %arg14[%c6_82, %c0_83], %78 {strides = array<i32>} : memref<44x128xf32, #tpu.memory_space<vmem>>, vector<32x128xf32>,
    %c6_84 = arith.constant 6 : index
    %c0_85 = arith.constant 0 : index
    %80 = vector.load %arg14[%c6_84, %c0_85] : memref<44x128xf32, #tpu.memory_space<vmem>>, vector<28x128xf32>
    %c0_86 = arith.constant 0 : index
    %c0_87 = arith.constant 0 : index
    %81 = vector.load %arg16[%c0_86, %c0_87] : memref<44x640xf32, #tpu.memory_space<vmem>>, vector<28x128xf32>
    tpu.vector_store %arg16[%c0_86, %c0_87], %80 {strides = array<i32>} : memref<44x640xf32, #tpu.memory_space<vmem>>, vector<28x128xf32>,
    %c7_88 = arith.constant 7 : index
    %c0_89 = arith.constant 0 : index
    %82 = vector.load %arg14[%c7_88, %c0_89] : memref<44x128xf32, #tpu.memory_space<vmem>>, vector<28x128xf32>
    %c0_90 = arith.constant 0 : index
    %c128_91 = arith.constant 128 : index
    %83 = vector.load %arg16[%c0_90, %c128_91] : memref<44x640xf32, #tpu.memory_space<vmem>>, vector<28x128xf32>
    tpu.vector_store %arg16[%c0_90, %c128_91], %82 {strides = array<i32>} : memref<44x640xf32, #tpu.memory_space<vmem>>, vector<28x128xf32>,
    %c8_92 = arith.constant 8 : index
    %c0_93 = arith.constant 0 : index
    %84 = vector.load %arg14[%c8_92, %c0_93] : memref<44x128xf32, #tpu.memory_space<vmem>>, vector<28x128xf32>
    %c0_94 = arith.constant 0 : index
    %c256_95 = arith.constant 256 : index
    %85 = vector.load %arg16[%c0_94, %c256_95] : memref<44x640xf32, #tpu.memory_space<vmem>>, vector<28x128xf32>
    tpu.vector_store %arg16[%c0_94, %c256_95], %84 {strides = array<i32>} : memref<44x640xf32, #tpu.memory_space<vmem>>, vector<28x128xf32>,
    %c9 = arith.constant 9 : index
    %c0_96 = arith.constant 0 : index
    %86 = vector.load %arg14[%c9, %c0_96] : memref<44x128xf32, #tpu.memory_space<vmem>>, vector<28x128xf32>
    %c0_97 = arith.constant 0 : index
    %c384_98 = arith.constant 384 : index
    %87 = vector.load %arg16[%c0_97, %c384_98] : memref<44x640xf32, #tpu.memory_space<vmem>>, vector<28x128xf32>
    tpu.vector_store %arg16[%c0_97, %c384_98], %86 {strides = array<i32>} : memref<44x640xf32, #tpu.memory_space<vmem>>, vector<28x128xf32>,
    %c10 = arith.constant 10 : index
    %c0_99 = arith.constant 0 : index
    %88 = vector.load %arg14[%c10, %c0_99] : memref<44x128xf32, #tpu.memory_space<vmem>>, vector<28x128xf32>
    %c0_100 = arith.constant 0 : index
    %c512_101 = arith.constant 512 : index
    %89 = vector.load %arg16[%c0_100, %c512_101] : memref<44x640xf32, #tpu.memory_space<vmem>>, vector<28x128xf32>
    tpu.vector_store %arg16[%c0_100, %c512_101], %88 {strides = array<i32>} : memref<44x640xf32, #tpu.memory_space<vmem>>, vector<28x128xf32>,
    %c0_102 = arith.constant 0 : index
    %c0_103 = arith.constant 0 : index
    %90 = vector.load %arg16[%c0_102, %c0_103] : memref<44x640xf32, #tpu.memory_space<vmem>>, vector<28x640xf32>
    %c0_104 = arith.constant 0 : index
    %c0_105 = arith.constant 0 : index
    %91 = vector.load %arg6[%c0_104, %c0_105] : memref<640x128xf32, #tpu.memory_space<vmem>>, vector<640x128xf32>
    %cst_106 = arith.constant dense<0.000000e+00> : vector<28x128xf32>
    %92 = tpu.matmul %90, %91, %cst_106 {dimension_numbers = #tpu.dot_dimension_numbers<[1], [0], [0], [1], [0, 0, 1, 1], [], []>} : vector<28x640xf32>, vector<640x128xf32>, vector<28x128xf32> -> vector<28x128xf32>
    %c0_107 = arith.constant 0 : index
    %c0_108 = arith.constant 0 : index
    %93 = vector.load %arg11[%c0_107, %c0_108] : memref<1x128xf32, #tpu.memory_space<vmem>>, vector<1x128xf32>
    %94 = vector.broadcast %93 : vector<1x128xf32> to vector<28x128xf32>
    %95 = arith.addf %92, %94 : vector<28x128xf32>
    %96 = math.tanh %95 : vector<28x128xf32>
    %97 = vector.extract_strided_slice %11 {offsets = [8, 0], sizes = [28, 1], strides = [1, 1]} : vector<44x1xf32> to vector<28x1xf32>
    %98 = vector.broadcast %97 : vector<28x1xf32> to vector<28x128xf32>
    %99 = arith.mulf %96, %98 : vector<28x128xf32>
    %c8_109 = arith.constant 8 : index
    %c0_110 = arith.constant 0 : index
    %100 = vector.load %arg15[%c8_109, %c0_110] : memref<44x128xf32, #tpu.memory_space<vmem>>, vector<28x128xf32>
    tpu.vector_store %arg15[%c8_109, %c0_110], %99 {strides = array<i32>} : memref<44x128xf32, #tpu.memory_space<vmem>>, vector<28x128xf32>,
    %c8_111 = arith.constant 8 : index
    %c0_112 = arith.constant 0 : index
    %101 = vector.load %arg15[%c8_111, %c0_112] : memref<44x128xf32, #tpu.memory_space<vmem>>, vector<24x128xf32>
    %c0_113 = arith.constant 0 : index
    %c0_114 = arith.constant 0 : index
    %102 = vector.load %arg16[%c0_113, %c0_114] : memref<44x640xf32, #tpu.memory_space<vmem>>, vector<24x128xf32>
    tpu.vector_store %arg16[%c0_113, %c0_114], %101 {strides = array<i32>} : memref<44x640xf32, #tpu.memory_space<vmem>>, vector<24x128xf32>,
    %c9_115 = arith.constant 9 : index
    %c0_116 = arith.constant 0 : index
    %103 = vector.load %arg15[%c9_115, %c0_116] : memref<44x128xf32, #tpu.memory_space<vmem>>, vector<24x128xf32>
    %c0_117 = arith.constant 0 : index
    %c128_118 = arith.constant 128 : index
    %104 = vector.load %arg16[%c0_117, %c128_118] : memref<44x640xf32, #tpu.memory_space<vmem>>, vector<24x128xf32>
    tpu.vector_store %arg16[%c0_117, %c128_118], %103 {strides = array<i32>} : memref<44x640xf32, #tpu.memory_space<vmem>>, vector<24x128xf32>,
    %c10_119 = arith.constant 10 : index
    %c0_120 = arith.constant 0 : index
    %105 = vector.load %arg15[%c10_119, %c0_120] : memref<44x128xf32, #tpu.memory_space<vmem>>, vector<24x128xf32>
    %c0_121 = arith.constant 0 : index
    %c256_122 = arith.constant 256 : index
    %106 = vector.load %arg16[%c0_121, %c256_122] : memref<44x640xf32, #tpu.memory_space<vmem>>, vector<24x128xf32>
    tpu.vector_store %arg16[%c0_121, %c256_122], %105 {strides = array<i32>} : memref<44x640xf32, #tpu.memory_space<vmem>>, vector<24x128xf32>,
    %c11 = arith.constant 11 : index
    %c0_123 = arith.constant 0 : index
    %107 = vector.load %arg15[%c11, %c0_123] : memref<44x128xf32, #tpu.memory_space<vmem>>, vector<24x128xf32>
    %c0_124 = arith.constant 0 : index
    %c384_125 = arith.constant 384 : index
    %108 = vector.load %arg16[%c0_124, %c384_125] : memref<44x640xf32, #tpu.memory_space<vmem>>, vector<24x128xf32>
    tpu.vector_store %arg16[%c0_124, %c384_125], %107 {strides = array<i32>} : memref<44x640xf32, #tpu.memory_space<vmem>>, vector<24x128xf32>,
    %c12 = arith.constant 12 : index
    %c0_126 = arith.constant 0 : index
    %109 = vector.load %arg15[%c12, %c0_126] : memref<44x128xf32, #tpu.memory_space<vmem>>, vector<24x128xf32>
    %c0_127 = arith.constant 0 : index
    %c512_128 = arith.constant 512 : index
    %110 = vector.load %arg16[%c0_127, %c512_128] : memref<44x640xf32, #tpu.memory_space<vmem>>, vector<24x128xf32>
    tpu.vector_store %arg16[%c0_127, %c512_128], %109 {strides = array<i32>} : memref<44x640xf32, #tpu.memory_space<vmem>>, vector<24x128xf32>,
    %c0_129 = arith.constant 0 : index
    %c0_130 = arith.constant 0 : index
    %111 = vector.load %arg16[%c0_129, %c0_130] : memref<44x640xf32, #tpu.memory_space<vmem>>, vector<24x640xf32>
    %c0_131 = arith.constant 0 : index
    %c0_132 = arith.constant 0 : index
    %112 = vector.load %arg7[%c0_131, %c0_132] : memref<640x128xf32, #tpu.memory_space<vmem>>, vector<640x128xf32>
    %cst_133 = arith.constant dense<0.000000e+00> : vector<24x128xf32>
    %113 = tpu.matmul %111, %112, %cst_133 {dimension_numbers = #tpu.dot_dimension_numbers<[1], [0], [0], [1], [0, 0, 1, 1], [], []>} : vector<24x640xf32>, vector<640x128xf32>, vector<24x128xf32> -> vector<24x128xf32>
    %c0_134 = arith.constant 0 : index
    %c0_135 = arith.constant 0 : index
    %114 = vector.load %arg12[%c0_134, %c0_135] : memref<1x128xf32, #tpu.memory_space<vmem>>, vector<1x128xf32>
    %115 = vector.broadcast %114 : vector<1x128xf32> to vector<24x128xf32>
    %116 = arith.addf %113, %115 : vector<24x128xf32>
    %c0_136 = arith.constant 0 : index
    %c0_137 = arith.constant 0 : index
    %c0_138 = arith.constant 0 : index
    %c0_139 = arith.constant 0 : index
    %117 = vector.load %arg13[%c0_136, %c0_137, %c0_138, %c0_139] : memref<1x1x24x128xf32, #tpu.memory_space<vmem>>, vector<1x1x24x128xf32>
    %118 = vector.shape_cast %117 : vector<1x1x24x128xf32> to vector<24x128xf32>
    %119 = vector.shape_cast %116 : vector<24x128xf32> to vector<1x1x24x128xf32>
    tpu.vector_store %arg13[%c0_136, %c0_137, %c0_138, %c0_139], %119 {strides = array<i32>} : memref<1x1x24x128xf32, #tpu.memory_space<vmem>>, vector<1x1x24x128xf32>,
    return
  }
  func.func @transform_0(%arg0: i32, %arg1: i32) -> (i32, i32, i32, i32) {
    %c0_i32 = arith.constant 0 : i32
    %c0_i32_0 = arith.constant 0 : i32
    %c0_i32_1 = arith.constant 0 : i32
    return %arg0, %arg1, %c0_i32, %c0_i32_0 : i32, i32, i32, i32
  }
  func.func @transform_1(%arg0: i32, %arg1: i32) -> (i32, i32) {
    %c0_i32 = arith.constant 0 : i32
    %c0_i32_0 = arith.constant 0 : i32
    %c0_i32_1 = arith.constant 0 : i32
    return %c0_i32, %c0_i32_0 : i32, i32
  }
  func.func @transform_2(%arg0: i32, %arg1: i32) -> (i32, i32) {
    %c0_i32 = arith.constant 0 : i32
    %c0_i32_0 = arith.constant 0 : i32
    %c0_i32_1 = arith.constant 0 : i32
    return %c0_i32, %c0_i32_0 : i32, i32
  }
  func.func @transform_3(%arg0: i32, %arg1: i32) -> (i32, i32) {
    %c0_i32 = arith.constant 0 : i32
    %c0_i32_0 = arith.constant 0 : i32
    %c0_i32_1 = arith.constant 0 : i32
    return %c0_i32, %c0_i32_0 : i32, i32
  }
  func.func @transform_4(%arg0: i32, %arg1: i32) -> (i32, i32) {
    %c0_i32 = arith.constant 0 : i32
    %c0_i32_0 = arith.constant 0 : i32
    %c0_i32_1 = arith.constant 0 : i32
    return %c0_i32, %c0_i32_0 : i32, i32
  }
  func.func @transform_5(%arg0: i32, %arg1: i32) -> (i32, i32) {
    %c0_i32 = arith.constant 0 : i32
    %c0_i32_0 = arith.constant 0 : i32
    %c0_i32_1 = arith.constant 0 : i32
    return %c0_i32, %c0_i32_0 : i32, i32
  }
  func.func @transform_6(%arg0: i32, %arg1: i32) -> (i32, i32) {
    %c0_i32 = arith.constant 0 : i32
    %c0_i32_0 = arith.constant 0 : i32
    %c0_i32_1 = arith.constant 0 : i32
    return %c0_i32, %c0_i32_0 : i32, i32
  }
  func.func @transform_7(%arg0: i32, %arg1: i32) -> (i32, i32) {
    %c0_i32 = arith.constant 0 : i32
    %c0_i32_0 = arith.constant 0 : i32
    %c0_i32_1 = arith.constant 0 : i32
    return %c0_i32, %c0_i32_0 : i32, i32
  }
  func.func @transform_8(%arg0: i32, %arg1: i32) -> (i32, i32) {
    %c0_i32 = arith.constant 0 : i32
    %c0_i32_0 = arith.constant 0 : i32
    %c0_i32_1 = arith.constant 0 : i32
    return %c0_i32, %c0_i32_0 : i32, i32
  }
  func.func @transform_9(%arg0: i32, %arg1: i32) -> (i32, i32) {
    %c0_i32 = arith.constant 0 : i32
    %c0_i32_0 = arith.constant 0 : i32
    %c0_i32_1 = arith.constant 0 : i32
    return %c0_i32, %c0_i32_0 : i32, i32
  }
  func.func @transform_10(%arg0: i32, %arg1: i32) -> (i32, i32) {
    %c0_i32 = arith.constant 0 : i32
    %c0_i32_0 = arith.constant 0 : i32
    %c0_i32_1 = arith.constant 0 : i32
    return %c0_i32, %c0_i32_0 : i32, i32
  }
  func.func @transform_11(%arg0: i32, %arg1: i32) -> (i32, i32, i32, i32) {
    %c0_i32 = arith.constant 0 : i32
    %c0_i32_0 = arith.constant 0 : i32
    %c0_i32_1 = arith.constant 0 : i32
    return %arg0, %arg1, %c0_i32, %c0_i32_0 : i32, i32, i32, i32
  }
}

</mosaic_0001>

<llo_original>
// kernel: tpu_custom_call.1
$region0: #{tpu_custom_call.1}
  #allocation0 [shape = 'u32[]', space=smem, size = 0x4, offset = 0x4, fixed_abs, tag = 'smem constant byte address 0x4 - core index']
  #allocation1 [shape = 'u32[144,128]{1,0:T(1,128)}', space=vmem, size = 0x12000, scoped, tag = 'internal scratch']
  #allocation2 [shape = 'f32[44,128]{1,0:T(8,128)}', space=vmem, size = 0x6000, scoped, tag = 'scratch operand']
  #allocation3 [shape = 'f32[44,128]{1,0:T(8,128)}', space=vmem, size = 0x6000, scoped, tag = 'scratch operand']
  #allocation4 [shape = 'f32[44,640]{1,0:T(8,128)}', space=vmem, size = 0x1e000, scoped, tag = 'scratch operand']
  %s0 = inlined_call_operand.vmem [shape: f32[2,1,44,128], index: 0, kind: input, shape index: {}]
  %s1 = inlined_call_operand.hbm [shape: f32[640,128], index: 1, kind: input, shape index: {}]
  %s2 = inlined_call_operand.hbm [shape: f32[640,128], index: 2, kind: input, shape index: {}]
  %s3 = inlined_call_operand.hbm [shape: f32[640,128], index: 3, kind: input, shape index: {}]
  %s4 = inlined_call_operand.hbm [shape: f32[640,128], index: 4, kind: input, shape index: {}]
  %s5 = inlined_call_operand.hbm [shape: f32[640,128], index: 5, kind: input, shape index: {}]
  %s6 = inlined_call_operand.vmem [shape: f32[1,128], index: 6, kind: input, shape index: {}]
  %s7 = inlined_call_operand.vmem [shape: f32[1,128], index: 7, kind: input, shape index: {}]
  %s8 = inlined_call_operand.vmem [shape: f32[1,128], index: 8, kind: input, shape index: {}]
  %s9 = inlined_call_operand.vmem [shape: f32[1,128], index: 9, kind: input, shape index: {}]
  %s10 = inlined_call_operand.vmem [shape: f32[1,128], index: 10, kind: input, shape index: {}]
  %s11 = inlined_call_operand.hbm [shape: f32[2,1,24,128], index: 11, kind: output, shape index: {}]
  %s12 = sld [smem:[#allocation0]]
  $region97: #{tpu_custom_call.1} parent=0
    _
  %s14 = ssub.s32 1, %s12
  %s15 = scalar_select 0, %s14, %s12
  $region1: #{tpu_custom_call.1} parent=0
    #allocation5 [shape = 'u8[327680]{0}', space=vmem, size = 0x50000, scoped, tag = 'input window, operand 1, single buffered']
    #allocation6 [shape = 's32[2]{0}', space=sflag, size = 0x8, scoped, tag = 'scoped memory for tpu_custom_call.1']
    #allocation7 [shape = 's32[2]{0}', space=sflag, size = 0x8, scoped, tag = 'scoped memory for tpu_custom_call.1']
    #allocation8 [shape = 'u8[327680]{0}', space=vmem, size = 0x50000, scoped, tag = 'input window, operand 2, single buffered']
    #allocation9 [shape = 's32[1]{0}', space=sflag, size = 0x4, scoped, tag = 'scoped memory for tpu_custom_call.1']
    #allocation10 [shape = 'u8[327680]{0}', space=vmem, size = 0x50000, scoped, tag = 'input window, operand 3, single buffered']
    #allocation11 [shape = 'u8[327680]{0}', space=vmem, size = 0x50000, scoped, tag = 'input window, operand 4, single buffered']
    #allocation12 [shape = 's32[1]{0}', space=sflag, size = 0x4, scoped, tag = 'scoped memory for tpu_custom_call.1']
    #allocation13 [shape = 'u8[327680]{0}', space=vmem, size = 0x50000, scoped, tag = 'input window, operand 5, single buffered']
    #allocation14 [shape = 'u8[24576]{0}', space=vmem, size = 0x6000, scoped, tag = 'output window, operand 0']
    %16 = vsyncpa [#allocation6], 0
    %17 = vsyncpa [#allocation9], 0
    %18 = vsyncpa [#allocation12], 0
    %19 = vsyncpa [#allocation7], 0
    %s20 = scalar_lea.sflag [#allocation7], 1
    %21 = vsyncpa %s20, 0
    loop: start=0, step=1, limit=4
    $region2: #{tpu_custom_call.1} parent=1 // loop_pre_header
      _
    $region3: #{tpu_custom_call.1} parent=1 // loop_header
      %s23 = sphi 0, %s27
      %p24 = scmp.ge.s32.totalorder %s23, 4
      %s30 = sphi 0, %s42
      %s31 = sphi 0, %s38
      %s32 = sphi 0, %s30
      %s33 = sphi 0, %s31
      %s34 = sphi 0, %s32
      %s35 = sphi 0, %s33
      %s47 = sphi 0, %s49
      %s50 = sphi 0, %s47
      %s51 = sphi 0, %s50
      %s67 = sphi 0, %s51
      %s71 = sphi 0, %s71
      %s73 = sphi 0, %s71
      %s74 = sphi 0, %s73
      %s88 = sphi 0, %s74
      %s92 = sphi 0, %s92
      %s94 = sphi 0, %s92
      %s95 = sphi 0, %s94
      %s109 = sphi 0, %s95
      %s113 = sphi 0, %s113
      %s115 = sphi 0, %s113
      %s116 = sphi 0, %s115
      %s130 = sphi 0, %s116
      %s134 = sphi 0, %s134
      %s136 = sphi 0, %s134
      %s137 = sphi 0, %s136
      %s151 = sphi 0, %s137
      %s155 = sphi 0, %s155
      %s157 = sphi 0, %s155
      %s158 = sphi 0, %s157
      %s172 = sphi 0, %s158
      %s176 = sphi 0, %s176
      %s178 = sphi 0, %s176
      %s179 = sphi 0, %s178
      %s193 = sphi 0, %s179
      %s197 = sphi 0, %s197
      %s199 = sphi 0, %s197
      %s200 = sphi 0, %s199
      %s214 = sphi 0, %s200
      %s218 = sphi 0, %s218
      %s220 = sphi 0, %s218
      %s221 = sphi 0, %s220
      %s235 = sphi 0, %s221
      %s239 = sphi 0, %s239
      %s241 = sphi 0, %s239
      %s242 = sphi 0, %s241
      %s256 = sphi 0, %s242
      %s260 = sphi 0, %s260
      %s262 = sphi 0, %s260
      %s263 = sphi 0, %s262
      %s277 = sphi 0, %s263
      %s285 = sphi 0, %s287
      %s288 = sphi 0, %s285
      %s289 = sphi 0, %s288
      %s305 = sphi 0, %s289
    $region4: #{tpu_custom_call.1} parent=1 // loop_header_branch
      %26 = sbr.rel (%p24) target = $region8
    $region5: #{tpu_custom_call.1} parent=1 // loop_body
      %s28 = ssub.s32 %s23, 1
      %s29 = ssub.s32 %s23, 2
      %s36 = sadd.s32 1, %s31
      %p37 = scmp.ge.s32.totalorder %s36, 1
      %s38 = scalar_select %p37, 0, %s36
      %s39 = sadd.s32 1, %s30
      %s40 = scalar_select %p37, %s39, %s30
      %p41 = scmp.ge.s32.totalorder %s40, 2
      %s42 = scalar_select %p41, 0, %s40
      %s43 = ssub.s32 %s30, %s42
      %s44 = ssub.s32 %s31, %s38
      %s45 = sor.u32 %s43, %s44
      %p46 = scmp.eq.s32.totalorder %s45, 0
      %s48 = sadd.s32 %s47, 1
      %s49 = scalar_select %p46, %s47, %s48
      %p52 = pneg %p46
      %p53 = scmp.eq.s32.totalorder %s23, 1
      %p54 = por %p52, %p53
      %p55 = scmp.ne.s32.totalorder %s47, %s50
      %p56 = scmp.eq.s32.totalorder %s23, 0
      %p57 = por %p55, %p56
      %p58 = scmp.ne.s32.totalorder %s47, %s50
      %p59 = scmp.eq.s32.totalorder %s28, 1
      %p60 = por %p58, %p59
      %p61 = scmp.ne.s32.totalorder %s50, %s51
      %p62 = scmp.eq.s32.totalorder %s28, 0
      %p63 = por %p61, %p62
      %p64 = scmp.ne.s32.totalorder %s50, %s51
      %p65 = scmp.eq.s32.totalorder %s29, 1
      %p66 = por %p64, %p65
      %p68 = scmp.ne.s32.totalorder %s51, %s67
      %p69 = scmp.eq.s32.totalorder %s29, 0
      %p70 = por %p68, %p69
      %s72 = sadd.s32 %s71, 1
      %p75 = scmp.eq.s32.totalorder %s23, 1
      %p76 = scmp.ne.s32.totalorder %s71, %s73
      %p77 = scmp.eq.s32.totalorder %s23, 0
      %p78 = por %p76, %p77
      %p79 = scmp.ne.s32.totalorder %s71, %s73
      %p80 = scmp.eq.s32.totalorder %s28, 1
      %p81 = por %p79, %p80
      %p82 = scmp.ne.s32.totalorder %s73, %s74
      %p83 = scmp.eq.s32.totalorder %s28, 0
      %p84 = por %p82, %p83
      %p85 = scmp.ne.s32.totalorder %s73, %s74
      %p86 = scmp.eq.s32.totalorder %s29, 1
      %p87 = por %p85, %p86
      %p89 = scmp.ne.s32.totalorder %s74, %s88
      %p90 = scmp.eq.s32.totalorder %s29, 0
      %p91 = por %p89, %p90
      %s93 = sadd.s32 %s92, 1
      %p96 = scmp.eq.s32.totalorder %s23, 1
      %p97 = scmp.ne.s32.totalorder %s92, %s94
      %p98 = scmp.eq.s32.totalorder %s23, 0
      %p99 = por %p97, %p98
      %p100 = scmp.ne.s32.totalorder %s92, %s94
      %p101 = scmp.eq.s32.totalorder %s28, 1
      %p102 = por %p100, %p101
      %p103 = scmp.ne.s32.totalorder %s94, %s95
      %p104 = scmp.eq.s32.totalorder %s28, 0
      %p105 = por %p103, %p104
      %p106 = scmp.ne.s32.totalorder %s94, %s95
      %p107 = scmp.eq.s32.totalorder %s29, 1
      %p108 = por %p106, %p107
      %p110 = scmp.ne.s32.totalorder %s95, %s109
      %p111 = scmp.eq.s32.totalorder %s29, 0
      %p112 = por %p110, %p111
      %s114 = sadd.s32 %s113, 1
      %p117 = scmp.eq.s32.totalorder %s23, 1
      %p118 = scmp.ne.s32.totalorder %s113, %s115
      %p119 = scmp.eq.s32.totalorder %s23, 0
      %p120 = por %p118, %p119
      %p121 = scmp.ne.s32.totalorder %s113, %s115
      %p122 = scmp.eq.s32.totalorder %s28, 1
      %p123 = por %p121, %p122
      %p124 = scmp.ne.s32.totalorder %s115, %s116
      %p125 = scmp.eq.s32.totalorder %s28, 0
      %p126 = por %p124, %p125
      %p127 = scmp.ne.s32.totalorder %s115, %s116
      %p128 = scmp.eq.s32.totalorder %s29, 1
      %p129 = por %p127, %p128
      %p131 = scmp.ne.s32.totalorder %s116, %s130
      %p132 = scmp.eq.s32.totalorder %s29, 0
      %p133 = por %p131, %p132
      %s135 = sadd.s32 %s134, 1
      %p138 = scmp.eq.s32.totalorder %s23, 1
      %p139 = scmp.ne.s32.totalorder %s134, %s136
      %p140 = scmp.eq.s32.totalorder %s23, 0
      %p141 = por %p139, %p140
      %p142 = scmp.ne.s32.totalorder %s134, %s136
      %p143 = scmp.eq.s32.totalorder %s28, 1
      %p144 = por %p142, %p143
      %p145 = scmp.ne.s32.totalorder %s136, %s137
      %p146 = scmp.eq.s32.totalorder %s28, 0
      %p147 = por %p145, %p146
      %p148 = scmp.ne.s32.totalorder %s136, %s137
      %p149 = scmp.eq.s32.totalorder %s29, 1
      %p150 = por %p148, %p149
      %p152 = scmp.ne.s32.totalorder %s137, %s151
      %p153 = scmp.eq.s32.totalorder %s29, 0
      %p154 = por %p152, %p153
      %s156 = sadd.s32 %s155, 1
      %p159 = scmp.eq.s32.totalorder %s23, 1
      %p160 = scmp.ne.s32.totalorder %s155, %s157
      %p161 = scmp.eq.s32.totalorder %s23, 0
      %p162 = por %p160, %p161
      %p163 = scmp.ne.s32.totalorder %s155, %s157
      %p164 = scmp.eq.s32.totalorder %s28, 1
      %p165 = por %p163, %p164
      %p166 = scmp.ne.s32.totalorder %s157, %s158
      %p167 = scmp.eq.s32.totalorder %s28, 0
      %p168 = por %p166, %p167
      %p169 = scmp.ne.s32.totalorder %s157, %s158
      %p170 = scmp.eq.s32.totalorder %s29, 1
      %p171 = por %p169, %p170
      %p173 = scmp.ne.s32.totalorder %s158, %s172
      %p174 = scmp.eq.s32.totalorder %s29, 0
      %p175 = por %p173, %p174
      %s177 = sadd.s32 %s176, 1
      %p180 = scmp.eq.s32.totalorder %s23, 1
      %p181 = scmp.ne.s32.totalorder %s176, %s178
      %p182 = scmp.eq.s32.totalorder %s23, 0
      %p183 = por %p181, %p182
      %p184 = scmp.ne.s32.totalorder %s176, %s178
      %p185 = scmp.eq.s32.totalorder %s28, 1
      %p186 = por %p184, %p185
      %p187 = scmp.ne.s32.totalorder %s178, %s179
      %p188 = scmp.eq.s32.totalorder %s28, 0
      %p189 = por %p187, %p188
      %p190 = scmp.ne.s32.totalorder %s178, %s179
      %p191 = scmp.eq.s32.totalorder %s29, 1
      %p192 = por %p190, %p191
      %p194 = scmp.ne.s32.totalorder %s179, %s193
      %p195 = scmp.eq.s32.totalorder %s29, 0
      %p196 = por %p194, %p195
      %s198 = sadd.s32 %s197, 1
      %p201 = scmp.eq.s32.totalorder %s23, 1
      %p202 = scmp.ne.s32.totalorder %s197, %s199
      %p203 = scmp.eq.s32.totalorder %s23, 0
      %p204 = por %p202, %p203
      %p205 = scmp.ne.s32.totalorder %s197, %s199
      %p206 = scmp.eq.s32.totalorder %s28, 1
      %p207 = por %p205, %p206
      %p208 = scmp.ne.s32.totalorder %s199, %s200
      %p209 = scmp.eq.s32.totalorder %s28, 0
      %p210 = por %p208, %p209
      %p211 = scmp.ne.s32.totalorder %s199, %s200
      %p212 = scmp.eq.s32.totalorder %s29, 1
      %p213 = por %p211, %p212
      %p215 = scmp.ne.s32.totalorder %s200, %s214
      %p216 = scmp.eq.s32.totalorder %s29, 0
      %p217 = por %p215, %p216
      %s219 = sadd.s32 %s218, 1
      %p222 = scmp.eq.s32.totalorder %s23, 1
      %p223 = scmp.ne.s32.totalorder %s218, %s220
      %p224 = scmp.eq.s32.totalorder %s23, 0
      %p225 = por %p223, %p224
      %p226 = scmp.ne.s32.totalorder %s218, %s220
      %p227 = scmp.eq.s32.totalorder %s28, 1
      %p228 = por %p226, %p227
      %p229 = scmp.ne.s32.totalorder %s220, %s221
      %p230 = scmp.eq.s32.totalorder %s28, 0
      %p231 = por %p229, %p230
      %p232 = scmp.ne.s32.totalorder %s220, %s221
      %p233 = scmp.eq.s32.totalorder %s29, 1
      %p234 = por %p232, %p233
      %p236 = scmp.ne.s32.totalorder %s221, %s235
      %p237 = scmp.eq.s32.totalorder %s29, 0
      %p238 = por %p236, %p237
      %s240 = sadd.s32 %s239, 1
      %p243 = scmp.eq.s32.totalorder %s23, 1
      %p244 = scmp.ne.s32.totalorder %s239, %s241
      %p245 = scmp.eq.s32.totalorder %s23, 0
      %p246 = por %p244, %p245
      %p247 = scmp.ne.s32.totalorder %s239, %s241
      %p248 = scmp.eq.s32.totalorder %s28, 1
      %p249 = por %p247, %p248
      %p250 = scmp.ne.s32.totalorder %s241, %s242
      %p251 = scmp.eq.s32.totalorder %s28, 0
      %p252 = por %p250, %p251
      %p253 = scmp.ne.s32.totalorder %s241, %s242
      %p254 = scmp.eq.s32.totalorder %s29, 1
      %p255 = por %p253, %p254
      %p257 = scmp.ne.s32.totalorder %s242, %s256
      %p258 = scmp.eq.s32.totalorder %s29, 0
      %p259 = por %p257, %p258
      %s261 = sadd.s32 %s260, 1
      %p264 = scmp.eq.s32.totalorder %s23, 1
      %p265 = scmp.ne.s32.totalorder %s260, %s262
      %p266 = scmp.eq.s32.totalorder %s23, 0
      %p267 = por %p265, %p266
      %p268 = scmp.ne.s32.totalorder %s260, %s262
      %p269 = scmp.eq.s32.totalorder %s28, 1
      %p270 = por %p268, %p269
      %p271 = scmp.ne.s32.totalorder %s262, %s263
      %p272 = scmp.eq.s32.totalorder %s28, 0
      %p273 = por %p271, %p272
      %p274 = scmp.ne.s32.totalorder %s262, %s263
      %p275 = scmp.eq.s32.totalorder %s29, 1
      %p276 = por %p274, %p275
      %p278 = scmp.ne.s32.totalorder %s263, %s277
      %p279 = scmp.eq.s32.totalorder %s29, 0
      %p280 = por %p278, %p279
      %s281 = ssub.s32 %s30, %s42
      %s282 = ssub.s32 %s31, %s38
      %s283 = sor.u32 %s281, %s282
      %p284 = scmp.eq.s32.totalorder %s283, 0
      %s286 = sadd.s32 %s285, 1
      %s287 = scalar_select %p284, %s285, %s286
      %p290 = pneg %p284
      %p291 = scmp.eq.s32.totalorder %s23, 1
      %p292 = por %p290, %p291
      %p293 = scmp.ne.s32.totalorder %s285, %s288
      %p294 = scmp.eq.s32.totalorder %s23, 0
      %p295 = por %p293, %p294
      %p296 = scmp.ne.s32.totalorder %s285, %s288
      %p297 = scmp.eq.s32.totalorder %s28, 1
      %p298 = por %p296, %p297
      %p299 = scmp.ne.s32.totalorder %s288, %s289
      %p300 = scmp.eq.s32.totalorder %s28, 0
      %p301 = por %p299, %p300
      %p302 = scmp.ne.s32.totalorder %s288, %s289
      %p303 = scmp.eq.s32.totalorder %s29, 1
      %p304 = por %p302, %p303
      %p306 = scmp.ne.s32.totalorder %s289, %s305
      %p307 = scmp.eq.s32.totalorder %s29, 0
      %p308 = por %p306, %p307
      %p309 = scmp.le.s32.totalorder 1, %s23
      %p310 = scmp.lt.s32.totalorder %s23, 3
      %p311 = pnand %p309, %p310
      %p312 = pneg %p311
      // Predicated region
      $region9: #{tpu_custom_call.1} parent=5 // pred_check
        _
      $region10: #{tpu_custom_call.1} parent=5 // pred_check_branch
        %314 = sbr.rel (%p311) target = $region12
      $region11: #{tpu_custom_call.1} parent=5 // pred_region
        %s315 = ssub.s32 %s23, 1
        // Predicated region
        $region13: #{tpu_custom_call.1} parent=11 // pred_check
          %p316 = pneg %p84
        $region14: #{tpu_custom_call.1} parent=11 // pred_check_branch
          %318 = sbr.rel (%p316) target = $region16
        $region15: #{tpu_custom_call.1} parent=11 // pred_region
          %s320 = ssub.s32 10240, 10240
          %321 = vsyncadd [#allocation6], %s320
          %s322 = sshll.u32 [#allocation5], 4
          %s323 = int_to_ptr.vmem [resolvable:$true] %s322
          %328 = dma.hbm_to_vmem [thread:$0]  %s1, 10240, %s323, [#allocation6], 128, 128, 8
        $region16: #{tpu_custom_call.1} parent=11 // pred_fallthru
          _
        // Predicated region
        $region17: #{tpu_custom_call.1} parent=11 // pred_check
          %p329 = pneg %p105
        $region18: #{tpu_custom_call.1} parent=11 // pred_check_branch
          %331 = sbr.rel (%p329) target = $region20
        $region19: #{tpu_custom_call.1} parent=11 // pred_region
          %s333 = ssub.s32 10240, 10240
          %334 = vsyncadd [#allocation9], %s333
          %s335 = sshll.u32 [#allocation8], 4
          %s336 = int_to_ptr.vmem [resolvable:$true] %s335
          %341 = dma.hbm_to_vmem [thread:$0]  %s2, 10240, %s336, [#allocation9], 128, 128, 8
        $region20: #{tpu_custom_call.1} parent=11 // pred_fallthru
          _
        // Predicated region
        $region21: #{tpu_custom_call.1} parent=11 // pred_check
          %p342 = pneg %p126
        $region22: #{tpu_custom_call.1} parent=11 // pred_check_branch
          %344 = sbr.rel (%p342) target = $region24
        $region23: #{tpu_custom_call.1} parent=11 // pred_region
          %s346 = ssub.s32 10240, 10240
          %347 = vsyncadd [#allocation9], %s346
          %s348 = sshll.u32 [#allocation10], 4
          %s349 = int_to_ptr.vmem [resolvable:$true] %s348
          %354 = dma.hbm_to_vmem [thread:$0]  %s3, 10240, %s349, [#allocation9], 128, 128, 8
        $region24: #{tpu_custom_call.1} parent=11 // pred_fallthru
          _
        // Predicated region
        $region25: #{tpu_custom_call.1} parent=11 // pred_check
          %p355 = pneg %p147
        $region26: #{tpu_custom_call.1} parent=11 // pred_check_branch
          %357 = sbr.rel (%p355) target = $region28
        $region27: #{tpu_custom_call.1} parent=11 // pred_region
          %s359 = ssub.s32 10240, 10240
          %360 = vsyncadd [#allocation12], %s359
          %s361 = sshll.u32 [#allocation11], 4
          %s362 = int_to_ptr.vmem [resolvable:$true] %s361
          %367 = dma.hbm_to_vmem [thread:$0]  %s4, 10240, %s362, [#allocation12], 128, 128, 8
        $region28: #{tpu_custom_call.1} parent=11 // pred_fallthru
          _
        // Predicated region
        $region29: #{tpu_custom_call.1} parent=11 // pred_check
          %p368 = pneg %p168
        $region30: #{tpu_custom_call.1} parent=11 // pred_check_branch
          %370 = sbr.rel (%p368) target = $region32
        $region31: #{tpu_custom_call.1} parent=11 // pred_region
          %s372 = ssub.s32 10240, 10240
          %373 = vsyncadd [#allocation12], %s372
          %s374 = sshll.u32 [#allocation13], 4
          %s375 = int_to_ptr.vmem [resolvable:$true] %s374
          %380 = dma.hbm_to_vmem [thread:$0]  %s5, 10240, %s375, [#allocation12], 128, 128, 8
        $region32: #{tpu_custom_call.1} parent=11 // pred_fallthru
          _
        // Predicated region
        $region33: #{tpu_custom_call.1} parent=11 // pred_check
          %p381 = pneg %p189
        $region34: #{tpu_custom_call.1} parent=11 // pred_check_branch
          %383 = sbr.rel (%p381) target = $region36
        $region35: #{tpu_custom_call.1} parent=11 // pred_region
          _
        $region36: #{tpu_custom_call.1} parent=11 // pred_fallthru
          _
        // Predicated region
        $region37: #{tpu_custom_call.1} parent=11 // pred_check
          %p384 = pneg %p210
        $region38: #{tpu_custom_call.1} parent=11 // pred_check_branch
          %386 = sbr.rel (%p384) target = $region40
        $region39: #{tpu_custom_call.1} parent=11 // pred_region
          _
        $region40: #{tpu_custom_call.1} parent=11 // pred_fallthru
          _
        // Predicated region
        $region41: #{tpu_custom_call.1} parent=11 // pred_check
          %p387 = pneg %p231
        $region42: #{tpu_custom_call.1} parent=11 // pred_check_branch
          %389 = sbr.rel (%p387) target = $region44
        $region43: #{tpu_custom_call.1} parent=11 // pred_region
          _
        $region44: #{tpu_custom_call.1} parent=11 // pred_fallthru
          _
        // Predicated region
        $region45: #{tpu_custom_call.1} parent=11 // pred_check
          %p390 = pneg %p252
        $region46: #{tpu_custom_call.1} parent=11 // pred_check_branch
          %392 = sbr.rel (%p390) target = $region48
        $region47: #{tpu_custom_call.1} parent=11 // pred_region
          _
        $region48: #{tpu_custom_call.1} parent=11 // pred_fallthru
          _
        // Predicated region
        $region49: #{tpu_custom_call.1} parent=11 // pred_check
          %p393 = pneg %p273
        $region50: #{tpu_custom_call.1} parent=11 // pred_check_branch
          %395 = sbr.rel (%p393) target = $region52
        $region51: #{tpu_custom_call.1} parent=11 // pred_region
          _
        $region52: #{tpu_custom_call.1} parent=11 // pred_fallthru
          _
      $region12: #{tpu_custom_call.1} parent=5 // pred_fallthru
        _
      %p396 = scmp.lt.s32.totalorder %s23, 2
      // Predicated region
      $region53: #{tpu_custom_call.1} parent=5 // pred_check
        %p397 = pneg %p396
      $region54: #{tpu_custom_call.1} parent=5 // pred_check_branch
        %399 = sbr.rel (%p397) target = $region56
      $region55: #{tpu_custom_call.1} parent=5 // pred_region
        // Predicated region
        $region57: #{tpu_custom_call.1} parent=55 // pred_check
          %p400 = pneg %p57
        $region58: #{tpu_custom_call.1} parent=55 // pred_check_branch
          %402 = sbr.rel (%p400) target = $region60
        $region59: #{tpu_custom_call.1} parent=55 // pred_region
          %p403 = scmp.lt.s32.totalorder %s30, 1
          %s404 = scalar_select %p403, %s30, 1
          %p405 = scmp.lt.s32.totalorder %s31, 0
          %s406 = scalar_select %p405, %s31, 0
          %s407 = smul.addr %s406, 6
          %s408 = smul.addr %s404, 6
          %s409 = sadd.s32 %s407, %s408
          %s410 = smul.addr %s409, 8
          %s411 = scalar_lea.vmem %s0, %s410
        $region60: #{tpu_custom_call.1} parent=55 // pred_fallthru
          _
      $region56: #{tpu_custom_call.1} parent=5 // pred_fallthru
        _
      %p412 = scmp.le.s32.totalorder 1, %s23
      %p413 = scmp.lt.s32.totalorder %s23, 3
      %p414 = pnand %p412, %p413
      %p415 = pneg %p414
      // Predicated region
      $region61: #{tpu_custom_call.1} parent=5 // pred_check
        _
      $region62: #{tpu_custom_call.1} parent=5 // pred_check_branch
        %417 = sbr.rel (%p414) target = $region64
      $region63: #{tpu_custom_call.1} parent=5 // pred_region
        %s418 = ssub.s32 %s23, 1
        // Predicated region
        $region65: #{tpu_custom_call.1} parent=63 // pred_check
          %p419 = pneg %p84
        $region66: #{tpu_custom_call.1} parent=63 // pred_check_branch
          %421 = sbr.rel (%p419) target = $region68
        $region67: #{tpu_custom_call.1} parent=63 // pred_region
          %422 = dma.done [#allocation6], 10240
        $region68: #{tpu_custom_call.1} parent=63 // pred_fallthru
          _
        // Predicated region
        $region69: #{tpu_custom_call.1} parent=63 // pred_check
          %p423 = pneg %p105
        $region70: #{tpu_custom_call.1} parent=63 // pred_check_branch
          %425 = sbr.rel (%p423) target = $region72
        $region71: #{tpu_custom_call.1} parent=63 // pred_region
          %426 = dma.done [#allocation9], 10240
        $region72: #{tpu_custom_call.1} parent=63 // pred_fallthru
          _
        // Predicated region
        $region73: #{tpu_custom_call.1} parent=63 // pred_check
          %p427 = pneg %p126
        $region74: #{tpu_custom_call.1} parent=63 // pred_check_branch
          %429 = sbr.rel (%p427) target = $region76
        $region75: #{tpu_custom_call.1} parent=63 // pred_region
          %430 = dma.done [#allocation9], 10240
        $region76: #{tpu_custom_call.1} parent=63 // pred_fallthru
          _
        // Predicated region
        $region77: #{tpu_custom_call.1} parent=63 // pred_check
          %p431 = pneg %p147
        $region78: #{tpu_custom_call.1} parent=63 // pred_check_branch
          %433 = sbr.rel (%p431) target = $region80
        $region79: #{tpu_custom_call.1} parent=63 // pred_region
          %434 = dma.done [#allocation12], 10240
        $region80: #{tpu_custom_call.1} parent=63 // pred_fallthru
          _
        // Predicated region
        $region81: #{tpu_custom_call.1} parent=63 // pred_check
          %p435 = pneg %p168
        $region82: #{tpu_custom_call.1} parent=63 // pred_check_branch
          %437 = sbr.rel (%p435) target = $region84
        $region83: #{tpu_custom_call.1} parent=63 // pred_region
          %438 = dma.done [#allocation12], 10240
        $region84: #{tpu_custom_call.1} parent=63 // pred_fallthru
          _
        %p439 = scmp.lt.s32.totalorder %s32, 1
        %s440 = scalar_select %p439, %s32, 1
        %p441 = scmp.lt.s32.totalorder %s33, 0
        %s442 = scalar_select %p441, %s33, 0
        %s443 = smul.addr %s442, 6
        %s444 = smul.addr %s440, 6
        %s445 = sadd.s32 %s443, %s444
        %s446 = smul.addr %s445, 8
        %s447 = scalar_lea.vmem %s0, %s446
        %p448 = pneg %p63
        %p449 = pneg %p60
        %p450 = pneg %p84
        %p451 = pneg %p81
        %p452 = pneg %p105
        %p453 = pneg %p102
        %p454 = pneg %p126
        %p455 = pneg %p123
        %p456 = pneg %p147
        %p457 = pneg %p144
        %p458 = pneg %p168
        %p459 = pneg %p165
        %p460 = pneg %p189
        %p461 = pneg %p186
        %p462 = pneg %p210
        %p463 = pneg %p207
        %p464 = pneg %p231
        %p465 = pneg %p228
        %p466 = pneg %p252
        %p467 = pneg %p249
        %p468 = pneg %p273
        %p469 = pneg %p270
        %p470 = pneg %p301
        %p471 = pneg %p298
        %s472 = sand.u32 %s288, 1
        %s473 = scalar_lea.sflag [#allocation7], %s472
        %s474 = sand.u32 %s288, 1
        %s475 = smul.addr %s474, 24
        %s476 = scalar_lea.vmem [#allocation14], %s475
        %p477 = scmp.lt.s32.totalorder %s32, 1
        %s478 = scalar_select %p477, %s32, 1
        %p479 = scmp.lt.s32.totalorder %s33, 0
        %s480 = scalar_select %p479, %s33, 0
        %s481 = smul.addr %s480, 6
        %s482 = smul.addr %s478, 6
        %s483 = sadd.s32 %s481, %s482
        %s484 = smul.addr %s483, 8
        %s485 = scalar_lea.vmem %s0, %s484
        %s486 = smul.u32 %s33, 24
        %s487 = ssub.s32 %s486, 10
        %v488 = vlaneseq
        %v489 = vshrl.u32 %v488, 7
        %v490 = vadd.s32 %v489, 8
        %v491 = vadd.s32 %v489, 16
        %v492 = vadd.s32 %v489, 24
        %v493 = vadd.s32 %v489, 32
        %v494 = vadd.s32 %v489, 40
        %v495 = vstv %s487
        %v496 = vadd.s32 %v489, %v495
        %v497 = vadd.s32 %v490, %v495
        %v498 = vadd.s32 %v491, %v495
        %v499 = vadd.s32 %v492, %v495
        %v500 = vadd.s32 %v493, %v495
        %v501 = vadd.s32 %v494, %v495
        %vm502 = vcmp.ge.s32.totalorder %v496, 0
        %vm503 = vcmp.ge.s32.totalorder %v497, 0
        %vm504 = vcmp.ge.s32.totalorder %v498, 0
        %vm505 = vcmp.ge.s32.totalorder %v499, 0
        %vm506 = vcmp.ge.s32.totalorder %v500, 0
        %vm507 = vcmp.ge.s32.totalorder %v501, 0
        %vm508 = vcmp.lt.s32.totalorder %v496, 24
        %vm509 = vcmp.lt.s32.totalorder %v497, 24
        %vm510 = vcmp.lt.s32.totalorder %v498, 24
        %vm511 = vcmp.lt.s32.totalorder %v499, 24
        %vm512 = vcmp.lt.s32.totalorder %v500, 24
        %vm513 = vcmp.lt.s32.totalorder %v501, 24
        %vm514 = vmand %vm502, %vm508
        %vm515 = vmand %vm503, %vm509
        %vm516 = vmand %vm504, %vm510
        %vm517 = vmand %vm505, %vm511
        %vm518 = vmand %vm506, %vm512
        %vm519 = vmand %vm507, %vm513
        %v520 = vsel %vm514, 1, 0
        %v521 = vsel %vm515, 1, 0
        %v522 = vsel %vm516, 1, 0
        %v523 = vsel %vm517, 1, 0
        %v524 = vsel %vm518, 1, 0
        %v525 = vsel %vm519, 1, 0
        %v526 = vcvt.s32.f32 %v520
        %v527 = vcvt.s32.f32 %v521
        %v528 = vcvt.s32.f32 %v522
        %v529 = vcvt.s32.f32 %v523
        %v530 = vcvt.s32.f32 %v524
        %v531 = vcvt.s32.f32 %v525
        %v532 = vld [vmem:[%s485] sm:$0xff]
        %v533 = vld [vmem:[%s485 + $0x8] sm:$0xff]
        %v534 = vld [vmem:[%s485 + $0x10] sm:$0xff]
        %v535 = vld [vmem:[%s485 + $0x18] sm:$0xff]
        %v536 = vld [vmem:[%s485 + $0x20] sm:$0xff]
        %537 = vst [vmem:[#allocation4] sm:$0xff] %v532
        %538 = vst [vmem:[#allocation4 + $0x28] sm:$0xff] %v533
        %539 = vst [vmem:[#allocation4 + $0x50] sm:$0xff] %v534
        %540 = vst [vmem:[#allocation4 + $0x78] sm:$0xff] %v535
        %541 = vst [vmem:[#allocation4 + $0xa0] sm:$0xff] %v536
        %v542 = vld [vmem:[%s485 + $0x1] sm:$0xff]
        %v543 = vld [vmem:[%s485 + $0x9] sm:$0xff]
        %v544 = vld [vmem:[%s485 + $0x11] sm:$0xff]
        %v545 = vld [vmem:[%s485 + $0x19] sm:$0xff]
        %v546 = vld [vmem:[%s485 + $0x21] sm:$0xff]
        %547 = vst [vmem:[#allocation4 + $0x8] sm:$0xff] %v542
        %548 = vst [vmem:[#allocation4 + $0x30] sm:$0xff] %v543
        %549 = vst [vmem:[#allocation4 + $0x58] sm:$0xff] %v544
        %550 = vst [vmem:[#allocation4 + $0x80] sm:$0xff] %v545
        %551 = vst [vmem:[#allocation4 + $0xa8] sm:$0xff] %v546
        %v552 = vld [vmem:[%s485 + $0x2] sm:$0xff]
        %v553 = vld [vmem:[%s485 + $0xa] sm:$0xff]
        %v554 = vld [vmem:[%s485 + $0x12] sm:$0xff]
        %v555 = vld [vmem:[%s485 + $0x1a] sm:$0xff]
        %v556 = vld [vmem:[%s485 + $0x22] sm:$0xff]
        %557 = vst [vmem:[#allocation4 + $0x10] sm:$0xff] %v552
        %558 = vst [vmem:[#allocation4 + $0x38] sm:$0xff] %v553
        %559 = vst [vmem:[#allocation4 + $0x60] sm:$0xff] %v554
        %560 = vst [vmem:[#allocation4 + $0x88] sm:$0xff] %v555
        %561 = vst [vmem:[#allocation4 + $0xb0] sm:$0xff] %v556
        %v562 = vld [vmem:[%s485 + $0x3] sm:$0xff]
        %v563 = vld [vmem:[%s485 + $0xb] sm:$0xff]
        %v564 = vld [vmem:[%s485 + $0x13] sm:$0xff]
        %v565 = vld [vmem:[%s485 + $0x1b] sm:$0xff]
        %v566 = vld [vmem:[%s485 + $0x23] sm:$0xff]
        %567 = vst [vmem:[#allocation4 + $0x18] sm:$0xff] %v562
        %568 = vst [vmem:[#allocation4 + $0x40] sm:$0xff] %v563
        %569 = vst [vmem:[#allocation4 + $0x68] sm:$0xff] %v564
        %570 = vst [vmem:[#allocation4 + $0x90] sm:$0xff] %v565
        %571 = vst [vmem:[#allocation4 + $0xb8] sm:$0xff] %v566
        %v572 = vld [vmem:[%s485 + $0x4] sm:$0xff]
        %v573 = vld [vmem:[%s485 + $0xc] sm:$0xff]
        %v574 = vld [vmem:[%s485 + $0x14] sm:$0xff]
        %v575 = vld [vmem:[%s485 + $0x1c] sm:$0xff]
        %v576 = vld [vmem:[%s485 + $0x24] sm:$0xff]
        %577 = vst [vmem:[#allocation4 + $0x20] sm:$0xff] %v572
        %578 = vst [vmem:[#allocation4 + $0x48] sm:$0xff] %v573
        %579 = vst [vmem:[#allocation4 + $0x70] sm:$0xff] %v574
        %580 = vst [vmem:[#allocation4 + $0x98] sm:$0xff] %v575
        %581 = vst [vmem:[#allocation4 + $0xc0] sm:$0xff] %v576
        %v582 = vld [vmem:[#allocation4] sm:$0xff]
        %v583 = vld [vmem:[#allocation4 + $0x8] sm:$0xff]
        %v584 = vld [vmem:[#allocation4 + $0x10] sm:$0xff]
        %v585 = vld [vmem:[#allocation4 + $0x18] sm:$0xff]
        %v586 = vld [vmem:[#allocation4 + $0x20] sm:$0xff]
        %v587 = vld [vmem:[#allocation4 + $0x28] sm:$0xff]
        %v588 = vld [vmem:[#allocation4 + $0x30] sm:$0xff]
        %v589 = vld [vmem:[#allocation4 + $0x38] sm:$0xff]
        %v590 = vld [vmem:[#allocation4 + $0x40] sm:$0xff]
        %v591 = vld [vmem:[#allocation4 + $0x48] sm:$0xff]
        %v592 = vld [vmem:[#allocation4 + $0x50] sm:$0xff]
        %v593 = vld [vmem:[#allocation4 + $0x58] sm:$0xff]
        %v594 = vld [vmem:[#allocation4 + $0x60] sm:$0xff]
        %v595 = vld [vmem:[#allocation4 + $0x68] sm:$0xff]
        %v596 = vld [vmem:[#allocation4 + $0x70] sm:$0xff]
        %v597 = vld [vmem:[#allocation4 + $0x78] sm:$0xff]
        %v598 = vld [vmem:[#allocation4 + $0x80] sm:$0xff]
        %v599 = vld [vmem:[#allocation4 + $0x88] sm:$0xff]
        %v600 = vld [vmem:[#allocation4 + $0x90] sm:$0xff]
        %v601 = vld [vmem:[#allocation4 + $0x98] sm:$0xff]
        %v602 = vld [vmem:[#allocation4 + $0xa0] sm:$0xff]
        %v603 = vld [vmem:[#allocation4 + $0xa8] sm:$0xff]
        %v604 = vld [vmem:[#allocation4 + $0xb0] sm:$0xff]
        %v605 = vld [vmem:[#allocation4 + $0xb8] sm:$0xff]
        %v606 = vld [vmem:[#allocation4 + $0xc0] sm:$0xff]
        %v607 = vld [vmem:[#allocation5] sm:$0xff]
        %v608 = vld [vmem:[#allocation5 + $0x8] sm:$0xff]
        %v609 = vld [vmem:[#allocation5 + $0x10] sm:$0xff]
        %v610 = vld [vmem:[#allocation5 + $0x18] sm:$0xff]
        %v611 = vld [vmem:[#allocation5 + $0x20] sm:$0xff]
        %v612 = vld [vmem:[#allocation5 + $0x28] sm:$0xff]
        %v613 = vld [vmem:[#allocation5 + $0x30] sm:$0xff]
        %v614 = vld [vmem:[#allocation5 + $0x38] sm:$0xff]
        %v615 = vld [vmem:[#allocation5 + $0x40] sm:$0xff]
        %v616 = vld [vmem:[#allocation5 + $0x48] sm:$0xff]
        %v617 = vld [vmem:[#allocation5 + $0x50] sm:$0xff]
        %v618 = vld [vmem:[#allocation5 + $0x58] sm:$0xff]
        %v619 = vld [vmem:[#allocation5 + $0x60] sm:$0xff]
        %v620 = vld [vmem:[#allocation5 + $0x68] sm:$0xff]
        %v621 = vld [vmem:[#allocation5 + $0x70] sm:$0xff]
        %v622 = vld [vmem:[#allocation5 + $0x78] sm:$0xff]
        %v623 = vld [vmem:[#allocation5 + $0x80] sm:$0xff]
        %v624 = vld [vmem:[#allocation5 + $0x88] sm:$0xff]
        %v625 = vld [vmem:[#allocation5 + $0x90] sm:$0xff]
        %v626 = vld [vmem:[#allocation5 + $0x98] sm:$0xff]
        %v627 = vld [vmem:[#allocation5 + $0xa0] sm:$0xff]
        %v628 = vld [vmem:[#allocation5 + $0xa8] sm:$0xff]
        %v629 = vld [vmem:[#allocation5 + $0xb0] sm:$0xff]
        %v630 = vld [vmem:[#allocation5 + $0xb8] sm:$0xff]
        %v631 = vld [vmem:[#allocation5 + $0xc0] sm:$0xff]
        %v632 = vld [vmem:[#allocation5 + $0xc8] sm:$0xff]
        %v633 = vld [vmem:[#allocation5 + $0xd0] sm:$0xff]
        %v634 = vld [vmem:[#allocation5 + $0xd8] sm:$0xff]
        %v635 = vld [vmem:[#allocation5 + $0xe0] sm:$0xff]
        %v636 = vld [vmem:[#allocation5 + $0xe8] sm:$0xff]
        %v637 = vld [vmem:[#allocation5 + $0xf0] sm:$0xff]
        %v638 = vld [vmem:[#allocation5 + $0xf8] sm:$0xff]
        %v639 = vld [vmem:[#allocation5 + $0x100] sm:$0xff]
        %v640 = vld [vmem:[#allocation5 + $0x108] sm:$0xff]
        %v641 = vld [vmem:[#allocation5 + $0x110] sm:$0xff]
        %v642 = vld [vmem:[#allocation5 + $0x118] sm:$0xff]
        %v643 = vld [vmem:[#allocation5 + $0x120] sm:$0xff]
        %v644 = vld [vmem:[#allocation5 + $0x128] sm:$0xff]
        %v645 = vld [vmem:[#allocation5 + $0x130] sm:$0xff]
        %v646 = vld [vmem:[#allocation5 + $0x138] sm:$0xff]
        %v647 = vld [vmem:[#allocation5 + $0x140] sm:$0xff]
        %v648 = vld [vmem:[#allocation5 + $0x148] sm:$0xff]
        %v649 = vld [vmem:[#allocation5 + $0x150] sm:$0xff]
        %v650 = vld [vmem:[#allocation5 + $0x158] sm:$0xff]
        %v651 = vld [vmem:[#allocation5 + $0x160] sm:$0xff]
        %v652 = vld [vmem:[#allocation5 + $0x168] sm:$0xff]
        %v653 = vld [vmem:[#allocation5 + $0x170] sm:$0xff]
        %v654 = vld [vmem:[#allocation5 + $0x178] sm:$0xff]
        %v655 = vld [vmem:[#allocation5 + $0x180] sm:$0xff]
        %v656 = vld [vmem:[#allocation5 + $0x188] sm:$0xff]
        %v657 = vld [vmem:[#allocation5 + $0x190] sm:$0xff]
        %v658 = vld [vmem:[#allocation5 + $0x198] sm:$0xff]
        %v659 = vld [vmem:[#allocation5 + $0x1a0] sm:$0xff]
        %v660 = vld [vmem:[#allocation5 + $0x1a8] sm:$0xff]
        %v661 = vld [vmem:[#allocation5 + $0x1b0] sm:$0xff]
        %v662 = vld [vmem:[#allocation5 + $0x1b8] sm:$0xff]
        %v663 = vld [vmem:[#allocation5 + $0x1c0] sm:$0xff]
        %v664 = vld [vmem:[#allocation5 + $0x1c8] sm:$0xff]
        %v665 = vld [vmem:[#allocation5 + $0x1d0] sm:$0xff]
        %v666 = vld [vmem:[#allocation5 + $0x1d8] sm:$0xff]
        %v667 = vld [vmem:[#allocation5 + $0x1e0] sm:$0xff]
        %v668 = vld [vmem:[#allocation5 + $0x1e8] sm:$0xff]
        %v669 = vld [vmem:[#allocation5 + $0x1f0] sm:$0xff]
        %v670 = vld [vmem:[#allocation5 + $0x1f8] sm:$0xff]
        %v671 = vld [vmem:[#allocation5 + $0x200] sm:$0xff]
        %v672 = vld [vmem:[#allocation5 + $0x208] sm:$0xff]
        %v673 = vld [vmem:[#allocation5 + $0x210] sm:$0xff]
        %v674 = vld [vmem:[#allocation5 + $0x218] sm:$0xff]
        %v675 = vld [vmem:[#allocation5 + $0x220] sm:$0xff]
        %v676 = vld [vmem:[#allocation5 + $0x228] sm:$0xff]
        %v677 = vld [vmem:[#allocation5 + $0x230] sm:$0xff]
        %v678 = vld [vmem:[#allocation5 + $0x238] sm:$0xff]
        %v679 = vld [vmem:[#allocation5 + $0x240] sm:$0xff]
        %v680 = vld [vmem:[#allocation5 + $0x248] sm:$0xff]
        %v681 = vld [vmem:[#allocation5 + $0x250] sm:$0xff]
        %v682 = vld [vmem:[#allocation5 + $0x258] sm:$0xff]
        %v683 = vld [vmem:[#allocation5 + $0x260] sm:$0xff]
        %v684 = vld [vmem:[#allocation5 + $0x268] sm:$0xff]
        %v685 = vld [vmem:[#allocation5 + $0x270] sm:$0xff]
        %v686 = vld [vmem:[#allocation5 + $0x278] sm:$0xff]
        %v687 = vld [vmem:[%s6] sm:$0x1]
        %v689 = vlaneseq
        %v690 = vshrl.u32 %v689, 7
        %v691 = vsub.s32 0, %v690
        %v692 = vrot.slane %v687, %v691
        %694 = vmatprep.subr.mxu0 0.0
        %695 = vmatpush1.msra.mxu0 %v607
        %696 = vmatprep.subr.mxu0 0.0
        %697 = vmatpush1.msra.mxu0 %v608
        %698 = vmatprep.subr.mxu0 0.0
        %699 = vmatpush1.msra.mxu0 %v609
        %700 = vmatprep.subr.mxu0 0.0
        %701 = vmatpush1.msra.mxu0 %v610
        %702 = vmatprep.subr.mxu0 0.0
        %703 = vmatpush1.msra.mxu0 %v611
        %704 = vmatprep.subr.mxu0 0.0
        %705 = vmatpush1.msra.mxu0 %v612
        %706 = vmatprep.subr.mxu0 0.0
        %707 = vmatpush1.msra.mxu0 %v613
        %708 = vmatprep.subr.mxu0 0.0
        %709 = vmatpush1.msra.mxu0 %v614
        %710 = vmatprep.subr.mxu0 0.0
        %711 = vmatpush1.msra.mxu0 %v615
        %712 = vmatprep.subr.mxu0 0.0
        %713 = vmatpush1.msra.mxu0 %v616
        %714 = vmatprep.subr.mxu0 0.0
        %715 = vmatpush1.msra.mxu0 %v617
        %716 = vmatprep.subr.mxu0 0.0
        %717 = vmatpush1.msra.mxu0 %v618
        %718 = vmatprep.subr.mxu0 0.0
        %719 = vmatpush1.msra.mxu0 %v619
        %720 = vmatprep.subr.mxu0 0.0
        %721 = vmatpush1.msra.mxu0 %v620
        %722 = vmatprep.subr.mxu0 0.0
        %723 = vmatpush1.msra.mxu0 %v621
        %724 = vmatprep.subr.mxu0 0.0
        %725 = vmatpush1.msra.mxu0 %v622
        %726 = vmatprep.subr.mxu0 0.0
        %727 = vmatpush1.msra.mxu0 %v623
        %728 = vmatprep.subr.mxu0 0.0
        %729 = vmatpush1.msra.mxu0 %v624
        %730 = vmatprep.subr.mxu0 0.0
        %731 = vmatpush1.msra.mxu0 %v625
        %732 = vmatprep.subr.mxu0 0.0
        %733 = vmatpush1.msra.mxu0 %v626
        %734 = vmatprep.subr.mxu0 0.0
        %735 = vmatpush1.msra.mxu0 %v627
        %736 = vmatprep.subr.mxu0 0.0
        %737 = vmatpush1.msra.mxu0 %v628
        %738 = vmatprep.subr.mxu0 0.0
        %739 = vmatpush1.msra.mxu0 %v629
        %740 = vmatprep.subr.mxu0 0.0
        %741 = vmatpush1.msra.mxu0 %v630
        %742 = vmatprep.subr.mxu0 0.0
        %743 = vmatpush1.msra.mxu0 %v631
        %744 = vmatprep.subr.mxu0 0.0
        %745 = vmatpush1.msra.mxu0 %v632
        %746 = vmatprep.subr.mxu0 0.0
        %747 = vmatpush1.msra.mxu0 %v633
        %748 = vmatprep.subr.mxu0 0.0
        %749 = vmatpush1.msra.mxu0 %v634
        %750 = vmatprep.subr.mxu0 0.0
        %751 = vmatpush1.msra.mxu0 %v635
        %752 = vmatprep.subr.mxu0 0.0
        %753 = vmatpush1.msra.mxu0 %v636
        %754 = vmatprep.subr.mxu0 0.0
        %755 = vmatpush1.msra.mxu0 %v637
        %756 = vmatprep.subr.mxu0 0.0
        %757 = vmatpush1.msra.mxu0 %v638
        %758 = vmatprep.mubr.f32.mxu0 %v583
        %759 = vmatmul.mubr.f32.gmra.mrb[0].mxu0 %v582
        %v760 = vpop.f32.mrb[0].mxu0
        %v761 = vadd.f32 %v692, %v760
        %v762 = vpop.f32.mrb[0].mxu0
        %763 = vmatprep.mubr.f32.mxu0 %v588
        %764 = vmatmul.mubr.f32.gmra.mrb[0].mxu0 %v587
        %v765 = vpop.f32.mrb[0].mxu0
        %v766 = vadd.f32 %v692, %v765
        %v767 = vpop.f32.mrb[0].mxu0
        %768 = vmatprep.mubr.f32.mxu0 %v593
        %769 = vmatmul.mubr.f32.gmra.mrb[0].mxu0 %v592
        %v770 = vpop.f32.mrb[0].mxu0
        %v771 = vadd.f32 %v692, %v770
        %v772 = vpop.f32.mrb[0].mxu0
        %773 = vmatprep.mubr.f32.mxu0 %v598
        %774 = vmatmul.mubr.f32.gmra.mrb[0].mxu0 %v597
        %v775 = vpop.f32.mrb[0].mxu0
        %v776 = vadd.f32 %v692, %v775
        %v777 = vpop.f32.mrb[0].mxu0
        %778 = vmatprep.mubr.f32.mxu0 %v603
        %779 = vmatmul.mubr.f32.gmra.mrb[0].mxu0 %v602
        %v780 = vpop.f32.mrb[0].mxu0
        %v781 = vadd.f32 %v692, %v780
        %v782 = vpop.f32.mrb[0].mxu0
        %783 = vdwg.mxu0
        %784 = vmatprep.subr.mxu0 0.0
        %785 = vmatpush1.msra.mxu0 %v639
        %786 = vmatprep.subr.mxu0 0.0
        %787 = vmatpush1.msra.mxu0 %v640
        %788 = vmatprep.subr.mxu0 0.0
        %789 = vmatpush1.msra.mxu0 %v641
        %790 = vmatprep.subr.mxu0 0.0
        %791 = vmatpush1.msra.mxu0 %v642
        %792 = vmatprep.subr.mxu0 0.0
        %793 = vmatpush1.msra.mxu0 %v643
        %794 = vmatprep.subr.mxu0 0.0
        %795 = vmatpush1.msra.mxu0 %v644
        %796 = vmatprep.subr.mxu0 0.0
        %797 = vmatpush1.msra.mxu0 %v645
        %798 = vmatprep.subr.mxu0 0.0
        %799 = vmatpush1.msra.mxu0 %v646
        %800 = vmatprep.subr.mxu0 0.0
        %801 = vmatpush1.msra.mxu0 %v647
        %802 = vmatprep.subr.mxu0 0.0
        %803 = vmatpush1.msra.mxu0 %v648
        %804 = vmatprep.subr.mxu0 0.0
        %805 = vmatpush1.msra.mxu0 %v649
        %806 = vmatprep.subr.mxu0 0.0
        %807 = vmatpush1.msra.mxu0 %v650
        %808 = vmatprep.subr.mxu0 0.0
        %809 = vmatpush1.msra.mxu0 %v651
        %810 = vmatprep.subr.mxu0 0.0
        %811 = vmatpush1.msra.mxu0 %v652
        %812 = vmatprep.subr.mxu0 0.0
        %813 = vmatpush1.msra.mxu0 %v653
        %814 = vmatprep.subr.mxu0 0.0
        %815 = vmatpush1.msra.mxu0 %v654
        %816 = vmatprep.subr.mxu0 0.0
        %817 = vmatpush1.msra.mxu0 %v655
        %818 = vmatprep.subr.mxu0 0.0
        %819 = vmatpush1.msra.mxu0 %v656
        %820 = vmatprep.subr.mxu0 0.0
        %821 = vmatpush1.msra.mxu0 %v657
        %822 = vmatprep.subr.mxu0 0.0
        %823 = vmatpush1.msra.mxu0 %v658
        %824 = vmatprep.subr.mxu0 0.0
        %825 = vmatpush1.msra.mxu0 %v659
        %826 = vmatprep.subr.mxu0 0.0
        %827 = vmatpush1.msra.mxu0 %v660
        %828 = vmatprep.subr.mxu0 0.0
        %829 = vmatpush1.msra.mxu0 %v661
        %830 = vmatprep.subr.mxu0 0.0
        %831 = vmatpush1.msra.mxu0 %v662
        %832 = vmatprep.subr.mxu0 0.0
        %833 = vmatpush1.msra.mxu0 %v663
        %834 = vmatprep.subr.mxu0 0.0
        %835 = vmatpush1.msra.mxu0 %v664
        %836 = vmatprep.subr.mxu0 0.0
        %837 = vmatpush1.msra.mxu0 %v665
        %838 = vmatprep.subr.mxu0 0.0
        %839 = vmatpush1.msra.mxu0 %v666
        %840 = vmatprep.subr.mxu0 0.0
        %841 = vmatpush1.msra.mxu0 %v667
        %842 = vmatprep.subr.mxu0 0.0
        %843 = vmatpush1.msra.mxu0 %v668
        %844 = vmatprep.subr.mxu0 0.0
        %845 = vmatpush1.msra.mxu0 %v669
        %846 = vmatprep.subr.mxu0 0.0
        %847 = vmatpush1.msra.mxu0 %v670
        %848 = vmatprep.mubr.f32.mxu0 %v585
        %849 = vmatmul.mubr.f32.gmra.mrb[0].mxu0 %v584
        %v850 = vpop.f32.mrb[0].mxu0
        %v851 = vadd.f32 %v761, %v850
        %v852 = vpop.f32.mrb[0].mxu0
        %853 = vmatprep.mubr.f32.mxu0 %v590
        %854 = vmatmul.mubr.f32.gmra.mrb[0].mxu0 %v589
        %v855 = vpop.f32.mrb[0].mxu0
        %v856 = vadd.f32 %v766, %v855
        %v857 = vpop.f32.mrb[0].mxu0
        %858 = vmatprep.mubr.f32.mxu0 %v595
        %859 = vmatmul.mubr.f32.gmra.mrb[0].mxu0 %v594
        %v860 = vpop.f32.mrb[0].mxu0
        %v861 = vadd.f32 %v771, %v860
        %v862 = vpop.f32.mrb[0].mxu0
        %863 = vmatprep.mubr.f32.mxu0 %v600
        %864 = vmatmul.mubr.f32.gmra.mrb[0].mxu0 %v599
        %v865 = vpop.f32.mrb[0].mxu0
        %v866 = vadd.f32 %v776, %v865
        %v867 = vpop.f32.mrb[0].mxu0
        %868 = vmatprep.mubr.f32.mxu0 %v605
        %869 = vmatmul.mubr.f32.gmra.mrb[0].mxu0 %v604
        %v870 = vpop.f32.mrb[0].mxu0
        %v871 = vadd.f32 %v781, %v870
        %v872 = vpop.f32.mrb[0].mxu0
        %873 = vdwg.mxu0
        %874 = vmatprep.subr.mxu0 0.0
        %875 = vmatpush1.msra.mxu0 %v671
        %876 = vmatprep.subr.mxu0 0.0
        %877 = vmatpush1.msra.mxu0 %v672
        %878 = vmatprep.subr.mxu0 0.0
        %879 = vmatpush1.msra.mxu0 %v673
        %880 = vmatprep.subr.mxu0 0.0
        %881 = vmatpush1.msra.mxu0 %v674
        %882 = vmatprep.subr.mxu0 0.0
        %883 = vmatpush1.msra.mxu0 %v675
        %884 = vmatprep.subr.mxu0 0.0
        %885 = vmatpush1.msra.mxu0 %v676
        %886 = vmatprep.subr.mxu0 0.0
        %887 = vmatpush1.msra.mxu0 %v677
        %888 = vmatprep.subr.mxu0 0.0
        %889 = vmatpush1.msra.mxu0 %v678
        %890 = vmatprep.subr.mxu0 0.0
        %891 = vmatpush1.msra.mxu0 %v679
        %892 = vmatprep.subr.mxu0 0.0
        %893 = vmatpush1.msra.mxu0 %v680
        %894 = vmatprep.subr.mxu0 0.0
        %895 = vmatpush1.msra.mxu0 %v681
        %896 = vmatprep.subr.mxu0 0.0
        %897 = vmatpush1.msra.mxu0 %v682
        %898 = vmatprep.subr.mxu0 0.0
        %899 = vmatpush1.msra.mxu0 %v683
        %900 = vmatprep.subr.mxu0 0.0
        %901 = vmatpush1.msra.mxu0 %v684
        %902 = vmatprep.subr.mxu0 0.0
        %903 = vmatpush1.msra.mxu0 %v685
        %904 = vmatprep.subr.mxu0 0.0
        %905 = vmatpush1.msra.mxu0 %v686
        %906 = vmatprep.subr.mxu0 0.0
        %907 = vmatpush1.msra.mxu0 0.0
        %908 = vmatprep.subr.mxu0 0.0
        %909 = vmatpush1.msra.mxu0 0.0
        %910 = vmatprep.subr.mxu0 0.0
        %911 = vmatpush1.msra.mxu0 0.0
        %912 = vmatprep.subr.mxu0 0.0
        %913 = vmatpush1.msra.mxu0 0.0
        %914 = vmatprep.subr.mxu0 0.0
        %915 = vmatpush1.msra.mxu0 0.0
        %916 = vmatprep.subr.mxu0 0.0
        %917 = vmatpush1.msra.mxu0 0.0
        %918 = vmatprep.subr.mxu0 0.0
        %919 = vmatpush1.msra.mxu0 0.0
        %920 = vmatprep.subr.mxu0 0.0
        %921 = vmatpush1.msra.mxu0 0.0
        %922 = vmatprep.subr.mxu0 0.0
        %923 = vmatpush1.msra.mxu0 0.0
        %924 = vmatprep.subr.mxu0 0.0
        %925 = vmatpush1.msra.mxu0 0.0
        %926 = vmatprep.subr.mxu0 0.0
        %927 = vmatpush1.msra.mxu0 0.0
        %928 = vmatprep.subr.mxu0 0.0
        %929 = vmatpush1.msra.mxu0 0.0
        %930 = vmatprep.subr.mxu0 0.0
        %931 = vmatpush1.msra.mxu0 0.0
        %932 = vmatprep.subr.mxu0 0.0
        %933 = vmatpush1.msra.mxu0 0.0
        %934 = vmatprep.subr.mxu0 0.0
        %935 = vmatpush1.msra.mxu0 0.0
        %936 = vmatprep.subr.mxu0 0.0
        %937 = vmatpush1.msra.mxu0 0.0
        %938 = vmatprep.mubr.f32.mxu0 0.0
        %939 = vmatmul.mubr.f32.gmra.mrb[0].mxu0 %v586
        %v940 = vpop.f32.mrb[0].mxu0
        %v941 = vadd.f32 %v851, %v940
        %v942 = vpop.f32.mrb[0].mxu0
        %943 = vmatprep.mubr.f32.mxu0 0.0
        %944 = vmatmul.mubr.f32.gmra.mrb[0].mxu0 %v591
        %v945 = vpop.f32.mrb[0].mxu0
        %v946 = vadd.f32 %v856, %v945
        %v947 = vpop.f32.mrb[0].mxu0
        %948 = vmatprep.mubr.f32.mxu0 0.0
        %949 = vmatmul.mubr.f32.gmra.mrb[0].mxu0 %v596
        %v950 = vpop.f32.mrb[0].mxu0
        %v951 = vadd.f32 %v861, %v950
        %v952 = vpop.f32.mrb[0].mxu0
        %953 = vmatprep.mubr.f32.mxu0 0.0
        %954 = vmatmul.mubr.f32.gmra.mrb[0].mxu0 %v601
        %v955 = vpop.f32.mrb[0].mxu0
        %v956 = vadd.f32 %v866, %v955
        %v957 = vpop.f32.mrb[0].mxu0
        %958 = vmatprep.mubr.f32.mxu0 0.0
        %959 = vmatmul.mubr.f32.gmra.mrb[0].mxu0 %v606
        %v960 = vpop.f32.mrb[0].mxu0
        %v961 = vadd.f32 %v871, %v960
        %v962 = vpop.f32.mrb[0].mxu0
        %963 = vdwg.mxu0
        %v964 = vtanh.pop %v941
        %v965 = vtanh.pop %v946
        %v966 = vtanh.pop %v951
        %v967 = vtanh.pop %v956
        %v968 = vtanh.pop %v961
        %vm975 = vcmask 1045504
        %v976 = vrot.slane %v526, 2
        %v977 = vrot.slane %v527, 2
        %v978 = vsel %vm975, %v976, %v977
        %v979 = vrot.slane %v528, 2
        %v980 = vsel %vm975, %v977, %v979
        %v981 = vrot.slane %v529, 2
        %v982 = vsel %vm975, %v979, %v981
        %v983 = vrot.slane %v530, 2
        %v984 = vsel %vm975, %v981, %v983
        %v985 = vrot.slane %v531, 2
        %v986 = vsel %vm975, %v983, %v985
        %v992 = vmul.f32 %v964, %v978
        %v993 = vmul.f32 %v965, %v980
        %v994 = vmul.f32 %v966, %v982
        %v995 = vmul.f32 %v967, %v984
        %v996 = vmul.f32 %v968, %v986
        %997 = vst [vmem:[#allocation2 + $0x2] sm:$0xff] %v992
        %998 = vst [vmem:[#allocation2 + $0xa] sm:$0xff] %v993
        %999 = vst [vmem:[#allocation2 + $0x12] sm:$0xff] %v994
        %1000 = vst [vmem:[#allocation2 + $0x1a] sm:$0xff] %v995
        %1001 = vst [vmem:[#allocation2 + $0x22] sm:$0xff] %v996
        %v1002 = vld [vmem:[#allocation2 + $0x2] sm:$0xff]
        %v1003 = vld [vmem:[#allocation2 + $0xa] sm:$0xff]
        %v1004 = vld [vmem:[#allocation2 + $0x12] sm:$0xff]
        %v1005 = vld [vmem:[#allocation2 + $0x1a] sm:$0xff]
        %v1006 = vld [vmem:[#allocation2 + $0x22] sm:$0xf]
        %1007 = vst [vmem:[#allocation4] sm:$0xff] %v1002
        %1008 = vst [vmem:[#allocation4 + $0x28] sm:$0xff] %v1003
        %1009 = vst [vmem:[#allocation4 + $0x50] sm:$0xff] %v1004
        %1010 = vst [vmem:[#allocation4 + $0x78] sm:$0xff] %v1005
        %1011 = vst [vmem:[#allocation4 + $0xa0] sm:$0xf] %v1006
        %v1012 = vld [vmem:[#allocation2 + $0x3] sm:$0xff]
        %v1013 = vld [vmem:[#allocation2 + $0xb] sm:$0xff]
        %v1014 = vld [vmem:[#allocation2 + $0x13] sm:$0xff]
        %v1015 = vld [vmem:[#allocation2 + $0x1b] sm:$0xff]
        %v1016 = vld [vmem:[#allocation2 + $0x23] sm:$0xf]
        %1017 = vst [vmem:[#allocation4 + $0x8] sm:$0xff] %v1012
        %1018 = vst [vmem:[#allocation4 + $0x30] sm:$0xff] %v1013
        %1019 = vst [vmem:[#allocation4 + $0x58] sm:$0xff] %v1014
        %1020 = vst [vmem:[#allocation4 + $0x80] sm:$0xff] %v1015
        %1021 = vst [vmem:[#allocation4 + $0xa8] sm:$0xf] %v1016
        %v1022 = vld [vmem:[#allocation2 + $0x4] sm:$0xff]
        %v1023 = vld [vmem:[#allocation2 + $0xc] sm:$0xff]
        %v1024 = vld [vmem:[#allocation2 + $0x14] sm:$0xff]
        %v1025 = vld [vmem:[#allocation2 + $0x1c] sm:$0xff]
        %v1026 = vld [vmem:[#allocation2 + $0x24] sm:$0xf]
        %1027 = vst [vmem:[#allocation4 + $0x10] sm:$0xff] %v1022
        %1028 = vst [vmem:[#allocation4 + $0x38] sm:$0xff] %v1023
        %1029 = vst [vmem:[#allocation4 + $0x60] sm:$0xff] %v1024
        %1030 = vst [vmem:[#allocation4 + $0x88] sm:$0xff] %v1025
        %1031 = vst [vmem:[#allocation4 + $0xb0] sm:$0xf] %v1026
        %v1032 = vld [vmem:[#allocation2 + $0x5] sm:$0xff]
        %v1033 = vld [vmem:[#allocation2 + $0xd] sm:$0xff]
        %v1034 = vld [vmem:[#allocation2 + $0x15] sm:$0xff]
        %v1035 = vld [vmem:[#allocation2 + $0x1d] sm:$0xff]
        %v1036 = vld [vmem:[#allocation2 + $0x25] sm:$0xf]
        %1037 = vst [vmem:[#allocation4 + $0x18] sm:$0xff] %v1032
        %1038 = vst [vmem:[#allocation4 + $0x40] sm:$0xff] %v1033
        %1039 = vst [vmem:[#allocation4 + $0x68] sm:$0xff] %v1034
        %1040 = vst [vmem:[#allocation4 + $0x90] sm:$0xff] %v1035
        %1041 = vst [vmem:[#allocation4 + $0xb8] sm:$0xf] %v1036
        %v1042 = vld [vmem:[#allocation2 + $0x6] sm:$0xff]
        %v1043 = vld [vmem:[#allocation2 + $0xe] sm:$0xff]
        %v1044 = vld [vmem:[#allocation2 + $0x16] sm:$0xff]
        %v1045 = vld [vmem:[#allocation2 + $0x1e] sm:$0xff]
        %v1046 = vld [vmem:[#allocation2 + $0x26] sm:$0xf]
        %1047 = vst [vmem:[#allocation4 + $0x20] sm:$0xff] %v1042
        %1048 = vst [vmem:[#allocation4 + $0x48] sm:$0xff] %v1043
        %1049 = vst [vmem:[#allocation4 + $0x70] sm:$0xff] %v1044
        %1050 = vst [vmem:[#allocation4 + $0x98] sm:$0xff] %v1045
        %1051 = vst [vmem:[#allocation4 + $0xc0] sm:$0xf] %v1046
        %v1052 = vld [vmem:[#allocation4] sm:$0xff]
        %v1053 = vld [vmem:[#allocation4 + $0x8] sm:$0xff]
        %v1054 = vld [vmem:[#allocation4 + $0x10] sm:$0xff]
        %v1055 = vld [vmem:[#allocation4 + $0x18] sm:$0xff]
        %v1056 = vld [vmem:[#allocation4 + $0x20] sm:$0xff]
        %v1057 = vld [vmem:[#allocation4 + $0x28] sm:$0xff]
        %v1058 = vld [vmem:[#allocation4 + $0x30] sm:$0xff]
        %v1059 = vld [vmem:[#allocation4 + $0x38] sm:$0xff]
        %v1060 = vld [vmem:[#allocation4 + $0x40] sm:$0xff]
        %v1061 = vld [vmem:[#allocation4 + $0x48] sm:$0xff]
        %v1062 = vld [vmem:[#allocation4 + $0x50] sm:$0xff]
        %v1063 = vld [vmem:[#allocation4 + $0x58] sm:$0xff]
        %v1064 = vld [vmem:[#allocation4 + $0x60] sm:$0xff]
        %v1065 = vld [vmem:[#allocation4 + $0x68] sm:$0xff]
        %v1066 = vld [vmem:[#allocation4 + $0x70] sm:$0xff]
        %v1067 = vld [vmem:[#allocation4 + $0x78] sm:$0xff]
        %v1068 = vld [vmem:[#allocation4 + $0x80] sm:$0xff]
        %v1069 = vld [vmem:[#allocation4 + $0x88] sm:$0xff]
        %v1070 = vld [vmem:[#allocation4 + $0x90] sm:$0xff]
        %v1071 = vld [vmem:[#allocation4 + $0x98] sm:$0xff]
        %v1072 = vld [vmem:[#allocation4 + $0xa0] sm:$0xf]
        %v1073 = vld [vmem:[#allocation4 + $0xa8] sm:$0xf]
        %v1074 = vld [vmem:[#allocation4 + $0xb0] sm:$0xf]
        %v1075 = vld [vmem:[#allocation4 + $0xb8] sm:$0xf]
        %v1076 = vld [vmem:[#allocation4 + $0xc0] sm:$0xf]
        %v1077 = vld [vmem:[#allocation8] sm:$0xff]
        %v1078 = vld [vmem:[#allocation8 + $0x8] sm:$0xff]
        %v1079 = vld [vmem:[#allocation8 + $0x10] sm:$0xff]
        %v1080 = vld [vmem:[#allocation8 + $0x18] sm:$0xff]
        %v1081 = vld [vmem:[#allocation8 + $0x20] sm:$0xff]
        %v1082 = vld [vmem:[#allocation8 + $0x28] sm:$0xff]
        %v1083 = vld [vmem:[#allocation8 + $0x30] sm:$0xff]
        %v1084 = vld [vmem:[#allocation8 + $0x38] sm:$0xff]
        %v1085 = vld [vmem:[#allocation8 + $0x40] sm:$0xff]
        %v1086 = vld [vmem:[#allocation8 + $0x48] sm:$0xff]
        %v1087 = vld [vmem:[#allocation8 + $0x50] sm:$0xff]
        %v1088 = vld [vmem:[#allocation8 + $0x58] sm:$0xff]
        %v1089 = vld [vmem:[#allocation8 + $0x60] sm:$0xff]
        %v1090 = vld [vmem:[#allocation8 + $0x68] sm:$0xff]
        %v1091 = vld [vmem:[#allocation8 + $0x70] sm:$0xff]
        %v1092 = vld [vmem:[#allocation8 + $0x78] sm:$0xff]
        %v1093 = vld [vmem:[#allocation8 + $0x80] sm:$0xff]
        %v1094 = vld [vmem:[#allocation8 + $0x88] sm:$0xff]
        %v1095 = vld [vmem:[#allocation8 + $0x90] sm:$0xff]
        %v1096 = vld [vmem:[#allocation8 + $0x98] sm:$0xff]
        %v1097 = vld [vmem:[#allocation8 + $0xa0] sm:$0xff]
        %v1098 = vld [vmem:[#allocation8 + $0xa8] sm:$0xff]
        %v1099 = vld [vmem:[#allocation8 + $0xb0] sm:$0xff]
        %v1100 = vld [vmem:[#allocation8 + $0xb8] sm:$0xff]
        %v1101 = vld [vmem:[#allocation8 + $0xc0] sm:$0xff]
        %v1102 = vld [vmem:[#allocation8 + $0xc8] sm:$0xff]
        %v1103 = vld [vmem:[#allocation8 + $0xd0] sm:$0xff]
        %v1104 = vld [vmem:[#allocation8 + $0xd8] sm:$0xff]
        %v1105 = vld [vmem:[#allocation8 + $0xe0] sm:$0xff]
        %v1106 = vld [vmem:[#allocation8 + $0xe8] sm:$0xff]
        %v1107 = vld [vmem:[#allocation8 + $0xf0] sm:$0xff]
        %v1108 = vld [vmem:[#allocation8 + $0xf8] sm:$0xff]
        %v1109 = vld [vmem:[#allocation8 + $0x100] sm:$0xff]
        %v1110 = vld [vmem:[#allocation8 + $0x108] sm:$0xff]
        %v1111 = vld [vmem:[#allocation8 + $0x110] sm:$0xff]
        %v1112 = vld [vmem:[#allocation8 + $0x118] sm:$0xff]
        %v1113 = vld [vmem:[#allocation8 + $0x120] sm:$0xff]
        %v1114 = vld [vmem:[#allocation8 + $0x128] sm:$0xff]
        %v1115 = vld [vmem:[#allocation8 + $0x130] sm:$0xff]
        %v1116 = vld [vmem:[#allocation8 + $0x138] sm:$0xff]
        %v1117 = vld [vmem:[#allocation8 + $0x140] sm:$0xff]
        %v1118 = vld [vmem:[#allocation8 + $0x148] sm:$0xff]
        %v1119 = vld [vmem:[#allocation8 + $0x150] sm:$0xff]
        %v1120 = vld [vmem:[#allocation8 + $0x158] sm:$0xff]
        %v1121 = vld [vmem:[#allocation8 + $0x160] sm:$0xff]
        %v1122 = vld [vmem:[#allocation8 + $0x168] sm:$0xff]
        %v1123 = vld [vmem:[#allocation8 + $0x170] sm:$0xff]
        %v1124 = vld [vmem:[#allocation8 + $0x178] sm:$0xff]
        %v1125 = vld [vmem:[#allocation8 + $0x180] sm:$0xff]
        %v1126 = vld [vmem:[#allocation8 + $0x188] sm:$0xff]
        %v1127 = vld [vmem:[#allocation8 + $0x190] sm:$0xff]
        %v1128 = vld [vmem:[#allocation8 + $0x198] sm:$0xff]
        %v1129 = vld [vmem:[#allocation8 + $0x1a0] sm:$0xff]
        %v1130 = vld [vmem:[#allocation8 + $0x1a8] sm:$0xff]
        %v1131 = vld [vmem:[#allocation8 + $0x1b0] sm:$0xff]
        %v1132 = vld [vmem:[#allocation8 + $0x1b8] sm:$0xff]
        %v1133 = vld [vmem:[#allocation8 + $0x1c0] sm:$0xff]
        %v1134 = vld [vmem:[#allocation8 + $0x1c8] sm:$0xff]
        %v1135 = vld [vmem:[#allocation8 + $0x1d0] sm:$0xff]
        %v1136 = vld [vmem:[#allocation8 + $0x1d8] sm:$0xff]
        %v1137 = vld [vmem:[#allocation8 + $0x1e0] sm:$0xff]
        %v1138 = vld [vmem:[#allocation8 + $0x1e8] sm:$0xff]
        %v1139 = vld [vmem:[#allocation8 + $0x1f0] sm:$0xff]
        %v1140 = vld [vmem:[#allocation8 + $0x1f8] sm:$0xff]
        %v1141 = vld [vmem:[#allocation8 + $0x200] sm:$0xff]
        %v1142 = vld [vmem:[#allocation8 + $0x208] sm:$0xff]
        %v1143 = vld [vmem:[#allocation8 + $0x210] sm:$0xff]
        %v1144 = vld [vmem:[#allocation8 + $0x218] sm:$0xff]
        %v1145 = vld [vmem:[#allocation8 + $0x220] sm:$0xff]
        %v1146 = vld [vmem:[#allocation8 + $0x228] sm:$0xff]
        %v1147 = vld [vmem:[#allocation8 + $0x230] sm:$0xff]
        %v1148 = vld [vmem:[#allocation8 + $0x238] sm:$0xff]
        %v1149 = vld [vmem:[#allocation8 + $0x240] sm:$0xff]
        %v1150 = vld [vmem:[#allocation8 + $0x248] sm:$0xff]
        %v1151 = vld [vmem:[#allocation8 + $0x250] sm:$0xff]
        %v1152 = vld [vmem:[#allocation8 + $0x258] sm:$0xff]
        %v1153 = vld [vmem:[#allocation8 + $0x260] sm:$0xff]
        %v1154 = vld [vmem:[#allocation8 + $0x268] sm:$0xff]
        %v1155 = vld [vmem:[#allocation8 + $0x270] sm:$0xff]
        %v1156 = vld [vmem:[#allocation8 + $0x278] sm:$0xff]
        %v1157 = vld [vmem:[%s7] sm:$0x1]
        %v1159 = vlaneseq
        %v1160 = vshrl.u32 %v1159, 7
        %v1161 = vsub.s32 0, %v1160
        %v1162 = vrot.slane %v1157, %v1161
        %1164 = vmatprep.subr.mxu0 0.0
        %1165 = vmatpush1.msra.mxu0 %v1077
        %1166 = vmatprep.subr.mxu0 0.0
        %1167 = vmatpush1.msra.mxu0 %v1078
        %1168 = vmatprep.subr.mxu0 0.0
        %1169 = vmatpush1.msra.mxu0 %v1079
        %1170 = vmatprep.subr.mxu0 0.0
        %1171 = vmatpush1.msra.mxu0 %v1080
        %1172 = vmatprep.subr.mxu0 0.0
        %1173 = vmatpush1.msra.mxu0 %v1081
        %1174 = vmatprep.subr.mxu0 0.0
        %1175 = vmatpush1.msra.mxu0 %v1082
        %1176 = vmatprep.subr.mxu0 0.0
        %1177 = vmatpush1.msra.mxu0 %v1083
        %1178 = vmatprep.subr.mxu0 0.0
        %1179 = vmatpush1.msra.mxu0 %v1084
        %1180 = vmatprep.subr.mxu0 0.0
        %1181 = vmatpush1.msra.mxu0 %v1085
        %1182 = vmatprep.subr.mxu0 0.0
        %1183 = vmatpush1.msra.mxu0 %v1086
        %1184 = vmatprep.subr.mxu0 0.0
        %1185 = vmatpush1.msra.mxu0 %v1087
        %1186 = vmatprep.subr.mxu0 0.0
        %1187 = vmatpush1.msra.mxu0 %v1088
        %1188 = vmatprep.subr.mxu0 0.0
        %1189 = vmatpush1.msra.mxu0 %v1089
        %1190 = vmatprep.subr.mxu0 0.0
        %1191 = vmatpush1.msra.mxu0 %v1090
        %1192 = vmatprep.subr.mxu0 0.0
        %1193 = vmatpush1.msra.mxu0 %v1091
        %1194 = vmatprep.subr.mxu0 0.0
        %1195 = vmatpush1.msra.mxu0 %v1092
        %1196 = vmatprep.subr.mxu0 0.0
        %1197 = vmatpush1.msra.mxu0 %v1093
        %1198 = vmatprep.subr.mxu0 0.0
        %1199 = vmatpush1.msra.mxu0 %v1094
        %1200 = vmatprep.subr.mxu0 0.0
        %1201 = vmatpush1.msra.mxu0 %v1095
        %1202 = vmatprep.subr.mxu0 0.0
        %1203 = vmatpush1.msra.mxu0 %v1096
        %1204 = vmatprep.subr.mxu0 0.0
        %1205 = vmatpush1.msra.mxu0 %v1097
        %1206 = vmatprep.subr.mxu0 0.0
        %1207 = vmatpush1.msra.mxu0 %v1098
        %1208 = vmatprep.subr.mxu0 0.0
        %1209 = vmatpush1.msra.mxu0 %v1099
        %1210 = vmatprep.subr.mxu0 0.0
        %1211 = vmatpush1.msra.mxu0 %v1100
        %1212 = vmatprep.subr.mxu0 0.0
        %1213 = vmatpush1.msra.mxu0 %v1101
        %1214 = vmatprep.subr.mxu0 0.0
        %1215 = vmatpush1.msra.mxu0 %v1102
        %1216 = vmatprep.subr.mxu0 0.0
        %1217 = vmatpush1.msra.mxu0 %v1103
        %1218 = vmatprep.subr.mxu0 0.0
        %1219 = vmatpush1.msra.mxu0 %v1104
        %1220 = vmatprep.subr.mxu0 0.0
        %1221 = vmatpush1.msra.mxu0 %v1105
        %1222 = vmatprep.subr.mxu0 0.0
        %1223 = vmatpush1.msra.mxu0 %v1106
        %1224 = vmatprep.subr.mxu0 0.0
        %1225 = vmatpush1.msra.mxu0 %v1107
        %1226 = vmatprep.subr.mxu0 0.0
        %1227 = vmatpush1.msra.mxu0 %v1108
        %1228 = vmatprep.mubr.f32.mxu0 %v1053
        %1229 = vmatmul.mubr.f32.gmra.mrb[0].mxu0 %v1052
        %v1230 = vpop.f32.mrb[0].mxu0
        %v1231 = vadd.f32 %v1162, %v1230
        %v1232 = vpop.f32.mrb[0].mxu0
        %1233 = vmatprep.mubr.f32.mxu0 %v1058
        %1234 = vmatmul.mubr.f32.gmra.mrb[0].mxu0 %v1057
        %v1235 = vpop.f32.mrb[0].mxu0
        %v1236 = vadd.f32 %v1162, %v1235
        %v1237 = vpop.f32.mrb[0].mxu0
        %1238 = vmatprep.mubr.f32.mxu0 %v1063
        %1239 = vmatmul.mubr.f32.gmra.mrb[0].mxu0 %v1062
        %v1240 = vpop.f32.mrb[0].mxu0
        %v1241 = vadd.f32 %v1162, %v1240
        %v1242 = vpop.f32.mrb[0].mxu0
        %1243 = vmatprep.mubr.f32.mxu0 %v1068
        %1244 = vmatmul.mubr.f32.gmra.mrb[0].mxu0 %v1067
        %v1245 = vpop.f32.mrb[0].mxu0
        %v1246 = vadd.f32 %v1162, %v1245
        %v1247 = vpop.f32.mrb[0].mxu0
        %1248 = vmatprep.mubr.f32.mxu0 %v1073
        %1249 = vmatmul.mubr.f32.gmra.mrb[0].mxu0 %v1072
        %v1250 = vpop.f32.mrb[0].mxu0
        %v1251 = vadd.f32 %v1162, %v1250
        %v1252 = vpop.f32.mrb[0].mxu0
        %1253 = vdwg.mxu0
        %1254 = vmatprep.subr.mxu0 0.0
        %1255 = vmatpush1.msra.mxu0 %v1109
        %1256 = vmatprep.subr.mxu0 0.0
        %1257 = vmatpush1.msra.mxu0 %v1110
        %1258 = vmatprep.subr.mxu0 0.0
        %1259 = vmatpush1.msra.mxu0 %v1111
        %1260 = vmatprep.subr.mxu0 0.0
        %1261 = vmatpush1.msra.mxu0 %v1112
        %1262 = vmatprep.subr.mxu0 0.0
        %1263 = vmatpush1.msra.mxu0 %v1113
        %1264 = vmatprep.subr.mxu0 0.0
        %1265 = vmatpush1.msra.mxu0 %v1114
        %1266 = vmatprep.subr.mxu0 0.0
        %1267 = vmatpush1.msra.mxu0 %v1115
        %1268 = vmatprep.subr.mxu0 0.0
        %1269 = vmatpush1.msra.mxu0 %v1116
        %1270 = vmatprep.subr.mxu0 0.0
        %1271 = vmatpush1.msra.mxu0 %v1117
        %1272 = vmatprep.subr.mxu0 0.0
        %1273 = vmatpush1.msra.mxu0 %v1118
        %1274 = vmatprep.subr.mxu0 0.0
        %1275 = vmatpush1.msra.mxu0 %v1119
        %1276 = vmatprep.subr.mxu0 0.0
        %1277 = vmatpush1.msra.mxu0 %v1120
        %1278 = vmatprep.subr.mxu0 0.0
        %1279 = vmatpush1.msra.mxu0 %v1121
        %1280 = vmatprep.subr.mxu0 0.0
        %1281 = vmatpush1.msra.mxu0 %v1122
        %1282 = vmatprep.subr.mxu0 0.0
        %1283 = vmatpush1.msra.mxu0 %v1123
        %1284 = vmatprep.subr.mxu0 0.0
        %1285 = vmatpush1.msra.mxu0 %v1124
        %1286 = vmatprep.subr.mxu0 0.0
        %1287 = vmatpush1.msra.mxu0 %v1125
        %1288 = vmatprep.subr.mxu0 0.0
        %1289 = vmatpush1.msra.mxu0 %v1126
        %1290 = vmatprep.subr.mxu0 0.0
        %1291 = vmatpush1.msra.mxu0 %v1127
        %1292 = vmatprep.subr.mxu0 0.0
        %1293 = vmatpush1.msra.mxu0 %v1128
        %1294 = vmatprep.subr.mxu0 0.0
        %1295 = vmatpush1.msra.mxu0 %v1129
        %1296 = vmatprep.subr.mxu0 0.0
        %1297 = vmatpush1.msra.mxu0 %v1130
        %1298 = vmatprep.subr.mxu0 0.0
        %1299 = vmatpush1.msra.mxu0 %v1131
        %1300 = vmatprep.subr.mxu0 0.0
        %1301 = vmatpush1.msra.mxu0 %v1132
        %1302 = vmatprep.subr.mxu0 0.0
        %1303 = vmatpush1.msra.mxu0 %v1133
        %1304 = vmatprep.subr.mxu0 0.0
        %1305 = vmatpush1.msra.mxu0 %v1134
        %1306 = vmatprep.subr.mxu0 0.0
        %1307 = vmatpush1.msra.mxu0 %v1135
        %1308 = vmatprep.subr.mxu0 0.0
        %1309 = vmatpush1.msra.mxu0 %v1136
        %1310 = vmatprep.subr.mxu0 0.0
        %1311 = vmatpush1.msra.mxu0 %v1137
        %1312 = vmatprep.subr.mxu0 0.0
        %1313 = vmatpush1.msra.mxu0 %v1138
        %1314 = vmatprep.subr.mxu0 0.0
        %1315 = vmatpush1.msra.mxu0 %v1139
        %1316 = vmatprep.subr.mxu0 0.0
        %1317 = vmatpush1.msra.mxu0 %v1140
        %1318 = vmatprep.mubr.f32.mxu0 %v1055
        %1319 = vmatmul.mubr.f32.gmra.mrb[0].mxu0 %v1054
        %v1320 = vpop.f32.mrb[0].mxu0
        %v1321 = vadd.f32 %v1231, %v1320
        %v1322 = vpop.f32.mrb[0].mxu0
        %1323 = vmatprep.mubr.f32.mxu0 %v1060
        %1324 = vmatmul.mubr.f32.gmra.mrb[0].mxu0 %v1059
        %v1325 = vpop.f32.mrb[0].mxu0
        %v1326 = vadd.f32 %v1236, %v1325
        %v1327 = vpop.f32.mrb[0].mxu0
        %1328 = vmatprep.mubr.f32.mxu0 %v1065
        %1329 = vmatmul.mubr.f32.gmra.mrb[0].mxu0 %v1064
        %v1330 = vpop.f32.mrb[0].mxu0
        %v1331 = vadd.f32 %v1241, %v1330
        %v1332 = vpop.f32.mrb[0].mxu0
        %1333 = vmatprep.mubr.f32.mxu0 %v1070
        %1334 = vmatmul.mubr.f32.gmra.mrb[0].mxu0 %v1069
        %v1335 = vpop.f32.mrb[0].mxu0
        %v1336 = vadd.f32 %v1246, %v1335
        %v1337 = vpop.f32.mrb[0].mxu0
        %1338 = vmatprep.mubr.f32.mxu0 %v1075
        %1339 = vmatmul.mubr.f32.gmra.mrb[0].mxu0 %v1074
        %v1340 = vpop.f32.mrb[0].mxu0
        %v1341 = vadd.f32 %v1251, %v1340
        %v1342 = vpop.f32.mrb[0].mxu0
        %1343 = vdwg.mxu0
        %1344 = vmatprep.subr.mxu0 0.0
        %1345 = vmatpush1.msra.mxu0 %v1141
        %1346 = vmatprep.subr.mxu0 0.0
        %1347 = vmatpush1.msra.mxu0 %v1142
        %1348 = vmatprep.subr.mxu0 0.0
        %1349 = vmatpush1.msra.mxu0 %v1143
        %1350 = vmatprep.subr.mxu0 0.0
        %1351 = vmatpush1.msra.mxu0 %v1144
        %1352 = vmatprep.subr.mxu0 0.0
        %1353 = vmatpush1.msra.mxu0 %v1145
        %1354 = vmatprep.subr.mxu0 0.0
        %1355 = vmatpush1.msra.mxu0 %v1146
        %1356 = vmatprep.subr.mxu0 0.0
        %1357 = vmatpush1.msra.mxu0 %v1147
        %1358 = vmatprep.subr.mxu0 0.0
        %1359 = vmatpush1.msra.mxu0 %v1148
        %1360 = vmatprep.subr.mxu0 0.0
        %1361 = vmatpush1.msra.mxu0 %v1149
        %1362 = vmatprep.subr.mxu0 0.0
        %1363 = vmatpush1.msra.mxu0 %v1150
        %1364 = vmatprep.subr.mxu0 0.0
        %1365 = vmatpush1.msra.mxu0 %v1151
        %1366 = vmatprep.subr.mxu0 0.0
        %1367 = vmatpush1.msra.mxu0 %v1152
        %1368 = vmatprep.subr.mxu0 0.0
        %1369 = vmatpush1.msra.mxu0 %v1153
        %1370 = vmatprep.subr.mxu0 0.0
        %1371 = vmatpush1.msra.mxu0 %v1154
        %1372 = vmatprep.subr.mxu0 0.0
        %1373 = vmatpush1.msra.mxu0 %v1155
        %1374 = vmatprep.subr.mxu0 0.0
        %1375 = vmatpush1.msra.mxu0 %v1156
        %1376 = vmatprep.subr.mxu0 0.0
        %1377 = vmatpush1.msra.mxu0 0.0
        %1378 = vmatprep.subr.mxu0 0.0
        %1379 = vmatpush1.msra.mxu0 0.0
        %1380 = vmatprep.subr.mxu0 0.0
        %1381 = vmatpush1.msra.mxu0 0.0
        %1382 = vmatprep.subr.mxu0 0.0
        %1383 = vmatpush1.msra.mxu0 0.0
        %1384 = vmatprep.subr.mxu0 0.0
        %1385 = vmatpush1.msra.mxu0 0.0
        %1386 = vmatprep.subr.mxu0 0.0
        %1387 = vmatpush1.msra.mxu0 0.0
        %1388 = vmatprep.subr.mxu0 0.0
        %1389 = vmatpush1.msra.mxu0 0.0
        %1390 = vmatprep.subr.mxu0 0.0
        %1391 = vmatpush1.msra.mxu0 0.0
        %1392 = vmatprep.subr.mxu0 0.0
        %1393 = vmatpush1.msra.mxu0 0.0
        %1394 = vmatprep.subr.mxu0 0.0
        %1395 = vmatpush1.msra.mxu0 0.0
        %1396 = vmatprep.subr.mxu0 0.0
        %1397 = vmatpush1.msra.mxu0 0.0
        %1398 = vmatprep.subr.mxu0 0.0
        %1399 = vmatpush1.msra.mxu0 0.0
        %1400 = vmatprep.subr.mxu0 0.0
        %1401 = vmatpush1.msra.mxu0 0.0
        %1402 = vmatprep.subr.mxu0 0.0
        %1403 = vmatpush1.msra.mxu0 0.0
        %1404 = vmatprep.subr.mxu0 0.0
        %1405 = vmatpush1.msra.mxu0 0.0
        %1406 = vmatprep.subr.mxu0 0.0
        %1407 = vmatpush1.msra.mxu0 0.0
        %1408 = vmatprep.mubr.f32.mxu0 0.0
        %1409 = vmatmul.mubr.f32.gmra.mrb[0].mxu0 %v1056
        %v1410 = vpop.f32.mrb[0].mxu0
        %v1411 = vadd.f32 %v1321, %v1410
        %v1412 = vpop.f32.mrb[0].mxu0
        %1413 = vmatprep.mubr.f32.mxu0 0.0
        %1414 = vmatmul.mubr.f32.gmra.mrb[0].mxu0 %v1061
        %v1415 = vpop.f32.mrb[0].mxu0
        %v1416 = vadd.f32 %v1326, %v1415
        %v1417 = vpop.f32.mrb[0].mxu0
        %1418 = vmatprep.mubr.f32.mxu0 0.0
        %1419 = vmatmul.mubr.f32.gmra.mrb[0].mxu0 %v1066
        %v1420 = vpop.f32.mrb[0].mxu0
        %v1421 = vadd.f32 %v1331, %v1420
        %v1422 = vpop.f32.mrb[0].mxu0
        %1423 = vmatprep.mubr.f32.mxu0 0.0
        %1424 = vmatmul.mubr.f32.gmra.mrb[0].mxu0 %v1071
        %v1425 = vpop.f32.mrb[0].mxu0
        %v1426 = vadd.f32 %v1336, %v1425
        %v1427 = vpop.f32.mrb[0].mxu0
        %1428 = vmatprep.mubr.f32.mxu0 0.0
        %1429 = vmatmul.mubr.f32.gmra.mrb[0].mxu0 %v1076
        %v1430 = vpop.f32.mrb[0].mxu0
        %v1431 = vadd.f32 %v1341, %v1430
        %v1432 = vpop.f32.mrb[0].mxu0
        %1433 = vdwg.mxu0
        %v1434 = vtanh.pop %v1411
        %v1435 = vtanh.pop %v1416
        %v1436 = vtanh.pop %v1421
        %v1437 = vtanh.pop %v1426
        %v1438 = vtanh.pop %v1431
        %vm1439 = vcmask 1043456
        %v1440 = vrot.slane %v526, 4
        %v1441 = vrot.slane %v527, 4
        %v1442 = vsel %vm1439, %v1440, %v1441
        %v1443 = vrot.slane %v528, 4
        %v1444 = vsel %vm1439, %v1441, %v1443
        %v1445 = vrot.slane %v529, 4
        %v1446 = vsel %vm1439, %v1443, %v1445
        %v1447 = vrot.slane %v530, 4
        %v1448 = vsel %vm1439, %v1445, %v1447
        %v1454 = vmul.f32 %v1434, %v1442
        %v1455 = vmul.f32 %v1435, %v1444
        %v1456 = vmul.f32 %v1436, %v1446
        %v1457 = vmul.f32 %v1437, %v1448
        %v1458 = vmul.f32 %v1438, %v1447
        %1459 = vst [vmem:[#allocation3 + $0x4] sm:$0xff] %v1454
        %1460 = vst [vmem:[#allocation3 + $0xc] sm:$0xff] %v1455
        %1461 = vst [vmem:[#allocation3 + $0x14] sm:$0xff] %v1456
        %1462 = vst [vmem:[#allocation3 + $0x1c] sm:$0xff] %v1457
        %1463 = vst [vmem:[#allocation3 + $0x24] sm:$0xf] %v1458
        %v1464 = vld [vmem:[#allocation3 + $0x4] sm:$0xff]
        %v1465 = vld [vmem:[#allocation3 + $0xc] sm:$0xff]
        %v1466 = vld [vmem:[#allocation3 + $0x14] sm:$0xff]
        %v1467 = vld [vmem:[#allocation3 + $0x1c] sm:$0xff]
        %1468 = vst [vmem:[#allocation4] sm:$0xff] %v1464
        %1469 = vst [vmem:[#allocation4 + $0x28] sm:$0xff] %v1465
        %1470 = vst [vmem:[#allocation4 + $0x50] sm:$0xff] %v1466
        %1471 = vst [vmem:[#allocation4 + $0x78] sm:$0xff] %v1467
        %v1472 = vld [vmem:[#allocation3 + $0x5] sm:$0xff]
        %v1473 = vld [vmem:[#allocation3 + $0xd] sm:$0xff]
        %v1474 = vld [vmem:[#allocation3 + $0x15] sm:$0xff]
        %v1475 = vld [vmem:[#allocation3 + $0x1d] sm:$0xff]
        %1476 = vst [vmem:[#allocation4 + $0x8] sm:$0xff] %v1472
        %1477 = vst [vmem:[#allocation4 + $0x30] sm:$0xff] %v1473
        %1478 = vst [vmem:[#allocation4 + $0x58] sm:$0xff] %v1474
        %1479 = vst [vmem:[#allocation4 + $0x80] sm:$0xff] %v1475
        %v1480 = vld [vmem:[#allocation3 + $0x6] sm:$0xff]
        %v1481 = vld [vmem:[#allocation3 + $0xe] sm:$0xff]
        %v1482 = vld [vmem:[#allocation3 + $0x16] sm:$0xff]
        %v1483 = vld [vmem:[#allocation3 + $0x1e] sm:$0xff]
        %1484 = vst [vmem:[#allocation4 + $0x10] sm:$0xff] %v1480
        %1485 = vst [vmem:[#allocation4 + $0x38] sm:$0xff] %v1481
        %1486 = vst [vmem:[#allocation4 + $0x60] sm:$0xff] %v1482
        %1487 = vst [vmem:[#allocation4 + $0x88] sm:$0xff] %v1483
        %v1488 = vld [vmem:[#allocation3 + $0x7] sm:$0xff]
        %v1489 = vld [vmem:[#allocation3 + $0xf] sm:$0xff]
        %v1490 = vld [vmem:[#allocation3 + $0x17] sm:$0xff]
        %v1491 = vld [vmem:[#allocation3 + $0x1f] sm:$0xff]
        %1492 = vst [vmem:[#allocation4 + $0x18] sm:$0xff] %v1488
        %1493 = vst [vmem:[#allocation4 + $0x40] sm:$0xff] %v1489
        %1494 = vst [vmem:[#allocation4 + $0x68] sm:$0xff] %v1490
        %1495 = vst [vmem:[#allocation4 + $0x90] sm:$0xff] %v1491
        %v1496 = vld [vmem:[#allocation3 + $0x8] sm:$0xff]
        %v1497 = vld [vmem:[#allocation3 + $0x10] sm:$0xff]
        %v1498 = vld [vmem:[#allocation3 + $0x18] sm:$0xff]
        %v1499 = vld [vmem:[#allocation3 + $0x20] sm:$0xff]
        %1500 = vst [vmem:[#allocation4 + $0x20] sm:$0xff] %v1496
        %1501 = vst [vmem:[#allocation4 + $0x48] sm:$0xff] %v1497
        %1502 = vst [vmem:[#allocation4 + $0x70] sm:$0xff] %v1498
        %1503 = vst [vmem:[#allocation4 + $0x98] sm:$0xff] %v1499
        %v1504 = vld [vmem:[#allocation4] sm:$0xff]
        %v1505 = vld [vmem:[#allocation4 + $0x8] sm:$0xff]
        %v1506 = vld [vmem:[#allocation4 + $0x10] sm:$0xff]
        %v1507 = vld [vmem:[#allocation4 + $0x18] sm:$0xff]
        %v1508 = vld [vmem:[#allocation4 + $0x20] sm:$0xff]
        %v1509 = vld [vmem:[#allocation4 + $0x28] sm:$0xff]
        %v1510 = vld [vmem:[#allocation4 + $0x30] sm:$0xff]
        %v1511 = vld [vmem:[#allocation4 + $0x38] sm:$0xff]
        %v1512 = vld [vmem:[#allocation4 + $0x40] sm:$0xff]
        %v1513 = vld [vmem:[#allocation4 + $0x48] sm:$0xff]
        %v1514 = vld [vmem:[#allocation4 + $0x50] sm:$0xff]
        %v1515 = vld [vmem:[#allocation4 + $0x58] sm:$0xff]
        %v1516 = vld [vmem:[#allocation4 + $0x60] sm:$0xff]
        %v1517 = vld [vmem:[#allocation4 + $0x68] sm:$0xff]
        %v1518 = vld [vmem:[#allocation4 + $0x70] sm:$0xff]
        %v1519 = vld [vmem:[#allocation4 + $0x78] sm:$0xff]
        %v1520 = vld [vmem:[#allocation4 + $0x80] sm:$0xff]
        %v1521 = vld [vmem:[#allocation4 + $0x88] sm:$0xff]
        %v1522 = vld [vmem:[#allocation4 + $0x90] sm:$0xff]
        %v1523 = vld [vmem:[#allocation4 + $0x98] sm:$0xff]
        %v1524 = vld [vmem:[#allocation10] sm:$0xff]
        %v1525 = vld [vmem:[#allocation10 + $0x8] sm:$0xff]
        %v1526 = vld [vmem:[#allocation10 + $0x10] sm:$0xff]
        %v1527 = vld [vmem:[#allocation10 + $0x18] sm:$0xff]
        %v1528 = vld [vmem:[#allocation10 + $0x20] sm:$0xff]
        %v1529 = vld [vmem:[#allocation10 + $0x28] sm:$0xff]
        %v1530 = vld [vmem:[#allocation10 + $0x30] sm:$0xff]
        %v1531 = vld [vmem:[#allocation10 + $0x38] sm:$0xff]
        %v1532 = vld [vmem:[#allocation10 + $0x40] sm:$0xff]
        %v1533 = vld [vmem:[#allocation10 + $0x48] sm:$0xff]
        %v1534 = vld [vmem:[#allocation10 + $0x50] sm:$0xff]
        %v1535 = vld [vmem:[#allocation10 + $0x58] sm:$0xff]
        %v1536 = vld [vmem:[#allocation10 + $0x60] sm:$0xff]
        %v1537 = vld [vmem:[#allocation10 + $0x68] sm:$0xff]
        %v1538 = vld [vmem:[#allocation10 + $0x70] sm:$0xff]
        %v1539 = vld [vmem:[#allocation10 + $0x78] sm:$0xff]
        %v1540 = vld [vmem:[#allocation10 + $0x80] sm:$0xff]
        %v1541 = vld [vmem:[#allocation10 + $0x88] sm:$0xff]
        %v1542 = vld [vmem:[#allocation10 + $0x90] sm:$0xff]
        %v1543 = vld [vmem:[#allocation10 + $0x98] sm:$0xff]
        %v1544 = vld [vmem:[#allocation10 + $0xa0] sm:$0xff]
        %v1545 = vld [vmem:[#allocation10 + $0xa8] sm:$0xff]
        %v1546 = vld [vmem:[#allocation10 + $0xb0] sm:$0xff]
        %v1547 = vld [vmem:[#allocation10 + $0xb8] sm:$0xff]
        %v1548 = vld [vmem:[#allocation10 + $0xc0] sm:$0xff]
        %v1549 = vld [vmem:[#allocation10 + $0xc8] sm:$0xff]
        %v1550 = vld [vmem:[#allocation10 + $0xd0] sm:$0xff]
        %v1551 = vld [vmem:[#allocation10 + $0xd8] sm:$0xff]
        %v1552 = vld [vmem:[#allocation10 + $0xe0] sm:$0xff]
        %v1553 = vld [vmem:[#allocation10 + $0xe8] sm:$0xff]
        %v1554 = vld [vmem:[#allocation10 + $0xf0] sm:$0xff]
        %v1555 = vld [vmem:[#allocation10 + $0xf8] sm:$0xff]
        %v1556 = vld [vmem:[#allocation10 + $0x100] sm:$0xff]
        %v1557 = vld [vmem:[#allocation10 + $0x108] sm:$0xff]
        %v1558 = vld [vmem:[#allocation10 + $0x110] sm:$0xff]
        %v1559 = vld [vmem:[#allocation10 + $0x118] sm:$0xff]
        %v1560 = vld [vmem:[#allocation10 + $0x120] sm:$0xff]
        %v1561 = vld [vmem:[#allocation10 + $0x128] sm:$0xff]
        %v1562 = vld [vmem:[#allocation10 + $0x130] sm:$0xff]
        %v1563 = vld [vmem:[#allocation10 + $0x138] sm:$0xff]
        %v1564 = vld [vmem:[#allocation10 + $0x140] sm:$0xff]
        %v1565 = vld [vmem:[#allocation10 + $0x148] sm:$0xff]
        %v1566 = vld [vmem:[#allocation10 + $0x150] sm:$0xff]
        %v1567 = vld [vmem:[#allocation10 + $0x158] sm:$0xff]
        %v1568 = vld [vmem:[#allocation10 + $0x160] sm:$0xff]
        %v1569 = vld [vmem:[#allocation10 + $0x168] sm:$0xff]
        %v1570 = vld [vmem:[#allocation10 + $0x170] sm:$0xff]
        %v1571 = vld [vmem:[#allocation10 + $0x178] sm:$0xff]
        %v1572 = vld [vmem:[#allocation10 + $0x180] sm:$0xff]
        %v1573 = vld [vmem:[#allocation10 + $0x188] sm:$0xff]
        %v1574 = vld [vmem:[#allocation10 + $0x190] sm:$0xff]
        %v1575 = vld [vmem:[#allocation10 + $0x198] sm:$0xff]
        %v1576 = vld [vmem:[#allocation10 + $0x1a0] sm:$0xff]
        %v1577 = vld [vmem:[#allocation10 + $0x1a8] sm:$0xff]
        %v1578 = vld [vmem:[#allocation10 + $0x1b0] sm:$0xff]
        %v1579 = vld [vmem:[#allocation10 + $0x1b8] sm:$0xff]
        %v1580 = vld [vmem:[#allocation10 + $0x1c0] sm:$0xff]
        %v1581 = vld [vmem:[#allocation10 + $0x1c8] sm:$0xff]
        %v1582 = vld [vmem:[#allocation10 + $0x1d0] sm:$0xff]
        %v1583 = vld [vmem:[#allocation10 + $0x1d8] sm:$0xff]
        %v1584 = vld [vmem:[#allocation10 + $0x1e0] sm:$0xff]
        %v1585 = vld [vmem:[#allocation10 + $0x1e8] sm:$0xff]
        %v1586 = vld [vmem:[#allocation10 + $0x1f0] sm:$0xff]
        %v1587 = vld [vmem:[#allocation10 + $0x1f8] sm:$0xff]
        %v1588 = vld [vmem:[#allocation10 + $0x200] sm:$0xff]
        %v1589 = vld [vmem:[#allocation10 + $0x208] sm:$0xff]
        %v1590 = vld [vmem:[#allocation10 + $0x210] sm:$0xff]
        %v1591 = vld [vmem:[#allocation10 + $0x218] sm:$0xff]
        %v1592 = vld [vmem:[#allocation10 + $0x220] sm:$0xff]
        %v1593 = vld [vmem:[#allocation10 + $0x228] sm:$0xff]
        %v1594 = vld [vmem:[#allocation10 + $0x230] sm:$0xff]
        %v1595 = vld [vmem:[#allocation10 + $0x238] sm:$0xff]
        %v1596 = vld [vmem:[#allocation10 + $0x240] sm:$0xff]
        %v1597 = vld [vmem:[#allocation10 + $0x248] sm:$0xff]
        %v1598 = vld [vmem:[#allocation10 + $0x250] sm:$0xff]
        %v1599 = vld [vmem:[#allocation10 + $0x258] sm:$0xff]
        %v1600 = vld [vmem:[#allocation10 + $0x260] sm:$0xff]
        %v1601 = vld [vmem:[#allocation10 + $0x268] sm:$0xff]
        %v1602 = vld [vmem:[#allocation10 + $0x270] sm:$0xff]
        %v1603 = vld [vmem:[#allocation10 + $0x278] sm:$0xff]
        %v1604 = vld [vmem:[%s8] sm:$0x1]
        %v1606 = vlaneseq
        %v1607 = vshrl.u32 %v1606, 7
        %v1608 = vsub.s32 0, %v1607
        %v1609 = vrot.slane %v1604, %v1608
        %1611 = vmatprep.subr.mxu0 0.0
        %1612 = vmatpush1.msra.mxu0 %v1524
        %1613 = vmatprep.subr.mxu0 0.0
        %1614 = vmatpush1.msra.mxu0 %v1525
        %1615 = vmatprep.subr.mxu0 0.0
        %1616 = vmatpush1.msra.mxu0 %v1526
        %1617 = vmatprep.subr.mxu0 0.0
        %1618 = vmatpush1.msra.mxu0 %v1527
        %1619 = vmatprep.subr.mxu0 0.0
        %1620 = vmatpush1.msra.mxu0 %v1528
        %1621 = vmatprep.subr.mxu0 0.0
        %1622 = vmatpush1.msra.mxu0 %v1529
        %1623 = vmatprep.subr.mxu0 0.0
        %1624 = vmatpush1.msra.mxu0 %v1530
        %1625 = vmatprep.subr.mxu0 0.0
        %1626 = vmatpush1.msra.mxu0 %v1531
        %1627 = vmatprep.subr.mxu0 0.0
        %1628 = vmatpush1.msra.mxu0 %v1532
        %1629 = vmatprep.subr.mxu0 0.0
        %1630 = vmatpush1.msra.mxu0 %v1533
        %1631 = vmatprep.subr.mxu0 0.0
        %1632 = vmatpush1.msra.mxu0 %v1534
        %1633 = vmatprep.subr.mxu0 0.0
        %1634 = vmatpush1.msra.mxu0 %v1535
        %1635 = vmatprep.subr.mxu0 0.0
        %1636 = vmatpush1.msra.mxu0 %v1536
        %1637 = vmatprep.subr.mxu0 0.0
        %1638 = vmatpush1.msra.mxu0 %v1537
        %1639 = vmatprep.subr.mxu0 0.0
        %1640 = vmatpush1.msra.mxu0 %v1538
        %1641 = vmatprep.subr.mxu0 0.0
        %1642 = vmatpush1.msra.mxu0 %v1539
        %1643 = vmatprep.subr.mxu0 0.0
        %1644 = vmatpush1.msra.mxu0 %v1540
        %1645 = vmatprep.subr.mxu0 0.0
        %1646 = vmatpush1.msra.mxu0 %v1541
        %1647 = vmatprep.subr.mxu0 0.0
        %1648 = vmatpush1.msra.mxu0 %v1542
        %1649 = vmatprep.subr.mxu0 0.0
        %1650 = vmatpush1.msra.mxu0 %v1543
        %1651 = vmatprep.subr.mxu0 0.0
        %1652 = vmatpush1.msra.mxu0 %v1544
        %1653 = vmatprep.subr.mxu0 0.0
        %1654 = vmatpush1.msra.mxu0 %v1545
        %1655 = vmatprep.subr.mxu0 0.0
        %1656 = vmatpush1.msra.mxu0 %v1546
        %1657 = vmatprep.subr.mxu0 0.0
        %1658 = vmatpush1.msra.mxu0 %v1547
        %1659 = vmatprep.subr.mxu0 0.0
        %1660 = vmatpush1.msra.mxu0 %v1548
        %1661 = vmatprep.subr.mxu0 0.0
        %1662 = vmatpush1.msra.mxu0 %v1549
        %1663 = vmatprep.subr.mxu0 0.0
        %1664 = vmatpush1.msra.mxu0 %v1550
        %1665 = vmatprep.subr.mxu0 0.0
        %1666 = vmatpush1.msra.mxu0 %v1551
        %1667 = vmatprep.subr.mxu0 0.0
        %1668 = vmatpush1.msra.mxu0 %v1552
        %1669 = vmatprep.subr.mxu0 0.0
        %1670 = vmatpush1.msra.mxu0 %v1553
        %1671 = vmatprep.subr.mxu0 0.0
        %1672 = vmatpush1.msra.mxu0 %v1554
        %1673 = vmatprep.subr.mxu0 0.0
        %1674 = vmatpush1.msra.mxu0 %v1555
        %1675 = vmatprep.mubr.f32.mxu0 %v1505
        %1676 = vmatmul.mubr.f32.gmra.mrb[0].mxu0 %v1504
        %v1677 = vpop.f32.mrb[0].mxu0
        %v1678 = vadd.f32 %v1609, %v1677
        %v1679 = vpop.f32.mrb[0].mxu0
        %1680 = vmatprep.mubr.f32.mxu0 %v1510
        %1681 = vmatmul.mubr.f32.gmra.mrb[0].mxu0 %v1509
        %v1682 = vpop.f32.mrb[0].mxu0
        %v1683 = vadd.f32 %v1609, %v1682
        %v1684 = vpop.f32.mrb[0].mxu0
        %1685 = vmatprep.mubr.f32.mxu0 %v1515
        %1686 = vmatmul.mubr.f32.gmra.mrb[0].mxu0 %v1514
        %v1687 = vpop.f32.mrb[0].mxu0
        %v1688 = vadd.f32 %v1609, %v1687
        %v1689 = vpop.f32.mrb[0].mxu0
        %1690 = vmatprep.mubr.f32.mxu0 %v1520
        %1691 = vmatmul.mubr.f32.gmra.mrb[0].mxu0 %v1519
        %v1692 = vpop.f32.mrb[0].mxu0
        %v1693 = vadd.f32 %v1609, %v1692
        %v1694 = vpop.f32.mrb[0].mxu0
        %1695 = vdwg.mxu0
        %1696 = vmatprep.subr.mxu0 0.0
        %1697 = vmatpush1.msra.mxu0 %v1556
        %1698 = vmatprep.subr.mxu0 0.0
        %1699 = vmatpush1.msra.mxu0 %v1557
        %1700 = vmatprep.subr.mxu0 0.0
        %1701 = vmatpush1.msra.mxu0 %v1558
        %1702 = vmatprep.subr.mxu0 0.0
        %1703 = vmatpush1.msra.mxu0 %v1559
        %1704 = vmatprep.subr.mxu0 0.0
        %1705 = vmatpush1.msra.mxu0 %v1560
        %1706 = vmatprep.subr.mxu0 0.0
        %1707 = vmatpush1.msra.mxu0 %v1561
        %1708 = vmatprep.subr.mxu0 0.0
        %1709 = vmatpush1.msra.mxu0 %v1562
        %1710 = vmatprep.subr.mxu0 0.0
        %1711 = vmatpush1.msra.mxu0 %v1563
        %1712 = vmatprep.subr.mxu0 0.0
        %1713 = vmatpush1.msra.mxu0 %v1564
        %1714 = vmatprep.subr.mxu0 0.0
        %1715 = vmatpush1.msra.mxu0 %v1565
        %1716 = vmatprep.subr.mxu0 0.0
        %1717 = vmatpush1.msra.mxu0 %v1566
        %1718 = vmatprep.subr.mxu0 0.0
        %1719 = vmatpush1.msra.mxu0 %v1567
        %1720 = vmatprep.subr.mxu0 0.0
        %1721 = vmatpush1.msra.mxu0 %v1568
        %1722 = vmatprep.subr.mxu0 0.0
        %1723 = vmatpush1.msra.mxu0 %v1569
        %1724 = vmatprep.subr.mxu0 0.0
        %1725 = vmatpush1.msra.mxu0 %v1570
        %1726 = vmatprep.subr.mxu0 0.0
        %1727 = vmatpush1.msra.mxu0 %v1571
        %1728 = vmatprep.subr.mxu0 0.0
        %1729 = vmatpush1.msra.mxu0 %v1572
        %1730 = vmatprep.subr.mxu0 0.0
        %1731 = vmatpush1.msra.mxu0 %v1573
        %1732 = vmatprep.subr.mxu0 0.0
        %1733 = vmatpush1.msra.mxu0 %v1574
        %1734 = vmatprep.subr.mxu0 0.0
        %1735 = vmatpush1.msra.mxu0 %v1575
        %1736 = vmatprep.subr.mxu0 0.0
        %1737 = vmatpush1.msra.mxu0 %v1576
        %1738 = vmatprep.subr.mxu0 0.0
        %1739 = vmatpush1.msra.mxu0 %v1577
        %1740 = vmatprep.subr.mxu0 0.0
        %1741 = vmatpush1.msra.mxu0 %v1578
        %1742 = vmatprep.subr.mxu0 0.0
        %1743 = vmatpush1.msra.mxu0 %v1579
        %1744 = vmatprep.subr.mxu0 0.0
        %1745 = vmatpush1.msra.mxu0 %v1580
        %1746 = vmatprep.subr.mxu0 0.0
        %1747 = vmatpush1.msra.mxu0 %v1581
        %1748 = vmatprep.subr.mxu0 0.0
        %1749 = vmatpush1.msra.mxu0 %v1582
        %1750 = vmatprep.subr.mxu0 0.0
        %1751 = vmatpush1.msra.mxu0 %v1583
        %1752 = vmatprep.subr.mxu0 0.0
        %1753 = vmatpush1.msra.mxu0 %v1584
        %1754 = vmatprep.subr.mxu0 0.0
        %1755 = vmatpush1.msra.mxu0 %v1585
        %1756 = vmatprep.subr.mxu0 0.0
        %1757 = vmatpush1.msra.mxu0 %v1586
        %1758 = vmatprep.subr.mxu0 0.0
        %1759 = vmatpush1.msra.mxu0 %v1587
        %1760 = vmatprep.mubr.f32.mxu0 %v1507
        %1761 = vmatmul.mubr.f32.gmra.mrb[0].mxu0 %v1506
        %v1762 = vpop.f32.mrb[0].mxu0
        %v1763 = vadd.f32 %v1678, %v1762
        %v1764 = vpop.f32.mrb[0].mxu0
        %1765 = vmatprep.mubr.f32.mxu0 %v1512
        %1766 = vmatmul.mubr.f32.gmra.mrb[0].mxu0 %v1511
        %v1767 = vpop.f32.mrb[0].mxu0
        %v1768 = vadd.f32 %v1683, %v1767
        %v1769 = vpop.f32.mrb[0].mxu0
        %1770 = vmatprep.mubr.f32.mxu0 %v1517
        %1771 = vmatmul.mubr.f32.gmra.mrb[0].mxu0 %v1516
        %v1772 = vpop.f32.mrb[0].mxu0
        %v1773 = vadd.f32 %v1688, %v1772
        %v1774 = vpop.f32.mrb[0].mxu0
        %1775 = vmatprep.mubr.f32.mxu0 %v1522
        %1776 = vmatmul.mubr.f32.gmra.mrb[0].mxu0 %v1521
        %v1777 = vpop.f32.mrb[0].mxu0
        %v1778 = vadd.f32 %v1693, %v1777
        %v1779 = vpop.f32.mrb[0].mxu0
        %1780 = vdwg.mxu0
        %1781 = vmatprep.subr.mxu0 0.0
        %1782 = vmatpush1.msra.mxu0 %v1588
        %1783 = vmatprep.subr.mxu0 0.0
        %1784 = vmatpush1.msra.mxu0 %v1589
        %1785 = vmatprep.subr.mxu0 0.0
        %1786 = vmatpush1.msra.mxu0 %v1590
        %1787 = vmatprep.subr.mxu0 0.0
        %1788 = vmatpush1.msra.mxu0 %v1591
        %1789 = vmatprep.subr.mxu0 0.0
        %1790 = vmatpush1.msra.mxu0 %v1592
        %1791 = vmatprep.subr.mxu0 0.0
        %1792 = vmatpush1.msra.mxu0 %v1593
        %1793 = vmatprep.subr.mxu0 0.0
        %1794 = vmatpush1.msra.mxu0 %v1594
        %1795 = vmatprep.subr.mxu0 0.0
        %1796 = vmatpush1.msra.mxu0 %v1595
        %1797 = vmatprep.subr.mxu0 0.0
        %1798 = vmatpush1.msra.mxu0 %v1596
        %1799 = vmatprep.subr.mxu0 0.0
        %1800 = vmatpush1.msra.mxu0 %v1597
        %1801 = vmatprep.subr.mxu0 0.0
        %1802 = vmatpush1.msra.mxu0 %v1598
        %1803 = vmatprep.subr.mxu0 0.0
        %1804 = vmatpush1.msra.mxu0 %v1599
        %1805 = vmatprep.subr.mxu0 0.0
        %1806 = vmatpush1.msra.mxu0 %v1600
        %1807 = vmatprep.subr.mxu0 0.0
        %1808 = vmatpush1.msra.mxu0 %v1601
        %1809 = vmatprep.subr.mxu0 0.0
        %1810 = vmatpush1.msra.mxu0 %v1602
        %1811 = vmatprep.subr.mxu0 0.0
        %1812 = vmatpush1.msra.mxu0 %v1603
        %1813 = vmatprep.subr.mxu0 0.0
        %1814 = vmatpush1.msra.mxu0 0.0
        %1815 = vmatprep.subr.mxu0 0.0
        %1816 = vmatpush1.msra.mxu0 0.0
        %1817 = vmatprep.subr.mxu0 0.0
        %1818 = vmatpush1.msra.mxu0 0.0
        %1819 = vmatprep.subr.mxu0 0.0
        %1820 = vmatpush1.msra.mxu0 0.0
        %1821 = vmatprep.subr.mxu0 0.0
        %1822 = vmatpush1.msra.mxu0 0.0
        %1823 = vmatprep.subr.mxu0 0.0
        %1824 = vmatpush1.msra.mxu0 0.0
        %1825 = vmatprep.subr.mxu0 0.0
        %1826 = vmatpush1.msra.mxu0 0.0
        %1827 = vmatprep.subr.mxu0 0.0
        %1828 = vmatpush1.msra.mxu0 0.0
        %1829 = vmatprep.subr.mxu0 0.0
        %1830 = vmatpush1.msra.mxu0 0.0
        %1831 = vmatprep.subr.mxu0 0.0
        %1832 = vmatpush1.msra.mxu0 0.0
        %1833 = vmatprep.subr.mxu0 0.0
        %1834 = vmatpush1.msra.mxu0 0.0
        %1835 = vmatprep.subr.mxu0 0.0
        %1836 = vmatpush1.msra.mxu0 0.0
        %1837 = vmatprep.subr.mxu0 0.0
        %1838 = vmatpush1.msra.mxu0 0.0
        %1839 = vmatprep.subr.mxu0 0.0
        %1840 = vmatpush1.msra.mxu0 0.0
        %1841 = vmatprep.subr.mxu0 0.0
        %1842 = vmatpush1.msra.mxu0 0.0
        %1843 = vmatprep.subr.mxu0 0.0
        %1844 = vmatpush1.msra.mxu0 0.0
        %1845 = vmatprep.mubr.f32.mxu0 0.0
        %1846 = vmatmul.mubr.f32.gmra.mrb[0].mxu0 %v1508
        %v1847 = vpop.f32.mrb[0].mxu0
        %v1848 = vadd.f32 %v1763, %v1847
        %v1849 = vpop.f32.mrb[0].mxu0
        %1850 = vmatprep.mubr.f32.mxu0 0.0
        %1851 = vmatmul.mubr.f32.gmra.mrb[0].mxu0 %v1513
        %v1852 = vpop.f32.mrb[0].mxu0
        %v1853 = vadd.f32 %v1768, %v1852
        %v1854 = vpop.f32.mrb[0].mxu0
        %1855 = vmatprep.mubr.f32.mxu0 0.0
        %1856 = vmatmul.mubr.f32.gmra.mrb[0].mxu0 %v1518
        %v1857 = vpop.f32.mrb[0].mxu0
        %v1858 = vadd.f32 %v1773, %v1857
        %v1859 = vpop.f32.mrb[0].mxu0
        %1860 = vmatprep.mubr.f32.mxu0 0.0
        %1861 = vmatmul.mubr.f32.gmra.mrb[0].mxu0 %v1523
        %v1862 = vpop.f32.mrb[0].mxu0
        %v1863 = vadd.f32 %v1778, %v1862
        %v1864 = vpop.f32.mrb[0].mxu0
        %1865 = vdwg.mxu0
        %v1866 = vtanh.pop %v1848
        %v1867 = vtanh.pop %v1853
        %v1868 = vtanh.pop %v1858
        %v1869 = vtanh.pop %v1863
        %vm1870 = vcmask 1041408
        %v1871 = vrot.slane %v526, 6
        %v1872 = vrot.slane %v527, 6
        %v1873 = vsel %vm1870, %v1871, %v1872
        %v1874 = vrot.slane %v528, 6
        %v1875 = vsel %vm1870, %v1872, %v1874
        %v1876 = vrot.slane %v529, 6
        %v1877 = vsel %vm1870, %v1874, %v1876
        %v1878 = vrot.slane %v530, 6
        %v1879 = vsel %vm1870, %v1876, %v1878
        %v1884 = vmul.f32 %v1866, %v1873
        %v1885 = vmul.f32 %v1867, %v1875
        %v1886 = vmul.f32 %v1868, %v1877
        %v1887 = vmul.f32 %v1869, %v1879
        %1888 = vst [vmem:[#allocation2 + $0x6] sm:$0xff] %v1884
        %1889 = vst [vmem:[#allocation2 + $0xe] sm:$0xff] %v1885
        %1890 = vst [vmem:[#allocation2 + $0x16] sm:$0xff] %v1886
        %1891 = vst [vmem:[#allocation2 + $0x1e] sm:$0xff] %v1887
        %v1892 = vld [vmem:[#allocation2 + $0x6] sm:$0xff]
        %v1893 = vld [vmem:[#allocation2 + $0xe] sm:$0xff]
        %v1894 = vld [vmem:[#allocation2 + $0x16] sm:$0xff]
        %v1895 = vld [vmem:[#allocation2 + $0x1e] sm:$0xf]
        %1896 = vst [vmem:[#allocation4] sm:$0xff] %v1892
        %1897 = vst [vmem:[#allocation4 + $0x28] sm:$0xff] %v1893
        %1898 = vst [vmem:[#allocation4 + $0x50] sm:$0xff] %v1894
        %1899 = vst [vmem:[#allocation4 + $0x78] sm:$0xf] %v1895
        %v1900 = vld [vmem:[#allocation2 + $0x7] sm:$0xff]
        %v1901 = vld [vmem:[#allocation2 + $0xf] sm:$0xff]
        %v1902 = vld [vmem:[#allocation2 + $0x17] sm:$0xff]
        %v1903 = vld [vmem:[#allocation2 + $0x1f] sm:$0xf]
        %1904 = vst [vmem:[#allocation4 + $0x8] sm:$0xff] %v1900
        %1905 = vst [vmem:[#allocation4 + $0x30] sm:$0xff] %v1901
        %1906 = vst [vmem:[#allocation4 + $0x58] sm:$0xff] %v1902
        %1907 = vst [vmem:[#allocation4 + $0x80] sm:$0xf] %v1903
        %v1908 = vld [vmem:[#allocation2 + $0x8] sm:$0xff]
        %v1909 = vld [vmem:[#allocation2 + $0x10] sm:$0xff]
        %v1910 = vld [vmem:[#allocation2 + $0x18] sm:$0xff]
        %v1911 = vld [vmem:[#allocation2 + $0x20] sm:$0xf]
        %1912 = vst [vmem:[#allocation4 + $0x10] sm:$0xff] %v1908
        %1913 = vst [vmem:[#allocation4 + $0x38] sm:$0xff] %v1909
        %1914 = vst [vmem:[#allocation4 + $0x60] sm:$0xff] %v1910
        %1915 = vst [vmem:[#allocation4 + $0x88] sm:$0xf] %v1911
        %v1916 = vld [vmem:[#allocation2 + $0x9] sm:$0xff]
        %v1917 = vld [vmem:[#allocation2 + $0x11] sm:$0xff]
        %v1918 = vld [vmem:[#allocation2 + $0x19] sm:$0xff]
        %v1919 = vld [vmem:[#allocation2 + $0x21] sm:$0xf]
        %1920 = vst [vmem:[#allocation4 + $0x18] sm:$0xff] %v1916
        %1921 = vst [vmem:[#allocation4 + $0x40] sm:$0xff] %v1917
        %1922 = vst [vmem:[#allocation4 + $0x68] sm:$0xff] %v1918
        %1923 = vst [vmem:[#allocation4 + $0x90] sm:$0xf] %v1919
        %v1924 = vld [vmem:[#allocation2 + $0xa] sm:$0xff]
        %v1925 = vld [vmem:[#allocation2 + $0x12] sm:$0xff]
        %v1926 = vld [vmem:[#allocation2 + $0x1a] sm:$0xff]
        %v1927 = vld [vmem:[#allocation2 + $0x22] sm:$0xf]
        %1928 = vst [vmem:[#allocation4 + $0x20] sm:$0xff] %v1924
        %1929 = vst [vmem:[#allocation4 + $0x48] sm:$0xff] %v1925
        %1930 = vst [vmem:[#allocation4 + $0x70] sm:$0xff] %v1926
        %1931 = vst [vmem:[#allocation4 + $0x98] sm:$0xf] %v1927
        %v1932 = vld [vmem:[#allocation4] sm:$0xff]
        %v1933 = vld [vmem:[#allocation4 + $0x8] sm:$0xff]
        %v1934 = vld [vmem:[#allocation4 + $0x10] sm:$0xff]
        %v1935 = vld [vmem:[#allocation4 + $0x18] sm:$0xff]
        %v1936 = vld [vmem:[#allocation4 + $0x20] sm:$0xff]
        %v1937 = vld [vmem:[#allocation4 + $0x28] sm:$0xff]
        %v1938 = vld [vmem:[#allocation4 + $0x30] sm:$0xff]
        %v1939 = vld [vmem:[#allocation4 + $0x38] sm:$0xff]
        %v1940 = vld [vmem:[#allocation4 + $0x40] sm:$0xff]
        %v1941 = vld [vmem:[#allocation4 + $0x48] sm:$0xff]
        %v1942 = vld [vmem:[#allocation4 + $0x50] sm:$0xff]
        %v1943 = vld [vmem:[#allocation4 + $0x58] sm:$0xff]
        %v1944 = vld [vmem:[#allocation4 + $0x60] sm:$0xff]
        %v1945 = vld [vmem:[#allocation4 + $0x68] sm:$0xff]
        %v1946 = vld [vmem:[#allocation4 + $0x70] sm:$0xff]
        %v1947 = vld [vmem:[#allocation4 + $0x78] sm:$0xf]
        %v1948 = vld [vmem:[#allocation4 + $0x80] sm:$0xf]
        %v1949 = vld [vmem:[#allocation4 + $0x88] sm:$0xf]
        %v1950 = vld [vmem:[#allocation4 + $0x90] sm:$0xf]
        %v1951 = vld [vmem:[#allocation4 + $0x98] sm:$0xf]
        %v1952 = vld [vmem:[#allocation11] sm:$0xff]
        %v1953 = vld [vmem:[#allocation11 + $0x8] sm:$0xff]
        %v1954 = vld [vmem:[#allocation11 + $0x10] sm:$0xff]
        %v1955 = vld [vmem:[#allocation11 + $0x18] sm:$0xff]
        %v1956 = vld [vmem:[#allocation11 + $0x20] sm:$0xff]
        %v1957 = vld [vmem:[#allocation11 + $0x28] sm:$0xff]
        %v1958 = vld [vmem:[#allocation11 + $0x30] sm:$0xff]
        %v1959 = vld [vmem:[#allocation11 + $0x38] sm:$0xff]
        %v1960 = vld [vmem:[#allocation11 + $0x40] sm:$0xff]
        %v1961 = vld [vmem:[#allocation11 + $0x48] sm:$0xff]
        %v1962 = vld [vmem:[#allocation11 + $0x50] sm:$0xff]
        %v1963 = vld [vmem:[#allocation11 + $0x58] sm:$0xff]
        %v1964 = vld [vmem:[#allocation11 + $0x60] sm:$0xff]
        %v1965 = vld [vmem:[#allocation11 + $0x68] sm:$0xff]
        %v1966 = vld [vmem:[#allocation11 + $0x70] sm:$0xff]
        %v1967 = vld [vmem:[#allocation11 + $0x78] sm:$0xff]
        %v1968 = vld [vmem:[#allocation11 + $0x80] sm:$0xff]
        %v1969 = vld [vmem:[#allocation11 + $0x88] sm:$0xff]
        %v1970 = vld [vmem:[#allocation11 + $0x90] sm:$0xff]
        %v1971 = vld [vmem:[#allocation11 + $0x98] sm:$0xff]
        %v1972 = vld [vmem:[#allocation11 + $0xa0] sm:$0xff]
        %v1973 = vld [vmem:[#allocation11 + $0xa8] sm:$0xff]
        %v1974 = vld [vmem:[#allocation11 + $0xb0] sm:$0xff]
        %v1975 = vld [vmem:[#allocation11 + $0xb8] sm:$0xff]
        %v1976 = vld [vmem:[#allocation11 + $0xc0] sm:$0xff]
        %v1977 = vld [vmem:[#allocation11 + $0xc8] sm:$0xff]
        %v1978 = vld [vmem:[#allocation11 + $0xd0] sm:$0xff]
        %v1979 = vld [vmem:[#allocation11 + $0xd8] sm:$0xff]
        %v1980 = vld [vmem:[#allocation11 + $0xe0] sm:$0xff]
        %v1981 = vld [vmem:[#allocation11 + $0xe8] sm:$0xff]
        %v1982 = vld [vmem:[#allocation11 + $0xf0] sm:$0xff]
        %v1983 = vld [vmem:[#allocation11 + $0xf8] sm:$0xff]
        %v1984 = vld [vmem:[#allocation11 + $0x100] sm:$0xff]
        %v1985 = vld [vmem:[#allocation11 + $0x108] sm:$0xff]
        %v1986 = vld [vmem:[#allocation11 + $0x110] sm:$0xff]
        %v1987 = vld [vmem:[#allocation11 + $0x118] sm:$0xff]
        %v1988 = vld [vmem:[#allocation11 + $0x120] sm:$0xff]
        %v1989 = vld [vmem:[#allocation11 + $0x128] sm:$0xff]
        %v1990 = vld [vmem:[#allocation11 + $0x130] sm:$0xff]
        %v1991 = vld [vmem:[#allocation11 + $0x138] sm:$0xff]
        %v1992 = vld [vmem:[#allocation11 + $0x140] sm:$0xff]
        %v1993 = vld [vmem:[#allocation11 + $0x148] sm:$0xff]
        %v1994 = vld [vmem:[#allocation11 + $0x150] sm:$0xff]
        %v1995 = vld [vmem:[#allocation11 + $0x158] sm:$0xff]
        %v1996 = vld [vmem:[#allocation11 + $0x160] sm:$0xff]
        %v1997 = vld [vmem:[#allocation11 + $0x168] sm:$0xff]
        %v1998 = vld [vmem:[#allocation11 + $0x170] sm:$0xff]
        %v1999 = vld [vmem:[#allocation11 + $0x178] sm:$0xff]
        %v2000 = vld [vmem:[#allocation11 + $0x180] sm:$0xff]
        %v2001 = vld [vmem:[#allocation11 + $0x188] sm:$0xff]
        %v2002 = vld [vmem:[#allocation11 + $0x190] sm:$0xff]
        %v2003 = vld [vmem:[#allocation11 + $0x198] sm:$0xff]
        %v2004 = vld [vmem:[#allocation11 + $0x1a0] sm:$0xff]
        %v2005 = vld [vmem:[#allocation11 + $0x1a8] sm:$0xff]
        %v2006 = vld [vmem:[#allocation11 + $0x1b0] sm:$0xff]
        %v2007 = vld [vmem:[#allocation11 + $0x1b8] sm:$0xff]
        %v2008 = vld [vmem:[#allocation11 + $0x1c0] sm:$0xff]
        %v2009 = vld [vmem:[#allocation11 + $0x1c8] sm:$0xff]
        %v2010 = vld [vmem:[#allocation11 + $0x1d0] sm:$0xff]
        %v2011 = vld [vmem:[#allocation11 + $0x1d8] sm:$0xff]
        %v2012 = vld [vmem:[#allocation11 + $0x1e0] sm:$0xff]
        %v2013 = vld [vmem:[#allocation11 + $0x1e8] sm:$0xff]
        %v2014 = vld [vmem:[#allocation11 + $0x1f0] sm:$0xff]
        %v2015 = vld [vmem:[#allocation11 + $0x1f8] sm:$0xff]
        %v2016 = vld [vmem:[#allocation11 + $0x200] sm:$0xff]
        %v2017 = vld [vmem:[#allocation11 + $0x208] sm:$0xff]
        %v2018 = vld [vmem:[#allocation11 + $0x210] sm:$0xff]
        %v2019 = vld [vmem:[#allocation11 + $0x218] sm:$0xff]
        %v2020 = vld [vmem:[#allocation11 + $0x220] sm:$0xff]
        %v2021 = vld [vmem:[#allocation11 + $0x228] sm:$0xff]
        %v2022 = vld [vmem:[#allocation11 + $0x230] sm:$0xff]
        %v2023 = vld [vmem:[#allocation11 + $0x238] sm:$0xff]
        %v2024 = vld [vmem:[#allocation11 + $0x240] sm:$0xff]
        %v2025 = vld [vmem:[#allocation11 + $0x248] sm:$0xff]
        %v2026 = vld [vmem:[#allocation11 + $0x250] sm:$0xff]
        %v2027 = vld [vmem:[#allocation11 + $0x258] sm:$0xff]
        %v2028 = vld [vmem:[#allocation11 + $0x260] sm:$0xff]
        %v2029 = vld [vmem:[#allocation11 + $0x268] sm:$0xff]
        %v2030 = vld [vmem:[#allocation11 + $0x270] sm:$0xff]
        %v2031 = vld [vmem:[#allocation11 + $0x278] sm:$0xff]
        %v2032 = vld [vmem:[%s9] sm:$0x1]
        %v2034 = vlaneseq
        %v2035 = vshrl.u32 %v2034, 7
        %v2036 = vsub.s32 0, %v2035
        %v2037 = vrot.slane %v2032, %v2036
        %2039 = vmatprep.subr.mxu0 0.0
        %2040 = vmatpush1.msra.mxu0 %v1952
        %2041 = vmatprep.subr.mxu0 0.0
        %2042 = vmatpush1.msra.mxu0 %v1953
        %2043 = vmatprep.subr.mxu0 0.0
        %2044 = vmatpush1.msra.mxu0 %v1954
        %2045 = vmatprep.subr.mxu0 0.0
        %2046 = vmatpush1.msra.mxu0 %v1955
        %2047 = vmatprep.subr.mxu0 0.0
        %2048 = vmatpush1.msra.mxu0 %v1956
        %2049 = vmatprep.subr.mxu0 0.0
        %2050 = vmatpush1.msra.mxu0 %v1957
        %2051 = vmatprep.subr.mxu0 0.0
        %2052 = vmatpush1.msra.mxu0 %v1958
        %2053 = vmatprep.subr.mxu0 0.0
        %2054 = vmatpush1.msra.mxu0 %v1959
        %2055 = vmatprep.subr.mxu0 0.0
        %2056 = vmatpush1.msra.mxu0 %v1960
        %2057 = vmatprep.subr.mxu0 0.0
        %2058 = vmatpush1.msra.mxu0 %v1961
        %2059 = vmatprep.subr.mxu0 0.0
        %2060 = vmatpush1.msra.mxu0 %v1962
        %2061 = vmatprep.subr.mxu0 0.0
        %2062 = vmatpush1.msra.mxu0 %v1963
        %2063 = vmatprep.subr.mxu0 0.0
        %2064 = vmatpush1.msra.mxu0 %v1964
        %2065 = vmatprep.subr.mxu0 0.0
        %2066 = vmatpush1.msra.mxu0 %v1965
        %2067 = vmatprep.subr.mxu0 0.0
        %2068 = vmatpush1.msra.mxu0 %v1966
        %2069 = vmatprep.subr.mxu0 0.0
        %2070 = vmatpush1.msra.mxu0 %v1967
        %2071 = vmatprep.subr.mxu0 0.0
        %2072 = vmatpush1.msra.mxu0 %v1968
        %2073 = vmatprep.subr.mxu0 0.0
        %2074 = vmatpush1.msra.mxu0 %v1969
        %2075 = vmatprep.subr.mxu0 0.0
        %2076 = vmatpush1.msra.mxu0 %v1970
        %2077 = vmatprep.subr.mxu0 0.0
        %2078 = vmatpush1.msra.mxu0 %v1971
        %2079 = vmatprep.subr.mxu0 0.0
        %2080 = vmatpush1.msra.mxu0 %v1972
        %2081 = vmatprep.subr.mxu0 0.0
        %2082 = vmatpush1.msra.mxu0 %v1973
        %2083 = vmatprep.subr.mxu0 0.0
        %2084 = vmatpush1.msra.mxu0 %v1974
        %2085 = vmatprep.subr.mxu0 0.0
        %2086 = vmatpush1.msra.mxu0 %v1975
        %2087 = vmatprep.subr.mxu0 0.0
        %2088 = vmatpush1.msra.mxu0 %v1976
        %2089 = vmatprep.subr.mxu0 0.0
        %2090 = vmatpush1.msra.mxu0 %v1977
        %2091 = vmatprep.subr.mxu0 0.0
        %2092 = vmatpush1.msra.mxu0 %v1978
        %2093 = vmatprep.subr.mxu0 0.0
        %2094 = vmatpush1.msra.mxu0 %v1979
        %2095 = vmatprep.subr.mxu0 0.0
        %2096 = vmatpush1.msra.mxu0 %v1980
        %2097 = vmatprep.subr.mxu0 0.0
        %2098 = vmatpush1.msra.mxu0 %v1981
        %2099 = vmatprep.subr.mxu0 0.0
        %2100 = vmatpush1.msra.mxu0 %v1982
        %2101 = vmatprep.subr.mxu0 0.0
        %2102 = vmatpush1.msra.mxu0 %v1983
        %2103 = vmatprep.mubr.f32.mxu0 %v1933
        %2104 = vmatmul.mubr.f32.gmra.mrb[0].mxu0 %v1932
        %v2105 = vpop.f32.mrb[0].mxu0
        %v2106 = vadd.f32 %v2037, %v2105
        %v2107 = vpop.f32.mrb[0].mxu0
        %2108 = vmatprep.mubr.f32.mxu0 %v1938
        %2109 = vmatmul.mubr.f32.gmra.mrb[0].mxu0 %v1937
        %v2110 = vpop.f32.mrb[0].mxu0
        %v2111 = vadd.f32 %v2037, %v2110
        %v2112 = vpop.f32.mrb[0].mxu0
        %2113 = vmatprep.mubr.f32.mxu0 %v1943
        %2114 = vmatmul.mubr.f32.gmra.mrb[0].mxu0 %v1942
        %v2115 = vpop.f32.mrb[0].mxu0
        %v2116 = vadd.f32 %v2037, %v2115
        %v2117 = vpop.f32.mrb[0].mxu0
        %2118 = vmatprep.mubr.f32.mxu0 %v1948
        %2119 = vmatmul.mubr.f32.gmra.mrb[0].mxu0 %v1947
        %v2120 = vpop.f32.mrb[0].mxu0
        %v2121 = vadd.f32 %v2037, %v2120
        %v2122 = vpop.f32.mrb[0].mxu0
        %2123 = vdwg.mxu0
        %2124 = vmatprep.subr.mxu0 0.0
        %2125 = vmatpush1.msra.mxu0 %v1984
        %2126 = vmatprep.subr.mxu0 0.0
        %2127 = vmatpush1.msra.mxu0 %v1985
        %2128 = vmatprep.subr.mxu0 0.0
        %2129 = vmatpush1.msra.mxu0 %v1986
        %2130 = vmatprep.subr.mxu0 0.0
        %2131 = vmatpush1.msra.mxu0 %v1987
        %2132 = vmatprep.subr.mxu0 0.0
        %2133 = vmatpush1.msra.mxu0 %v1988
        %2134 = vmatprep.subr.mxu0 0.0
        %2135 = vmatpush1.msra.mxu0 %v1989
        %2136 = vmatprep.subr.mxu0 0.0
        %2137 = vmatpush1.msra.mxu0 %v1990
        %2138 = vmatprep.subr.mxu0 0.0
        %2139 = vmatpush1.msra.mxu0 %v1991
        %2140 = vmatprep.subr.mxu0 0.0
        %2141 = vmatpush1.msra.mxu0 %v1992
        %2142 = vmatprep.subr.mxu0 0.0
        %2143 = vmatpush1.msra.mxu0 %v1993
        %2144 = vmatprep.subr.mxu0 0.0
        %2145 = vmatpush1.msra.mxu0 %v1994
        %2146 = vmatprep.subr.mxu0 0.0
        %2147 = vmatpush1.msra.mxu0 %v1995
        %2148 = vmatprep.subr.mxu0 0.0
        %2149 = vmatpush1.msra.mxu0 %v1996
        %2150 = vmatprep.subr.mxu0 0.0
        %2151 = vmatpush1.msra.mxu0 %v1997
        %2152 = vmatprep.subr.mxu0 0.0
        %2153 = vmatpush1.msra.mxu0 %v1998
        %2154 = vmatprep.subr.mxu0 0.0
        %2155 = vmatpush1.msra.mxu0 %v1999
        %2156 = vmatprep.subr.mxu0 0.0
        %2157 = vmatpush1.msra.mxu0 %v2000
        %2158 = vmatprep.subr.mxu0 0.0
        %2159 = vmatpush1.msra.mxu0 %v2001
        %2160 = vmatprep.subr.mxu0 0.0
        %2161 = vmatpush1.msra.mxu0 %v2002
        %2162 = vmatprep.subr.mxu0 0.0
        %2163 = vmatpush1.msra.mxu0 %v2003
        %2164 = vmatprep.subr.mxu0 0.0
        %2165 = vmatpush1.msra.mxu0 %v2004
        %2166 = vmatprep.subr.mxu0 0.0
        %2167 = vmatpush1.msra.mxu0 %v2005
        %2168 = vmatprep.subr.mxu0 0.0
        %2169 = vmatpush1.msra.mxu0 %v2006
        %2170 = vmatprep.subr.mxu0 0.0
        %2171 = vmatpush1.msra.mxu0 %v2007
        %2172 = vmatprep.subr.mxu0 0.0
        %2173 = vmatpush1.msra.mxu0 %v2008
        %2174 = vmatprep.subr.mxu0 0.0
        %2175 = vmatpush1.msra.mxu0 %v2009
        %2176 = vmatprep.subr.mxu0 0.0
        %2177 = vmatpush1.msra.mxu0 %v2010
        %2178 = vmatprep.subr.mxu0 0.0
        %2179 = vmatpush1.msra.mxu0 %v2011
        %2180 = vmatprep.subr.mxu0 0.0
        %2181 = vmatpush1.msra.mxu0 %v2012
        %2182 = vmatprep.subr.mxu0 0.0
        %2183 = vmatpush1.msra.mxu0 %v2013
        %2184 = vmatprep.subr.mxu0 0.0
        %2185 = vmatpush1.msra.mxu0 %v2014
        %2186 = vmatprep.subr.mxu0 0.0
        %2187 = vmatpush1.msra.mxu0 %v2015
        %2188 = vmatprep.mubr.f32.mxu0 %v1935
        %2189 = vmatmul.mubr.f32.gmra.mrb[0].mxu0 %v1934
        %v2190 = vpop.f32.mrb[0].mxu0
        %v2191 = vadd.f32 %v2106, %v2190
        %v2192 = vpop.f32.mrb[0].mxu0
        %2193 = vmatprep.mubr.f32.mxu0 %v1940
        %2194 = vmatmul.mubr.f32.gmra.mrb[0].mxu0 %v1939
        %v2195 = vpop.f32.mrb[0].mxu0
        %v2196 = vadd.f32 %v2111, %v2195
        %v2197 = vpop.f32.mrb[0].mxu0
        %2198 = vmatprep.mubr.f32.mxu0 %v1945
        %2199 = vmatmul.mubr.f32.gmra.mrb[0].mxu0 %v1944
        %v2200 = vpop.f32.mrb[0].mxu0
        %v2201 = vadd.f32 %v2116, %v2200
        %v2202 = vpop.f32.mrb[0].mxu0
        %2203 = vmatprep.mubr.f32.mxu0 %v1950
        %2204 = vmatmul.mubr.f32.gmra.mrb[0].mxu0 %v1949
        %v2205 = vpop.f32.mrb[0].mxu0
        %v2206 = vadd.f32 %v2121, %v2205
        %v2207 = vpop.f32.mrb[0].mxu0
        %2208 = vdwg.mxu0
        %2209 = vmatprep.subr.mxu0 0.0
        %2210 = vmatpush1.msra.mxu0 %v2016
        %2211 = vmatprep.subr.mxu0 0.0
        %2212 = vmatpush1.msra.mxu0 %v2017
        %2213 = vmatprep.subr.mxu0 0.0
        %2214 = vmatpush1.msra.mxu0 %v2018
        %2215 = vmatprep.subr.mxu0 0.0
        %2216 = vmatpush1.msra.mxu0 %v2019
        %2217 = vmatprep.subr.mxu0 0.0
        %2218 = vmatpush1.msra.mxu0 %v2020
        %2219 = vmatprep.subr.mxu0 0.0
        %2220 = vmatpush1.msra.mxu0 %v2021
        %2221 = vmatprep.subr.mxu0 0.0
        %2222 = vmatpush1.msra.mxu0 %v2022
        %2223 = vmatprep.subr.mxu0 0.0
        %2224 = vmatpush1.msra.mxu0 %v2023
        %2225 = vmatprep.subr.mxu0 0.0
        %2226 = vmatpush1.msra.mxu0 %v2024
        %2227 = vmatprep.subr.mxu0 0.0
        %2228 = vmatpush1.msra.mxu0 %v2025
        %2229 = vmatprep.subr.mxu0 0.0
        %2230 = vmatpush1.msra.mxu0 %v2026
        %2231 = vmatprep.subr.mxu0 0.0
        %2232 = vmatpush1.msra.mxu0 %v2027
        %2233 = vmatprep.subr.mxu0 0.0
        %2234 = vmatpush1.msra.mxu0 %v2028
        %2235 = vmatprep.subr.mxu0 0.0
        %2236 = vmatpush1.msra.mxu0 %v2029
        %2237 = vmatprep.subr.mxu0 0.0
        %2238 = vmatpush1.msra.mxu0 %v2030
        %2239 = vmatprep.subr.mxu0 0.0
        %2240 = vmatpush1.msra.mxu0 %v2031
        %2241 = vmatprep.subr.mxu0 0.0
        %2242 = vmatpush1.msra.mxu0 0.0
        %2243 = vmatprep.subr.mxu0 0.0
        %2244 = vmatpush1.msra.mxu0 0.0
        %2245 = vmatprep.subr.mxu0 0.0
        %2246 = vmatpush1.msra.mxu0 0.0
        %2247 = vmatprep.subr.mxu0 0.0
        %2248 = vmatpush1.msra.mxu0 0.0
        %2249 = vmatprep.subr.mxu0 0.0
        %2250 = vmatpush1.msra.mxu0 0.0
        %2251 = vmatprep.subr.mxu0 0.0
        %2252 = vmatpush1.msra.mxu0 0.0
        %2253 = vmatprep.subr.mxu0 0.0
        %2254 = vmatpush1.msra.mxu0 0.0
        %2255 = vmatprep.subr.mxu0 0.0
        %2256 = vmatpush1.msra.mxu0 0.0
        %2257 = vmatprep.subr.mxu0 0.0
        %2258 = vmatpush1.msra.mxu0 0.0
        %2259 = vmatprep.subr.mxu0 0.0
        %2260 = vmatpush1.msra.mxu0 0.0
        %2261 = vmatprep.subr.mxu0 0.0
        %2262 = vmatpush1.msra.mxu0 0.0
        %2263 = vmatprep.subr.mxu0 0.0
        %2264 = vmatpush1.msra.mxu0 0.0
        %2265 = vmatprep.subr.mxu0 0.0
        %2266 = vmatpush1.msra.mxu0 0.0
        %2267 = vmatprep.subr.mxu0 0.0
        %2268 = vmatpush1.msra.mxu0 0.0
        %2269 = vmatprep.subr.mxu0 0.0
        %2270 = vmatpush1.msra.mxu0 0.0
        %2271 = vmatprep.subr.mxu0 0.0
        %2272 = vmatpush1.msra.mxu0 0.0
        %2273 = vmatprep.mubr.f32.mxu0 0.0
        %2274 = vmatmul.mubr.f32.gmra.mrb[0].mxu0 %v1936
        %v2275 = vpop.f32.mrb[0].mxu0
        %v2276 = vadd.f32 %v2191, %v2275
        %v2277 = vpop.f32.mrb[0].mxu0
        %2278 = vmatprep.mubr.f32.mxu0 0.0
        %2279 = vmatmul.mubr.f32.gmra.mrb[0].mxu0 %v1941
        %v2280 = vpop.f32.mrb[0].mxu0
        %v2281 = vadd.f32 %v2196, %v2280
        %v2282 = vpop.f32.mrb[0].mxu0
        %2283 = vmatprep.mubr.f32.mxu0 0.0
        %2284 = vmatmul.mubr.f32.gmra.mrb[0].mxu0 %v1946
        %v2285 = vpop.f32.mrb[0].mxu0
        %v2286 = vadd.f32 %v2201, %v2285
        %v2287 = vpop.f32.mrb[0].mxu0
        %2288 = vmatprep.mubr.f32.mxu0 0.0
        %2289 = vmatmul.mubr.f32.gmra.mrb[0].mxu0 %v1951
        %v2290 = vpop.f32.mrb[0].mxu0
        %v2291 = vadd.f32 %v2206, %v2290
        %v2292 = vpop.f32.mrb[0].mxu0
        %2293 = vdwg.mxu0
        %v2294 = vtanh.pop %v2276
        %v2295 = vtanh.pop %v2281
        %v2296 = vtanh.pop %v2286
        %v2297 = vtanh.pop %v2291
        %v2298 = vmul.f32 %v2294, %v527
        %v2299 = vmul.f32 %v2295, %v528
        %v2300 = vmul.f32 %v2296, %v529
        %v2301 = vmul.f32 %v2297, %v530
        %2302 = vst [vmem:[#allocation3 + $0x8] sm:$0xff] %v2298
        %2303 = vst [vmem:[#allocation3 + $0x10] sm:$0xff] %v2299
        %2304 = vst [vmem:[#allocation3 + $0x18] sm:$0xff] %v2300
        %2305 = vst [vmem:[#allocation3 + $0x20] sm:$0xf] %v2301
        %v2306 = vld [vmem:[#allocation3 + $0x8] sm:$0xff]
        %v2307 = vld [vmem:[#allocation3 + $0x10] sm:$0xff]
        %v2308 = vld [vmem:[#allocation3 + $0x18] sm:$0xff]
        %2309 = vst [vmem:[#allocation4] sm:$0xff] %v2306
        %2310 = vst [vmem:[#allocation4 + $0x28] sm:$0xff] %v2307
        %2311 = vst [vmem:[#allocation4 + $0x50] sm:$0xff] %v2308
        %v2312 = vld [vmem:[#allocation3 + $0x9] sm:$0xff]
        %v2313 = vld [vmem:[#allocation3 + $0x11] sm:$0xff]
        %v2314 = vld [vmem:[#allocation3 + $0x19] sm:$0xff]
        %2315 = vst [vmem:[#allocation4 + $0x8] sm:$0xff] %v2312
        %2316 = vst [vmem:[#allocation4 + $0x30] sm:$0xff] %v2313
        %2317 = vst [vmem:[#allocation4 + $0x58] sm:$0xff] %v2314
        %v2318 = vld [vmem:[#allocation3 + $0xa] sm:$0xff]
        %v2319 = vld [vmem:[#allocation3 + $0x12] sm:$0xff]
        %v2320 = vld [vmem:[#allocation3 + $0x1a] sm:$0xff]
        %2321 = vst [vmem:[#allocation4 + $0x10] sm:$0xff] %v2318
        %2322 = vst [vmem:[#allocation4 + $0x38] sm:$0xff] %v2319
        %2323 = vst [vmem:[#allocation4 + $0x60] sm:$0xff] %v2320
        %v2324 = vld [vmem:[#allocation3 + $0xb] sm:$0xff]
        %v2325 = vld [vmem:[#allocation3 + $0x13] sm:$0xff]
        %v2326 = vld [vmem:[#allocation3 + $0x1b] sm:$0xff]
        %2327 = vst [vmem:[#allocation4 + $0x18] sm:$0xff] %v2324
        %2328 = vst [vmem:[#allocation4 + $0x40] sm:$0xff] %v2325
        %2329 = vst [vmem:[#allocation4 + $0x68] sm:$0xff] %v2326
        %v2330 = vld [vmem:[#allocation3 + $0xc] sm:$0xff]
        %v2331 = vld [vmem:[#allocation3 + $0x14] sm:$0xff]
        %v2332 = vld [vmem:[#allocation3 + $0x1c] sm:$0xff]
        %2333 = vst [vmem:[#allocation4 + $0x20] sm:$0xff] %v2330
        %2334 = vst [vmem:[#allocation4 + $0x48] sm:$0xff] %v2331
        %2335 = vst [vmem:[#allocation4 + $0x70] sm:$0xff] %v2332
        %v2336 = vld [vmem:[#allocation4] sm:$0xff]
        %v2337 = vld [vmem:[#allocation4 + $0x8] sm:$0xff]
        %v2338 = vld [vmem:[#allocation4 + $0x10] sm:$0xff]
        %v2339 = vld [vmem:[#allocation4 + $0x18] sm:$0xff]
        %v2340 = vld [vmem:[#allocation4 + $0x20] sm:$0xff]
        %v2341 = vld [vmem:[#allocation4 + $0x28] sm:$0xff]
        %v2342 = vld [vmem:[#allocation4 + $0x30] sm:$0xff]
        %v2343 = vld [vmem:[#allocation4 + $0x38] sm:$0xff]
        %v2344 = vld [vmem:[#allocation4 + $0x40] sm:$0xff]
        %v2345 = vld [vmem:[#allocation4 + $0x48] sm:$0xff]
        %v2346 = vld [vmem:[#allocation4 + $0x50] sm:$0xff]
        %v2347 = vld [vmem:[#allocation4 + $0x58] sm:$0xff]
        %v2348 = vld [vmem:[#allocation4 + $0x60] sm:$0xff]
        %v2349 = vld [vmem:[#allocation4 + $0x68] sm:$0xff]
        %v2350 = vld [vmem:[#allocation4 + $0x70] sm:$0xff]
        %v2351 = vld [vmem:[#allocation13] sm:$0xff]
        %v2352 = vld [vmem:[#allocation13 + $0x8] sm:$0xff]
        %v2353 = vld [vmem:[#allocation13 + $0x10] sm:$0xff]
        %v2354 = vld [vmem:[#allocation13 + $0x18] sm:$0xff]
        %v2355 = vld [vmem:[#allocation13 + $0x20] sm:$0xff]
        %v2356 = vld [vmem:[#allocation13 + $0x28] sm:$0xff]
        %v2357 = vld [vmem:[#allocation13 + $0x30] sm:$0xff]
        %v2358 = vld [vmem:[#allocation13 + $0x38] sm:$0xff]
        %v2359 = vld [vmem:[#allocation13 + $0x40] sm:$0xff]
        %v2360 = vld [vmem:[#allocation13 + $0x48] sm:$0xff]
        %v2361 = vld [vmem:[#allocation13 + $0x50] sm:$0xff]
        %v2362 = vld [vmem:[#allocation13 + $0x58] sm:$0xff]
        %v2363 = vld [vmem:[#allocation13 + $0x60] sm:$0xff]
        %v2364 = vld [vmem:[#allocation13 + $0x68] sm:$0xff]
        %v2365 = vld [vmem:[#allocation13 + $0x70] sm:$0xff]
        %v2366 = vld [vmem:[#allocation13 + $0x78] sm:$0xff]
        %v2367 = vld [vmem:[#allocation13 + $0x80] sm:$0xff]
        %v2368 = vld [vmem:[#allocation13 + $0x88] sm:$0xff]
        %v2369 = vld [vmem:[#allocation13 + $0x90] sm:$0xff]
        %v2370 = vld [vmem:[#allocation13 + $0x98] sm:$0xff]
        %v2371 = vld [vmem:[#allocation13 + $0xa0] sm:$0xff]
        %v2372 = vld [vmem:[#allocation13 + $0xa8] sm:$0xff]
        %v2373 = vld [vmem:[#allocation13 + $0xb0] sm:$0xff]
        %v2374 = vld [vmem:[#allocation13 + $0xb8] sm:$0xff]
        %v2375 = vld [vmem:[#allocation13 + $0xc0] sm:$0xff]
        %v2376 = vld [vmem:[#allocation13 + $0xc8] sm:$0xff]
        %v2377 = vld [vmem:[#allocation13 + $0xd0] sm:$0xff]
        %v2378 = vld [vmem:[#allocation13 + $0xd8] sm:$0xff]
        %v2379 = vld [vmem:[#allocation13 + $0xe0] sm:$0xff]
        %v2380 = vld [vmem:[#allocation13 + $0xe8] sm:$0xff]
        %v2381 = vld [vmem:[#allocation13 + $0xf0] sm:$0xff]
        %v2382 = vld [vmem:[#allocation13 + $0xf8] sm:$0xff]
        %v2383 = vld [vmem:[#allocation13 + $0x100] sm:$0xff]
        %v2384 = vld [vmem:[#allocation13 + $0x108] sm:$0xff]
        %v2385 = vld [vmem:[#allocation13 + $0x110] sm:$0xff]
        %v2386 = vld [vmem:[#allocation13 + $0x118] sm:$0xff]
        %v2387 = vld [vmem:[#allocation13 + $0x120] sm:$0xff]
        %v2388 = vld [vmem:[#allocation13 + $0x128] sm:$0xff]
        %v2389 = vld [vmem:[#allocation13 + $0x130] sm:$0xff]
        %v2390 = vld [vmem:[#allocation13 + $0x138] sm:$0xff]
        %v2391 = vld [vmem:[#allocation13 + $0x140] sm:$0xff]
        %v2392 = vld [vmem:[#allocation13 + $0x148] sm:$0xff]
        %v2393 = vld [vmem:[#allocation13 + $0x150] sm:$0xff]
        %v2394 = vld [vmem:[#allocation13 + $0x158] sm:$0xff]
        %v2395 = vld [vmem:[#allocation13 + $0x160] sm:$0xff]
        %v2396 = vld [vmem:[#allocation13 + $0x168] sm:$0xff]
        %v2397 = vld [vmem:[#allocation13 + $0x170] sm:$0xff]
        %v2398 = vld [vmem:[#allocation13 + $0x178] sm:$0xff]
        %v2399 = vld [vmem:[#allocation13 + $0x180] sm:$0xff]
        %v2400 = vld [vmem:[#allocation13 + $0x188] sm:$0xff]
        %v2401 = vld [vmem:[#allocation13 + $0x190] sm:$0xff]
        %v2402 = vld [vmem:[#allocation13 + $0x198] sm:$0xff]
        %v2403 = vld [vmem:[#allocation13 + $0x1a0] sm:$0xff]
        %v2404 = vld [vmem:[#allocation13 + $0x1a8] sm:$0xff]
        %v2405 = vld [vmem:[#allocation13 + $0x1b0] sm:$0xff]
        %v2406 = vld [vmem:[#allocation13 + $0x1b8] sm:$0xff]
        %v2407 = vld [vmem:[#allocation13 + $0x1c0] sm:$0xff]
        %v2408 = vld [vmem:[#allocation13 + $0x1c8] sm:$0xff]
        %v2409 = vld [vmem:[#allocation13 + $0x1d0] sm:$0xff]
        %v2410 = vld [vmem:[#allocation13 + $0x1d8] sm:$0xff]
        %v2411 = vld [vmem:[#allocation13 + $0x1e0] sm:$0xff]
        %v2412 = vld [vmem:[#allocation13 + $0x1e8] sm:$0xff]
        %v2413 = vld [vmem:[#allocation13 + $0x1f0] sm:$0xff]
        %v2414 = vld [vmem:[#allocation13 + $0x1f8] sm:$0xff]
        %v2415 = vld [vmem:[#allocation13 + $0x200] sm:$0xff]
        %v2416 = vld [vmem:[#allocation13 + $0x208] sm:$0xff]
        %v2417 = vld [vmem:[#allocation13 + $0x210] sm:$0xff]
        %v2418 = vld [vmem:[#allocation13 + $0x218] sm:$0xff]
        %v2419 = vld [vmem:[#allocation13 + $0x220] sm:$0xff]
        %v2420 = vld [vmem:[#allocation13 + $0x228] sm:$0xff]
        %v2421 = vld [vmem:[#allocation13 + $0x230] sm:$0xff]
        %v2422 = vld [vmem:[#allocation13 + $0x238] sm:$0xff]
        %v2423 = vld [vmem:[#allocation13 + $0x240] sm:$0xff]
        %v2424 = vld [vmem:[#allocation13 + $0x248] sm:$0xff]
        %v2425 = vld [vmem:[#allocation13 + $0x250] sm:$0xff]
        %v2426 = vld [vmem:[#allocation13 + $0x258] sm:$0xff]
        %v2427 = vld [vmem:[#allocation13 + $0x260] sm:$0xff]
        %v2428 = vld [vmem:[#allocation13 + $0x268] sm:$0xff]
        %v2429 = vld [vmem:[#allocation13 + $0x270] sm:$0xff]
        %v2430 = vld [vmem:[#allocation13 + $0x278] sm:$0xff]
        %v2431 = vld [vmem:[%s10] sm:$0x1]
        %v2433 = vlaneseq
        %v2434 = vshrl.u32 %v2433, 7
        %v2435 = vsub.s32 0, %v2434
        %v2436 = vrot.slane %v2431, %v2435
        %2438 = vmatprep.subr.mxu0 0.0
        %2439 = vmatpush1.msra.mxu0 %v2351
        %2440 = vmatprep.subr.mxu0 0.0
        %2441 = vmatpush1.msra.mxu0 %v2352
        %2442 = vmatprep.subr.mxu0 0.0
        %2443 = vmatpush1.msra.mxu0 %v2353
        %2444 = vmatprep.subr.mxu0 0.0
        %2445 = vmatpush1.msra.mxu0 %v2354
        %2446 = vmatprep.subr.mxu0 0.0
        %2447 = vmatpush1.msra.mxu0 %v2355
        %2448 = vmatprep.subr.mxu0 0.0
        %2449 = vmatpush1.msra.mxu0 %v2356
        %2450 = vmatprep.subr.mxu0 0.0
        %2451 = vmatpush1.msra.mxu0 %v2357
        %2452 = vmatprep.subr.mxu0 0.0
        %2453 = vmatpush1.msra.mxu0 %v2358
        %2454 = vmatprep.subr.mxu0 0.0
        %2455 = vmatpush1.msra.mxu0 %v2359
        %2456 = vmatprep.subr.mxu0 0.0
        %2457 = vmatpush1.msra.mxu0 %v2360
        %2458 = vmatprep.subr.mxu0 0.0
        %2459 = vmatpush1.msra.mxu0 %v2361
        %2460 = vmatprep.subr.mxu0 0.0
        %2461 = vmatpush1.msra.mxu0 %v2362
        %2462 = vmatprep.subr.mxu0 0.0
        %2463 = vmatpush1.msra.mxu0 %v2363
        %2464 = vmatprep.subr.mxu0 0.0
        %2465 = vmatpush1.msra.mxu0 %v2364
        %2466 = vmatprep.subr.mxu0 0.0
        %2467 = vmatpush1.msra.mxu0 %v2365
        %2468 = vmatprep.subr.mxu0 0.0
        %2469 = vmatpush1.msra.mxu0 %v2366
        %2470 = vmatprep.subr.mxu0 0.0
        %2471 = vmatpush1.msra.mxu0 %v2367
        %2472 = vmatprep.subr.mxu0 0.0
        %2473 = vmatpush1.msra.mxu0 %v2368
        %2474 = vmatprep.subr.mxu0 0.0
        %2475 = vmatpush1.msra.mxu0 %v2369
        %2476 = vmatprep.subr.mxu0 0.0
        %2477 = vmatpush1.msra.mxu0 %v2370
        %2478 = vmatprep.subr.mxu0 0.0
        %2479 = vmatpush1.msra.mxu0 %v2371
        %2480 = vmatprep.subr.mxu0 0.0
        %2481 = vmatpush1.msra.mxu0 %v2372
        %2482 = vmatprep.subr.mxu0 0.0
        %2483 = vmatpush1.msra.mxu0 %v2373
        %2484 = vmatprep.subr.mxu0 0.0
        %2485 = vmatpush1.msra.mxu0 %v2374
        %2486 = vmatprep.subr.mxu0 0.0
        %2487 = vmatpush1.msra.mxu0 %v2375
        %2488 = vmatprep.subr.mxu0 0.0
        %2489 = vmatpush1.msra.mxu0 %v2376
        %2490 = vmatprep.subr.mxu0 0.0
        %2491 = vmatpush1.msra.mxu0 %v2377
        %2492 = vmatprep.subr.mxu0 0.0
        %2493 = vmatpush1.msra.mxu0 %v2378
        %2494 = vmatprep.subr.mxu0 0.0
        %2495 = vmatpush1.msra.mxu0 %v2379
        %2496 = vmatprep.subr.mxu0 0.0
        %2497 = vmatpush1.msra.mxu0 %v2380
        %2498 = vmatprep.subr.mxu0 0.0
        %2499 = vmatpush1.msra.mxu0 %v2381
        %2500 = vmatprep.subr.mxu0 0.0
        %2501 = vmatpush1.msra.mxu0 %v2382
        %2502 = vmatprep.mubr.f32.mxu0 %v2337
        %2503 = vmatmul.mubr.f32.gmra.mrb[0].mxu0 %v2336
        %v2504 = vpop.f32.mrb[0].mxu0
        %v2505 = vadd.f32 %v2436, %v2504
        %v2506 = vpop.f32.mrb[0].mxu0
        %2507 = vmatprep.mubr.f32.mxu0 %v2342
        %2508 = vmatmul.mubr.f32.gmra.mrb[0].mxu0 %v2341
        %v2509 = vpop.f32.mrb[0].mxu0
        %v2510 = vadd.f32 %v2436, %v2509
        %v2511 = vpop.f32.mrb[0].mxu0
        %2512 = vmatprep.mubr.f32.mxu0 %v2347
        %2513 = vmatmul.mubr.f32.gmra.mrb[0].mxu0 %v2346
        %v2514 = vpop.f32.mrb[0].mxu0
        %v2515 = vadd.f32 %v2436, %v2514
        %v2516 = vpop.f32.mrb[0].mxu0
        %2517 = vdwg.mxu0
        %2518 = vmatprep.subr.mxu0 0.0
        %2519 = vmatpush1.msra.mxu0 %v2383
        %2520 = vmatprep.subr.mxu0 0.0
        %2521 = vmatpush1.msra.mxu0 %v2384
        %2522 = vmatprep.subr.mxu0 0.0
        %2523 = vmatpush1.msra.mxu0 %v2385
        %2524 = vmatprep.subr.mxu0 0.0
        %2525 = vmatpush1.msra.mxu0 %v2386
        %2526 = vmatprep.subr.mxu0 0.0
        %2527 = vmatpush1.msra.mxu0 %v2387
        %2528 = vmatprep.subr.mxu0 0.0
        %2529 = vmatpush1.msra.mxu0 %v2388
        %2530 = vmatprep.subr.mxu0 0.0
        %2531 = vmatpush1.msra.mxu0 %v2389
        %2532 = vmatprep.subr.mxu0 0.0
        %2533 = vmatpush1.msra.mxu0 %v2390
        %2534 = vmatprep.subr.mxu0 0.0
        %2535 = vmatpush1.msra.mxu0 %v2391
        %2536 = vmatprep.subr.mxu0 0.0
        %2537 = vmatpush1.msra.mxu0 %v2392
        %2538 = vmatprep.subr.mxu0 0.0
        %2539 = vmatpush1.msra.mxu0 %v2393
        %2540 = vmatprep.subr.mxu0 0.0
        %2541 = vmatpush1.msra.mxu0 %v2394
        %2542 = vmatprep.subr.mxu0 0.0
        %2543 = vmatpush1.msra.mxu0 %v2395
        %2544 = vmatprep.subr.mxu0 0.0
        %2545 = vmatpush1.msra.mxu0 %v2396
        %2546 = vmatprep.subr.mxu0 0.0
        %2547 = vmatpush1.msra.mxu0 %v2397
        %2548 = vmatprep.subr.mxu0 0.0
        %2549 = vmatpush1.msra.mxu0 %v2398
        %2550 = vmatprep.subr.mxu0 0.0
        %2551 = vmatpush1.msra.mxu0 %v2399
        %2552 = vmatprep.subr.mxu0 0.0
        %2553 = vmatpush1.msra.mxu0 %v2400
        %2554 = vmatprep.subr.mxu0 0.0
        %2555 = vmatpush1.msra.mxu0 %v2401
        %2556 = vmatprep.subr.mxu0 0.0
        %2557 = vmatpush1.msra.mxu0 %v2402
        %2558 = vmatprep.subr.mxu0 0.0
        %2559 = vmatpush1.msra.mxu0 %v2403
        %2560 = vmatprep.subr.mxu0 0.0
        %2561 = vmatpush1.msra.mxu0 %v2404
        %2562 = vmatprep.subr.mxu0 0.0
        %2563 = vmatpush1.msra.mxu0 %v2405
        %2564 = vmatprep.subr.mxu0 0.0
        %2565 = vmatpush1.msra.mxu0 %v2406
        %2566 = vmatprep.subr.mxu0 0.0
        %2567 = vmatpush1.msra.mxu0 %v2407
        %2568 = vmatprep.subr.mxu0 0.0
        %2569 = vmatpush1.msra.mxu0 %v2408
        %2570 = vmatprep.subr.mxu0 0.0
        %2571 = vmatpush1.msra.mxu0 %v2409
        %2572 = vmatprep.subr.mxu0 0.0
        %2573 = vmatpush1.msra.mxu0 %v2410
        %2574 = vmatprep.subr.mxu0 0.0
        %2575 = vmatpush1.msra.mxu0 %v2411
        %2576 = vmatprep.subr.mxu0 0.0
        %2577 = vmatpush1.msra.mxu0 %v2412
        %2578 = vmatprep.subr.mxu0 0.0
        %2579 = vmatpush1.msra.mxu0 %v2413
        %2580 = vmatprep.subr.mxu0 0.0
        %2581 = vmatpush1.msra.mxu0 %v2414
        %2582 = vmatprep.mubr.f32.mxu0 %v2339
        %2583 = vmatmul.mubr.f32.gmra.mrb[0].mxu0 %v2338
        %v2584 = vpop.f32.mrb[0].mxu0
        %v2585 = vadd.f32 %v2505, %v2584
        %v2586 = vpop.f32.mrb[0].mxu0
        %2587 = vmatprep.mubr.f32.mxu0 %v2344
        %2588 = vmatmul.mubr.f32.gmra.mrb[0].mxu0 %v2343
        %v2589 = vpop.f32.mrb[0].mxu0
        %v2590 = vadd.f32 %v2510, %v2589
        %v2591 = vpop.f32.mrb[0].mxu0
        %2592 = vmatprep.mubr.f32.mxu0 %v2349
        %2593 = vmatmul.mubr.f32.gmra.mrb[0].mxu0 %v2348
        %v2594 = vpop.f32.mrb[0].mxu0
        %v2595 = vadd.f32 %v2515, %v2594
        %v2596 = vpop.f32.mrb[0].mxu0
        %2597 = vdwg.mxu0
        %2598 = vmatprep.subr.mxu0 0.0
        %2599 = vmatpush1.msra.mxu0 %v2415
        %2600 = vmatprep.subr.mxu0 0.0
        %2601 = vmatpush1.msra.mxu0 %v2416
        %2602 = vmatprep.subr.mxu0 0.0
        %2603 = vmatpush1.msra.mxu0 %v2417
        %2604 = vmatprep.subr.mxu0 0.0
        %2605 = vmatpush1.msra.mxu0 %v2418
        %2606 = vmatprep.subr.mxu0 0.0
        %2607 = vmatpush1.msra.mxu0 %v2419
        %2608 = vmatprep.subr.mxu0 0.0
        %2609 = vmatpush1.msra.mxu0 %v2420
        %2610 = vmatprep.subr.mxu0 0.0
        %2611 = vmatpush1.msra.mxu0 %v2421
        %2612 = vmatprep.subr.mxu0 0.0
        %2613 = vmatpush1.msra.mxu0 %v2422
        %2614 = vmatprep.subr.mxu0 0.0
        %2615 = vmatpush1.msra.mxu0 %v2423
        %2616 = vmatprep.subr.mxu0 0.0
        %2617 = vmatpush1.msra.mxu0 %v2424
        %2618 = vmatprep.subr.mxu0 0.0
        %2619 = vmatpush1.msra.mxu0 %v2425
        %2620 = vmatprep.subr.mxu0 0.0
        %2621 = vmatpush1.msra.mxu0 %v2426
        %2622 = vmatprep.subr.mxu0 0.0
        %2623 = vmatpush1.msra.mxu0 %v2427
        %2624 = vmatprep.subr.mxu0 0.0
        %2625 = vmatpush1.msra.mxu0 %v2428
        %2626 = vmatprep.subr.mxu0 0.0
        %2627 = vmatpush1.msra.mxu0 %v2429
        %2628 = vmatprep.subr.mxu0 0.0
        %2629 = vmatpush1.msra.mxu0 %v2430
        %2630 = vmatprep.subr.mxu0 0.0
        %2631 = vmatpush1.msra.mxu0 0.0
        %2632 = vmatprep.subr.mxu0 0.0
        %2633 = vmatpush1.msra.mxu0 0.0
        %2634 = vmatprep.subr.mxu0 0.0
        %2635 = vmatpush1.msra.mxu0 0.0
        %2636 = vmatprep.subr.mxu0 0.0
        %2637 = vmatpush1.msra.mxu0 0.0
        %2638 = vmatprep.subr.mxu0 0.0
        %2639 = vmatpush1.msra.mxu0 0.0
        %2640 = vmatprep.subr.mxu0 0.0
        %2641 = vmatpush1.msra.mxu0 0.0
        %2642 = vmatprep.subr.mxu0 0.0
        %2643 = vmatpush1.msra.mxu0 0.0
        %2644 = vmatprep.subr.mxu0 0.0
        %2645 = vmatpush1.msra.mxu0 0.0
        %2646 = vmatprep.subr.mxu0 0.0
        %2647 = vmatpush1.msra.mxu0 0.0
        %2648 = vmatprep.subr.mxu0 0.0
        %2649 = vmatpush1.msra.mxu0 0.0
        %2650 = vmatprep.subr.mxu0 0.0
        %2651 = vmatpush1.msra.mxu0 0.0
        %2652 = vmatprep.subr.mxu0 0.0
        %2653 = vmatpush1.msra.mxu0 0.0
        %2654 = vmatprep.subr.mxu0 0.0
        %2655 = vmatpush1.msra.mxu0 0.0
        %2656 = vmatprep.subr.mxu0 0.0
        %2657 = vmatpush1.msra.mxu0 0.0
        %2658 = vmatprep.subr.mxu0 0.0
        %2659 = vmatpush1.msra.mxu0 0.0
        %2660 = vmatprep.subr.mxu0 0.0
        %2661 = vmatpush1.msra.mxu0 0.0
        %2662 = vmatprep.mubr.f32.mxu0 0.0
        %2663 = vmatmul.mubr.f32.gmra.mrb[0].mxu0 %v2340
        %v2664 = vpop.f32.mrb[0].mxu0
        %v2665 = vadd.f32 %v2585, %v2664
        %v2666 = vpop.f32.mrb[0].mxu0
        %2667 = vmatprep.mubr.f32.mxu0 0.0
        %2668 = vmatmul.mubr.f32.gmra.mrb[0].mxu0 %v2345
        %v2669 = vpop.f32.mrb[0].mxu0
        %v2670 = vadd.f32 %v2590, %v2669
        %v2671 = vpop.f32.mrb[0].mxu0
        %2672 = vmatprep.mubr.f32.mxu0 0.0
        %2673 = vmatmul.mubr.f32.gmra.mrb[0].mxu0 %v2350
        %v2674 = vpop.f32.mrb[0].mxu0
        %v2675 = vadd.f32 %v2595, %v2674
        %v2676 = vpop.f32.mrb[0].mxu0
        %2677 = vdwg.mxu0
        %2678 = vst [vmem:[%s476] sm:$0xff] %v2665
        %2679 = vst [vmem:[%s476 + $0x8] sm:$0xff] %v2670
        %2680 = vst [vmem:[%s476 + $0x10] sm:$0xff] %v2675
        %s2681 = sand.u32 %s288, 1
        %s2682 = scalar_lea.sflag [#allocation7], %s2681
        %s2683 = sand.u32 %s288, 1
        %s2684 = smul.addr %s2683, 24
        %s2685 = scalar_lea.vmem [#allocation14], %s2684
        // Predicated region
        $region85: #{tpu_custom_call.1} parent=63 // pred_check
          %p2686 = pneg %p298
        $region86: #{tpu_custom_call.1} parent=63 // pred_check_branch
          %2688 = sbr.rel (%p2686) target = $region88
        $region87: #{tpu_custom_call.1} parent=63 // pred_region
          %s2690 = ssub.s32 384, 384
          %2691 = vsyncadd %s2682, %s2690
          %s2692 = smul.addr %s33, 3
          %s2693 = smul.addr %s32, 3
          %s2694 = sadd.s32 %s2692, %s2693
          %s2695 = smul.addr %s2694, 128
          %s2696 = scalar_lea.hbm %s11, %s2695
          %s2697 = sshll.u32 %s2685, 4
          %s2698 = int_to_ptr.vmem [resolvable:$true] %s2697
          %2703 = dma.vmem_to_hbm [thread:$0]  %s2698, 384, %s2696, %s2682, 128, 128, 8
        $region88: #{tpu_custom_call.1} parent=63 // pred_fallthru
          _
      $region64: #{tpu_custom_call.1} parent=5 // pred_fallthru
        _
      %p2704 = scmp.le.s32.totalorder 2, %s23
      // Predicated region
      $region89: #{tpu_custom_call.1} parent=5 // pred_check
        %p2705 = pneg %p2704
      $region90: #{tpu_custom_call.1} parent=5 // pred_check_branch
        %2707 = sbr.rel (%p2705) target = $region92
      $region91: #{tpu_custom_call.1} parent=5 // pred_region
        %s2708 = ssub.s32 %s23, 2
        // Predicated region
        $region93: #{tpu_custom_call.1} parent=91 // pred_check
          %p2709 = pneg %p304
        $region94: #{tpu_custom_call.1} parent=91 // pred_check_branch
          %2711 = sbr.rel (%p2709) target = $region96
        $region95: #{tpu_custom_call.1} parent=91 // pred_region
          %s2712 = sand.u32 %s289, 1
          %s2713 = scalar_lea.sflag [#allocation7], %s2712
          %s2714 = sand.u32 %s289, 1
          %s2715 = smul.addr %s2714, 24
          %s2716 = scalar_lea.vmem [#allocation14], %s2715
          %2717 = dma.done %s2713, 384
        $region96: #{tpu_custom_call.1} parent=91 // pred_fallthru
          _
      $region92: #{tpu_custom_call.1} parent=5 // pred_fallthru
        _
    $region6: #{tpu_custom_call.1} parent=1 // loop_footer
      %s27 = sadd.s32 1, %s23
    $region7: #{tpu_custom_call.1} parent=1 // loop_footer_branch
      %22 = sbr.rel target = $region3
    $region8: #{tpu_custom_call.1} parent=1 // loop_exit
      _
    %2718 = vsyncpa [#allocation6], 1
    %s2719 = scalar_lea.sflag [#allocation6], 1
    %2720 = vsyncpa %s2719, 1
    %2721 = vsyncpa [#allocation9], 1
    %2722 = vsyncpa [#allocation12], 1
    %2723 = vsyncpa [#allocation7], 1
    %s2724 = scalar_lea.sflag [#allocation7], 1
    %2725 = vsyncpa %s2724, 1

// kernel: tpu_custom_call.1
$region0: #{tpu_custom_call.1}
  #allocation0 [shape = 'u32[]', space=smem, size = 0x4, offset = 0x4, fixed_abs, tag = 'smem constant byte address 0x4 - core index']
  #allocation1 [shape = 'u32[144,128]{1,0:T(1,128)}', space=vmem, size = 0x12000, scoped, tag = 'internal scratch']
  #allocation2 [shape = 'f32[44,128]{1,0:T(8,128)}', space=vmem, size = 0x6000, scoped, tag = 'scratch operand']
  #allocation3 [shape = 'f32[44,128]{1,0:T(8,128)}', space=vmem, size = 0x6000, scoped, tag = 'scratch operand']
  #allocation4 [shape = 'f32[44,640]{1,0:T(8,128)}', space=vmem, size = 0x1e000, scoped, tag = 'scratch operand']
  %s0 = inlined_call_operand.vmem [shape: f32[2,1,44,128], index: 0, kind: input, shape index: {}]
  %s1 = inlined_call_operand.hbm [shape: f32[640,128], index: 1, kind: input, shape index: {}]
  %s2 = inlined_call_operand.hbm [shape: f32[640,128], index: 2, kind: input, shape index: {}]
  %s3 = inlined_call_operand.hbm [shape: f32[640,128], index: 3, kind: input, shape index: {}]
  %s4 = inlined_call_operand.hbm [shape: f32[640,128], index: 4, kind: input, shape index: {}]
  %s5 = inlined_call_operand.hbm [shape: f32[640,128], index: 5, kind: input, shape index: {}]
  %s6 = inlined_call_operand.vmem [shape: f32[1,128], index: 6, kind: input, shape index: {}]
  %s7 = inlined_call_operand.vmem [shape: f32[1,128], index: 7, kind: input, shape index: {}]
  %s8 = inlined_call_operand.vmem [shape: f32[1,128], index: 8, kind: input, shape index: {}]
  %s9 = inlined_call_operand.vmem [shape: f32[1,128], index: 9, kind: input, shape index: {}]
  %s10 = inlined_call_operand.vmem [shape: f32[1,128], index: 10, kind: input, shape index: {}]
  %s11 = inlined_call_operand.hbm [shape: f32[2,1,24,128], index: 11, kind: output, shape index: {}]
  %s12 = sld [smem:[#allocation0]]
  $region97: #{tpu_custom_call.1} parent=0
    _
  %s14 = ssub.s32 1, %s12
  %s15 = scalar_select 0, %s14, %s12
  $region1: #{tpu_custom_call.1} parent=0
    #allocation5 [shape = 'u8[327680]{0}', space=vmem, size = 0x50000, scoped, tag = 'input window, operand 1, single buffered']
    #allocation6 [shape = 's32[2]{0}', space=sflag, size = 0x8, scoped, tag = 'scoped memory for tpu_custom_call.1']
    #allocation7 [shape = 's32[2]{0}', space=sflag, size = 0x8, scoped, tag = 'scoped memory for tpu_custom_call.1']
    #allocation8 [shape = 'u8[327680]{0}', space=vmem, size = 0x50000, scoped, tag = 'input window, operand 2, single buffered']
    #allocation9 [shape = 's32[1]{0}', space=sflag, size = 0x4, scoped, tag = 'scoped memory for tpu_custom_call.1']
    #allocation10 [shape = 'u8[327680]{0}', space=vmem, size = 0x50000, scoped, tag = 'input window, operand 3, single buffered']
    #allocation11 [shape = 'u8[327680]{0}', space=vmem, size = 0x50000, scoped, tag = 'input window, operand 4, single buffered']
    #allocation12 [shape = 's32[1]{0}', space=sflag, size = 0x4, scoped, tag = 'scoped memory for tpu_custom_call.1']
    #allocation13 [shape = 'u8[327680]{0}', space=vmem, size = 0x50000, scoped, tag = 'input window, operand 5, single buffered']
    #allocation14 [shape = 'u8[24576]{0}', space=vmem, size = 0x6000, scoped, tag = 'output window, operand 0']
    %16 = vsyncpa [#allocation6], 0
    %17 = vsyncpa [#allocation9], 0
    %18 = vsyncpa [#allocation12], 0
    %19 = vsyncpa [#allocation7], 0
    %s20 = scalar_lea.sflag [#allocation7], 1
    %21 = vsyncpa %s20, 0
    loop: start=0, step=1, limit=4
    $region2: #{tpu_custom_call.1} parent=1 // loop_pre_header
      _
    $region3: #{tpu_custom_call.1} parent=1 // loop_header
      %s23 = sphi 0, %s27
      %p24 = scmp.ge.s32.totalorder %s23, 4
      %s30 = sphi 0, %s42
      %s31 = sphi 0, %s38
      %s32 = sphi 0, %s30
      %s33 = sphi 0, %s31
      %s34 = sphi 0, %s32
      %s35 = sphi 0, %s33
      %s47 = sphi 0, %s49
      %s50 = sphi 0, %s47
      %s51 = sphi 0, %s50
      %s67 = sphi 0, %s51
      %s71 = sphi 0, %s71
      %s73 = sphi 0, %s71
      %s74 = sphi 0, %s73
      %s88 = sphi 0, %s74
      %s92 = sphi 0, %s92
      %s94 = sphi 0, %s92
      %s95 = sphi 0, %s94
      %s109 = sphi 0, %s95
      %s113 = sphi 0, %s113
      %s115 = sphi 0, %s113
      %s116 = sphi 0, %s115
      %s130 = sphi 0, %s116
      %s134 = sphi 0, %s134
      %s136 = sphi 0, %s134
      %s137 = sphi 0, %s136
      %s151 = sphi 0, %s137
      %s155 = sphi 0, %s155
      %s157 = sphi 0, %s155
      %s158 = sphi 0, %s157
      %s172 = sphi 0, %s158
      %s176 = sphi 0, %s176
      %s178 = sphi 0, %s176
      %s179 = sphi 0, %s178
      %s193 = sphi 0, %s179
      %s197 = sphi 0, %s197
      %s199 = sphi 0, %s197
      %s200 = sphi 0, %s199
      %s214 = sphi 0, %s200
      %s218 = sphi 0, %s218
      %s220 = sphi 0, %s218
      %s221 = sphi 0, %s220
      %s235 = sphi 0, %s221
      %s239 = sphi 0, %s239
      %s241 = sphi 0, %s239
      %s242 = sphi 0, %s241
      %s256 = sphi 0, %s242
      %s260 = sphi 0, %s260
      %s262 = sphi 0, %s260
      %s263 = sphi 0, %s262
      %s277 = sphi 0, %s263
      %s285 = sphi 0, %s287
      %s288 = sphi 0, %s285
      %s289 = sphi 0, %s288
      %s305 = sphi 0, %s289
    $region4: #{tpu_custom_call.1} parent=1 // loop_header_branch
      %26 = sbr.rel (%p24) target = $region8
    $region5: #{tpu_custom_call.1} parent=1 // loop_body
      %s28 = ssub.s32 %s23, 1
      %s29 = ssub.s32 %s23, 2
      %s36 = sadd.s32 1, %s31
      %p37 = scmp.ge.s32.totalorder %s36, 1
      %s38 = scalar_select %p37, 0, %s36
      %s39 = sadd.s32 1, %s30
      %s40 = scalar_select %p37, %s39, %s30
      %p41 = scmp.ge.s32.totalorder %s40, 2
      %s42 = scalar_select %p41, 0, %s40
      %s43 = ssub.s32 %s30, %s42
      %s44 = ssub.s32 %s31, %s38
      %s45 = sor.u32 %s43, %s44
      %p46 = scmp.eq.s32.totalorder %s45, 0
      %s48 = sadd.s32 %s47, 1
      %s49 = scalar_select %p46, %s47, %s48
      %p52 = pneg %p46
      %p53 = scmp.eq.s32.totalorder %s23, 1
      %p54 = por %p52, %p53
      %p55 = scmp.ne.s32.totalorder %s47, %s50
      %p56 = scmp.eq.s32.totalorder %s23, 0
      %p57 = por %p55, %p56
      %p58 = scmp.ne.s32.totalorder %s47, %s50
      %p59 = scmp.eq.s32.totalorder %s28, 1
      %p60 = por %p58, %p59
      %p61 = scmp.ne.s32.totalorder %s50, %s51
      %p62 = scmp.eq.s32.totalorder %s28, 0
      %p63 = por %p61, %p62
      %p64 = scmp.ne.s32.totalorder %s50, %s51
      %p65 = scmp.eq.s32.totalorder %s29, 1
      %p66 = por %p64, %p65
      %p68 = scmp.ne.s32.totalorder %s51, %s67
      %p69 = scmp.eq.s32.totalorder %s29, 0
      %p70 = por %p68, %p69
      %s72 = sadd.s32 %s71, 1
      %p75 = scmp.eq.s32.totalorder %s23, 1
      %p76 = scmp.ne.s32.totalorder %s71, %s73
      %p77 = scmp.eq.s32.totalorder %s23, 0
      %p78 = por %p76, %p77
      %p79 = scmp.ne.s32.totalorder %s71, %s73
      %p80 = scmp.eq.s32.totalorder %s28, 1
      %p81 = por %p79, %p80
      %p82 = scmp.ne.s32.totalorder %s73, %s74
      %p83 = scmp.eq.s32.totalorder %s28, 0
      %p84 = por %p82, %p83
      %p85 = scmp.ne.s32.totalorder %s73, %s74
      %p86 = scmp.eq.s32.totalorder %s29, 1
      %p87 = por %p85, %p86
      %p89 = scmp.ne.s32.totalorder %s74, %s88
      %p90 = scmp.eq.s32.totalorder %s29, 0
      %p91 = por %p89, %p90
      %s93 = sadd.s32 %s92, 1
      %p96 = scmp.eq.s32.totalorder %s23, 1
      %p97 = scmp.ne.s32.totalorder %s92, %s94
      %p98 = scmp.eq.s32.totalorder %s23, 0
      %p99 = por %p97, %p98
      %p100 = scmp.ne.s32.totalorder %s92, %s94
      %p101 = scmp.eq.s32.totalorder %s28, 1
      %p102 = por %p100, %p101
      %p103 = scmp.ne.s32.totalorder %s94, %s95
      %p104 = scmp.eq.s32.totalorder %s28, 0
      %p105 = por %p103, %p104
      %p106 = scmp.ne.s32.totalorder %s94, %s95
      %p107 = scmp.eq.s32.totalorder %s29, 1
      %p108 = por %p106, %p107
      %p110 = scmp.ne.s32.totalorder %s95, %s109
      %p111 = scmp.eq.s32.totalorder %s29, 0
      %p112 = por %p110, %p111
      %s114 = sadd.s32 %s113, 1
      %p117 = scmp.eq.s32.totalorder %s23, 1
      %p118 = scmp.ne.s32.totalorder %s113, %s115
      %p119 = scmp.eq.s32.totalorder %s23, 0
      %p120 = por %p118, %p119
      %p121 = scmp.ne.s32.totalorder %s113, %s115
      %p122 = scmp.eq.s32.totalorder %s28, 1
      %p123 = por %p121, %p122
      %p124 = scmp.ne.s32.totalorder %s115, %s116
      %p125 = scmp.eq.s32.totalorder %s28, 0
      %p126 = por %p124, %p125
      %p127 = scmp.ne.s32.totalorder %s115, %s116
      %p128 = scmp.eq.s32.totalorder %s29, 1
      %p129 = por %p127, %p128
      %p131 = scmp.ne.s32.totalorder %s116, %s130
      %p132 = scmp.eq.s32.totalorder %s29, 0
      %p133 = por %p131, %p132
      %s135 = sadd.s32 %s134, 1
      %p138 = scmp.eq.s32.totalorder %s23, 1
      %p139 = scmp.ne.s32.totalorder %s134, %s136
      %p140 = scmp.eq.s32.totalorder %s23, 0
      %p141 = por %p139, %p140
      %p142 = scmp.ne.s32.totalorder %s134, %s136
      %p143 = scmp.eq.s32.totalorder %s28, 1
      %p144 = por %p142, %p143
      %p145 = scmp.ne.s32.totalorder %s136, %s137
      %p146 = scmp.eq.s32.totalorder %s28, 0
      %p147 = por %p145, %p146
      %p148 = scmp.ne.s32.totalorder %s136, %s137
      %p149 = scmp.eq.s32.totalorder %s29, 1
      %p150 = por %p148, %p149
      %p152 = scmp.ne.s32.totalorder %s137, %s151
      %p153 = scmp.eq.s32.totalorder %s29, 0
      %p154 = por %p152, %p153
      %s156 = sadd.s32 %s155, 1
      %p159 = scmp.eq.s32.totalorder %s23, 1
      %p160 = scmp.ne.s32.totalorder %s155, %s157
      %p161 = scmp.eq.s32.totalorder %s23, 0
      %p162 = por %p160, %p161
      %p163 = scmp.ne.s32.totalorder %s155, %s157
      %p164 = scmp.eq.s32.totalorder %s28, 1
      %p165 = por %p163, %p164
      %p166 = scmp.ne.s32.totalorder %s157, %s158
      %p167 = scmp.eq.s32.totalorder %s28, 0
      %p168 = por %p166, %p167
      %p169 = scmp.ne.s32.totalorder %s157, %s158
      %p170 = scmp.eq.s32.totalorder %s29, 1
      %p171 = por %p169, %p170
      %p173 = scmp.ne.s32.totalorder %s158, %s172
      %p174 = scmp.eq.s32.totalorder %s29, 0
      %p175 = por %p173, %p174
      %s177 = sadd.s32 %s176, 1
      %p180 = scmp.eq.s32.totalorder %s23, 1
      %p181 = scmp.ne.s32.totalorder %s176, %s178
      %p182 = scmp.eq.s32.totalorder %s23, 0
      %p183 = por %p181, %p182
      %p184 = scmp.ne.s32.totalorder %s176, %s178
      %p185 = scmp.eq.s32.totalorder %s28, 1
      %p186 = por %p184, %p185
      %p187 = scmp.ne.s32.totalorder %s178, %s179
      %p188 = scmp.eq.s32.totalorder %s28, 0
      %p189 = por %p187, %p188
      %p190 = scmp.ne.s32.totalorder %s178, %s179
      %p191 = scmp.eq.s32.totalorder %s29, 1
      %p192 = por %p190, %p191
      %p194 = scmp.ne.s32.totalorder %s179, %s193
      %p195 = scmp.eq.s32.totalorder %s29, 0
      %p196 = por %p194, %p195
      %s198 = sadd.s32 %s197, 1
      %p201 = scmp.eq.s32.totalorder %s23, 1
      %p202 = scmp.ne.s32.totalorder %s197, %s199
      %p203 = scmp.eq.s32.totalorder %s23, 0
      %p204 = por %p202, %p203
      %p205 = scmp.ne.s32.totalorder %s197, %s199
      %p206 = scmp.eq.s32.totalorder %s28, 1
      %p207 = por %p205, %p206
      %p208 = scmp.ne.s32.totalorder %s199, %s200
      %p209 = scmp.eq.s32.totalorder %s28, 0
      %p210 = por %p208, %p209
      %p211 = scmp.ne.s32.totalorder %s199, %s200
      %p212 = scmp.eq.s32.totalorder %s29, 1
      %p213 = por %p211, %p212
      %p215 = scmp.ne.s32.totalorder %s200, %s214
      %p216 = scmp.eq.s32.totalorder %s29, 0
      %p217 = por %p215, %p216
      %s219 = sadd.s32 %s218, 1
      %p222 = scmp.eq.s32.totalorder %s23, 1
      %p223 = scmp.ne.s32.totalorder %s218, %s220
      %p224 = scmp.eq.s32.totalorder %s23, 0
      %p225 = por %p223, %p224
      %p226 = scmp.ne.s32.totalorder %s218, %s220
      %p227 = scmp.eq.s32.totalorder %s28, 1
      %p228 = por %p226, %p227
      %p229 = scmp.ne.s32.totalorder %s220, %s221
      %p230 = scmp.eq.s32.totalorder %s28, 0
      %p231 = por %p229, %p230
      %p232 = scmp.ne.s32.totalorder %s220, %s221
      %p233 = scmp.eq.s32.totalorder %s29, 1
      %p234 = por %p232, %p233
      %p236 = scmp.ne.s32.totalorder %s221, %s235
      %p237 = scmp.eq.s32.totalorder %s29, 0
      %p238 = por %p236, %p237
      %s240 = sadd.s32 %s239, 1
      %p243 = scmp.eq.s32.totalorder %s23, 1
      %p244 = scmp.ne.s32.totalorder %s239, %s241
      %p245 = scmp.eq.s32.totalorder %s23, 0
      %p246 = por %p244, %p245
      %p247 = scmp.ne.s32.totalorder %s239, %s241
      %p248 = scmp.eq.s32.totalorder %s28, 1
      %p249 = por %p247, %p248
      %p250 = scmp.ne.s32.totalorder %s241, %s242
      %p251 = scmp.eq.s32.totalorder %s28, 0
      %p252 = por %p250, %p251
      %p253 = scmp.ne.s32.totalorder %s241, %s242
      %p254 = scmp.eq.s32.totalorder %s29, 1
      %p255 = por %p253, %p254
      %p257 = scmp.ne.s32.totalorder %s242, %s256
      %p258 = scmp.eq.s32.totalorder %s29, 0
      %p259 = por %p257, %p258
      %s261 = sadd.s32 %s260, 1
      %p264 = scmp.eq.s32.totalorder %s23, 1
      %p265 = scmp.ne.s32.totalorder %s260, %s262
      %p266 = scmp.eq.s32.totalorder %s23, 0
      %p267 = por %p265, %p266
      %p268 = scmp.ne.s32.totalorder %s260, %s262
      %p269 = scmp.eq.s32.totalorder %s28, 1
      %p270 = por %p268, %p269
      %p271 = scmp.ne.s32.totalorder %s262, %s263
      %p272 = scmp.eq.s32.totalorder %s28, 0
      %p273 = por %p271, %p272
      %p274 = scmp.ne.s32.totalorder %s262, %s263
      %p275 = scmp.eq.s32.totalorder %s29, 1
      %p276 = por %p274, %p275
      %p278 = scmp.ne.s32.totalorder %s263, %s277
      %p279 = scmp.eq.s32.totalorder %s29, 0
      %p280 = por %p278, %p279
      %s281 = ssub.s32 %s30, %s42
      %s282 = ssub.s32 %s31, %s38
      %s283 = sor.u32 %s281, %s282
      %p284 = scmp.eq.s32.totalorder %s283, 0
      %s286 = sadd.s32 %s285, 1
      %s287 = scalar_select %p284, %s285, %s286
      %p290 = pneg %p284
      %p291 = scmp.eq.s32.totalorder %s23, 1
      %p292 = por %p290, %p291
      %p293 = scmp.ne.s32.totalorder %s285, %s288
      %p294 = scmp.eq.s32.totalorder %s23, 0
      %p295 = por %p293, %p294
      %p296 = scmp.ne.s32.totalorder %s285, %s288
      %p297 = scmp.eq.s32.totalorder %s28, 1
      %p298 = por %p296, %p297
      %p299 = scmp.ne.s32.totalorder %s288, %s289
      %p300 = scmp.eq.s32.totalorder %s28, 0
      %p301 = por %p299, %p300
      %p302 = scmp.ne.s32.totalorder %s288, %s289
      %p303 = scmp.eq.s32.totalorder %s29, 1
      %p304 = por %p302, %p303
      %p306 = scmp.ne.s32.totalorder %s289, %s305
      %p307 = scmp.eq.s32.totalorder %s29, 0
      %p308 = por %p306, %p307
      %p309 = scmp.le.s32.totalorder 1, %s23
      %p310 = scmp.lt.s32.totalorder %s23, 3
      %p311 = pnand %p309, %p310
      %p312 = pneg %p311
      // Predicated region
      $region9: #{tpu_custom_call.1} parent=5 // pred_check
        _
      $region10: #{tpu_custom_call.1} parent=5 // pred_check_branch
        %314 = sbr.rel (%p311) target = $region12
      $region11: #{tpu_custom_call.1} parent=5 // pred_region
        %s315 = ssub.s32 %s23, 1
        // Predicated region
        $region13: #{tpu_custom_call.1} parent=11 // pred_check
          %p316 = pneg %p84
        $region14: #{tpu_custom_call.1} parent=11 // pred_check_branch
          %318 = sbr.rel (%p316) target = $region16
        $region15: #{tpu_custom_call.1} parent=11 // pred_region
          %s320 = ssub.s32 10240, 10240
          %321 = vsyncadd [#allocation6], %s320
          %s322 = sshll.u32 [#allocation5], 4
          %s323 = int_to_ptr.vmem [resolvable:$true] %s322
          %328 = dma.hbm_to_vmem [thread:$0]  %s1, 10240, %s323, [#allocation6], 128, 128, 8
        $region16: #{tpu_custom_call.1} parent=11 // pred_fallthru
          _
        // Predicated region
        $region17: #{tpu_custom_call.1} parent=11 // pred_check
          %p329 = pneg %p105
        $region18: #{tpu_custom_call.1} parent=11 // pred_check_branch
          %331 = sbr.rel (%p329) target = $region20
        $region19: #{tpu_custom_call.1} parent=11 // pred_region
          %s333 = ssub.s32 10240, 10240
          %334 = vsyncadd [#allocation9], %s333
          %s335 = sshll.u32 [#allocation8], 4
          %s336 = int_to_ptr.vmem [resolvable:$true] %s335
          %341 = dma.hbm_to_vmem [thread:$0]  %s2, 10240, %s336, [#allocation9], 128, 128, 8
        $region20: #{tpu_custom_call.1} parent=11 // pred_fallthru
          _
        // Predicated region
        $region21: #{tpu_custom_call.1} parent=11 // pred_check
          %p342 = pneg %p126
        $region22: #{tpu_custom_call.1} parent=11 // pred_check_branch
          %344 = sbr.rel (%p342) target = $region24
        $region23: #{tpu_custom_call.1} parent=11 // pred_region
          %s346 = ssub.s32 10240, 10240
          %347 = vsyncadd [#allocation9], %s346
          %s348 = sshll.u32 [#allocation10], 4
          %s349 = int_to_ptr.vmem [resolvable:$true] %s348
          %354 = dma.hbm_to_vmem [thread:$0]  %s3, 10240, %s349, [#allocation9], 128, 128, 8
        $region24: #{tpu_custom_call.1} parent=11 // pred_fallthru
          _
        // Predicated region
        $region25: #{tpu_custom_call.1} parent=11 // pred_check
          %p355 = pneg %p147
        $region26: #{tpu_custom_call.1} parent=11 // pred_check_branch
          %357 = sbr.rel (%p355) target = $region28
        $region27: #{tpu_custom_call.1} parent=11 // pred_region
          %s359 = ssub.s32 10240, 10240
          %360 = vsyncadd [#allocation12], %s359
          %s361 = sshll.u32 [#allocation11], 4
          %s362 = int_to_ptr.vmem [resolvable:$true] %s361
          %367 = dma.hbm_to_vmem [thread:$0]  %s4, 10240, %s362, [#allocation12], 128, 128, 8
        $region28: #{tpu_custom_call.1} parent=11 // pred_fallthru
          _
        // Predicated region
        $region29: #{tpu_custom_call.1} parent=11 // pred_check
          %p368 = pneg %p168
        $region30: #{tpu_custom_call.1} parent=11 // pred_check_branch
          %370 = sbr.rel (%p368) target = $region32
        $region31: #{tpu_custom_call.1} parent=11 // pred_region
          %s372 = ssub.s32 10240, 10240
          %373 = vsyncadd [#allocation12], %s372
          %s374 = sshll.u32 [#allocation13], 4
          %s375 = int_to_ptr.vmem [resolvable:$true] %s374
          %380 = dma.hbm_to_vmem [thread:$0]  %s5, 10240, %s375, [#allocation12], 128, 128, 8
        $region32: #{tpu_custom_call.1} parent=11 // pred_fallthru
          _
        // Predicated region
        $region33: #{tpu_custom_call.1} parent=11 // pred_check
          %p381 = pneg %p189
        $region34: #{tpu_custom_call.1} parent=11 // pred_check_branch
          %383 = sbr.rel (%p381) target = $region36
        $region35: #{tpu_custom_call.1} parent=11 // pred_region
          _
        $region36: #{tpu_custom_call.1} parent=11 // pred_fallthru
          _
        // Predicated region
        $region37: #{tpu_custom_call.1} parent=11 // pred_check
          %p384 = pneg %p210
        $region38: #{tpu_custom_call.1} parent=11 // pred_check_branch
          %386 = sbr.rel (%p384) target = $region40
        $region39: #{tpu_custom_call.1} parent=11 // pred_region
          _
        $region40: #{tpu_custom_call.1} parent=11 // pred_fallthru
          _
        // Predicated region
        $region41: #{tpu_custom_call.1} parent=11 // pred_check
          %p387 = pneg %p231
        $region42: #{tpu_custom_call.1} parent=11 // pred_check_branch
          %389 = sbr.rel (%p387) target = $region44
        $region43: #{tpu_custom_call.1} parent=11 // pred_region
          _
        $region44: #{tpu_custom_call.1} parent=11 // pred_fallthru
          _
        // Predicated region
        $region45: #{tpu_custom_call.1} parent=11 // pred_check
          %p390 = pneg %p252
        $region46: #{tpu_custom_call.1} parent=11 // pred_check_branch
          %392 = sbr.rel (%p390) target = $region48
        $region47: #{tpu_custom_call.1} parent=11 // pred_region
          _
        $region48: #{tpu_custom_call.1} parent=11 // pred_fallthru
          _
        // Predicated region
        $region49: #{tpu_custom_call.1} parent=11 // pred_check
          %p393 = pneg %p273
        $region50: #{tpu_custom_call.1} parent=11 // pred_check_branch
          %395 = sbr.rel (%p393) target = $region52
        $region51: #{tpu_custom_call.1} parent=11 // pred_region
          _
        $region52: #{tpu_custom_call.1} parent=11 // pred_fallthru
          _
      $region12: #{tpu_custom_call.1} parent=5 // pred_fallthru
        _
      %p396 = scmp.lt.s32.totalorder %s23, 2
      // Predicated region
      $region53: #{tpu_custom_call.1} parent=5 // pred_check
        %p397 = pneg %p396
      $region54: #{tpu_custom_call.1} parent=5 // pred_check_branch
        %399 = sbr.rel (%p397) target = $region56
      $region55: #{tpu_custom_call.1} parent=5 // pred_region
        // Predicated region
        $region57: #{tpu_custom_call.1} parent=55 // pred_check
          %p400 = pneg %p57
        $region58: #{tpu_custom_call.1} parent=55 // pred_check_branch
          %402 = sbr.rel (%p400) target = $region60
        $region59: #{tpu_custom_call.1} parent=55 // pred_region
          %p403 = scmp.lt.s32.totalorder %s30, 1
          %s404 = scalar_select %p403, %s30, 1
          %p405 = scmp.lt.s32.totalorder %s31, 0
          %s406 = scalar_select %p405, %s31, 0
          %s407 = smul.addr %s406, 6
          %s408 = smul.addr %s404, 6
          %s409 = sadd.s32 %s407, %s408
          %s410 = smul.addr %s409, 8
          %s411 = scalar_lea.vmem %s0, %s410
        $region60: #{tpu_custom_call.1} parent=55 // pred_fallthru
          _
      $region56: #{tpu_custom_call.1} parent=5 // pred_fallthru
        _
      %p412 = scmp.le.s32.totalorder 1, %s23
      %p413 = scmp.lt.s32.totalorder %s23, 3
      %p414 = pnand %p412, %p413
      %p415 = pneg %p414
      // Predicated region
      $region61: #{tpu_custom_call.1} parent=5 // pred_check
        _
      $region62: #{tpu_custom_call.1} parent=5 // pred_check_branch
        %417 = sbr.rel (%p414) target = $region64
      $region63: #{tpu_custom_call.1} parent=5 // pred_region
        %s418 = ssub.s32 %s23, 1
        // Predicated region
        $region65: #{tpu_custom_call.1} parent=63 // pred_check
          %p419 = pneg %p84
        $region66: #{tpu_custom_call.1} parent=63 // pred_check_branch
          %421 = sbr.rel (%p419) target = $region68
        $region67: #{tpu_custom_call.1} parent=63 // pred_region
          %422 = dma.done [#allocation6], 10240
        $region68: #{tpu_custom_call.1} parent=63 // pred_fallthru
          _
        // Predicated region
        $region69: #{tpu_custom_call.1} parent=63 // pred_check
          %p423 = pneg %p105
        $region70: #{tpu_custom_call.1} parent=63 // pred_check_branch
          %425 = sbr.rel (%p423) target = $region72
        $region71: #{tpu_custom_call.1} parent=63 // pred_region
          %426 = dma.done [#allocation9], 10240
        $region72: #{tpu_custom_call.1} parent=63 // pred_fallthru
          _
        // Predicated region
        $region73: #{tpu_custom_call.1} parent=63 // pred_check
          %p427 = pneg %p126
        $region74: #{tpu_custom_call.1} parent=63 // pred_check_branch
          %429 = sbr.rel (%p427) target = $region76
        $region75: #{tpu_custom_call.1} parent=63 // pred_region
          %430 = dma.done [#allocation9], 10240
        $region76: #{tpu_custom_call.1} parent=63 // pred_fallthru
          _
        // Predicated region
        $region77: #{tpu_custom_call.1} parent=63 // pred_check
          %p431 = pneg %p147
        $region78: #{tpu_custom_call.1} parent=63 // pred_check_branch
          %433 = sbr.rel (%p431) target = $region80
        $region79: #{tpu_custom_call.1} parent=63 // pred_region
          %434 = dma.done [#allocation12], 10240
        $region80: #{tpu_custom_call.1} parent=63 // pred_fallthru
          _
        // Predicated region
        $region81: #{tpu_custom_call.1} parent=63 // pred_check
          %p435 = pneg %p168
        $region82: #{tpu_custom_call.1} parent=63 // pred_check_branch
          %437 = sbr.rel (%p435) target = $region84
        $region83: #{tpu_custom_call.1} parent=63 // pred_region
          %438 = dma.done [#allocation12], 10240
        $region84: #{tpu_custom_call.1} parent=63 // pred_fallthru
          _
        %p439 = scmp.lt.s32.totalorder %s32, 1
        %s440 = scalar_select %p439, %s32, 1
        %p441 = scmp.lt.s32.totalorder %s33, 0
        %s442 = scalar_select %p441, %s33, 0
        %s443 = smul.addr %s442, 6
        %s444 = smul.addr %s440, 6
        %s445 = sadd.s32 %s443, %s444
        %s446 = smul.addr %s445, 8
        %s447 = scalar_lea.vmem %s0, %s446
        %p448 = pneg %p63
        %p449 = pneg %p60
        %p450 = pneg %p84
        %p451 = pneg %p81
        %p452 = pneg %p105
        %p453 = pneg %p102
        %p454 = pneg %p126
        %p455 = pneg %p123
        %p456 = pneg %p147
        %p457 = pneg %p144
        %p458 = pneg %p168
        %p459 = pneg %p165
        %p460 = pneg %p189
        %p461 = pneg %p186
        %p462 = pneg %p210
        %p463 = pneg %p207
        %p464 = pneg %p231
        %p465 = pneg %p228
        %p466 = pneg %p252
        %p467 = pneg %p249
        %p468 = pneg %p273
        %p469 = pneg %p270
        %p470 = pneg %p301
        %p471 = pneg %p298
        %s472 = sand.u32 %s288, 1
        %s473 = scalar_lea.sflag [#allocation7], %s472
        %s474 = sand.u32 %s288, 1
        %s475 = smul.addr %s474, 24
        %s476 = scalar_lea.vmem [#allocation14], %s475
        %p477 = scmp.lt.s32.totalorder %s32, 1
        %s478 = scalar_select %p477, %s32, 1
        %p479 = scmp.lt.s32.totalorder %s33, 0
        %s480 = scalar_select %p479, %s33, 0
        %s481 = smul.addr %s480, 6
        %s482 = smul.addr %s478, 6
        %s483 = sadd.s32 %s481, %s482
        %s484 = smul.addr %s483, 8
        %s485 = scalar_lea.vmem %s0, %s484
        %s486 = smul.u32 %s33, 24
        %s487 = ssub.s32 %s486, 10
        %v488 = vlaneseq
        %v489 = vshrl.u32 %v488, 7
        %v490 = vadd.s32 %v489, 8
        %v491 = vadd.s32 %v489, 16
        %v492 = vadd.s32 %v489, 24
        %v493 = vadd.s32 %v489, 32
        %v494 = vadd.s32 %v489, 40
        %v495 = vstv %s487
        %v496 = vadd.s32 %v489, %v495
        %v497 = vadd.s32 %v490, %v495
        %v498 = vadd.s32 %v491, %v495
        %v499 = vadd.s32 %v492, %v495
        %v500 = vadd.s32 %v493, %v495
        %v501 = vadd.s32 %v494, %v495
        %vm502 = vcmp.ge.s32.totalorder %v496, 0
        %vm503 = vcmp.ge.s32.totalorder %v497, 0
        %vm504 = vcmp.ge.s32.totalorder %v498, 0
        %vm505 = vcmp.ge.s32.totalorder %v499, 0
        %vm506 = vcmp.ge.s32.totalorder %v500, 0
        %vm507 = vcmp.ge.s32.totalorder %v501, 0
        %vm508 = vcmp.lt.s32.totalorder %v496, 24
        %vm509 = vcmp.lt.s32.totalorder %v497, 24
        %vm510 = vcmp.lt.s32.totalorder %v498, 24
        %vm511 = vcmp.lt.s32.totalorder %v499, 24
        %vm512 = vcmp.lt.s32.totalorder %v500, 24
        %vm513 = vcmp.lt.s32.totalorder %v501, 24
        %vm514 = vmand %vm502, %vm508
        %vm515 = vmand %vm503, %vm509
        %vm516 = vmand %vm504, %vm510
        %vm517 = vmand %vm505, %vm511
        %vm518 = vmand %vm506, %vm512
        %vm519 = vmand %vm507, %vm513
        %v520 = vsel %vm514, 1, 0
        %v521 = vsel %vm515, 1, 0
        %v522 = vsel %vm516, 1, 0
        %v523 = vsel %vm517, 1, 0
        %v524 = vsel %vm518, 1, 0
        %v525 = vsel %vm519, 1, 0
        %v526 = vcvt.s32.f32 %v520
        %v527 = vcvt.s32.f32 %v521
        %v528 = vcvt.s32.f32 %v522
        %v529 = vcvt.s32.f32 %v523
        %v530 = vcvt.s32.f32 %v524
        %v531 = vcvt.s32.f32 %v525
        %v532 = vld [vmem:[%s485] sm:$0xff]
        %v533 = vld [vmem:[%s485 + $0x8] sm:$0xff]
        %v534 = vld [vmem:[%s485 + $0x10] sm:$0xff]
        %v535 = vld [vmem:[%s485 + $0x18] sm:$0xff]
        %v536 = vld [vmem:[%s485 + $0x20] sm:$0xff]
        %537 = vst [vmem:[#allocation4] sm:$0xff] %v532
        %538 = vst [vmem:[#allocation4 + $0x28] sm:$0xff] %v533
        %539 = vst [vmem:[#allocation4 + $0x50] sm:$0xff] %v534
        %540 = vst [vmem:[#allocation4 + $0x78] sm:$0xff] %v535
        %541 = vst [vmem:[#allocation4 + $0xa0] sm:$0xff] %v536
        %v542 = vld [vmem:[%s485 + $0x1] sm:$0xff]
        %v543 = vld [vmem:[%s485 + $0x9] sm:$0xff]
        %v544 = vld [vmem:[%s485 + $0x11] sm:$0xff]
        %v545 = vld [vmem:[%s485 + $0x19] sm:$0xff]
        %v546 = vld [vmem:[%s485 + $0x21] sm:$0xff]
        %547 = vst [vmem:[#allocation4 + $0x8] sm:$0xff] %v542
        %548 = vst [vmem:[#allocation4 + $0x30] sm:$0xff] %v543
        %549 = vst [vmem:[#allocation4 + $0x58] sm:$0xff] %v544
        %550 = vst [vmem:[#allocation4 + $0x80] sm:$0xff] %v545
        %551 = vst [vmem:[#allocation4 + $0xa8] sm:$0xff] %v546
        %v552 = vld [vmem:[%s485 + $0x2] sm:$0xff]
        %v553 = vld [vmem:[%s485 + $0xa] sm:$0xff]
        %v554 = vld [vmem:[%s485 + $0x12] sm:$0xff]
        %v555 = vld [vmem:[%s485 + $0x1a] sm:$0xff]
        %v556 = vld [vmem:[%s485 + $0x22] sm:$0xff]
        %557 = vst [vmem:[#allocation4 + $0x10] sm:$0xff] %v552
        %558 = vst [vmem:[#allocation4 + $0x38] sm:$0xff] %v553
        %559 = vst [vmem:[#allocation4 + $0x60] sm:$0xff] %v554
        %560 = vst [vmem:[#allocation4 + $0x88] sm:$0xff] %v555
        %561 = vst [vmem:[#allocation4 + $0xb0] sm:$0xff] %v556
        %v562 = vld [vmem:[%s485 + $0x3] sm:$0xff]
        %v563 = vld [vmem:[%s485 + $0xb] sm:$0xff]
        %v564 = vld [vmem:[%s485 + $0x13] sm:$0xff]
        %v565 = vld [vmem:[%s485 + $0x1b] sm:$0xff]
        %v566 = vld [vmem:[%s485 + $0x23] sm:$0xff]
        %567 = vst [vmem:[#allocation4 + $0x18] sm:$0xff] %v562
        %568 = vst [vmem:[#allocation4 + $0x40] sm:$0xff] %v563
        %569 = vst [vmem:[#allocation4 + $0x68] sm:$0xff] %v564
        %570 = vst [vmem:[#allocation4 + $0x90] sm:$0xff] %v565
        %571 = vst [vmem:[#allocation4 + $0xb8] sm:$0xff] %v566
        %v572 = vld [vmem:[%s485 + $0x4] sm:$0xff]
        %v573 = vld [vmem:[%s485 + $0xc] sm:$0xff]
        %v574 = vld [vmem:[%s485 + $0x14] sm:$0xff]
        %v575 = vld [vmem:[%s485 + $0x1c] sm:$0xff]
        %v576 = vld [vmem:[%s485 + $0x24] sm:$0xff]
        %577 = vst [vmem:[#allocation4 + $0x20] sm:$0xff] %v572
        %578 = vst [vmem:[#allocation4 + $0x48] sm:$0xff] %v573
        %579 = vst [vmem:[#allocation4 + $0x70] sm:$0xff] %v574
        %580 = vst [vmem:[#allocation4 + $0x98] sm:$0xff] %v575
        %581 = vst [vmem:[#allocation4 + $0xc0] sm:$0xff] %v576
        %v582 = vld [vmem:[#allocation4] sm:$0xff]
        %v583 = vld [vmem:[#allocation4 + $0x8] sm:$0xff]
        %v584 = vld [vmem:[#allocation4 + $0x10] sm:$0xff]
        %v585 = vld [vmem:[#allocation4 + $0x18] sm:$0xff]
        %v586 = vld [vmem:[#allocation4 + $0x20] sm:$0xff]
        %v587 = vld [vmem:[#allocation4 + $0x28] sm:$0xff]
        %v588 = vld [vmem:[#allocation4 + $0x30] sm:$0xff]
        %v589 = vld [vmem:[#allocation4 + $0x38] sm:$0xff]
        %v590 = vld [vmem:[#allocation4 + $0x40] sm:$0xff]
        %v591 = vld [vmem:[#allocation4 + $0x48] sm:$0xff]
        %v592 = vld [vmem:[#allocation4 + $0x50] sm:$0xff]
        %v593 = vld [vmem:[#allocation4 + $0x58] sm:$0xff]
        %v594 = vld [vmem:[#allocation4 + $0x60] sm:$0xff]
        %v595 = vld [vmem:[#allocation4 + $0x68] sm:$0xff]
        %v596 = vld [vmem:[#allocation4 + $0x70] sm:$0xff]
        %v597 = vld [vmem:[#allocation4 + $0x78] sm:$0xff]
        %v598 = vld [vmem:[#allocation4 + $0x80] sm:$0xff]
        %v599 = vld [vmem:[#allocation4 + $0x88] sm:$0xff]
        %v600 = vld [vmem:[#allocation4 + $0x90] sm:$0xff]
        %v601 = vld [vmem:[#allocation4 + $0x98] sm:$0xff]
        %v602 = vld [vmem:[#allocation4 + $0xa0] sm:$0xff]
        %v603 = vld [vmem:[#allocation4 + $0xa8] sm:$0xff]
        %v604 = vld [vmem:[#allocation4 + $0xb0] sm:$0xff]
        %v605 = vld [vmem:[#allocation4 + $0xb8] sm:$0xff]
        %v606 = vld [vmem:[#allocation4 + $0xc0] sm:$0xff]
        %v607 = vld [vmem:[#allocation5] sm:$0xff]
        %v608 = vld [vmem:[#allocation5 + $0x8] sm:$0xff]
        %v609 = vld [vmem:[#allocation5 + $0x10] sm:$0xff]
        %v610 = vld [vmem:[#allocation5 + $0x18] sm:$0xff]
        %v611 = vld [vmem:[#allocation5 + $0x20] sm:$0xff]
        %v612 = vld [vmem:[#allocation5 + $0x28] sm:$0xff]
        %v613 = vld [vmem:[#allocation5 + $0x30] sm:$0xff]
        %v614 = vld [vmem:[#allocation5 + $0x38] sm:$0xff]
        %v615 = vld [vmem:[#allocation5 + $0x40] sm:$0xff]
        %v616 = vld [vmem:[#allocation5 + $0x48] sm:$0xff]
        %v617 = vld [vmem:[#allocation5 + $0x50] sm:$0xff]
        %v618 = vld [vmem:[#allocation5 + $0x58] sm:$0xff]
        %v619 = vld [vmem:[#allocation5 + $0x60] sm:$0xff]
        %v620 = vld [vmem:[#allocation5 + $0x68] sm:$0xff]
        %v621 = vld [vmem:[#allocation5 + $0x70] sm:$0xff]
        %v622 = vld [vmem:[#allocation5 + $0x78] sm:$0xff]
        %v623 = vld [vmem:[#allocation5 + $0x80] sm:$0xff]
        %v624 = vld [vmem:[#allocation5 + $0x88] sm:$0xff]
        %v625 = vld [vmem:[#allocation5 + $0x90] sm:$0xff]
        %v626 = vld [vmem:[#allocation5 + $0x98] sm:$0xff]
        %v627 = vld [vmem:[#allocation5 + $0xa0] sm:$0xff]
        %v628 = vld [vmem:[#allocation5 + $0xa8] sm:$0xff]
        %v629 = vld [vmem:[#allocation5 + $0xb0] sm:$0xff]
        %v630 = vld [vmem:[#allocation5 + $0xb8] sm:$0xff]
        %v631 = vld [vmem:[#allocation5 + $0xc0] sm:$0xff]
        %v632 = vld [vmem:[#allocation5 + $0xc8] sm:$0xff]
        %v633 = vld [vmem:[#allocation5 + $0xd0] sm:$0xff]
        %v634 = vld [vmem:[#allocation5 + $0xd8] sm:$0xff]
        %v635 = vld [vmem:[#allocation5 + $0xe0] sm:$0xff]
        %v636 = vld [vmem:[#allocation5 + $0xe8] sm:$0xff]
        %v637 = vld [vmem:[#allocation5 + $0xf0] sm:$0xff]
        %v638 = vld [vmem:[#allocation5 + $0xf8] sm:$0xff]
        %v639 = vld [vmem:[#allocation5 + $0x100] sm:$0xff]
        %v640 = vld [vmem:[#allocation5 + $0x108] sm:$0xff]
        %v641 = vld [vmem:[#allocation5 + $0x110] sm:$0xff]
        %v642 = vld [vmem:[#allocation5 + $0x118] sm:$0xff]
        %v643 = vld [vmem:[#allocation5 + $0x120] sm:$0xff]
        %v644 = vld [vmem:[#allocation5 + $0x128] sm:$0xff]
        %v645 = vld [vmem:[#allocation5 + $0x130] sm:$0xff]
        %v646 = vld [vmem:[#allocation5 + $0x138] sm:$0xff]
        %v647 = vld [vmem:[#allocation5 + $0x140] sm:$0xff]
        %v648 = vld [vmem:[#allocation5 + $0x148] sm:$0xff]
        %v649 = vld [vmem:[#allocation5 + $0x150] sm:$0xff]
        %v650 = vld [vmem:[#allocation5 + $0x158] sm:$0xff]
        %v651 = vld [vmem:[#allocation5 + $0x160] sm:$0xff]
        %v652 = vld [vmem:[#allocation5 + $0x168] sm:$0xff]
        %v653 = vld [vmem:[#allocation5 + $0x170] sm:$0xff]
        %v654 = vld [vmem:[#allocation5 + $0x178] sm:$0xff]
        %v655 = vld [vmem:[#allocation5 + $0x180] sm:$0xff]
        %v656 = vld [vmem:[#allocation5 + $0x188] sm:$0xff]
        %v657 = vld [vmem:[#allocation5 + $0x190] sm:$0xff]
        %v658 = vld [vmem:[#allocation5 + $0x198] sm:$0xff]
        %v659 = vld [vmem:[#allocation5 + $0x1a0] sm:$0xff]
        %v660 = vld [vmem:[#allocation5 + $0x1a8] sm:$0xff]
        %v661 = vld [vmem:[#allocation5 + $0x1b0] sm:$0xff]
        %v662 = vld [vmem:[#allocation5 + $0x1b8] sm:$0xff]
        %v663 = vld [vmem:[#allocation5 + $0x1c0] sm:$0xff]
        %v664 = vld [vmem:[#allocation5 + $0x1c8] sm:$0xff]
        %v665 = vld [vmem:[#allocation5 + $0x1d0] sm:$0xff]
        %v666 = vld [vmem:[#allocation5 + $0x1d8] sm:$0xff]
        %v667 = vld [vmem:[#allocation5 + $0x1e0] sm:$0xff]
        %v668 = vld [vmem:[#allocation5 + $0x1e8] sm:$0xff]
        %v669 = vld [vmem:[#allocation5 + $0x1f0] sm:$0xff]
        %v670 = vld [vmem:[#allocation5 + $0x1f8] sm:$0xff]
        %v671 = vld [vmem:[#allocation5 + $0x200] sm:$0xff]
        %v672 = vld [vmem:[#allocation5 + $0x208] sm:$0xff]
        %v673 = vld [vmem:[#allocation5 + $0x210] sm:$0xff]
        %v674 = vld [vmem:[#allocation5 + $0x218] sm:$0xff]
        %v675 = vld [vmem:[#allocation5 + $0x220] sm:$0xff]
        %v676 = vld [vmem:[#allocation5 + $0x228] sm:$0xff]
        %v677 = vld [vmem:[#allocation5 + $0x230] sm:$0xff]
        %v678 = vld [vmem:[#allocation5 + $0x238] sm:$0xff]
        %v679 = vld [vmem:[#allocation5 + $0x240] sm:$0xff]
        %v680 = vld [vmem:[#allocation5 + $0x248] sm:$0xff]
        %v681 = vld [vmem:[#allocation5 + $0x250] sm:$0xff]
        %v682 = vld [vmem:[#allocation5 + $0x258] sm:$0xff]
        %v683 = vld [vmem:[#allocation5 + $0x260] sm:$0xff]
        %v684 = vld [vmem:[#allocation5 + $0x268] sm:$0xff]
        %v685 = vld [vmem:[#allocation5 + $0x270] sm:$0xff]
        %v686 = vld [vmem:[#allocation5 + $0x278] sm:$0xff]
        %v687 = vld [vmem:[%s6] sm:$0x1]
        %v689 = vlaneseq
        %v690 = vshrl.u32 %v689, 7
        %v691 = vsub.s32 0, %v690
        %v692 = vrot.slane %v687, %v691
        %694 = vmatprep.subr.mxu0 0.0
        %695 = vmatpush1.msra.mxu0 %v607
        %696 = vmatprep.subr.mxu0 0.0
        %697 = vmatpush1.msra.mxu0 %v608
        %698 = vmatprep.subr.mxu0 0.0
        %699 = vmatpush1.msra.mxu0 %v609
        %700 = vmatprep.subr.mxu0 0.0
        %701 = vmatpush1.msra.mxu0 %v610
        %702 = vmatprep.subr.mxu0 0.0
        %703 = vmatpush1.msra.mxu0 %v611
        %704 = vmatprep.subr.mxu0 0.0
        %705 = vmatpush1.msra.mxu0 %v612
        %706 = vmatprep.subr.mxu0 0.0
        %707 = vmatpush1.msra.mxu0 %v613
        %708 = vmatprep.subr.mxu0 0.0
        %709 = vmatpush1.msra.mxu0 %v614
        %710 = vmatprep.subr.mxu0 0.0
        %711 = vmatpush1.msra.mxu0 %v615
        %712 = vmatprep.subr.mxu0 0.0
        %713 = vmatpush1.msra.mxu0 %v616
        %714 = vmatprep.subr.mxu0 0.0
        %715 = vmatpush1.msra.mxu0 %v617
        %716 = vmatprep.subr.mxu0 0.0
        %717 = vmatpush1.msra.mxu0 %v618
        %718 = vmatprep.subr.mxu0 0.0
        %719 = vmatpush1.msra.mxu0 %v619
        %720 = vmatprep.subr.mxu0 0.0
        %721 = vmatpush1.msra.mxu0 %v620
        %722 = vmatprep.subr.mxu0 0.0
        %723 = vmatpush1.msra.mxu0 %v621
        %724 = vmatprep.subr.mxu0 0.0
        %725 = vmatpush1.msra.mxu0 %v622
        %726 = vmatprep.subr.mxu0 0.0
        %727 = vmatpush1.msra.mxu0 %v623
        %728 = vmatprep.subr.mxu0 0.0
        %729 = vmatpush1.msra.mxu0 %v624
        %730 = vmatprep.subr.mxu0 0.0
        %731 = vmatpush1.msra.mxu0 %v625
        %732 = vmatprep.subr.mxu0 0.0
        %733 = vmatpush1.msra.mxu0 %v626
        %734 = vmatprep.subr.mxu0 0.0
        %735 = vmatpush1.msra.mxu0 %v627
        %736 = vmatprep.subr.mxu0 0.0
        %737 = vmatpush1.msra.mxu0 %v628
        %738 = vmatprep.subr.mxu0 0.0
        %739 = vmatpush1.msra.mxu0 %v629
        %740 = vmatprep.subr.mxu0 0.0
        %741 = vmatpush1.msra.mxu0 %v630
        %742 = vmatprep.subr.mxu0 0.0
        %743 = vmatpush1.msra.mxu0 %v631
        %744 = vmatprep.subr.mxu0 0.0
        %745 = vmatpush1.msra.mxu0 %v632
        %746 = vmatprep.subr.mxu0 0.0
        %747 = vmatpush1.msra.mxu0 %v633
        %748 = vmatprep.subr.mxu0 0.0
        %749 = vmatpush1.msra.mxu0 %v634
        %750 = vmatprep.subr.mxu0 0.0
        %751 = vmatpush1.msra.mxu0 %v635
        %752 = vmatprep.subr.mxu0 0.0
        %753 = vmatpush1.msra.mxu0 %v636
        %754 = vmatprep.subr.mxu0 0.0
        %755 = vmatpush1.msra.mxu0 %v637
        %756 = vmatprep.subr.mxu0 0.0
        %757 = vmatpush1.msra.mxu0 %v638
        %758 = vmatprep.mubr.f32.mxu0 %v583
        %759 = vmatmul.mubr.f32.gmra.mrb[0].mxu0 %v582
        %v760 = vpop.f32.mrb[0].mxu0
        %v761 = vadd.f32 %v692, %v760
        %v762 = vpop.f32.mrb[0].mxu0
        %763 = vmatprep.mubr.f32.mxu0 %v588
        %764 = vmatmul.mubr.f32.gmra.mrb[0].mxu0 %v587
        %v765 = vpop.f32.mrb[0].mxu0
        %v766 = vadd.f32 %v692, %v765
        %v767 = vpop.f32.mrb[0].mxu0
        %768 = vmatprep.mubr.f32.mxu0 %v593
        %769 = vmatmul.mubr.f32.gmra.mrb[0].mxu0 %v592
        %v770 = vpop.f32.mrb[0].mxu0
        %v771 = vadd.f32 %v692, %v770
        %v772 = vpop.f32.mrb[0].mxu0
        %773 = vmatprep.mubr.f32.mxu0 %v598
        %774 = vmatmul.mubr.f32.gmra.mrb[0].mxu0 %v597
        %v775 = vpop.f32.mrb[0].mxu0
        %v776 = vadd.f32 %v692, %v775
        %v777 = vpop.f32.mrb[0].mxu0
        %778 = vmatprep.mubr.f32.mxu0 %v603
        %779 = vmatmul.mubr.f32.gmra.mrb[0].mxu0 %v602
        %v780 = vpop.f32.mrb[0].mxu0
        %v781 = vadd.f32 %v692, %v780
        %v782 = vpop.f32.mrb[0].mxu0
        %783 = vdwg.mxu0
        %784 = vmatprep.subr.mxu0 0.0
        %785 = vmatpush1.msra.mxu0 %v639
        %786 = vmatprep.subr.mxu0 0.0
        %787 = vmatpush1.msra.mxu0 %v640
        %788 = vmatprep.subr.mxu0 0.0
        %789 = vmatpush1.msra.mxu0 %v641
        %790 = vmatprep.subr.mxu0 0.0
        %791 = vmatpush1.msra.mxu0 %v642
        %792 = vmatprep.subr.mxu0 0.0
        %793 = vmatpush1.msra.mxu0 %v643
        %794 = vmatprep.subr.mxu0 0.0
        %795 = vmatpush1.msra.mxu0 %v644
        %796 = vmatprep.subr.mxu0 0.0
        %797 = vmatpush1.msra.mxu0 %v645
        %798 = vmatprep.subr.mxu0 0.0
        %799 = vmatpush1.msra.mxu0 %v646
        %800 = vmatprep.subr.mxu0 0.0
        %801 = vmatpush1.msra.mxu0 %v647
        %802 = vmatprep.subr.mxu0 0.0
        %803 = vmatpush1.msra.mxu0 %v648
        %804 = vmatprep.subr.mxu0 0.0
        %805 = vmatpush1.msra.mxu0 %v649
        %806 = vmatprep.subr.mxu0 0.0
        %807 = vmatpush1.msra.mxu0 %v650
        %808 = vmatprep.subr.mxu0 0.0
        %809 = vmatpush1.msra.mxu0 %v651
        %810 = vmatprep.subr.mxu0 0.0
        %811 = vmatpush1.msra.mxu0 %v652
        %812 = vmatprep.subr.mxu0 0.0
        %813 = vmatpush1.msra.mxu0 %v653
        %814 = vmatprep.subr.mxu0 0.0
        %815 = vmatpush1.msra.mxu0 %v654
        %816 = vmatprep.subr.mxu0 0.0
        %817 = vmatpush1.msra.mxu0 %v655
        %818 = vmatprep.subr.mxu0 0.0
        %819 = vmatpush1.msra.mxu0 %v656
        %820 = vmatprep.subr.mxu0 0.0
        %821 = vmatpush1.msra.mxu0 %v657
        %822 = vmatprep.subr.mxu0 0.0
        %823 = vmatpush1.msra.mxu0 %v658
        %824 = vmatprep.subr.mxu0 0.0
        %825 = vmatpush1.msra.mxu0 %v659
        %826 = vmatprep.subr.mxu0 0.0
        %827 = vmatpush1.msra.mxu0 %v660
        %828 = vmatprep.subr.mxu0 0.0
        %829 = vmatpush1.msra.mxu0 %v661
        %830 = vmatprep.subr.mxu0 0.0
        %831 = vmatpush1.msra.mxu0 %v662
        %832 = vmatprep.subr.mxu0 0.0
        %833 = vmatpush1.msra.mxu0 %v663
        %834 = vmatprep.subr.mxu0 0.0
        %835 = vmatpush1.msra.mxu0 %v664
        %836 = vmatprep.subr.mxu0 0.0
        %837 = vmatpush1.msra.mxu0 %v665
        %838 = vmatprep.subr.mxu0 0.0
        %839 = vmatpush1.msra.mxu0 %v666
        %840 = vmatprep.subr.mxu0 0.0
        %841 = vmatpush1.msra.mxu0 %v667
        %842 = vmatprep.subr.mxu0 0.0
        %843 = vmatpush1.msra.mxu0 %v668
        %844 = vmatprep.subr.mxu0 0.0
        %845 = vmatpush1.msra.mxu0 %v669
        %846 = vmatprep.subr.mxu0 0.0
        %847 = vmatpush1.msra.mxu0 %v670
        %848 = vmatprep.mubr.f32.mxu0 %v585
        %849 = vmatmul.mubr.f32.gmra.mrb[0].mxu0 %v584
        %v850 = vpop.f32.mrb[0].mxu0
        %v851 = vadd.f32 %v761, %v850
        %v852 = vpop.f32.mrb[0].mxu0
        %853 = vmatprep.mubr.f32.mxu0 %v590
        %854 = vmatmul.mubr.f32.gmra.mrb[0].mxu0 %v589
        %v855 = vpop.f32.mrb[0].mxu0
        %v856 = vadd.f32 %v766, %v855
        %v857 = vpop.f32.mrb[0].mxu0
        %858 = vmatprep.mubr.f32.mxu0 %v595
        %859 = vmatmul.mubr.f32.gmra.mrb[0].mxu0 %v594
        %v860 = vpop.f32.mrb[0].mxu0
        %v861 = vadd.f32 %v771, %v860
        %v862 = vpop.f32.mrb[0].mxu0
        %863 = vmatprep.mubr.f32.mxu0 %v600
        %864 = vmatmul.mubr.f32.gmra.mrb[0].mxu0 %v599
        %v865 = vpop.f32.mrb[0].mxu0
        %v866 = vadd.f32 %v776, %v865
        %v867 = vpop.f32.mrb[0].mxu0
        %868 = vmatprep.mubr.f32.mxu0 %v605
        %869 = vmatmul.mubr.f32.gmra.mrb[0].mxu0 %v604
        %v870 = vpop.f32.mrb[0].mxu0
        %v871 = vadd.f32 %v781, %v870
        %v872 = vpop.f32.mrb[0].mxu0
        %873 = vdwg.mxu0
        %874 = vmatprep.subr.mxu0 0.0
        %875 = vmatpush1.msra.mxu0 %v671
        %876 = vmatprep.subr.mxu0 0.0
        %877 = vmatpush1.msra.mxu0 %v672
        %878 = vmatprep.subr.mxu0 0.0
        %879 = vmatpush1.msra.mxu0 %v673
        %880 = vmatprep.subr.mxu0 0.0
        %881 = vmatpush1.msra.mxu0 %v674
        %882 = vmatprep.subr.mxu0 0.0
        %883 = vmatpush1.msra.mxu0 %v675
        %884 = vmatprep.subr.mxu0 0.0
        %885 = vmatpush1.msra.mxu0 %v676
        %886 = vmatprep.subr.mxu0 0.0
        %887 = vmatpush1.msra.mxu0 %v677
        %888 = vmatprep.subr.mxu0 0.0
        %889 = vmatpush1.msra.mxu0 %v678
        %890 = vmatprep.subr.mxu0 0.0
        %891 = vmatpush1.msra.mxu0 %v679
        %892 = vmatprep.subr.mxu0 0.0
        %893 = vmatpush1.msra.mxu0 %v680
        %894 = vmatprep.subr.mxu0 0.0
        %895 = vmatpush1.msra.mxu0 %v681
        %896 = vmatprep.subr.mxu0 0.0
        %897 = vmatpush1.msra.mxu0 %v682
        %898 = vmatprep.subr.mxu0 0.0
        %899 = vmatpush1.msra.mxu0 %v683
        %900 = vmatprep.subr.mxu0 0.0
        %901 = vmatpush1.msra.mxu0 %v684
        %902 = vmatprep.subr.mxu0 0.0
        %903 = vmatpush1.msra.mxu0 %v685
        %904 = vmatprep.subr.mxu0 0.0
        %905 = vmatpush1.msra.mxu0 %v686
        %906 = vmatprep.subr.mxu0 0.0
        %907 = vmatpush1.msra.mxu0 0.0
        %908 = vmatprep.subr.mxu0 0.0
        %909 = vmatpush1.msra.mxu0 0.0
        %910 = vmatprep.subr.mxu0 0.0
        %911 = vmatpush1.msra.mxu0 0.0
        %912 = vmatprep.subr.mxu0 0.0
        %913 = vmatpush1.msra.mxu0 0.0
        %914 = vmatprep.subr.mxu0 0.0
        %915 = vmatpush1.msra.mxu0 0.0
        %916 = vmatprep.subr.mxu0 0.0
        %917 = vmatpush1.msra.mxu0 0.0
        %918 = vmatprep.subr.mxu0 0.0
        %919 = vmatpush1.msra.mxu0 0.0
        %920 = vmatprep.subr.mxu0 0.0
        %921 = vmatpush1.msra.mxu0 0.0
        %922 = vmatprep.subr.mxu0 0.0
        %923 = vmatpush1.msra.mxu0 0.0
        %924 = vmatprep.subr.mxu0 0.0
        %925 = vmatpush1.msra.mxu0 0.0
        %926 = vmatprep.subr.mxu0 0.0
        %927 = vmatpush1.msra.mxu0 0.0
        %928 = vmatprep.subr.mxu0 0.0
        %929 = vmatpush1.msra.mxu0 0.0
        %930 = vmatprep.subr.mxu0 0.0
        %931 = vmatpush1.msra.mxu0 0.0
        %932 = vmatprep.subr.mxu0 0.0
        %933 = vmatpush1.msra.mxu0 0.0
        %934 = vmatprep.subr.mxu0 0.0
        %935 = vmatpush1.msra.mxu0 0.0
        %936 = vmatprep.subr.mxu0 0.0
        %937 = vmatpush1.msra.mxu0 0.0
        %938 = vmatprep.mubr.f32.mxu0 0.0
        %939 = vmatmul.mubr.f32.gmra.mrb[0].mxu0 %v586
        %v940 = vpop.f32.mrb[0].mxu0
        %v941 = vadd.f32 %v851, %v940
        %v942 = vpop.f32.mrb[0].mxu0
        %943 = vmatprep.mubr.f32.mxu0 0.0
        %944 = vmatmul.mubr.f32.gmra.mrb[0].mxu0 %v591
        %v945 = vpop.f32.mrb[0].mxu0
        %v946 = vadd.f32 %v856, %v945
        %v947 = vpop.f32.mrb[0].mxu0
        %948 = vmatprep.mubr.f32.mxu0 0.0
        %949 = vmatmul.mubr.f32.gmra.mrb[0].mxu0 %v596
        %v950 = vpop.f32.mrb[0].mxu0
        %v951 = vadd.f32 %v861, %v950
        %v952 = vpop.f32.mrb[0].mxu0
        %953 = vmatprep.mubr.f32.mxu0 0.0
        %954 = vmatmul.mubr.f32.gmra.mrb[0].mxu0 %v601
        %v955 = vpop.f32.mrb[0].mxu0
        %v956 = vadd.f32 %v866, %v955
        %v957 = vpop.f32.mrb[0].mxu0
        %958 = vmatprep.mubr.f32.mxu0 0.0
        %959 = vmatmul.mubr.f32.gmra.mrb[0].mxu0 %v606
        %v960 = vpop.f32.mrb[0].mxu0
        %v961 = vadd.f32 %v871, %v960
        %v962 = vpop.f32.mrb[0].mxu0
        %963 = vdwg.mxu0
        %v964 = vtanh.pop %v941
        %v965 = vtanh.pop %v946
        %v966 = vtanh.pop %v951
        %v967 = vtanh.pop %v956
        %v968 = vtanh.pop %v961
        %vm975 = vcmask 1045504
        %v976 = vrot.slane %v526, 2
        %v977 = vrot.slane %v527, 2
        %v978 = vsel %vm975, %v976, %v977
        %v979 = vrot.slane %v528, 2
        %v980 = vsel %vm975, %v977, %v979
        %v981 = vrot.slane %v529, 2
        %v982 = vsel %vm975, %v979, %v981
        %v983 = vrot.slane %v530, 2
        %v984 = vsel %vm975, %v981, %v983
        %v985 = vrot.slane %v531, 2
        %v986 = vsel %vm975, %v983, %v985
        %v992 = vmul.f32 %v964, %v978
        %v993 = vmul.f32 %v965, %v980
        %v994 = vmul.f32 %v966, %v982
        %v995 = vmul.f32 %v967, %v984
        %v996 = vmul.f32 %v968, %v986
        %997 = vst [vmem:[#allocation2 + $0x2] sm:$0xff] %v992
        %998 = vst [vmem:[#allocation2 + $0xa] sm:$0xff] %v993
        %999 = vst [vmem:[#allocation2 + $0x12] sm:$0xff] %v994
        %1000 = vst [vmem:[#allocation2 + $0x1a] sm:$0xff] %v995
        %1001 = vst [vmem:[#allocation2 + $0x22] sm:$0xff] %v996
        %v1002 = vld [vmem:[#allocation2 + $0x2] sm:$0xff]
        %v1003 = vld [vmem:[#allocation2 + $0xa] sm:$0xff]
        %v1004 = vld [vmem:[#allocation2 + $0x12] sm:$0xff]
        %v1005 = vld [vmem:[#allocation2 + $0x1a] sm:$0xff]
        %v1006 = vld [vmem:[#allocation2 + $0x22] sm:$0xf]
        %1007 = vst [vmem:[#allocation4] sm:$0xff] %v1002
        %1008 = vst [vmem:[#allocation4 + $0x28] sm:$0xff] %v1003
        %1009 = vst [vmem:[#allocation4 + $0x50] sm:$0xff] %v1004
        %1010 = vst [vmem:[#allocation4 + $0x78] sm:$0xff] %v1005
        %1011 = vst [vmem:[#allocation4 + $0xa0] sm:$0xf] %v1006
        %v1012 = vld [vmem:[#allocation2 + $0x3] sm:$0xff]
        %v1013 = vld [vmem:[#allocation2 + $0xb] sm:$0xff]
        %v1014 = vld [vmem:[#allocation2 + $0x13] sm:$0xff]
        %v1015 = vld [vmem:[#allocation2 + $0x1b] sm:$0xff]
        %v1016 = vld [vmem:[#allocation2 + $0x23] sm:$0xf]
        %1017 = vst [vmem:[#allocation4 + $0x8] sm:$0xff] %v1012
        %1018 = vst [vmem:[#allocation4 + $0x30] sm:$0xff] %v1013
        %1019 = vst [vmem:[#allocation4 + $0x58] sm:$0xff] %v1014
        %1020 = vst [vmem:[#allocation4 + $0x80] sm:$0xff] %v1015
        %1021 = vst [vmem:[#allocation4 + $0xa8] sm:$0xf] %v1016
        %v1022 = vld [vmem:[#allocation2 + $0x4] sm:$0xff]
        %v1023 = vld [vmem:[#allocation2 + $0xc] sm:$0xff]
        %v1024 = vld [vmem:[#allocation2 + $0x14] sm:$0xff]
        %v1025 = vld [vmem:[#allocation2 + $0x1c] sm:$0xff]
        %v1026 = vld [vmem:[#allocation2 + $0x24] sm:$0xf]
        %1027 = vst [vmem:[#allocation4 + $0x10] sm:$0xff] %v1022
        %1028 = vst [vmem:[#allocation4 + $0x38] sm:$0xff] %v1023
        %1029 = vst [vmem:[#allocation4 + $0x60] sm:$0xff] %v1024
        %1030 = vst [vmem:[#allocation4 + $0x88] sm:$0xff] %v1025
        %1031 = vst [vmem:[#allocation4 + $0xb0] sm:$0xf] %v1026
        %v1032 = vld [vmem:[#allocation2 + $0x5] sm:$0xff]
        %v1033 = vld [vmem:[#allocation2 + $0xd] sm:$0xff]
        %v1034 = vld [vmem:[#allocation2 + $0x15] sm:$0xff]
        %v1035 = vld [vmem:[#allocation2 + $0x1d] sm:$0xff]
        %v1036 = vld [vmem:[#allocation2 + $0x25] sm:$0xf]
        %1037 = vst [vmem:[#allocation4 + $0x18] sm:$0xff] %v1032
        %1038 = vst [vmem:[#allocation4 + $0x40] sm:$0xff] %v1033
        %1039 = vst [vmem:[#allocation4 + $0x68] sm:$0xff] %v1034
        %1040 = vst [vmem:[#allocation4 + $0x90] sm:$0xff] %v1035
        %1041 = vst [vmem:[#allocation4 + $0xb8] sm:$0xf] %v1036
        %v1042 = vld [vmem:[#allocation2 + $0x6] sm:$0xff]
        %v1043 = vld [vmem:[#allocation2 + $0xe] sm:$0xff]
        %v1044 = vld [vmem:[#allocation2 + $0x16] sm:$0xff]
        %v1045 = vld [vmem:[#allocation2 + $0x1e] sm:$0xff]
        %v1046 = vld [vmem:[#allocation2 + $0x26] sm:$0xf]
        %1047 = vst [vmem:[#allocation4 + $0x20] sm:$0xff] %v1042
        %1048 = vst [vmem:[#allocation4 + $0x48] sm:$0xff] %v1043
        %1049 = vst [vmem:[#allocation4 + $0x70] sm:$0xff] %v1044
        %1050 = vst [vmem:[#allocation4 + $0x98] sm:$0xff] %v1045
        %1051 = vst [vmem:[#allocation4 + $0xc0] sm:$0xf] %v1046
        %v1052 = vld [vmem:[#allocation4] sm:$0xff]
        %v1053 = vld [vmem:[#allocation4 + $0x8] sm:$0xff]
        %v1054 = vld [vmem:[#allocation4 + $0x10] sm:$0xff]
        %v1055 = vld [vmem:[#allocation4 + $0x18] sm:$0xff]
        %v1056 = vld [vmem:[#allocation4 + $0x20] sm:$0xff]
        %v1057 = vld [vmem:[#allocation4 + $0x28] sm:$0xff]
        %v1058 = vld [vmem:[#allocation4 + $0x30] sm:$0xff]
        %v1059 = vld [vmem:[#allocation4 + $0x38] sm:$0xff]
        %v1060 = vld [vmem:[#allocation4 + $0x40] sm:$0xff]
        %v1061 = vld [vmem:[#allocation4 + $0x48] sm:$0xff]
        %v1062 = vld [vmem:[#allocation4 + $0x50] sm:$0xff]
        %v1063 = vld [vmem:[#allocation4 + $0x58] sm:$0xff]
        %v1064 = vld [vmem:[#allocation4 + $0x60] sm:$0xff]
        %v1065 = vld [vmem:[#allocation4 + $0x68] sm:$0xff]
        %v1066 = vld [vmem:[#allocation4 + $0x70] sm:$0xff]
        %v1067 = vld [vmem:[#allocation4 + $0x78] sm:$0xff]
        %v1068 = vld [vmem:[#allocation4 + $0x80] sm:$0xff]
        %v1069 = vld [vmem:[#allocation4 + $0x88] sm:$0xff]
        %v1070 = vld [vmem:[#allocation4 + $0x90] sm:$0xff]
        %v1071 = vld [vmem:[#allocation4 + $0x98] sm:$0xff]
        %v1072 = vld [vmem:[#allocation4 + $0xa0] sm:$0xf]
        %v1073 = vld [vmem:[#allocation4 + $0xa8] sm:$0xf]
        %v1074 = vld [vmem:[#allocation4 + $0xb0] sm:$0xf]
        %v1075 = vld [vmem:[#allocation4 + $0xb8] sm:$0xf]
        %v1076 = vld [vmem:[#allocation4 + $0xc0] sm:$0xf]
        %v1077 = vld [vmem:[#allocation8] sm:$0xff]
        %v1078 = vld [vmem:[#allocation8 + $0x8] sm:$0xff]
        %v1079 = vld [vmem:[#allocation8 + $0x10] sm:$0xff]
        %v1080 = vld [vmem:[#allocation8 + $0x18] sm:$0xff]
        %v1081 = vld [vmem:[#allocation8 + $0x20] sm:$0xff]
        %v1082 = vld [vmem:[#allocation8 + $0x28] sm:$0xff]
        %v1083 = vld [vmem:[#allocation8 + $0x30] sm:$0xff]
        %v1084 = vld [vmem:[#allocation8 + $0x38] sm:$0xff]
        %v1085 = vld [vmem:[#allocation8 + $0x40] sm:$0xff]
        %v1086 = vld [vmem:[#allocation8 + $0x48] sm:$0xff]
        %v1087 = vld [vmem:[#allocation8 + $0x50] sm:$0xff]
        %v1088 = vld [vmem:[#allocation8 + $0x58] sm:$0xff]
        %v1089 = vld [vmem:[#allocation8 + $0x60] sm:$0xff]
        %v1090 = vld [vmem:[#allocation8 + $0x68] sm:$0xff]
        %v1091 = vld [vmem:[#allocation8 + $0x70] sm:$0xff]
        %v1092 = vld [vmem:[#allocation8 + $0x78] sm:$0xff]
        %v1093 = vld [vmem:[#allocation8 + $0x80] sm:$0xff]
        %v1094 = vld [vmem:[#allocation8 + $0x88] sm:$0xff]
        %v1095 = vld [vmem:[#allocation8 + $0x90] sm:$0xff]
        %v1096 = vld [vmem:[#allocation8 + $0x98] sm:$0xff]
        %v1097 = vld [vmem:[#allocation8 + $0xa0] sm:$0xff]
        %v1098 = vld [vmem:[#allocation8 + $0xa8] sm:$0xff]
        %v1099 = vld [vmem:[#allocation8 + $0xb0] sm:$0xff]
        %v1100 = vld [vmem:[#allocation8 + $0xb8] sm:$0xff]
        %v1101 = vld [vmem:[#allocation8 + $0xc0] sm:$0xff]
        %v1102 = vld [vmem:[#allocation8 + $0xc8] sm:$0xff]
        %v1103 = vld [vmem:[#allocation8 + $0xd0] sm:$0xff]
        %v1104 = vld [vmem:[#allocation8 + $0xd8] sm:$0xff]
        %v1105 = vld [vmem:[#allocation8 + $0xe0] sm:$0xff]
        %v1106 = vld [vmem:[#allocation8 + $0xe8] sm:$0xff]
        %v1107 = vld [vmem:[#allocation8 + $0xf0] sm:$0xff]
        %v1108 = vld [vmem:[#allocation8 + $0xf8] sm:$0xff]
        %v1109 = vld [vmem:[#allocation8 + $0x100] sm:$0xff]
        %v1110 = vld [vmem:[#allocation8 + $0x108] sm:$0xff]
        %v1111 = vld [vmem:[#allocation8 + $0x110] sm:$0xff]
        %v1112 = vld [vmem:[#allocation8 + $0x118] sm:$0xff]
        %v1113 = vld [vmem:[#allocation8 + $0x120] sm:$0xff]
        %v1114 = vld [vmem:[#allocation8 + $0x128] sm:$0xff]
        %v1115 = vld [vmem:[#allocation8 + $0x130] sm:$0xff]
        %v1116 = vld [vmem:[#allocation8 + $0x138] sm:$0xff]
        %v1117 = vld [vmem:[#allocation8 + $0x140] sm:$0xff]
        %v1118 = vld [vmem:[#allocation8 + $0x148] sm:$0xff]
        %v1119 = vld [vmem:[#allocation8 + $0x150] sm:$0xff]
        %v1120 = vld [vmem:[#allocation8 + $0x158] sm:$0xff]
        %v1121 = vld [vmem:[#allocation8 + $0x160] sm:$0xff]
        %v1122 = vld [vmem:[#allocation8 + $0x168] sm:$0xff]
        %v1123 = vld [vmem:[#allocation8 + $0x170] sm:$0xff]
        %v1124 = vld [vmem:[#allocation8 + $0x178] sm:$0xff]
        %v1125 = vld [vmem:[#allocation8 + $0x180] sm:$0xff]
        %v1126 = vld [vmem:[#allocation8 + $0x188] sm:$0xff]
        %v1127 = vld [vmem:[#allocation8 + $0x190] sm:$0xff]
        %v1128 = vld [vmem:[#allocation8 + $0x198] sm:$0xff]
        %v1129 = vld [vmem:[#allocation8 + $0x1a0] sm:$0xff]
        %v1130 = vld [vmem:[#allocation8 + $0x1a8] sm:$0xff]
        %v1131 = vld [vmem:[#allocation8 + $0x1b0] sm:$0xff]
        %v1132 = vld [vmem:[#allocation8 + $0x1b8] sm:$0xff]
        %v1133 = vld [vmem:[#allocation8 + $0x1c0] sm:$0xff]
        %v1134 = vld [vmem:[#allocation8 + $0x1c8] sm:$0xff]
        %v1135 = vld [vmem:[#allocation8 + $0x1d0] sm:$0xff]
        %v1136 = vld [vmem:[#allocation8 + $0x1d8] sm:$0xff]
        %v1137 = vld [vmem:[#allocation8 + $0x1e0] sm:$0xff]
        %v1138 = vld [vmem:[#allocation8 + $0x1e8] sm:$0xff]
        %v1139 = vld [vmem:[#allocation8 + $0x1f0] sm:$0xff]
        %v1140 = vld [vmem:[#allocation8 + $0x1f8] sm:$0xff]
        %v1141 = vld [vmem:[#allocation8 + $0x200] sm:$0xff]
        %v1142 = vld [vmem:[#allocation8 + $0x208] sm:$0xff]
        %v1143 = vld [vmem:[#allocation8 + $0x210] sm:$0xff]
        %v1144 = vld [vmem:[#allocation8 + $0x218] sm:$0xff]
        %v1145 = vld [vmem:[#allocation8 + $0x220] sm:$0xff]
        %v1146 = vld [vmem:[#allocation8 + $0x228] sm:$0xff]
        %v1147 = vld [vmem:[#allocation8 + $0x230] sm:$0xff]
        %v1148 = vld [vmem:[#allocation8 + $0x238] sm:$0xff]
        %v1149 = vld [vmem:[#allocation8 + $0x240] sm:$0xff]
        %v1150 = vld [vmem:[#allocation8 + $0x248] sm:$0xff]
        %v1151 = vld [vmem:[#allocation8 + $0x250] sm:$0xff]
        %v1152 = vld [vmem:[#allocation8 + $0x258] sm:$0xff]
        %v1153 = vld [vmem:[#allocation8 + $0x260] sm:$0xff]
        %v1154 = vld [vmem:[#allocation8 + $0x268] sm:$0xff]
        %v1155 = vld [vmem:[#allocation8 + $0x270] sm:$0xff]
        %v1156 = vld [vmem:[#allocation8 + $0x278] sm:$0xff]
        %v1157 = vld [vmem:[%s7] sm:$0x1]
        %v1159 = vlaneseq
        %v1160 = vshrl.u32 %v1159, 7
        %v1161 = vsub.s32 0, %v1160
        %v1162 = vrot.slane %v1157, %v1161
        %1164 = vmatprep.subr.mxu0 0.0
        %1165 = vmatpush1.msra.mxu0 %v1077
        %1166 = vmatprep.subr.mxu0 0.0
        %1167 = vmatpush1.msra.mxu0 %v1078
        %1168 = vmatprep.subr.mxu0 0.0
        %1169 = vmatpush1.msra.mxu0 %v1079
        %1170 = vmatprep.subr.mxu0 0.0
        %1171 = vmatpush1.msra.mxu0 %v1080
        %1172 = vmatprep.subr.mxu0 0.0
        %1173 = vmatpush1.msra.mxu0 %v1081
        %1174 = vmatprep.subr.mxu0 0.0
        %1175 = vmatpush1.msra.mxu0 %v1082
        %1176 = vmatprep.subr.mxu0 0.0
        %1177 = vmatpush1.msra.mxu0 %v1083
        %1178 = vmatprep.subr.mxu0 0.0
        %1179 = vmatpush1.msra.mxu0 %v1084
        %1180 = vmatprep.subr.mxu0 0.0
        %1181 = vmatpush1.msra.mxu0 %v1085
        %1182 = vmatprep.subr.mxu0 0.0
        %1183 = vmatpush1.msra.mxu0 %v1086
        %1184 = vmatprep.subr.mxu0 0.0
        %1185 = vmatpush1.msra.mxu0 %v1087
        %1186 = vmatprep.subr.mxu0 0.0
        %1187 = vmatpush1.msra.mxu0 %v1088
        %1188 = vmatprep.subr.mxu0 0.0
        %1189 = vmatpush1.msra.mxu0 %v1089
        %1190 = vmatprep.subr.mxu0 0.0
        %1191 = vmatpush1.msra.mxu0 %v1090
        %1192 = vmatprep.subr.mxu0 0.0
        %1193 = vmatpush1.msra.mxu0 %v1091
        %1194 = vmatprep.subr.mxu0 0.0
        %1195 = vmatpush1.msra.mxu0 %v1092
        %1196 = vmatprep.subr.mxu0 0.0
        %1197 = vmatpush1.msra.mxu0 %v1093
        %1198 = vmatprep.subr.mxu0 0.0
        %1199 = vmatpush1.msra.mxu0 %v1094
        %1200 = vmatprep.subr.mxu0 0.0
        %1201 = vmatpush1.msra.mxu0 %v1095
        %1202 = vmatprep.subr.mxu0 0.0
        %1203 = vmatpush1.msra.mxu0 %v1096
        %1204 = vmatprep.subr.mxu0 0.0
        %1205 = vmatpush1.msra.mxu0 %v1097
        %1206 = vmatprep.subr.mxu0 0.0
        %1207 = vmatpush1.msra.mxu0 %v1098
        %1208 = vmatprep.subr.mxu0 0.0
        %1209 = vmatpush1.msra.mxu0 %v1099
        %1210 = vmatprep.subr.mxu0 0.0
        %1211 = vmatpush1.msra.mxu0 %v1100
        %1212 = vmatprep.subr.mxu0 0.0
        %1213 = vmatpush1.msra.mxu0 %v1101
        %1214 = vmatprep.subr.mxu0 0.0
        %1215 = vmatpush1.msra.mxu0 %v1102
        %1216 = vmatprep.subr.mxu0 0.0
        %1217 = vmatpush1.msra.mxu0 %v1103
        %1218 = vmatprep.subr.mxu0 0.0
        %1219 = vmatpush1.msra.mxu0 %v1104
        %1220 = vmatprep.subr.mxu0 0.0
        %1221 = vmatpush1.msra.mxu0 %v1105
        %1222 = vmatprep.subr.mxu0 0.0
        %1223 = vmatpush1.msra.mxu0 %v1106
        %1224 = vmatprep.subr.mxu0 0.0
        %1225 = vmatpush1.msra.mxu0 %v1107
        %1226 = vmatprep.subr.mxu0 0.0
        %1227 = vmatpush1.msra.mxu0 %v1108
        %1228 = vmatprep.mubr.f32.mxu0 %v1053
        %1229 = vmatmul.mubr.f32.gmra.mrb[0].mxu0 %v1052
        %v1230 = vpop.f32.mrb[0].mxu0
        %v1231 = vadd.f32 %v1162, %v1230
        %v1232 = vpop.f32.mrb[0].mxu0
        %1233 = vmatprep.mubr.f32.mxu0 %v1058
        %1234 = vmatmul.mubr.f32.gmra.mrb[0].mxu0 %v1057
        %v1235 = vpop.f32.mrb[0].mxu0
        %v1236 = vadd.f32 %v1162, %v1235
        %v1237 = vpop.f32.mrb[0].mxu0
        %1238 = vmatprep.mubr.f32.mxu0 %v1063
        %1239 = vmatmul.mubr.f32.gmra.mrb[0].mxu0 %v1062
        %v1240 = vpop.f32.mrb[0].mxu0
        %v1241 = vadd.f32 %v1162, %v1240
        %v1242 = vpop.f32.mrb[0].mxu0
        %1243 = vmatprep.mubr.f32.mxu0 %v1068
        %1244 = vmatmul.mubr.f32.gmra.mrb[0].mxu0 %v1067
        %v1245 = vpop.f32.mrb[0].mxu0
        %v1246 = vadd.f32 %v1162, %v1245
        %v1247 = vpop.f32.mrb[0].mxu0
        %1248 = vmatprep.mubr.f32.mxu0 %v1073
        %1249 = vmatmul.mubr.f32.gmra.mrb[0].mxu0 %v1072
        %v1250 = vpop.f32.mrb[0].mxu0
        %v1251 = vadd.f32 %v1162, %v1250
        %v1252 = vpop.f32.mrb[0].mxu0
        %1253 = vdwg.mxu0
        %1254 = vmatprep.subr.mxu0 0.0
        %1255 = vmatpush1.msra.mxu0 %v1109
        %1256 = vmatprep.subr.mxu0 0.0
        %1257 = vmatpush1.msra.mxu0 %v1110
        %1258 = vmatprep.subr.mxu0 0.0
        %1259 = vmatpush1.msra.mxu0 %v1111
        %1260 = vmatprep.subr.mxu0 0.0
        %1261 = vmatpush1.msra.mxu0 %v1112
        %1262 = vmatprep.subr.mxu0 0.0
        %1263 = vmatpush1.msra.mxu0 %v1113
        %1264 = vmatprep.subr.mxu0 0.0
        %1265 = vmatpush1.msra.mxu0 %v1114
        %1266 = vmatprep.subr.mxu0 0.0
        %1267 = vmatpush1.msra.mxu0 %v1115
        %1268 = vmatprep.subr.mxu0 0.0
        %1269 = vmatpush1.msra.mxu0 %v1116
        %1270 = vmatprep.subr.mxu0 0.0
        %1271 = vmatpush1.msra.mxu0 %v1117
        %1272 = vmatprep.subr.mxu0 0.0
        %1273 = vmatpush1.msra.mxu0 %v1118
        %1274 = vmatprep.subr.mxu0 0.0
        %1275 = vmatpush1.msra.mxu0 %v1119
        %1276 = vmatprep.subr.mxu0 0.0
        %1277 = vmatpush1.msra.mxu0 %v1120
        %1278 = vmatprep.subr.mxu0 0.0
        %1279 = vmatpush1.msra.mxu0 %v1121
        %1280 = vmatprep.subr.mxu0 0.0
        %1281 = vmatpush1.msra.mxu0 %v1122
        %1282 = vmatprep.subr.mxu0 0.0
        %1283 = vmatpush1.msra.mxu0 %v1123
        %1284 = vmatprep.subr.mxu0 0.0
        %1285 = vmatpush1.msra.mxu0 %v1124
        %1286 = vmatprep.subr.mxu0 0.0
        %1287 = vmatpush1.msra.mxu0 %v1125
        %1288 = vmatprep.subr.mxu0 0.0
        %1289 = vmatpush1.msra.mxu0 %v1126
        %1290 = vmatprep.subr.mxu0 0.0
        %1291 = vmatpush1.msra.mxu0 %v1127
        %1292 = vmatprep.subr.mxu0 0.0
        %1293 = vmatpush1.msra.mxu0 %v1128
        %1294 = vmatprep.subr.mxu0 0.0
        %1295 = vmatpush1.msra.mxu0 %v1129
        %1296 = vmatprep.subr.mxu0 0.0
        %1297 = vmatpush1.msra.mxu0 %v1130
        %1298 = vmatprep.subr.mxu0 0.0
        %1299 = vmatpush1.msra.mxu0 %v1131
        %1300 = vmatprep.subr.mxu0 0.0
        %1301 = vmatpush1.msra.mxu0 %v1132
        %1302 = vmatprep.subr.mxu0 0.0
        %1303 = vmatpush1.msra.mxu0 %v1133
        %1304 = vmatprep.subr.mxu0 0.0
        %1305 = vmatpush1.msra.mxu0 %v1134
        %1306 = vmatprep.subr.mxu0 0.0
        %1307 = vmatpush1.msra.mxu0 %v1135
        %1308 = vmatprep.subr.mxu0 0.0
        %1309 = vmatpush1.msra.mxu0 %v1136
        %1310 = vmatprep.subr.mxu0 0.0
        %1311 = vmatpush1.msra.mxu0 %v1137
        %1312 = vmatprep.subr.mxu0 0.0
        %1313 = vmatpush1.msra.mxu0 %v1138
        %1314 = vmatprep.subr.mxu0 0.0
        %1315 = vmatpush1.msra.mxu0 %v1139
        %1316 = vmatprep.subr.mxu0 0.0
        %1317 = vmatpush1.msra.mxu0 %v1140
        %1318 = vmatprep.mubr.f32.mxu0 %v1055
        %1319 = vmatmul.mubr.f32.gmra.mrb[0].mxu0 %v1054
        %v1320 = vpop.f32.mrb[0].mxu0
        %v1321 = vadd.f32 %v1231, %v1320
        %v1322 = vpop.f32.mrb[0].mxu0
        %1323 = vmatprep.mubr.f32.mxu0 %v1060
        %1324 = vmatmul.mubr.f32.gmra.mrb[0].mxu0 %v1059
        %v1325 = vpop.f32.mrb[0].mxu0
        %v1326 = vadd.f32 %v1236, %v1325
        %v1327 = vpop.f32.mrb[0].mxu0
        %1328 = vmatprep.mubr.f32.mxu0 %v1065
        %1329 = vmatmul.mubr.f32.gmra.mrb[0].mxu0 %v1064
        %v1330 = vpop.f32.mrb[0].mxu0
        %v1331 = vadd.f32 %v1241, %v1330
        %v1332 = vpop.f32.mrb[0].mxu0
        %1333 = vmatprep.mubr.f32.mxu0 %v1070
        %1334 = vmatmul.mubr.f32.gmra.mrb[0].mxu0 %v1069
        %v1335 = vpop.f32.mrb[0].mxu0
        %v1336 = vadd.f32 %v1246, %v1335
        %v1337 = vpop.f32.mrb[0].mxu0
        %1338 = vmatprep.mubr.f32.mxu0 %v1075
        %1339 = vmatmul.mubr.f32.gmra.mrb[0].mxu0 %v1074
        %v1340 = vpop.f32.mrb[0].mxu0
        %v1341 = vadd.f32 %v1251, %v1340
        %v1342 = vpop.f32.mrb[0].mxu0
        %1343 = vdwg.mxu0
        %1344 = vmatprep.subr.mxu0 0.0
        %1345 = vmatpush1.msra.mxu0 %v1141
        %1346 = vmatprep.subr.mxu0 0.0
        %1347 = vmatpush1.msra.mxu0 %v1142
        %1348 = vmatprep.subr.mxu0 0.0
        %1349 = vmatpush1.msra.mxu0 %v1143
        %1350 = vmatprep.subr.mxu0 0.0
        %1351 = vmatpush1.msra.mxu0 %v1144
        %1352 = vmatprep.subr.mxu0 0.0
        %1353 = vmatpush1.msra.mxu0 %v1145
        %1354 = vmatprep.subr.mxu0 0.0
        %1355 = vmatpush1.msra.mxu0 %v1146
        %1356 = vmatprep.subr.mxu0 0.0
        %1357 = vmatpush1.msra.mxu0 %v1147
        %1358 = vmatprep.subr.mxu0 0.0
        %1359 = vmatpush1.msra.mxu0 %v1148
        %1360 = vmatprep.subr.mxu0 0.0
        %1361 = vmatpush1.msra.mxu0 %v1149
        %1362 = vmatprep.subr.mxu0 0.0
        %1363 = vmatpush1.msra.mxu0 %v1150
        %1364 = vmatprep.subr.mxu0 0.0
        %1365 = vmatpush1.msra.mxu0 %v1151
        %1366 = vmatprep.subr.mxu0 0.0
        %1367 = vmatpush1.msra.mxu0 %v1152
        %1368 = vmatprep.subr.mxu0 0.0
        %1369 = vmatpush1.msra.mxu0 %v1153
        %1370 = vmatprep.subr.mxu0 0.0
        %1371 = vmatpush1.msra.mxu0 %v1154
        %1372 = vmatprep.subr.mxu0 0.0
        %1373 = vmatpush1.msra.mxu0 %v1155
        %1374 = vmatprep.subr.mxu0 0.0
        %1375 = vmatpush1.msra.mxu0 %v1156
        %1376 = vmatprep.subr.mxu0 0.0
        %1377 = vmatpush1.msra.mxu0 0.0
        %1378 = vmatprep.subr.mxu0 0.0
        %1379 = vmatpush1.msra.mxu0 0.0
        %1380 = vmatprep.subr.mxu0 0.0
        %1381 = vmatpush1.msra.mxu0 0.0
        %1382 = vmatprep.subr.mxu0 0.0
        %1383 = vmatpush1.msra.mxu0 0.0
        %1384 = vmatprep.subr.mxu0 0.0
        %1385 = vmatpush1.msra.mxu0 0.0
        %1386 = vmatprep.subr.mxu0 0.0
        %1387 = vmatpush1.msra.mxu0 0.0
        %1388 = vmatprep.subr.mxu0 0.0
        %1389 = vmatpush1.msra.mxu0 0.0
        %1390 = vmatprep.subr.mxu0 0.0
        %1391 = vmatpush1.msra.mxu0 0.0
        %1392 = vmatprep.subr.mxu0 0.0
        %1393 = vmatpush1.msra.mxu0 0.0
        %1394 = vmatprep.subr.mxu0 0.0
        %1395 = vmatpush1.msra.mxu0 0.0
        %1396 = vmatprep.subr.mxu0 0.0
        %1397 = vmatpush1.msra.mxu0 0.0
        %1398 = vmatprep.subr.mxu0 0.0
        %1399 = vmatpush1.msra.mxu0 0.0
        %1400 = vmatprep.subr.mxu0 0.0
        %1401 = vmatpush1.msra.mxu0 0.0
        %1402 = vmatprep.subr.mxu0 0.0
        %1403 = vmatpush1.msra.mxu0 0.0
        %1404 = vmatprep.subr.mxu0 0.0
        %1405 = vmatpush1.msra.mxu0 0.0
        %1406 = vmatprep.subr.mxu0 0.0
        %1407 = vmatpush1.msra.mxu0 0.0
        %1408 = vmatprep.mubr.f32.mxu0 0.0
        %1409 = vmatmul.mubr.f32.gmra.mrb[0].mxu0 %v1056
        %v1410 = vpop.f32.mrb[0].mxu0
        %v1411 = vadd.f32 %v1321, %v1410
        %v1412 = vpop.f32.mrb[0].mxu0
        %1413 = vmatprep.mubr.f32.mxu0 0.0
        %1414 = vmatmul.mubr.f32.gmra.mrb[0].mxu0 %v1061
        %v1415 = vpop.f32.mrb[0].mxu0
        %v1416 = vadd.f32 %v1326, %v1415
        %v1417 = vpop.f32.mrb[0].mxu0
        %1418 = vmatprep.mubr.f32.mxu0 0.0
        %1419 = vmatmul.mubr.f32.gmra.mrb[0].mxu0 %v1066
        %v1420 = vpop.f32.mrb[0].mxu0
        %v1421 = vadd.f32 %v1331, %v1420
        %v1422 = vpop.f32.mrb[0].mxu0
        %1423 = vmatprep.mubr.f32.mxu0 0.0
        %1424 = vmatmul.mubr.f32.gmra.mrb[0].mxu0 %v1071
        %v1425 = vpop.f32.mrb[0].mxu0
        %v1426 = vadd.f32 %v1336, %v1425
        %v1427 = vpop.f32.mrb[0].mxu0
        %1428 = vmatprep.mubr.f32.mxu0 0.0
        %1429 = vmatmul.mubr.f32.gmra.mrb[0].mxu0 %v1076
        %v1430 = vpop.f32.mrb[0].mxu0
        %v1431 = vadd.f32 %v1341, %v1430
        %v1432 = vpop.f32.mrb[0].mxu0
        %1433 = vdwg.mxu0
        %v1434 = vtanh.pop %v1411
        %v1435 = vtanh.pop %v1416
        %v1436 = vtanh.pop %v1421
        %v1437 = vtanh.pop %v1426
        %v1438 = vtanh.pop %v1431
        %vm1439 = vcmask 1043456
        %v1440 = vrot.slane %v526, 4
        %v1441 = vrot.slane %v527, 4
        %v1442 = vsel %vm1439, %v1440, %v1441
        %v1443 = vrot.slane %v528, 4
        %v1444 = vsel %vm1439, %v1441, %v1443
        %v1445 = vrot.slane %v529, 4
        %v1446 = vsel %vm1439, %v1443, %v1445
        %v1447 = vrot.slane %v530, 4
        %v1448 = vsel %vm1439, %v1445, %v1447
        %v1454 = vmul.f32 %v1434, %v1442
        %v1455 = vmul.f32 %v1435, %v1444
        %v1456 = vmul.f32 %v1436, %v1446
        %v1457 = vmul.f32 %v1437, %v1448
        %v1458 = vmul.f32 %v1438, %v1447
        %1459 = vst [vmem:[#allocation3 + $0x4] sm:$0xff] %v1454
        %1460 = vst [vmem:[#allocation3 + $0xc] sm:$0xff] %v1455
        %1461 = vst [vmem:[#allocation3 + $0x14] sm:$0xff] %v1456
        %1462 = vst [vmem:[#allocation3 + $0x1c] sm:$0xff] %v1457
        %1463 = vst [vmem:[#allocation3 + $0x24] sm:$0xf] %v1458
        %v1464 = vld [vmem:[#allocation3 + $0x4] sm:$0xff]
        %v1465 = vld [vmem:[#allocation3 + $0xc] sm:$0xff]
        %v1466 = vld [vmem:[#allocation3 + $0x14] sm:$0xff]
        %v1467 = vld [vmem:[#allocation3 + $0x1c] sm:$0xff]
        %1468 = vst [vmem:[#allocation4] sm:$0xff] %v1464
        %1469 = vst [vmem:[#allocation4 + $0x28] sm:$0xff] %v1465
        %1470 = vst [vmem:[#allocation4 + $0x50] sm:$0xff] %v1466
        %1471 = vst [vmem:[#allocation4 + $0x78] sm:$0xff] %v1467
        %v1472 = vld [vmem:[#allocation3 + $0x5] sm:$0xff]
        %v1473 = vld [vmem:[#allocation3 + $0xd] sm:$0xff]
        %v1474 = vld [vmem:[#allocation3 + $0x15] sm:$0xff]
        %v1475 = vld [vmem:[#allocation3 + $0x1d] sm:$0xff]
        %1476 = vst [vmem:[#allocation4 + $0x8] sm:$0xff] %v1472
        %1477 = vst [vmem:[#allocation4 + $0x30] sm:$0xff] %v1473
        %1478 = vst [vmem:[#allocation4 + $0x58] sm:$0xff] %v1474
        %1479 = vst [vmem:[#allocation4 + $0x80] sm:$0xff] %v1475
        %v1480 = vld [vmem:[#allocation3 + $0x6] sm:$0xff]
        %v1481 = vld [vmem:[#allocation3 + $0xe] sm:$0xff]
        %v1482 = vld [vmem:[#allocation3 + $0x16] sm:$0xff]
        %v1483 = vld [vmem:[#allocation3 + $0x1e] sm:$0xff]
        %1484 = vst [vmem:[#allocation4 + $0x10] sm:$0xff] %v1480
        %1485 = vst [vmem:[#allocation4 + $0x38] sm:$0xff] %v1481
        %1486 = vst [vmem:[#allocation4 + $0x60] sm:$0xff] %v1482
        %1487 = vst [vmem:[#allocation4 + $0x88] sm:$0xff] %v1483
        %v1488 = vld [vmem:[#allocation3 + $0x7] sm:$0xff]
        %v1489 = vld [vmem:[#allocation3 + $0xf] sm:$0xff]
        %v1490 = vld [vmem:[#allocation3 + $0x17] sm:$0xff]
        %v1491 = vld [vmem:[#allocation3 + $0x1f] sm:$0xff]
        %1492 = vst [vmem:[#allocation4 + $0x18] sm:$0xff] %v1488
        %1493 = vst [vmem:[#allocation4 + $0x40] sm:$0xff] %v1489
        %1494 = vst [vmem:[#allocation4 + $0x68] sm:$0xff] %v1490
        %1495 = vst [vmem:[#allocation4 + $0x90] sm:$0xff] %v1491
        %v1496 = vld [vmem:[#allocation3 + $0x8] sm:$0xff]
        %v1497 = vld [vmem:[#allocation3 + $0x10] sm:$0xff]
        %v1498 = vld [vmem:[#allocation3 + $0x18] sm:$0xff]
        %v1499 = vld [vmem:[#allocation3 + $0x20] sm:$0xff]
        %1500 = vst [vmem:[#allocation4 + $0x20] sm:$0xff] %v1496
        %1501 = vst [vmem:[#allocation4 + $0x48] sm:$0xff] %v1497
        %1502 = vst [vmem:[#allocation4 + $0x70] sm:$0xff] %v1498
        %1503 = vst [vmem:[#allocation4 + $0x98] sm:$0xff] %v1499
        %v1504 = vld [vmem:[#allocation4] sm:$0xff]
        %v1505 = vld [vmem:[#allocation4 + $0x8] sm:$0xff]
        %v1506 = vld [vmem:[#allocation4 + $0x10] sm:$0xff]
        %v1507 = vld [vmem:[#allocation4 + $0x18] sm:$0xff]
        %v1508 = vld [vmem:[#allocation4 + $0x20] sm:$0xff]
        %v1509 = vld [vmem:[#allocation4 + $0x28] sm:$0xff]
        %v1510 = vld [vmem:[#allocation4 + $0x30] sm:$0xff]
        %v1511 = vld [vmem:[#allocation4 + $0x38] sm:$0xff]
        %v1512 = vld [vmem:[#allocation4 + $0x40] sm:$0xff]
        %v1513 = vld [vmem:[#allocation4 + $0x48] sm:$0xff]
        %v1514 = vld [vmem:[#allocation4 + $0x50] sm:$0xff]
        %v1515 = vld [vmem:[#allocation4 + $0x58] sm:$0xff]
        %v1516 = vld [vmem:[#allocation4 + $0x60] sm:$0xff]
        %v1517 = vld [vmem:[#allocation4 + $0x68] sm:$0xff]
        %v1518 = vld [vmem:[#allocation4 + $0x70] sm:$0xff]
        %v1519 = vld [vmem:[#allocation4 + $0x78] sm:$0xff]
        %v1520 = vld [vmem:[#allocation4 + $0x80] sm:$0xff]
        %v1521 = vld [vmem:[#allocation4 + $0x88] sm:$0xff]
        %v1522 = vld [vmem:[#allocation4 + $0x90] sm:$0xff]
        %v1523 = vld [vmem:[#allocation4 + $0x98] sm:$0xff]
        %v1524 = vld [vmem:[#allocation10] sm:$0xff]
        %v1525 = vld [vmem:[#allocation10 + $0x8] sm:$0xff]
        %v1526 = vld [vmem:[#allocation10 + $0x10] sm:$0xff]
        %v1527 = vld [vmem:[#allocation10 + $0x18] sm:$0xff]
        %v1528 = vld [vmem:[#allocation10 + $0x20] sm:$0xff]
        %v1529 = vld [vmem:[#allocation10 + $0x28] sm:$0xff]
        %v1530 = vld [vmem:[#allocation10 + $0x30] sm:$0xff]
        %v1531 = vld [vmem:[#allocation10 + $0x38] sm:$0xff]
        %v1532 = vld [vmem:[#allocation10 + $0x40] sm:$0xff]
        %v1533 = vld [vmem:[#allocation10 + $0x48] sm:$0xff]
        %v1534 = vld [vmem:[#allocation10 + $0x50] sm:$0xff]
        %v1535 = vld [vmem:[#allocation10 + $0x58] sm:$0xff]
        %v1536 = vld [vmem:[#allocation10 + $0x60] sm:$0xff]
        %v1537 = vld [vmem:[#allocation10 + $0x68] sm:$0xff]
        %v1538 = vld [vmem:[#allocation10 + $0x70] sm:$0xff]
        %v1539 = vld [vmem:[#allocation10 + $0x78] sm:$0xff]
        %v1540 = vld [vmem:[#allocation10 + $0x80] sm:$0xff]
        %v1541 = vld [vmem:[#allocation10 + $0x88] sm:$0xff]
        %v1542 = vld [vmem:[#allocation10 + $0x90] sm:$0xff]
        %v1543 = vld [vmem:[#allocation10 + $0x98] sm:$0xff]
        %v1544 = vld [vmem:[#allocation10 + $0xa0] sm:$0xff]
        %v1545 = vld [vmem:[#allocation10 + $0xa8] sm:$0xff]
        %v1546 = vld [vmem:[#allocation10 + $0xb0] sm:$0xff]
        %v1547 = vld [vmem:[#allocation10 + $0xb8] sm:$0xff]
        %v1548 = vld [vmem:[#allocation10 + $0xc0] sm:$0xff]
        %v1549 = vld [vmem:[#allocation10 + $0xc8] sm:$0xff]
        %v1550 = vld [vmem:[#allocation10 + $0xd0] sm:$0xff]
        %v1551 = vld [vmem:[#allocation10 + $0xd8] sm:$0xff]
        %v1552 = vld [vmem:[#allocation10 + $0xe0] sm:$0xff]
        %v1553 = vld [vmem:[#allocation10 + $0xe8] sm:$0xff]
        %v1554 = vld [vmem:[#allocation10 + $0xf0] sm:$0xff]
        %v1555 = vld [vmem:[#allocation10 + $0xf8] sm:$0xff]
        %v1556 = vld [vmem:[#allocation10 + $0x100] sm:$0xff]
        %v1557 = vld [vmem:[#allocation10 + $0x108] sm:$0xff]
        %v1558 = vld [vmem:[#allocation10 + $0x110] sm:$0xff]
        %v1559 = vld [vmem:[#allocation10 + $0x118] sm:$0xff]
        %v1560 = vld [vmem:[#allocation10 + $0x120] sm:$0xff]
        %v1561 = vld [vmem:[#allocation10 + $0x128] sm:$0xff]
        %v1562 = vld [vmem:[#allocation10 + $0x130] sm:$0xff]
        %v1563 = vld [vmem:[#allocation10 + $0x138] sm:$0xff]
        %v1564 = vld [vmem:[#allocation10 + $0x140] sm:$0xff]
        %v1565 = vld [vmem:[#allocation10 + $0x148] sm:$0xff]
        %v1566 = vld [vmem:[#allocation10 + $0x150] sm:$0xff]
        %v1567 = vld [vmem:[#allocation10 + $0x158] sm:$0xff]
        %v1568 = vld [vmem:[#allocation10 + $0x160] sm:$0xff]
        %v1569 = vld [vmem:[#allocation10 + $0x168] sm:$0xff]
        %v1570 = vld [vmem:[#allocation10 + $0x170] sm:$0xff]
        %v1571 = vld [vmem:[#allocation10 + $0x178] sm:$0xff]
        %v1572 = vld [vmem:[#allocation10 + $0x180] sm:$0xff]
        %v1573 = vld [vmem:[#allocation10 + $0x188] sm:$0xff]
        %v1574 = vld [vmem:[#allocation10 + $0x190] sm:$0xff]
        %v1575 = vld [vmem:[#allocation10 + $0x198] sm:$0xff]
        %v1576 = vld [vmem:[#allocation10 + $0x1a0] sm:$0xff]
        %v1577 = vld [vmem:[#allocation10 + $0x1a8] sm:$0xff]
        %v1578 = vld [vmem:[#allocation10 + $0x1b0] sm:$0xff]
        %v1579 = vld [vmem:[#allocation10 + $0x1b8] sm:$0xff]
        %v1580 = vld [vmem:[#allocation10 + $0x1c0] sm:$0xff]
        %v1581 = vld [vmem:[#allocation10 + $0x1c8] sm:$0xff]
        %v1582 = vld [vmem:[#allocation10 + $0x1d0] sm:$0xff]
        %v1583 = vld [vmem:[#allocation10 + $0x1d8] sm:$0xff]
        %v1584 = vld [vmem:[#allocation10 + $0x1e0] sm:$0xff]
        %v1585 = vld [vmem:[#allocation10 + $0x1e8] sm:$0xff]
        %v1586 = vld [vmem:[#allocation10 + $0x1f0] sm:$0xff]
        %v1587 = vld [vmem:[#allocation10 + $0x1f8] sm:$0xff]
        %v1588 = vld [vmem:[#allocation10 + $0x200] sm:$0xff]
        %v1589 = vld [vmem:[#allocation10 + $0x208] sm:$0xff]
        %v1590 = vld [vmem:[#allocation10 + $0x210] sm:$0xff]
        %v1591 = vld [vmem:[#allocation10 + $0x218] sm:$0xff]
        %v1592 = vld [vmem:[#allocation10 + $0x220] sm:$0xff]
        %v1593 = vld [vmem:[#allocation10 + $0x228] sm:$0xff]
        %v1594 = vld [vmem:[#allocation10 + $0x230] sm:$0xff]
        %v1595 = vld [vmem:[#allocation10 + $0x238] sm:$0xff]
        %v1596 = vld [vmem:[#allocation10 + $0x240] sm:$0xff]
        %v1597 = vld [vmem:[#allocation10 + $0x248] sm:$0xff]
        %v1598 = vld [vmem:[#allocation10 + $0x250] sm:$0xff]
        %v1599 = vld [vmem:[#allocation10 + $0x258] sm:$0xff]
        %v1600 = vld [vmem:[#allocation10 + $0x260] sm:$0xff]
        %v1601 = vld [vmem:[#allocation10 + $0x268] sm:$0xff]
        %v1602 = vld [vmem:[#allocation10 + $0x270] sm:$0xff]
        %v1603 = vld [vmem:[#allocation10 + $0x278] sm:$0xff]
        %v1604 = vld [vmem:[%s8] sm:$0x1]
        %v1606 = vlaneseq
        %v1607 = vshrl.u32 %v1606, 7
        %v1608 = vsub.s32 0, %v1607
        %v1609 = vrot.slane %v1604, %v1608
        %1611 = vmatprep.subr.mxu0 0.0
        %1612 = vmatpush1.msra.mxu0 %v1524
        %1613 = vmatprep.subr.mxu0 0.0
        %1614 = vmatpush1.msra.mxu0 %v1525
        %1615 = vmatprep.subr.mxu0 0.0
        %1616 = vmatpush1.msra.mxu0 %v1526
        %1617 = vmatprep.subr.mxu0 0.0
        %1618 = vmatpush1.msra.mxu0 %v1527
        %1619 = vmatprep.subr.mxu0 0.0
        %1620 = vmatpush1.msra.mxu0 %v1528
        %1621 = vmatprep.subr.mxu0 0.0
        %1622 = vmatpush1.msra.mxu0 %v1529
        %1623 = vmatprep.subr.mxu0 0.0
        %1624 = vmatpush1.msra.mxu0 %v1530
        %1625 = vmatprep.subr.mxu0 0.0
        %1626 = vmatpush1.msra.mxu0 %v1531
        %1627 = vmatprep.subr.mxu0 0.0
        %1628 = vmatpush1.msra.mxu0 %v1532
        %1629 = vmatprep.subr.mxu0 0.0
        %1630 = vmatpush1.msra.mxu0 %v1533
        %1631 = vmatprep.subr.mxu0 0.0
        %1632 = vmatpush1.msra.mxu0 %v1534
        %1633 = vmatprep.subr.mxu0 0.0
        %1634 = vmatpush1.msra.mxu0 %v1535
        %1635 = vmatprep.subr.mxu0 0.0
        %1636 = vmatpush1.msra.mxu0 %v1536
        %1637 = vmatprep.subr.mxu0 0.0
        %1638 = vmatpush1.msra.mxu0 %v1537
        %1639 = vmatprep.subr.mxu0 0.0
        %1640 = vmatpush1.msra.mxu0 %v1538
        %1641 = vmatprep.subr.mxu0 0.0
        %1642 = vmatpush1.msra.mxu0 %v1539
        %1643 = vmatprep.subr.mxu0 0.0
        %1644 = vmatpush1.msra.mxu0 %v1540
        %1645 = vmatprep.subr.mxu0 0.0
        %1646 = vmatpush1.msra.mxu0 %v1541
        %1647 = vmatprep.subr.mxu0 0.0
        %1648 = vmatpush1.msra.mxu0 %v1542
        %1649 = vmatprep.subr.mxu0 0.0
        %1650 = vmatpush1.msra.mxu0 %v1543
        %1651 = vmatprep.subr.mxu0 0.0
        %1652 = vmatpush1.msra.mxu0 %v1544
        %1653 = vmatprep.subr.mxu0 0.0
        %1654 = vmatpush1.msra.mxu0 %v1545
        %1655 = vmatprep.subr.mxu0 0.0
        %1656 = vmatpush1.msra.mxu0 %v1546
        %1657 = vmatprep.subr.mxu0 0.0
        %1658 = vmatpush1.msra.mxu0 %v1547
        %1659 = vmatprep.subr.mxu0 0.0
        %1660 = vmatpush1.msra.mxu0 %v1548
        %1661 = vmatprep.subr.mxu0 0.0
        %1662 = vmatpush1.msra.mxu0 %v1549
        %1663 = vmatprep.subr.mxu0 0.0
        %1664 = vmatpush1.msra.mxu0 %v1550
        %1665 = vmatprep.subr.mxu0 0.0
        %1666 = vmatpush1.msra.mxu0 %v1551
        %1667 = vmatprep.subr.mxu0 0.0
        %1668 = vmatpush1.msra.mxu0 %v1552
        %1669 = vmatprep.subr.mxu0 0.0
        %1670 = vmatpush1.msra.mxu0 %v1553
        %1671 = vmatprep.subr.mxu0 0.0
        %1672 = vmatpush1.msra.mxu0 %v1554
        %1673 = vmatprep.subr.mxu0 0.0
        %1674 = vmatpush1.msra.mxu0 %v1555
        %1675 = vmatprep.mubr.f32.mxu0 %v1505
        %1676 = vmatmul.mubr.f32.gmra.mrb[0].mxu0 %v1504
        %v1677 = vpop.f32.mrb[0].mxu0
        %v1678 = vadd.f32 %v1609, %v1677
        %v1679 = vpop.f32.mrb[0].mxu0
        %1680 = vmatprep.mubr.f32.mxu0 %v1510
        %1681 = vmatmul.mubr.f32.gmra.mrb[0].mxu0 %v1509
        %v1682 = vpop.f32.mrb[0].mxu0
        %v1683 = vadd.f32 %v1609, %v1682
        %v1684 = vpop.f32.mrb[0].mxu0
        %1685 = vmatprep.mubr.f32.mxu0 %v1515
        %1686 = vmatmul.mubr.f32.gmra.mrb[0].mxu0 %v1514
        %v1687 = vpop.f32.mrb[0].mxu0
        %v1688 = vadd.f32 %v1609, %v1687
        %v1689 = vpop.f32.mrb[0].mxu0
        %1690 = vmatprep.mubr.f32.mxu0 %v1520
        %1691 = vmatmul.mubr.f32.gmra.mrb[0].mxu0 %v1519
        %v1692 = vpop.f32.mrb[0].mxu0
        %v1693 = vadd.f32 %v1609, %v1692
        %v1694 = vpop.f32.mrb[0].mxu0
        %1695 = vdwg.mxu0
        %1696 = vmatprep.subr.mxu0 0.0
        %1697 = vmatpush1.msra.mxu0 %v1556
        %1698 = vmatprep.subr.mxu0 0.0
        %1699 = vmatpush1.msra.mxu0 %v1557
        %1700 = vmatprep.subr.mxu0 0.0
        %1701 = vmatpush1.msra.mxu0 %v1558
        %1702 = vmatprep.subr.mxu0 0.0
        %1703 = vmatpush1.msra.mxu0 %v1559
        %1704 = vmatprep.subr.mxu0 0.0
        %1705 = vmatpush1.msra.mxu0 %v1560
        %1706 = vmatprep.subr.mxu0 0.0
        %1707 = vmatpush1.msra.mxu0 %v1561
        %1708 = vmatprep.subr.mxu0 0.0
        %1709 = vmatpush1.msra.mxu0 %v1562
        %1710 = vmatprep.subr.mxu0 0.0
        %1711 = vmatpush1.msra.mxu0 %v1563
        %1712 = vmatprep.subr.mxu0 0.0
        %1713 = vmatpush1.msra.mxu0 %v1564
        %1714 = vmatprep.subr.mxu0 0.0
        %1715 = vmatpush1.msra.mxu0 %v1565
        %1716 = vmatprep.subr.mxu0 0.0
        %1717 = vmatpush1.msra.mxu0 %v1566
        %1718 = vmatprep.subr.mxu0 0.0
        %1719 = vmatpush1.msra.mxu0 %v1567
        %1720 = vmatprep.subr.mxu0 0.0
        %1721 = vmatpush1.msra.mxu0 %v1568
        %1722 = vmatprep.subr.mxu0 0.0
        %1723 = vmatpush1.msra.mxu0 %v1569
        %1724 = vmatprep.subr.mxu0 0.0
        %1725 = vmatpush1.msra.mxu0 %v1570
        %1726 = vmatprep.subr.mxu0 0.0
        %1727 = vmatpush1.msra.mxu0 %v1571
        %1728 = vmatprep.subr.mxu0 0.0
        %1729 = vmatpush1.msra.mxu0 %v1572
        %1730 = vmatprep.subr.mxu0 0.0
        %1731 = vmatpush1.msra.mxu0 %v1573
        %1732 = vmatprep.subr.mxu0 0.0
        %1733 = vmatpush1.msra.mxu0 %v1574
        %1734 = vmatprep.subr.mxu0 0.0
        %1735 = vmatpush1.msra.mxu0 %v1575
        %1736 = vmatprep.subr.mxu0 0.0
        %1737 = vmatpush1.msra.mxu0 %v1576
        %1738 = vmatprep.subr.mxu0 0.0
        %1739 = vmatpush1.msra.mxu0 %v1577
        %1740 = vmatprep.subr.mxu0 0.0
        %1741 = vmatpush1.msra.mxu0 %v1578
        %1742 = vmatprep.subr.mxu0 0.0
        %1743 = vmatpush1.msra.mxu0 %v1579
        %1744 = vmatprep.subr.mxu0 0.0
        %1745 = vmatpush1.msra.mxu0 %v1580
        %1746 = vmatprep.subr.mxu0 0.0
        %1747 = vmatpush1.msra.mxu0 %v1581
        %1748 = vmatprep.subr.mxu0 0.0
        %1749 = vmatpush1.msra.mxu0 %v1582
        %1750 = vmatprep.subr.mxu0 0.0
        %1751 = vmatpush1.msra.mxu0 %v1583
        %1752 = vmatprep.subr.mxu0 0.0
        %1753 = vmatpush1.msra.mxu0 %v1584
        %1754 = vmatprep.subr.mxu0 0.0
        %1755 = vmatpush1.msra.mxu0 %v1585
        %1756 = vmatprep.subr.mxu0 0.0
        %1757 = vmatpush1.msra.mxu0 %v1586
        %1758 = vmatprep.subr.mxu0 0.0
        %1759 = vmatpush1.msra.mxu0 %v1587
        %1760 = vmatprep.mubr.f32.mxu0 %v1507
        %1761 = vmatmul.mubr.f32.gmra.mrb[0].mxu0 %v1506
        %v1762 = vpop.f32.mrb[0].mxu0
        %v1763 = vadd.f32 %v1678, %v1762
        %v1764 = vpop.f32.mrb[0].mxu0
        %1765 = vmatprep.mubr.f32.mxu0 %v1512
        %1766 = vmatmul.mubr.f32.gmra.mrb[0].mxu0 %v1511
        %v1767 = vpop.f32.mrb[0].mxu0
        %v1768 = vadd.f32 %v1683, %v1767
        %v1769 = vpop.f32.mrb[0].mxu0
        %1770 = vmatprep.mubr.f32.mxu0 %v1517
        %1771 = vmatmul.mubr.f32.gmra.mrb[0].mxu0 %v1516
        %v1772 = vpop.f32.mrb[0].mxu0
        %v1773 = vadd.f32 %v1688, %v1772
        %v1774 = vpop.f32.mrb[0].mxu0
        %1775 = vmatprep.mubr.f32.mxu0 %v1522
        %1776 = vmatmul.mubr.f32.gmra.mrb[0].mxu0 %v1521
        %v1777 = vpop.f32.mrb[0].mxu0
        %v1778 = vadd.f32 %v1693, %v1777
        %v1779 = vpop.f32.mrb[0].mxu0
        %1780 = vdwg.mxu0
        %1781 = vmatprep.subr.mxu0 0.0
        %1782 = vmatpush1.msra.mxu0 %v1588
        %1783 = vmatprep.subr.mxu0 0.0
        %1784 = vmatpush1.msra.mxu0 %v1589
        %1785 = vmatprep.subr.mxu0 0.0
        %1786 = vmatpush1.msra.mxu0 %v1590
        %1787 = vmatprep.subr.mxu0 0.0
        %1788 = vmatpush1.msra.mxu0 %v1591
        %1789 = vmatprep.subr.mxu0 0.0
        %1790 = vmatpush1.msra.mxu0 %v1592
        %1791 = vmatprep.subr.mxu0 0.0
        %1792 = vmatpush1.msra.mxu0 %v1593
        %1793 = vmatprep.subr.mxu0 0.0
        %1794 = vmatpush1.msra.mxu0 %v1594
        %1795 = vmatprep.subr.mxu0 0.0
        %1796 = vmatpush1.msra.mxu0 %v1595
        %1797 = vmatprep.subr.mxu0 0.0
        %1798 = vmatpush1.msra.mxu0 %v1596
        %1799 = vmatprep.subr.mxu0 0.0
        %1800 = vmatpush1.msra.mxu0 %v1597
        %1801 = vmatprep.subr.mxu0 0.0
        %1802 = vmatpush1.msra.mxu0 %v1598
        %1803 = vmatprep.subr.mxu0 0.0
        %1804 = vmatpush1.msra.mxu0 %v1599
        %1805 = vmatprep.subr.mxu0 0.0
        %1806 = vmatpush1.msra.mxu0 %v1600
        %1807 = vmatprep.subr.mxu0 0.0
        %1808 = vmatpush1.msra.mxu0 %v1601
        %1809 = vmatprep.subr.mxu0 0.0
        %1810 = vmatpush1.msra.mxu0 %v1602
        %1811 = vmatprep.subr.mxu0 0.0
        %1812 = vmatpush1.msra.mxu0 %v1603
        %1813 = vmatprep.subr.mxu0 0.0
        %1814 = vmatpush1.msra.mxu0 0.0
        %1815 = vmatprep.subr.mxu0 0.0
        %1816 = vmatpush1.msra.mxu0 0.0
        %1817 = vmatprep.subr.mxu0 0.0
        %1818 = vmatpush1.msra.mxu0 0.0
        %1819 = vmatprep.subr.mxu0 0.0
        %1820 = vmatpush1.msra.mxu0 0.0
        %1821 = vmatprep.subr.mxu0 0.0
        %1822 = vmatpush1.msra.mxu0 0.0
        %1823 = vmatprep.subr.mxu0 0.0
        %1824 = vmatpush1.msra.mxu0 0.0
        %1825 = vmatprep.subr.mxu0 0.0
        %1826 = vmatpush1.msra.mxu0 0.0
        %1827 = vmatprep.subr.mxu0 0.0
        %1828 = vmatpush1.msra.mxu0 0.0
        %1829 = vmatprep.subr.mxu0 0.0
        %1830 = vmatpush1.msra.mxu0 0.0
        %1831 = vmatprep.subr.mxu0 0.0
        %1832 = vmatpush1.msra.mxu0 0.0
        %1833 = vmatprep.subr.mxu0 0.0
        %1834 = vmatpush1.msra.mxu0 0.0
        %1835 = vmatprep.subr.mxu0 0.0
        %1836 = vmatpush1.msra.mxu0 0.0
        %1837 = vmatprep.subr.mxu0 0.0
        %1838 = vmatpush1.msra.mxu0 0.0
        %1839 = vmatprep.subr.mxu0 0.0
        %1840 = vmatpush1.msra.mxu0 0.0
        %1841 = vmatprep.subr.mxu0 0.0
        %1842 = vmatpush1.msra.mxu0 0.0
        %1843 = vmatprep.subr.mxu0 0.0
        %1844 = vmatpush1.msra.mxu0 0.0
        %1845 = vmatprep.mubr.f32.mxu0 0.0
        %1846 = vmatmul.mubr.f32.gmra.mrb[0].mxu0 %v1508
        %v1847 = vpop.f32.mrb[0].mxu0
        %v1848 = vadd.f32 %v1763, %v1847
        %v1849 = vpop.f32.mrb[0].mxu0
        %1850 = vmatprep.mubr.f32.mxu0 0.0
        %1851 = vmatmul.mubr.f32.gmra.mrb[0].mxu0 %v1513
        %v1852 = vpop.f32.mrb[0].mxu0
        %v1853 = vadd.f32 %v1768, %v1852
        %v1854 = vpop.f32.mrb[0].mxu0
        %1855 = vmatprep.mubr.f32.mxu0 0.0
        %1856 = vmatmul.mubr.f32.gmra.mrb[0].mxu0 %v1518
        %v1857 = vpop.f32.mrb[0].mxu0
        %v1858 = vadd.f32 %v1773, %v1857
        %v1859 = vpop.f32.mrb[0].mxu0
        %1860 = vmatprep.mubr.f32.mxu0 0.0
        %1861 = vmatmul.mubr.f32.gmra.mrb[0].mxu0 %v1523
        %v1862 = vpop.f32.mrb[0].mxu0
        %v1863 = vadd.f32 %v1778, %v1862
        %v1864 = vpop.f32.mrb[0].mxu0
        %1865 = vdwg.mxu0
        %v1866 = vtanh.pop %v1848
        %v1867 = vtanh.pop %v1853
        %v1868 = vtanh.pop %v1858
        %v1869 = vtanh.pop %v1863
        %vm1870 = vcmask 1041408
        %v1871 = vrot.slane %v526, 6
        %v1872 = vrot.slane %v527, 6
        %v1873 = vsel %vm1870, %v1871, %v1872
        %v1874 = vrot.slane %v528, 6
        %v1875 = vsel %vm1870, %v1872, %v1874
        %v1876 = vrot.slane %v529, 6
        %v1877 = vsel %vm1870, %v1874, %v1876
        %v1878 = vrot.slane %v530, 6
        %v1879 = vsel %vm1870, %v1876, %v1878
        %v1884 = vmul.f32 %v1866, %v1873
        %v1885 = vmul.f32 %v1867, %v1875
        %v1886 = vmul.f32 %v1868, %v1877
        %v1887 = vmul.f32 %v1869, %v1879
        %1888 = vst [vmem:[#allocation2 + $0x6] sm:$0xff] %v1884
        %1889 = vst [vmem:[#allocation2 + $0xe] sm:$0xff] %v1885
        %1890 = vst [vmem:[#allocation2 + $0x16] sm:$0xff] %v1886
        %1891 = vst [vmem:[#allocation2 + $0x1e] sm:$0xff] %v1887
        %v1892 = vld [vmem:[#allocation2 + $0x6] sm:$0xff]
        %v1893 = vld [vmem:[#allocation2 + $0xe] sm:$0xff]
        %v1894 = vld [vmem:[#allocation2 + $0x16] sm:$0xff]
        %v1895 = vld [vmem:[#allocation2 + $0x1e] sm:$0xf]
        %1896 = vst [vmem:[#allocation4] sm:$0xff] %v1892
        %1897 = vst [vmem:[#allocation4 + $0x28] sm:$0xff] %v1893
        %1898 = vst [vmem:[#allocation4 + $0x50] sm:$0xff] %v1894
        %1899 = vst [vmem:[#allocation4 + $0x78] sm:$0xf] %v1895
        %v1900 = vld [vmem:[#allocation2 + $0x7] sm:$0xff]
        %v1901 = vld [vmem:[#allocation2 + $0xf] sm:$0xff]
        %v1902 = vld [vmem:[#allocation2 + $0x17] sm:$0xff]
        %v1903 = vld [vmem:[#allocation2 + $0x1f] sm:$0xf]
        %1904 = vst [vmem:[#allocation4 + $0x8] sm:$0xff] %v1900
        %1905 = vst [vmem:[#allocation4 + $0x30] sm:$0xff] %v1901
        %1906 = vst [vmem:[#allocation4 + $0x58] sm:$0xff] %v1902
        %1907 = vst [vmem:[#allocation4 + $0x80] sm:$0xf] %v1903
        %v1908 = vld [vmem:[#allocation2 + $0x8] sm:$0xff]
        %v1909 = vld [vmem:[#allocation2 + $0x10] sm:$0xff]
        %v1910 = vld [vmem:[#allocation2 + $0x18] sm:$0xff]
        %v1911 = vld [vmem:[#allocation2 + $0x20] sm:$0xf]
        %1912 = vst [vmem:[#allocation4 + $0x10] sm:$0xff] %v1908
        %1913 = vst [vmem:[#allocation4 + $0x38] sm:$0xff] %v1909
        %1914 = vst [vmem:[#allocation4 + $0x60] sm:$0xff] %v1910
        %1915 = vst [vmem:[#allocation4 + $0x88] sm:$0xf] %v1911
        %v1916 = vld [vmem:[#allocation2 + $0x9] sm:$0xff]
        %v1917 = vld [vmem:[#allocation2 + $0x11] sm:$0xff]
        %v1918 = vld [vmem:[#allocation2 + $0x19] sm:$0xff]
        %v1919 = vld [vmem:[#allocation2 + $0x21] sm:$0xf]
        %1920 = vst [vmem:[#allocation4 + $0x18] sm:$0xff] %v1916
        %1921 = vst [vmem:[#allocation4 + $0x40] sm:$0xff] %v1917
        %1922 = vst [vmem:[#allocation4 + $0x68] sm:$0xff] %v1918
        %1923 = vst [vmem:[#allocation4 + $0x90] sm:$0xf] %v1919
        %v1924 = vld [vmem:[#allocation2 + $0xa] sm:$0xff]
        %v1925 = vld [vmem:[#allocation2 + $0x12] sm:$0xff]
        %v1926 = vld [vmem:[#allocation2 + $0x1a] sm:$0xff]
        %v1927 = vld [vmem:[#allocation2 + $0x22] sm:$0xf]
        %1928 = vst [vmem:[#allocation4 + $0x20] sm:$0xff] %v1924
        %1929 = vst [vmem:[#allocation4 + $0x48] sm:$0xff] %v1925
        %1930 = vst [vmem:[#allocation4 + $0x70] sm:$0xff] %v1926
        %1931 = vst [vmem:[#allocation4 + $0x98] sm:$0xf] %v1927
        %v1932 = vld [vmem:[#allocation4] sm:$0xff]
        %v1933 = vld [vmem:[#allocation4 + $0x8] sm:$0xff]
        %v1934 = vld [vmem:[#allocation4 + $0x10] sm:$0xff]
        %v1935 = vld [vmem:[#allocation4 + $0x18] sm:$0xff]
        %v1936 = vld [vmem:[#allocation4 + $0x20] sm:$0xff]
        %v1937 = vld [vmem:[#allocation4 + $0x28] sm:$0xff]
        %v1938 = vld [vmem:[#allocation4 + $0x30] sm:$0xff]
        %v1939 = vld [vmem:[#allocation4 + $0x38] sm:$0xff]
        %v1940 = vld [vmem:[#allocation4 + $0x40] sm:$0xff]
        %v1941 = vld [vmem:[#allocation4 + $0x48] sm:$0xff]
        %v1942 = vld [vmem:[#allocation4 + $0x50] sm:$0xff]
        %v1943 = vld [vmem:[#allocation4 + $0x58] sm:$0xff]
        %v1944 = vld [vmem:[#allocation4 + $0x60] sm:$0xff]
        %v1945 = vld [vmem:[#allocation4 + $0x68] sm:$0xff]
        %v1946 = vld [vmem:[#allocation4 + $0x70] sm:$0xff]
        %v1947 = vld [vmem:[#allocation4 + $0x78] sm:$0xf]
        %v1948 = vld [vmem:[#allocation4 + $0x80] sm:$0xf]
        %v1949 = vld [vmem:[#allocation4 + $0x88] sm:$0xf]
        %v1950 = vld [vmem:[#allocation4 + $0x90] sm:$0xf]
        %v1951 = vld [vmem:[#allocation4 + $0x98] sm:$0xf]
        %v1952 = vld [vmem:[#allocation11] sm:$0xff]
        %v1953 = vld [vmem:[#allocation11 + $0x8] sm:$0xff]
        %v1954 = vld [vmem:[#allocation11 + $0x10] sm:$0xff]
        %v1955 = vld [vmem:[#allocation11 + $0x18] sm:$0xff]
        %v1956 = vld [vmem:[#allocation11 + $0x20] sm:$0xff]
        %v1957 = vld [vmem:[#allocation11 + $0x28] sm:$0xff]
        %v1958 = vld [vmem:[#allocation11 + $0x30] sm:$0xff]
        %v1959 = vld [vmem:[#allocation11 + $0x38] sm:$0xff]
        %v1960 = vld [vmem:[#allocation11 + $0x40] sm:$0xff]
        %v1961 = vld [vmem:[#allocation11 + $0x48] sm:$0xff]
        %v1962 = vld [vmem:[#allocation11 + $0x50] sm:$0xff]
        %v1963 = vld [vmem:[#allocation11 + $0x58] sm:$0xff]
        %v1964 = vld [vmem:[#allocation11 + $0x60] sm:$0xff]
        %v1965 = vld [vmem:[#allocation11 + $0x68] sm:$0xff]
        %v1966 = vld [vmem:[#allocation11 + $0x70] sm:$0xff]
        %v1967 = vld [vmem:[#allocation11 + $0x78] sm:$0xff]
        %v1968 = vld [vmem:[#allocation11 + $0x80] sm:$0xff]
        %v1969 = vld [vmem:[#allocation11 + $0x88] sm:$0xff]
        %v1970 = vld [vmem:[#allocation11 + $0x90] sm:$0xff]
        %v1971 = vld [vmem:[#allocation11 + $0x98] sm:$0xff]
        %v1972 = vld [vmem:[#allocation11 + $0xa0] sm:$0xff]
        %v1973 = vld [vmem:[#allocation11 + $0xa8] sm:$0xff]
        %v1974 = vld [vmem:[#allocation11 + $0xb0] sm:$0xff]
        %v1975 = vld [vmem:[#allocation11 + $0xb8] sm:$0xff]
        %v1976 = vld [vmem:[#allocation11 + $0xc0] sm:$0xff]
        %v1977 = vld [vmem:[#allocation11 + $0xc8] sm:$0xff]
        %v1978 = vld [vmem:[#allocation11 + $0xd0] sm:$0xff]
        %v1979 = vld [vmem:[#allocation11 + $0xd8] sm:$0xff]
        %v1980 = vld [vmem:[#allocation11 + $0xe0] sm:$0xff]
        %v1981 = vld [vmem:[#allocation11 + $0xe8] sm:$0xff]
        %v1982 = vld [vmem:[#allocation11 + $0xf0] sm:$0xff]
        %v1983 = vld [vmem:[#allocation11 + $0xf8] sm:$0xff]
        %v1984 = vld [vmem:[#allocation11 + $0x100] sm:$0xff]
        %v1985 = vld [vmem:[#allocation11 + $0x108] sm:$0xff]
        %v1986 = vld [vmem:[#allocation11 + $0x110] sm:$0xff]
        %v1987 = vld [vmem:[#allocation11 + $0x118] sm:$0xff]
        %v1988 = vld [vmem:[#allocation11 + $0x120] sm:$0xff]
        %v1989 = vld [vmem:[#allocation11 + $0x128] sm:$0xff]
        %v1990 = vld [vmem:[#allocation11 + $0x130] sm:$0xff]
        %v1991 = vld [vmem:[#allocation11 + $0x138] sm:$0xff]
        %v1992 = vld [vmem:[#allocation11 + $0x140] sm:$0xff]
        %v1993 = vld [vmem:[#allocation11 + $0x148] sm:$0xff]
        %v1994 = vld [vmem:[#allocation11 + $0x150] sm:$0xff]
        %v1995 = vld [vmem:[#allocation11 + $0x158] sm:$0xff]
        %v1996 = vld [vmem:[#allocation11 + $0x160] sm:$0xff]
        %v1997 = vld [vmem:[#allocation11 + $0x168] sm:$0xff]
        %v1998 = vld [vmem:[#allocation11 + $0x170] sm:$0xff]
        %v1999 = vld [vmem:[#allocation11 + $0x178] sm:$0xff]
        %v2000 = vld [vmem:[#allocation11 + $0x180] sm:$0xff]
        %v2001 = vld [vmem:[#allocation11 + $0x188] sm:$0xff]
        %v2002 = vld [vmem:[#allocation11 + $0x190] sm:$0xff]
        %v2003 = vld [vmem:[#allocation11 + $0x198] sm:$0xff]
        %v2004 = vld [vmem:[#allocation11 + $0x1a0] sm:$0xff]
        %v2005 = vld [vmem:[#allocation11 + $0x1a8] sm:$0xff]
        %v2006 = vld [vmem:[#allocation11 + $0x1b0] sm:$0xff]
        %v2007 = vld [vmem:[#allocation11 + $0x1b8] sm:$0xff]
        %v2008 = vld [vmem:[#allocation11 + $0x1c0] sm:$0xff]
        %v2009 = vld [vmem:[#allocation11 + $0x1c8] sm:$0xff]
        %v2010 = vld [vmem:[#allocation11 + $0x1d0] sm:$0xff]
        %v2011 = vld [vmem:[#allocation11 + $0x1d8] sm:$0xff]
        %v2012 = vld [vmem:[#allocation11 + $0x1e0] sm:$0xff]
        %v2013 = vld [vmem:[#allocation11 + $0x1e8] sm:$0xff]
        %v2014 = vld [vmem:[#allocation11 + $0x1f0] sm:$0xff]
        %v2015 = vld [vmem:[#allocation11 + $0x1f8] sm:$0xff]
        %v2016 = vld [vmem:[#allocation11 + $0x200] sm:$0xff]
        %v2017 = vld [vmem:[#allocation11 + $0x208] sm:$0xff]
        %v2018 = vld [vmem:[#allocation11 + $0x210] sm:$0xff]
        %v2019 = vld [vmem:[#allocation11 + $0x218] sm:$0xff]
        %v2020 = vld [vmem:[#allocation11 + $0x220] sm:$0xff]
        %v2021 = vld [vmem:[#allocation11 + $0x228] sm:$0xff]
        %v2022 = vld [vmem:[#allocation11 + $0x230] sm:$0xff]
        %v2023 = vld [vmem:[#allocation11 + $0x238] sm:$0xff]
        %v2024 = vld [vmem:[#allocation11 + $0x240] sm:$0xff]
        %v2025 = vld [vmem:[#allocation11 + $0x248] sm:$0xff]
        %v2026 = vld [vmem:[#allocation11 + $0x250] sm:$0xff]
        %v2027 = vld [vmem:[#allocation11 + $0x258] sm:$0xff]
        %v2028 = vld [vmem:[#allocation11 + $0x260] sm:$0xff]
        %v2029 = vld [vmem:[#allocation11 + $0x268] sm:$0xff]
        %v2030 = vld [vmem:[#allocation11 + $0x270] sm:$0xff]
        %v2031 = vld [vmem:[#allocation11 + $0x278] sm:$0xff]
        %v2032 = vld [vmem:[%s9] sm:$0x1]
        %v2034 = vlaneseq
        %v2035 = vshrl.u32 %v2034, 7
        %v2036 = vsub.s32 0, %v2035
        %v2037 = vrot.slane %v2032, %v2036
        %2039 = vmatprep.subr.mxu0 0.0
        %2040 = vmatpush1.msra.mxu0 %v1952
        %2041 = vmatprep.subr.mxu0 0.0
        %2042 = vmatpush1.msra.mxu0 %v1953
        %2043 = vmatprep.subr.mxu0 0.0
        %2044 = vmatpush1.msra.mxu0 %v1954
        %2045 = vmatprep.subr.mxu0 0.0
        %2046 = vmatpush1.msra.mxu0 %v1955
        %2047 = vmatprep.subr.mxu0 0.0
        %2048 = vmatpush1.msra.mxu0 %v1956
        %2049 = vmatprep.subr.mxu0 0.0
        %2050 = vmatpush1.msra.mxu0 %v1957
        %2051 = vmatprep.subr.mxu0 0.0
        %2052 = vmatpush1.msra.mxu0 %v1958
        %2053 = vmatprep.subr.mxu0 0.0
        %2054 = vmatpush1.msra.mxu0 %v1959
        %2055 = vmatprep.subr.mxu0 0.0
        %2056 = vmatpush1.msra.mxu0 %v1960
        %2057 = vmatprep.subr.mxu0 0.0
        %2058 = vmatpush1.msra.mxu0 %v1961
        %2059 = vmatprep.subr.mxu0 0.0
        %2060 = vmatpush1.msra.mxu0 %v1962
        %2061 = vmatprep.subr.mxu0 0.0
        %2062 = vmatpush1.msra.mxu0 %v1963
        %2063 = vmatprep.subr.mxu0 0.0
        %2064 = vmatpush1.msra.mxu0 %v1964
        %2065 = vmatprep.subr.mxu0 0.0
        %2066 = vmatpush1.msra.mxu0 %v1965
        %2067 = vmatprep.subr.mxu0 0.0
        %2068 = vmatpush1.msra.mxu0 %v1966
        %2069 = vmatprep.subr.mxu0 0.0
        %2070 = vmatpush1.msra.mxu0 %v1967
        %2071 = vmatprep.subr.mxu0 0.0
        %2072 = vmatpush1.msra.mxu0 %v1968
        %2073 = vmatprep.subr.mxu0 0.0
        %2074 = vmatpush1.msra.mxu0 %v1969
        %2075 = vmatprep.subr.mxu0 0.0
        %2076 = vmatpush1.msra.mxu0 %v1970
        %2077 = vmatprep.subr.mxu0 0.0
        %2078 = vmatpush1.msra.mxu0 %v1971
        %2079 = vmatprep.subr.mxu0 0.0
        %2080 = vmatpush1.msra.mxu0 %v1972
        %2081 = vmatprep.subr.mxu0 0.0
        %2082 = vmatpush1.msra.mxu0 %v1973
        %2083 = vmatprep.subr.mxu0 0.0
        %2084 = vmatpush1.msra.mxu0 %v1974
        %2085 = vmatprep.subr.mxu0 0.0
        %2086 = vmatpush1.msra.mxu0 %v1975
        %2087 = vmatprep.subr.mxu0 0.0
        %2088 = vmatpush1.msra.mxu0 %v1976
        %2089 = vmatprep.subr.mxu0 0.0
        %2090 = vmatpush1.msra.mxu0 %v1977
        %2091 = vmatprep.subr.mxu0 0.0
        %2092 = vmatpush1.msra.mxu0 %v1978
        %2093 = vmatprep.subr.mxu0 0.0
        %2094 = vmatpush1.msra.mxu0 %v1979
        %2095 = vmatprep.subr.mxu0 0.0
        %2096 = vmatpush1.msra.mxu0 %v1980
        %2097 = vmatprep.subr.mxu0 0.0
        %2098 = vmatpush1.msra.mxu0 %v1981
        %2099 = vmatprep.subr.mxu0 0.0
        %2100 = vmatpush1.msra.mxu0 %v1982
        %2101 = vmatprep.subr.mxu0 0.0
        %2102 = vmatpush1.msra.mxu0 %v1983
        %2103 = vmatprep.mubr.f32.mxu0 %v1933
        %2104 = vmatmul.mubr.f32.gmra.mrb[0].mxu0 %v1932
        %v2105 = vpop.f32.mrb[0].mxu0
        %v2106 = vadd.f32 %v2037, %v2105
        %v2107 = vpop.f32.mrb[0].mxu0
        %2108 = vmatprep.mubr.f32.mxu0 %v1938
        %2109 = vmatmul.mubr.f32.gmra.mrb[0].mxu0 %v1937
        %v2110 = vpop.f32.mrb[0].mxu0
        %v2111 = vadd.f32 %v2037, %v2110
        %v2112 = vpop.f32.mrb[0].mxu0
        %2113 = vmatprep.mubr.f32.mxu0 %v1943
        %2114 = vmatmul.mubr.f32.gmra.mrb[0].mxu0 %v1942
        %v2115 = vpop.f32.mrb[0].mxu0
        %v2116 = vadd.f32 %v2037, %v2115
        %v2117 = vpop.f32.mrb[0].mxu0
        %2118 = vmatprep.mubr.f32.mxu0 %v1948
        %2119 = vmatmul.mubr.f32.gmra.mrb[0].mxu0 %v1947
        %v2120 = vpop.f32.mrb[0].mxu0
        %v2121 = vadd.f32 %v2037, %v2120
        %v2122 = vpop.f32.mrb[0].mxu0
        %2123 = vdwg.mxu0
        %2124 = vmatprep.subr.mxu0 0.0
        %2125 = vmatpush1.msra.mxu0 %v1984
        %2126 = vmatprep.subr.mxu0 0.0
        %2127 = vmatpush1.msra.mxu0 %v1985
        %2128 = vmatprep.subr.mxu0 0.0
        %2129 = vmatpush1.msra.mxu0 %v1986
        %2130 = vmatprep.subr.mxu0 0.0
        %2131 = vmatpush1.msra.mxu0 %v1987
        %2132 = vmatprep.subr.mxu0 0.0
        %2133 = vmatpush1.msra.mxu0 %v1988
        %2134 = vmatprep.subr.mxu0 0.0
        %2135 = vmatpush1.msra.mxu0 %v1989
        %2136 = vmatprep.subr.mxu0 0.0
        %2137 = vmatpush1.msra.mxu0 %v1990
        %2138 = vmatprep.subr.mxu0 0.0
        %2139 = vmatpush1.msra.mxu0 %v1991
        %2140 = vmatprep.subr.mxu0 0.0
        %2141 = vmatpush1.msra.mxu0 %v1992
        %2142 = vmatprep.subr.mxu0 0.0
        %2143 = vmatpush1.msra.mxu0 %v1993
        %2144 = vmatprep.subr.mxu0 0.0
        %2145 = vmatpush1.msra.mxu0 %v1994
        %2146 = vmatprep.subr.mxu0 0.0
        %2147 = vmatpush1.msra.mxu0 %v1995
        %2148 = vmatprep.subr.mxu0 0.0
        %2149 = vmatpush1.msra.mxu0 %v1996
        %2150 = vmatprep.subr.mxu0 0.0
        %2151 = vmatpush1.msra.mxu0 %v1997
        %2152 = vmatprep.subr.mxu0 0.0
        %2153 = vmatpush1.msra.mxu0 %v1998
        %2154 = vmatprep.subr.mxu0 0.0
        %2155 = vmatpush1.msra.mxu0 %v1999
        %2156 = vmatprep.subr.mxu0 0.0
        %2157 = vmatpush1.msra.mxu0 %v2000
        %2158 = vmatprep.subr.mxu0 0.0
        %2159 = vmatpush1.msra.mxu0 %v2001
        %2160 = vmatprep.subr.mxu0 0.0
        %2161 = vmatpush1.msra.mxu0 %v2002
        %2162 = vmatprep.subr.mxu0 0.0
        %2163 = vmatpush1.msra.mxu0 %v2003
        %2164 = vmatprep.subr.mxu0 0.0
        %2165 = vmatpush1.msra.mxu0 %v2004
        %2166 = vmatprep.subr.mxu0 0.0
        %2167 = vmatpush1.msra.mxu0 %v2005
        %2168 = vmatprep.subr.mxu0 0.0
        %2169 = vmatpush1.msra.mxu0 %v2006
        %2170 = vmatprep.subr.mxu0 0.0
        %2171 = vmatpush1.msra.mxu0 %v2007
        %2172 = vmatprep.subr.mxu0 0.0
        %2173 = vmatpush1.msra.mxu0 %v2008
        %2174 = vmatprep.subr.mxu0 0.0
        %2175 = vmatpush1.msra.mxu0 %v2009
        %2176 = vmatprep.subr.mxu0 0.0
        %2177 = vmatpush1.msra.mxu0 %v2010
        %2178 = vmatprep.subr.mxu0 0.0
        %2179 = vmatpush1.msra.mxu0 %v2011
        %2180 = vmatprep.subr.mxu0 0.0
        %2181 = vmatpush1.msra.mxu0 %v2012
        %2182 = vmatprep.subr.mxu0 0.0
        %2183 = vmatpush1.msra.mxu0 %v2013
        %2184 = vmatprep.subr.mxu0 0.0
        %2185 = vmatpush1.msra.mxu0 %v2014
        %2186 = vmatprep.subr.mxu0 0.0
        %2187 = vmatpush1.msra.mxu0 %v2015
        %2188 = vmatprep.mubr.f32.mxu0 %v1935
        %2189 = vmatmul.mubr.f32.gmra.mrb[0].mxu0 %v1934
        %v2190 = vpop.f32.mrb[0].mxu0
        %v2191 = vadd.f32 %v2106, %v2190
        %v2192 = vpop.f32.mrb[0].mxu0
        %2193 = vmatprep.mubr.f32.mxu0 %v1940
        %2194 = vmatmul.mubr.f32.gmra.mrb[0].mxu0 %v1939
        %v2195 = vpop.f32.mrb[0].mxu0
        %v2196 = vadd.f32 %v2111, %v2195
        %v2197 = vpop.f32.mrb[0].mxu0
        %2198 = vmatprep.mubr.f32.mxu0 %v1945
        %2199 = vmatmul.mubr.f32.gmra.mrb[0].mxu0 %v1944
        %v2200 = vpop.f32.mrb[0].mxu0
        %v2201 = vadd.f32 %v2116, %v2200
        %v2202 = vpop.f32.mrb[0].mxu0
        %2203 = vmatprep.mubr.f32.mxu0 %v1950
        %2204 = vmatmul.mubr.f32.gmra.mrb[0].mxu0 %v1949
        %v2205 = vpop.f32.mrb[0].mxu0
        %v2206 = vadd.f32 %v2121, %v2205
        %v2207 = vpop.f32.mrb[0].mxu0
        %2208 = vdwg.mxu0
        %2209 = vmatprep.subr.mxu0 0.0
        %2210 = vmatpush1.msra.mxu0 %v2016
        %2211 = vmatprep.subr.mxu0 0.0
        %2212 = vmatpush1.msra.mxu0 %v2017
        %2213 = vmatprep.subr.mxu0 0.0
        %2214 = vmatpush1.msra.mxu0 %v2018
        %2215 = vmatprep.subr.mxu0 0.0
        %2216 = vmatpush1.msra.mxu0 %v2019
        %2217 = vmatprep.subr.mxu0 0.0
        %2218 = vmatpush1.msra.mxu0 %v2020
        %2219 = vmatprep.subr.mxu0 0.0
        %2220 = vmatpush1.msra.mxu0 %v2021
        %2221 = vmatprep.subr.mxu0 0.0
        %2222 = vmatpush1.msra.mxu0 %v2022
        %2223 = vmatprep.subr.mxu0 0.0
        %2224 = vmatpush1.msra.mxu0 %v2023
        %2225 = vmatprep.subr.mxu0 0.0
        %2226 = vmatpush1.msra.mxu0 %v2024
        %2227 = vmatprep.subr.mxu0 0.0
        %2228 = vmatpush1.msra.mxu0 %v2025
        %2229 = vmatprep.subr.mxu0 0.0
        %2230 = vmatpush1.msra.mxu0 %v2026
        %2231 = vmatprep.subr.mxu0 0.0
        %2232 = vmatpush1.msra.mxu0 %v2027
        %2233 = vmatprep.subr.mxu0 0.0
        %2234 = vmatpush1.msra.mxu0 %v2028
        %2235 = vmatprep.subr.mxu0 0.0
        %2236 = vmatpush1.msra.mxu0 %v2029
        %2237 = vmatprep.subr.mxu0 0.0
        %2238 = vmatpush1.msra.mxu0 %v2030
        %2239 = vmatprep.subr.mxu0 0.0
        %2240 = vmatpush1.msra.mxu0 %v2031
        %2241 = vmatprep.subr.mxu0 0.0
        %2242 = vmatpush1.msra.mxu0 0.0
        %2243 = vmatprep.subr.mxu0 0.0
        %2244 = vmatpush1.msra.mxu0 0.0
        %2245 = vmatprep.subr.mxu0 0.0
        %2246 = vmatpush1.msra.mxu0 0.0
        %2247 = vmatprep.subr.mxu0 0.0
        %2248 = vmatpush1.msra.mxu0 0.0
        %2249 = vmatprep.subr.mxu0 0.0
        %2250 = vmatpush1.msra.mxu0 0.0
        %2251 = vmatprep.subr.mxu0 0.0
        %2252 = vmatpush1.msra.mxu0 0.0
        %2253 = vmatprep.subr.mxu0 0.0
        %2254 = vmatpush1.msra.mxu0 0.0
        %2255 = vmatprep.subr.mxu0 0.0
        %2256 = vmatpush1.msra.mxu0 0.0
        %2257 = vmatprep.subr.mxu0 0.0
        %2258 = vmatpush1.msra.mxu0 0.0
        %2259 = vmatprep.subr.mxu0 0.0
        %2260 = vmatpush1.msra.mxu0 0.0
        %2261 = vmatprep.subr.mxu0 0.0
        %2262 = vmatpush1.msra.mxu0 0.0
        %2263 = vmatprep.subr.mxu0 0.0
        %2264 = vmatpush1.msra.mxu0 0.0
        %2265 = vmatprep.subr.mxu0 0.0
        %2266 = vmatpush1.msra.mxu0 0.0
        %2267 = vmatprep.subr.mxu0 0.0
        %2268 = vmatpush1.msra.mxu0 0.0
        %2269 = vmatprep.subr.mxu0 0.0
        %2270 = vmatpush1.msra.mxu0 0.0
        %2271 = vmatprep.subr.mxu0 0.0
        %2272 = vmatpush1.msra.mxu0 0.0
        %2273 = vmatprep.mubr.f32.mxu0 0.0
        %2274 = vmatmul.mubr.f32.gmra.mrb[0].mxu0 %v1936
        %v2275 = vpop.f32.mrb[0].mxu0
        %v2276 = vadd.f32 %v2191, %v2275
        %v2277 = vpop.f32.mrb[0].mxu0
        %2278 = vmatprep.mubr.f32.mxu0 0.0
        %2279 = vmatmul.mubr.f32.gmra.mrb[0].mxu0 %v1941
        %v2280 = vpop.f32.mrb[0].mxu0
        %v2281 = vadd.f32 %v2196, %v2280
        %v2282 = vpop.f32.mrb[0].mxu0
        %2283 = vmatprep.mubr.f32.mxu0 0.0
        %2284 = vmatmul.mubr.f32.gmra.mrb[0].mxu0 %v1946
        %v2285 = vpop.f32.mrb[0].mxu0
        %v2286 = vadd.f32 %v2201, %v2285
        %v2287 = vpop.f32.mrb[0].mxu0
        %2288 = vmatprep.mubr.f32.mxu0 0.0
        %2289 = vmatmul.mubr.f32.gmra.mrb[0].mxu0 %v1951
        %v2290 = vpop.f32.mrb[0].mxu0
        %v2291 = vadd.f32 %v2206, %v2290
        %v2292 = vpop.f32.mrb[0].mxu0
        %2293 = vdwg.mxu0
        %v2294 = vtanh.pop %v2276
        %v2295 = vtanh.pop %v2281
        %v2296 = vtanh.pop %v2286
        %v2297 = vtanh.pop %v2291
        %v2298 = vmul.f32 %v2294, %v527
        %v2299 = vmul.f32 %v2295, %v528
        %v2300 = vmul.f32 %v2296, %v529
        %v2301 = vmul.f32 %v2297, %v530
        %2302 = vst [vmem:[#allocation3 + $0x8] sm:$0xff] %v2298
        %2303 = vst [vmem:[#allocation3 + $0x10] sm:$0xff] %v2299
        %2304 = vst [vmem:[#allocation3 + $0x18] sm:$0xff] %v2300
        %2305 = vst [vmem:[#allocation3 + $0x20] sm:$0xf] %v2301
        %v2306 = vld [vmem:[#allocation3 + $0x8] sm:$0xff]
        %v2307 = vld [vmem:[#allocation3 + $0x10] sm:$0xff]
        %v2308 = vld [vmem:[#allocation3 + $0x18] sm:$0xff]
        %2309 = vst [vmem:[#allocation4] sm:$0xff] %v2306
        %2310 = vst [vmem:[#allocation4 + $0x28] sm:$0xff] %v2307
        %2311 = vst [vmem:[#allocation4 + $0x50] sm:$0xff] %v2308
        %v2312 = vld [vmem:[#allocation3 + $0x9] sm:$0xff]
        %v2313 = vld [vmem:[#allocation3 + $0x11] sm:$0xff]
        %v2314 = vld [vmem:[#allocation3 + $0x19] sm:$0xff]
        %2315 = vst [vmem:[#allocation4 + $0x8] sm:$0xff] %v2312
        %2316 = vst [vmem:[#allocation4 + $0x30] sm:$0xff] %v2313
        %2317 = vst [vmem:[#allocation4 + $0x58] sm:$0xff] %v2314
        %v2318 = vld [vmem:[#allocation3 + $0xa] sm:$0xff]
        %v2319 = vld [vmem:[#allocation3 + $0x12] sm:$0xff]
        %v2320 = vld [vmem:[#allocation3 + $0x1a] sm:$0xff]
        %2321 = vst [vmem:[#allocation4 + $0x10] sm:$0xff] %v2318
        %2322 = vst [vmem:[#allocation4 + $0x38] sm:$0xff] %v2319
        %2323 = vst [vmem:[#allocation4 + $0x60] sm:$0xff] %v2320
        %v2324 = vld [vmem:[#allocation3 + $0xb] sm:$0xff]
        %v2325 = vld [vmem:[#allocation3 + $0x13] sm:$0xff]
        %v2326 = vld [vmem:[#allocation3 + $0x1b] sm:$0xff]
        %2327 = vst [vmem:[#allocation4 + $0x18] sm:$0xff] %v2324
        %2328 = vst [vmem:[#allocation4 + $0x40] sm:$0xff] %v2325
        %2329 = vst [vmem:[#allocation4 + $0x68] sm:$0xff] %v2326
        %v2330 = vld [vmem:[#allocation3 + $0xc] sm:$0xff]
        %v2331 = vld [vmem:[#allocation3 + $0x14] sm:$0xff]
        %v2332 = vld [vmem:[#allocation3 + $0x1c] sm:$0xff]
        %2333 = vst [vmem:[#allocation4 + $0x20] sm:$0xff] %v2330
        %2334 = vst [vmem:[#allocation4 + $0x48] sm:$0xff] %v2331
        %2335 = vst [vmem:[#allocation4 + $0x70] sm:$0xff] %v2332
        %v2336 = vld [vmem:[#allocation4] sm:$0xff]
        %v2337 = vld [vmem:[#allocation4 + $0x8] sm:$0xff]
        %v2338 = vld [vmem:[#allocation4 + $0x10] sm:$0xff]
        %v2339 = vld [vmem:[#allocation4 + $0x18] sm:$0xff]
        %v2340 = vld [vmem:[#allocation4 + $0x20] sm:$0xff]
        %v2341 = vld [vmem:[#allocation4 + $0x28] sm:$0xff]
        %v2342 = vld [vmem:[#allocation4 + $0x30] sm:$0xff]
        %v2343 = vld [vmem:[#allocation4 + $0x38] sm:$0xff]
        %v2344 = vld [vmem:[#allocation4 + $0x40] sm:$0xff]
        %v2345 = vld [vmem:[#allocation4 + $0x48] sm:$0xff]
        %v2346 = vld [vmem:[#allocation4 + $0x50] sm:$0xff]
        %v2347 = vld [vmem:[#allocation4 + $0x58] sm:$0xff]
        %v2348 = vld [vmem:[#allocation4 + $0x60] sm:$0xff]
        %v2349 = vld [vmem:[#allocation4 + $0x68] sm:$0xff]
        %v2350 = vld [vmem:[#allocation4 + $0x70] sm:$0xff]
        %v2351 = vld [vmem:[#allocation13] sm:$0xff]
        %v2352 = vld [vmem:[#allocation13 + $0x8] sm:$0xff]
        %v2353 = vld [vmem:[#allocation13 + $0x10] sm:$0xff]
        %v2354 = vld [vmem:[#allocation13 + $0x18] sm:$0xff]
        %v2355 = vld [vmem:[#allocation13 + $0x20] sm:$0xff]
        %v2356 = vld [vmem:[#allocation13 + $0x28] sm:$0xff]
        %v2357 = vld [vmem:[#allocation13 + $0x30] sm:$0xff]
        %v2358 = vld [vmem:[#allocation13 + $0x38] sm:$0xff]
        %v2359 = vld [vmem:[#allocation13 + $0x40] sm:$0xff]
        %v2360 = vld [vmem:[#allocation13 + $0x48] sm:$0xff]
        %v2361 = vld [vmem:[#allocation13 + $0x50] sm:$0xff]
        %v2362 = vld [vmem:[#allocation13 + $0x58] sm:$0xff]
        %v2363 = vld [vmem:[#allocation13 + $0x60] sm:$0xff]
        %v2364 = vld [vmem:[#allocation13 + $0x68] sm:$0xff]
        %v2365 = vld [vmem:[#allocation13 + $0x70] sm:$0xff]
        %v2366 = vld [vmem:[#allocation13 + $0x78] sm:$0xff]
        %v2367 = vld [vmem:[#allocation13 + $0x80] sm:$0xff]
        %v2368 = vld [vmem:[#allocation13 + $0x88] sm:$0xff]
        %v2369 = vld [vmem:[#allocation13 + $0x90] sm:$0xff]
        %v2370 = vld [vmem:[#allocation13 + $0x98] sm:$0xff]
        %v2371 = vld [vmem:[#allocation13 + $0xa0] sm:$0xff]
        %v2372 = vld [vmem:[#allocation13 + $0xa8] sm:$0xff]
        %v2373 = vld [vmem:[#allocation13 + $0xb0] sm:$0xff]
        %v2374 = vld [vmem:[#allocation13 + $0xb8] sm:$0xff]
        %v2375 = vld [vmem:[#allocation13 + $0xc0] sm:$0xff]
        %v2376 = vld [vmem:[#allocation13 + $0xc8] sm:$0xff]
        %v2377 = vld [vmem:[#allocation13 + $0xd0] sm:$0xff]
        %v2378 = vld [vmem:[#allocation13 + $0xd8] sm:$0xff]
        %v2379 = vld [vmem:[#allocation13 + $0xe0] sm:$0xff]
        %v2380 = vld [vmem:[#allocation13 + $0xe8] sm:$0xff]
        %v2381 = vld [vmem:[#allocation13 + $0xf0] sm:$0xff]
        %v2382 = vld [vmem:[#allocation13 + $0xf8] sm:$0xff]
        %v2383 = vld [vmem:[#allocation13 + $0x100] sm:$0xff]
        %v2384 = vld [vmem:[#allocation13 + $0x108] sm:$0xff]
        %v2385 = vld [vmem:[#allocation13 + $0x110] sm:$0xff]
        %v2386 = vld [vmem:[#allocation13 + $0x118] sm:$0xff]
        %v2387 = vld [vmem:[#allocation13 + $0x120] sm:$0xff]
        %v2388 = vld [vmem:[#allocation13 + $0x128] sm:$0xff]
        %v2389 = vld [vmem:[#allocation13 + $0x130] sm:$0xff]
        %v2390 = vld [vmem:[#allocation13 + $0x138] sm:$0xff]
        %v2391 = vld [vmem:[#allocation13 + $0x140] sm:$0xff]
        %v2392 = vld [vmem:[#allocation13 + $0x148] sm:$0xff]
        %v2393 = vld [vmem:[#allocation13 + $0x150] sm:$0xff]
        %v2394 = vld [vmem:[#allocation13 + $0x158] sm:$0xff]
        %v2395 = vld [vmem:[#allocation13 + $0x160] sm:$0xff]
        %v2396 = vld [vmem:[#allocation13 + $0x168] sm:$0xff]
        %v2397 = vld [vmem:[#allocation13 + $0x170] sm:$0xff]
        %v2398 = vld [vmem:[#allocation13 + $0x178] sm:$0xff]
        %v2399 = vld [vmem:[#allocation13 + $0x180] sm:$0xff]
        %v2400 = vld [vmem:[#allocation13 + $0x188] sm:$0xff]
        %v2401 = vld [vmem:[#allocation13 + $0x190] sm:$0xff]
        %v2402 = vld [vmem:[#allocation13 + $0x198] sm:$0xff]
        %v2403 = vld [vmem:[#allocation13 + $0x1a0] sm:$0xff]
        %v2404 = vld [vmem:[#allocation13 + $0x1a8] sm:$0xff]
        %v2405 = vld [vmem:[#allocation13 + $0x1b0] sm:$0xff]
        %v2406 = vld [vmem:[#allocation13 + $0x1b8] sm:$0xff]
        %v2407 = vld [vmem:[#allocation13 + $0x1c0] sm:$0xff]
        %v2408 = vld [vmem:[#allocation13 + $0x1c8] sm:$0xff]
        %v2409 = vld [vmem:[#allocation13 + $0x1d0] sm:$0xff]
        %v2410 = vld [vmem:[#allocation13 + $0x1d8] sm:$0xff]
        %v2411 = vld [vmem:[#allocation13 + $0x1e0] sm:$0xff]
        %v2412 = vld [vmem:[#allocation13 + $0x1e8] sm:$0xff]
        %v2413 = vld [vmem:[#allocation13 + $0x1f0] sm:$0xff]
        %v2414 = vld [vmem:[#allocation13 + $0x1f8] sm:$0xff]
        %v2415 = vld [vmem:[#allocation13 + $0x200] sm:$0xff]
        %v2416 = vld [vmem:[#allocation13 + $0x208] sm:$0xff]
        %v2417 = vld [vmem:[#allocation13 + $0x210] sm:$0xff]
        %v2418 = vld [vmem:[#allocation13 + $0x218] sm:$0xff]
        %v2419 = vld [vmem:[#allocation13 + $0x220] sm:$0xff]
        %v2420 = vld [vmem:[#allocation13 + $0x228] sm:$0xff]
        %v2421 = vld [vmem:[#allocation13 + $0x230] sm:$0xff]
        %v2422 = vld [vmem:[#allocation13 + $0x238] sm:$0xff]
        %v2423 = vld [vmem:[#allocation13 + $0x240] sm:$0xff]
        %v2424 = vld [vmem:[#allocation13 + $0x248] sm:$0xff]
        %v2425 = vld [vmem:[#allocation13 + $0x250] sm:$0xff]
        %v2426 = vld [vmem:[#allocation13 + $0x258] sm:$0xff]
        %v2427 = vld [vmem:[#allocation13 + $0x260] sm:$0xff]
        %v2428 = vld [vmem:[#allocation13 + $0x268] sm:$0xff]
        %v2429 = vld [vmem:[#allocation13 + $0x270] sm:$0xff]
        %v2430 = vld [vmem:[#allocation13 + $0x278] sm:$0xff]
        %v2431 = vld [vmem:[%s10] sm:$0x1]
        %v2433 = vlaneseq
        %v2434 = vshrl.u32 %v2433, 7
        %v2435 = vsub.s32 0, %v2434
        %v2436 = vrot.slane %v2431, %v2435
        %2438 = vmatprep.subr.mxu0 0.0
        %2439 = vmatpush1.msra.mxu0 %v2351
        %2440 = vmatprep.subr.mxu0 0.0
        %2441 = vmatpush1.msra.mxu0 %v2352
        %2442 = vmatprep.subr.mxu0 0.0
        %2443 = vmatpush1.msra.mxu0 %v2353
        %2444 = vmatprep.subr.mxu0 0.0
        %2445 = vmatpush1.msra.mxu0 %v2354
        %2446 = vmatprep.subr.mxu0 0.0
        %2447 = vmatpush1.msra.mxu0 %v2355
        %2448 = vmatprep.subr.mxu0 0.0
        %2449 = vmatpush1.msra.mxu0 %v2356
        %2450 = vmatprep.subr.mxu0 0.0
        %2451 = vmatpush1.msra.mxu0 %v2357
        %2452 = vmatprep.subr.mxu0 0.0
        %2453 = vmatpush1.msra.mxu0 %v2358
        %2454 = vmatprep.subr.mxu0 0.0
        %2455 = vmatpush1.msra.mxu0 %v2359
        %2456 = vmatprep.subr.mxu0 0.0
        %2457 = vmatpush1.msra.mxu0 %v2360
        %2458 = vmatprep.subr.mxu0 0.0
        %2459 = vmatpush1.msra.mxu0 %v2361
        %2460 = vmatprep.subr.mxu0 0.0
        %2461 = vmatpush1.msra.mxu0 %v2362
        %2462 = vmatprep.subr.mxu0 0.0
        %2463 = vmatpush1.msra.mxu0 %v2363
        %2464 = vmatprep.subr.mxu0 0.0
        %2465 = vmatpush1.msra.mxu0 %v2364
        %2466 = vmatprep.subr.mxu0 0.0
        %2467 = vmatpush1.msra.mxu0 %v2365
        %2468 = vmatprep.subr.mxu0 0.0
        %2469 = vmatpush1.msra.mxu0 %v2366
        %2470 = vmatprep.subr.mxu0 0.0
        %2471 = vmatpush1.msra.mxu0 %v2367
        %2472 = vmatprep.subr.mxu0 0.0
        %2473 = vmatpush1.msra.mxu0 %v2368
        %2474 = vmatprep.subr.mxu0 0.0
        %2475 = vmatpush1.msra.mxu0 %v2369
        %2476 = vmatprep.subr.mxu0 0.0
        %2477 = vmatpush1.msra.mxu0 %v2370
        %2478 = vmatprep.subr.mxu0 0.0
        %2479 = vmatpush1.msra.mxu0 %v2371
        %2480 = vmatprep.subr.mxu0 0.0
        %2481 = vmatpush1.msra.mxu0 %v2372
        %2482 = vmatprep.subr.mxu0 0.0
        %2483 = vmatpush1.msra.mxu0 %v2373
        %2484 = vmatprep.subr.mxu0 0.0
        %2485 = vmatpush1.msra.mxu0 %v2374
        %2486 = vmatprep.subr.mxu0 0.0
        %2487 = vmatpush1.msra.mxu0 %v2375
        %2488 = vmatprep.subr.mxu0 0.0
        %2489 = vmatpush1.msra.mxu0 %v2376
        %2490 = vmatprep.subr.mxu0 0.0
        %2491 = vmatpush1.msra.mxu0 %v2377
        %2492 = vmatprep.subr.mxu0 0.0
        %2493 = vmatpush1.msra.mxu0 %v2378
        %2494 = vmatprep.subr.mxu0 0.0
        %2495 = vmatpush1.msra.mxu0 %v2379
        %2496 = vmatprep.subr.mxu0 0.0
        %2497 = vmatpush1.msra.mxu0 %v2380
        %2498 = vmatprep.subr.mxu0 0.0
        %2499 = vmatpush1.msra.mxu0 %v2381
        %2500 = vmatprep.subr.mxu0 0.0
        %2501 = vmatpush1.msra.mxu0 %v2382
        %2502 = vmatprep.mubr.f32.mxu0 %v2337
        %2503 = vmatmul.mubr.f32.gmra.mrb[0].mxu0 %v2336
        %v2504 = vpop.f32.mrb[0].mxu0
        %v2505 = vadd.f32 %v2436, %v2504
        %v2506 = vpop.f32.mrb[0].mxu0
        %2507 = vmatprep.mubr.f32.mxu0 %v2342
        %2508 = vmatmul.mubr.f32.gmra.mrb[0].mxu0 %v2341
        %v2509 = vpop.f32.mrb[0].mxu0
        %v2510 = vadd.f32 %v2436, %v2509
        %v2511 = vpop.f32.mrb[0].mxu0
        %2512 = vmatprep.mubr.f32.mxu0 %v2347
        %2513 = vmatmul.mubr.f32.gmra.mrb[0].mxu0 %v2346
        %v2514 = vpop.f32.mrb[0].mxu0
        %v2515 = vadd.f32 %v2436, %v2514
        %v2516 = vpop.f32.mrb[0].mxu0
        %2517 = vdwg.mxu0
        %2518 = vmatprep.subr.mxu0 0.0
        %2519 = vmatpush1.msra.mxu0 %v2383
        %2520 = vmatprep.subr.mxu0 0.0
        %2521 = vmatpush1.msra.mxu0 %v2384
        %2522 = vmatprep.subr.mxu0 0.0
        %2523 = vmatpush1.msra.mxu0 %v2385
        %2524 = vmatprep.subr.mxu0 0.0
        %2525 = vmatpush1.msra.mxu0 %v2386
        %2526 = vmatprep.subr.mxu0 0.0
        %2527 = vmatpush1.msra.mxu0 %v2387
        %2528 = vmatprep.subr.mxu0 0.0
        %2529 = vmatpush1.msra.mxu0 %v2388
        %2530 = vmatprep.subr.mxu0 0.0
        %2531 = vmatpush1.msra.mxu0 %v2389
        %2532 = vmatprep.subr.mxu0 0.0
        %2533 = vmatpush1.msra.mxu0 %v2390
        %2534 = vmatprep.subr.mxu0 0.0
        %2535 = vmatpush1.msra.mxu0 %v2391
        %2536 = vmatprep.subr.mxu0 0.0
        %2537 = vmatpush1.msra.mxu0 %v2392
        %2538 = vmatprep.subr.mxu0 0.0
        %2539 = vmatpush1.msra.mxu0 %v2393
        %2540 = vmatprep.subr.mxu0 0.0
        %2541 = vmatpush1.msra.mxu0 %v2394
        %2542 = vmatprep.subr.mxu0 0.0
        %2543 = vmatpush1.msra.mxu0 %v2395
        %2544 = vmatprep.subr.mxu0 0.0
        %2545 = vmatpush1.msra.mxu0 %v2396
        %2546 = vmatprep.subr.mxu0 0.0
        %2547 = vmatpush1.msra.mxu0 %v2397
        %2548 = vmatprep.subr.mxu0 0.0
        %2549 = vmatpush1.msra.mxu0 %v2398
        %2550 = vmatprep.subr.mxu0 0.0
        %2551 = vmatpush1.msra.mxu0 %v2399
        %2552 = vmatprep.subr.mxu0 0.0
        %2553 = vmatpush1.msra.mxu0 %v2400
        %2554 = vmatprep.subr.mxu0 0.0
        %2555 = vmatpush1.msra.mxu0 %v2401
        %2556 = vmatprep.subr.mxu0 0.0
        %2557 = vmatpush1.msra.mxu0 %v2402
        %2558 = vmatprep.subr.mxu0 0.0
        %2559 = vmatpush1.msra.mxu0 %v2403
        %2560 = vmatprep.subr.mxu0 0.0
        %2561 = vmatpush1.msra.mxu0 %v2404
        %2562 = vmatprep.subr.mxu0 0.0
        %2563 = vmatpush1.msra.mxu0 %v2405
        %2564 = vmatprep.subr.mxu0 0.0
        %2565 = vmatpush1.msra.mxu0 %v2406
        %2566 = vmatprep.subr.mxu0 0.0
        %2567 = vmatpush1.msra.mxu0 %v2407
        %2568 = vmatprep.subr.mxu0 0.0
        %2569 = vmatpush1.msra.mxu0 %v2408
        %2570 = vmatprep.subr.mxu0 0.0
        %2571 = vmatpush1.msra.mxu0 %v2409
        %2572 = vmatprep.subr.mxu0 0.0
        %2573 = vmatpush1.msra.mxu0 %v2410
        %2574 = vmatprep.subr.mxu0 0.0
        %2575 = vmatpush1.msra.mxu0 %v2411
        %2576 = vmatprep.subr.mxu0 0.0
        %2577 = vmatpush1.msra.mxu0 %v2412
        %2578 = vmatprep.subr.mxu0 0.0
        %2579 = vmatpush1.msra.mxu0 %v2413
        %2580 = vmatprep.subr.mxu0 0.0
        %2581 = vmatpush1.msra.mxu0 %v2414
        %2582 = vmatprep.mubr.f32.mxu0 %v2339
        %2583 = vmatmul.mubr.f32.gmra.mrb[0].mxu0 %v2338
        %v2584 = vpop.f32.mrb[0].mxu0
        %v2585 = vadd.f32 %v2505, %v2584
        %v2586 = vpop.f32.mrb[0].mxu0
        %2587 = vmatprep.mubr.f32.mxu0 %v2344
        %2588 = vmatmul.mubr.f32.gmra.mrb[0].mxu0 %v2343
        %v2589 = vpop.f32.mrb[0].mxu0
        %v2590 = vadd.f32 %v2510, %v2589
        %v2591 = vpop.f32.mrb[0].mxu0
        %2592 = vmatprep.mubr.f32.mxu0 %v2349
        %2593 = vmatmul.mubr.f32.gmra.mrb[0].mxu0 %v2348
        %v2594 = vpop.f32.mrb[0].mxu0
        %v2595 = vadd.f32 %v2515, %v2594
        %v2596 = vpop.f32.mrb[0].mxu0
        %2597 = vdwg.mxu0
        %2598 = vmatprep.subr.mxu0 0.0
        %2599 = vmatpush1.msra.mxu0 %v2415
        %2600 = vmatprep.subr.mxu0 0.0
        %2601 = vmatpush1.msra.mxu0 %v2416
        %2602 = vmatprep.subr.mxu0 0.0
        %2603 = vmatpush1.msra.mxu0 %v2417
        %2604 = vmatprep.subr.mxu0 0.0
        %2605 = vmatpush1.msra.mxu0 %v2418
        %2606 = vmatprep.subr.mxu0 0.0
        %2607 = vmatpush1.msra.mxu0 %v2419
        %2608 = vmatprep.subr.mxu0 0.0
        %2609 = vmatpush1.msra.mxu0 %v2420
        %2610 = vmatprep.subr.mxu0 0.0
        %2611 = vmatpush1.msra.mxu0 %v2421
        %2612 = vmatprep.subr.mxu0 0.0
        %2613 = vmatpush1.msra.mxu0 %v2422
        %2614 = vmatprep.subr.mxu0 0.0
        %2615 = vmatpush1.msra.mxu0 %v2423
        %2616 = vmatprep.subr.mxu0 0.0
        %2617 = vmatpush1.msra.mxu0 %v2424
        %2618 = vmatprep.subr.mxu0 0.0
        %2619 = vmatpush1.msra.mxu0 %v2425
        %2620 = vmatprep.subr.mxu0 0.0
        %2621 = vmatpush1.msra.mxu0 %v2426
        %2622 = vmatprep.subr.mxu0 0.0
        %2623 = vmatpush1.msra.mxu0 %v2427
        %2624 = vmatprep.subr.mxu0 0.0
        %2625 = vmatpush1.msra.mxu0 %v2428
        %2626 = vmatprep.subr.mxu0 0.0
        %2627 = vmatpush1.msra.mxu0 %v2429
        %2628 = vmatprep.subr.mxu0 0.0
        %2629 = vmatpush1.msra.mxu0 %v2430
        %2630 = vmatprep.subr.mxu0 0.0
        %2631 = vmatpush1.msra.mxu0 0.0
        %2632 = vmatprep.subr.mxu0 0.0
        %2633 = vmatpush1.msra.mxu0 0.0
        %2634 = vmatprep.subr.mxu0 0.0
        %2635 = vmatpush1.msra.mxu0 0.0
        %2636 = vmatprep.subr.mxu0 0.0
        %2637 = vmatpush1.msra.mxu0 0.0
        %2638 = vmatprep.subr.mxu0 0.0
        %2639 = vmatpush1.msra.mxu0 0.0
        %2640 = vmatprep.subr.mxu0 0.0
        %2641 = vmatpush1.msra.mxu0 0.0
        %2642 = vmatprep.subr.mxu0 0.0
        %2643 = vmatpush1.msra.mxu0 0.0
        %2644 = vmatprep.subr.mxu0 0.0
        %2645 = vmatpush1.msra.mxu0 0.0
        %2646 = vmatprep.subr.mxu0 0.0
        %2647 = vmatpush1.msra.mxu0 0.0
        %2648 = vmatprep.subr.mxu0 0.0
        %2649 = vmatpush1.msra.mxu0 0.0
        %2650 = vmatprep.subr.mxu0 0.0
        %2651 = vmatpush1.msra.mxu0 0.0
        %2652 = vmatprep.subr.mxu0 0.0
        %2653 = vmatpush1.msra.mxu0 0.0
        %2654 = vmatprep.subr.mxu0 0.0
        %2655 = vmatpush1.msra.mxu0 0.0
        %2656 = vmatprep.subr.mxu0 0.0
        %2657 = vmatpush1.msra.mxu0 0.0
        %2658 = vmatprep.subr.mxu0 0.0
        %2659 = vmatpush1.msra.mxu0 0.0
        %2660 = vmatprep.subr.mxu0 0.0
        %2661 = vmatpush1.msra.mxu0 0.0
        %2662 = vmatprep.mubr.f32.mxu0 0.0
        %2663 = vmatmul.mubr.f32.gmra.mrb[0].mxu0 %v2340
        %v2664 = vpop.f32.mrb[0].mxu0
        %v2665 = vadd.f32 %v2585, %v2664
        %v2666 = vpop.f32.mrb[0].mxu0
        %2667 = vmatprep.mubr.f32.mxu0 0.0
        %2668 = vmatmul.mubr.f32.gmra.mrb[0].mxu0 %v2345
        %v2669 = vpop.f32.mrb[0].mxu0
        %v2670 = vadd.f32 %v2590, %v2669
        %v2671 = vpop.f32.mrb[0].mxu0
        %2672 = vmatprep.mubr.f32.mxu0 0.0
        %2673 = vmatmul.mubr.f32.gmra.mrb[0].mxu0 %v2350
        %v2674 = vpop.f32.mrb[0].mxu0
        %v2675 = vadd.f32 %v2595, %v2674
        %v2676 = vpop.f32.mrb[0].mxu0
        %2677 = vdwg.mxu0
        %2678 = vst [vmem:[%s476] sm:$0xff] %v2665
        %2679 = vst [vmem:[%s476 + $0x8] sm:$0xff] %v2670
        %2680 = vst [vmem:[%s476 + $0x10] sm:$0xff] %v2675
        %s2681 = sand.u32 %s288, 1
        %s2682 = scalar_lea.sflag [#allocation7], %s2681
        %s2683 = sand.u32 %s288, 1
        %s2684 = smul.addr %s2683, 24
        %s2685 = scalar_lea.vmem [#allocation14], %s2684
        // Predicated region
        $region85: #{tpu_custom_call.1} parent=63 // pred_check
          %p2686 = pneg %p298
        $region86: #{tpu_custom_call.1} parent=63 // pred_check_branch
          %2688 = sbr.rel (%p2686) target = $region88
        $region87: #{tpu_custom_call.1} parent=63 // pred_region
          %s2690 = ssub.s32 384, 384
          %2691 = vsyncadd %s2682, %s2690
          %s2692 = smul.addr %s33, 3
          %s2693 = smul.addr %s32, 3
          %s2694 = sadd.s32 %s2692, %s2693
          %s2695 = smul.addr %s2694, 128
          %s2696 = scalar_lea.hbm %s11, %s2695
          %s2697 = sshll.u32 %s2685, 4
          %s2698 = int_to_ptr.vmem [resolvable:$true] %s2697
          %2703 = dma.vmem_to_hbm [thread:$0]  %s2698, 384, %s2696, %s2682, 128, 128, 8
        $region88: #{tpu_custom_call.1} parent=63 // pred_fallthru
          _
      $region64: #{tpu_custom_call.1} parent=5 // pred_fallthru
        _
      %p2704 = scmp.le.s32.totalorder 2, %s23
      // Predicated region
      $region89: #{tpu_custom_call.1} parent=5 // pred_check
        %p2705 = pneg %p2704
      $region90: #{tpu_custom_call.1} parent=5 // pred_check_branch
        %2707 = sbr.rel (%p2705) target = $region92
      $region91: #{tpu_custom_call.1} parent=5 // pred_region
        %s2708 = ssub.s32 %s23, 2
        // Predicated region
        $region93: #{tpu_custom_call.1} parent=91 // pred_check
          %p2709 = pneg %p304
        $region94: #{tpu_custom_call.1} parent=91 // pred_check_branch
          %2711 = sbr.rel (%p2709) target = $region96
        $region95: #{tpu_custom_call.1} parent=91 // pred_region
          %s2712 = sand.u32 %s289, 1
          %s2713 = scalar_lea.sflag [#allocation7], %s2712
          %s2714 = sand.u32 %s289, 1
          %s2715 = smul.addr %s2714, 24
          %s2716 = scalar_lea.vmem [#allocation14], %s2715
          %2717 = dma.done %s2713, 384
        $region96: #{tpu_custom_call.1} parent=91 // pred_fallthru
          _
      $region92: #{tpu_custom_call.1} parent=5 // pred_fallthru
        _
    $region6: #{tpu_custom_call.1} parent=1 // loop_footer
      %s27 = sadd.s32 1, %s23
    $region7: #{tpu_custom_call.1} parent=1 // loop_footer_branch
      %22 = sbr.rel target = $region3
    $region8: #{tpu_custom_call.1} parent=1 // loop_exit
      _
    %2718 = vsyncpa [#allocation6], 1
    %s2719 = scalar_lea.sflag [#allocation6], 1
    %2720 = vsyncpa %s2719, 1
    %2721 = vsyncpa [#allocation9], 1
    %2722 = vsyncpa [#allocation12], 1
    %2723 = vsyncpa [#allocation7], 1
    %s2724 = scalar_lea.sflag [#allocation7], 1
    %2725 = vsyncpa %s2724, 1

</llo_original>
